<compile_context>
chip_gen: v6e
topology: v6e:2x2x1
jax: 0.10.0
libtpu: 0.0.40
codegen_flags: <defaults>
</compile_context>

<pallas_src>
import functools

import jax
import jax.numpy as jnp
from jax.experimental import pallas as pl
from jax.experimental.pallas import tpu as pltpu

DIM = 384
PATCH_SIZE = 3
TM = 256                     # matmul M-tile
CONV_TH = 64                 # direct-conv output-row tile
PATCH_GROUP = 8              # patches gathered per grid step
_IN_SINGLE_BLOCK_BYTES = 4 * 1024 * 1024   # per-image block budget for InstanceNorm


def _round_up(x, m):
    return ((x + m - 1) // m) * m


# ----------------------------------------------------------------------------
# Pallas kernel 1: tiled matmul with fused bias / ReLU / scale epilogue
# (used for im2col convs and all 1x1 convs).  bf16 operands, f32 accumulate.
# ----------------------------------------------------------------------------
def _matmul_bias_kernel(a_ref, w_ref, b_ref, o_ref, *, relu, scale):
    acc = jnp.dot(a_ref[...], w_ref[...], preferred_element_type=jnp.float32)
    acc = acc + b_ref[...]
    if relu:
        acc = jnp.maximum(acc, 0.0)
    if scale is not None:
        acc = acc * scale
    o_ref[...] = acc


def matmul_bias(a, w, b, relu=False, scale=None):
    """a: (M, K), w: (K, N), b: (N,) -> (M, N) f32 with fused epilogue."""
    M, K = a.shape
    N = w.shape[1]
    a = a.astype(jnp.bfloat16)
    w = w.astype(jnp.bfloat16)
    tm = min(TM, _round_up(M, 8))
    return pl.pallas_call(
        functools.partial(_matmul_bias_kernel, relu=relu, scale=scale),
        out_shape=jax.ShapeDtypeStruct((M, N), jnp.float32),
        grid=(pl.cdiv(M, tm),),
        in_specs=[
            pl.BlockSpec((tm, K), lambda i: (i, 0)),
            pl.BlockSpec((K, N), lambda i: (0, 0)),
            pl.BlockSpec((1, N), lambda i: (0, 0)),
        ],
        out_specs=pl.BlockSpec((tm, N), lambda i: (i, 0)),
        compiler_params=pltpu.CompilerParams(dimension_semantics=("parallel",)),
    )(a, w, b.reshape(1, N).astype(jnp.float32))


# ----------------------------------------------------------------------------
# Pallas kernel 2: direct 3x3 / stride-1 / pad-1 convolution (no im2col).
# Row-tiled; each grid step DMAs a (TH+2)-row halo window from HBM and
# accumulates the 9 tap matmuls; bias / ReLU / scale fused.
# ----------------------------------------------------------------------------
def _conv3x3_kernel(x_hbm, w_ref, b_ref, o_ref, xbuf, sem, *, TH, Wo, Cin, Cout,
                    relu, scale):
    n = pl.program_id(0)
    t = pl.program_id(1)
    cp = pltpu.make_async_copy(
        x_hbm.at[pl.ds(n, 1), pl.ds(t * TH, TH + 2), :, :], xbuf, sem)
    cp.start()
    # TODO(synk): double-buffer this halo DMA (prefetch tile t+1) if it shows up
    # as exposed latency; compute dominates at the shapes used here.
    cp.wait()

    acc = jnp.zeros((TH * Wo, Cout), jnp.float32)
    for di in range(3):
        for dj in range(3):
            xs = xbuf[0, di:di + TH, dj:dj + Wo, :]        # (TH, Wo, Cin) bf16
            xs = xs.reshape(TH * Wo, Cin)
            tap = di * 3 + dj
            wk = w_ref[tap * Cin:(tap + 1) * Cin, :]       # (Cin, Cout) bf16
            acc = acc + jnp.dot(xs, wk, preferred_element_type=jnp.float32)

    y = acc + b_ref[...]
    if relu:
        y = jnp.maximum(y, 0.0)
    if scale is not None:
        y = y * scale
    o_ref[...] = y.reshape(1, TH, Wo, Cout)


def _conv3x3_direct(x, w, b, relu=False, scale=None):
    """x: (N, H, W, Cin) f32; w: (3, 3, Cin, Cout); stride 1, pad 1."""
    N, H, W, Cin = x.shape
    Cout = w.shape[-1]
    Ho, Wo = H, W
    TH = Ho if Ho <= CONV_TH else CONV_TH
    n_tiles = pl.cdiv(Ho, TH)
    # pad so every (TH+2)-row halo window of every tile stays in bounds
    Hp = n_tiles * TH + 2
    xp = jnp.pad(x.astype(jnp.bfloat16),
                 ((0, 0), (1, Hp - H - 1), (1, 1), (0, 0)))
    wf = w.reshape(9 * Cin, Cout).astype(jnp.bfloat16)
    bf = b.reshape(1, Cout).astype(jnp.float32)
    return pl.pallas_call(
        functools.partial(_conv3x3_kernel, TH=TH, Wo=Wo, Cin=Cin, Cout=Cout,
                          relu=relu, scale=scale),
        out_shape=jax.ShapeDtypeStruct((N, Ho, Wo, Cout), jnp.float32),
        grid_spec=pltpu.PrefetchScalarGridSpec(
            num_scalar_prefetch=0,
            grid=(N, n_tiles),
            in_specs=[pl.BlockSpec(memory_space=pl.ANY),
                      pl.BlockSpec((9 * Cin, Cout), lambda n, t: (0, 0)),
                      pl.BlockSpec((1, Cout), lambda n, t: (0, 0))],
            out_specs=pl.BlockSpec((1, TH, Wo, Cout), lambda n, t: (n, t, 0, 0)),
            scratch_shapes=[pltpu.VMEM((1, TH + 2, W + 2, Cin), jnp.bfloat16),
                            pltpu.SemaphoreType.DMA(())],
        ),
        compiler_params=pltpu.CompilerParams(
            dimension_semantics=("parallel", "parallel")),
    )(xp, wf, bf)


_DIRECT_CONV_OK = None


def _direct_conv_available():
    """Probe the direct-conv kernel once; fall back to im2col if it fails."""
    global _DIRECT_CONV_OK
    if _DIRECT_CONV_OK is None:
        try:
            x = jnp.zeros((1, 8, 16, 8), jnp.float32)
            w = jnp.zeros((3, 3, 8, 8), jnp.float32)
            b = jnp.zeros((8,), jnp.float32)
            jax.block_until_ready(_conv3x3_direct(x, w, b, relu=True))
            _DIRECT_CONV_OK = True
        except Exception:
            _DIRECT_CONV_OK = False
    return _DIRECT_CONV_OK


# ----------------------------------------------------------------------------
# Pallas kernels 3: InstanceNorm2d (no affine, eps=1e-5, biased var) + fused ReLU.
# Small maps: one block per image.  Large maps: tiled two-pass (stats + normalize)
# to bound VMEM (v7x has only 64 MiB).
# ----------------------------------------------------------------------------
def _in_single_kernel(x_ref, o_ref, *, relu):
    x = x_ref[0]                                   # (HW, C)
    mean = jnp.mean(x, axis=0, keepdims=True)
    xc = x - mean
    var = jnp.mean(xc * xc, axis=0, keepdims=True)
    y = xc * jax.lax.rsqrt(var + 1e-5)
    if relu:
        y = jnp.maximum(y, 0.0)
    o_ref[0] = y


def _in_stats_kernel(x_ref, s_ref, q_ref, *, hw, thw):
    t = pl.program_id(1)

    @pl.when(t == 0)
    def _():
        s_ref[...] = jnp.zeros_like(s_ref)
        q_ref[...] = jnp.zeros_like(q_ref)

    x = x_ref[0]                                   # (thw, C)
    row = jax.lax.broadcasted_iota(jnp.int32, x.shape, 0) + t * thw
    x = jnp.where(row < hw, x, 0.0)                # mask ragged tail rows
    s_ref[0] = s_ref[0] + jnp.sum(x, axis=0, keepdims=True)
    q_ref[0] = q_ref[0] + jnp.sum(x * x, axis=0, keepdims=True)


def _in_norm_kernel(x_ref, s_ref, q_ref, o_ref, *, hw, relu):
    x = x_ref[0]
    mean = s_ref[0] * (1.0 / hw)
    var = jnp.maximum(q_ref[0] * (1.0 / hw) - mean * mean, 0.0)
    y = (x - mean) * jax.lax.rsqrt(var + 1e-5)
    if relu:
        y = jnp.maximum(y, 0.0)
    o_ref[0] = y


def _instance_norm_tiled(x, relu=False, tile_rows=2048):
    N, H, W, C = x.shape
    hw = H * W
    thw = hw if hw <= tile_rows else tile_rows
    T = pl.cdiv(hw, thw)
    xf = x.reshape(N, hw, C)
    s, q = pl.pallas_call(
        functools.partial(_in_stats_kernel, hw=hw, thw=thw),
        out_shape=(jax.ShapeDtypeStruct((N, 1, C), jnp.float32),
                   jax.ShapeDtypeStruct((N, 1, C), jnp.float32)),
        grid=(N, T),
        in_specs=[pl.BlockSpec((1, thw, C), lambda i, t: (i, t, 0))],
        out_specs=(pl.BlockSpec((1, 1, C), lambda i, t: (i, 0, 0)),
                   pl.BlockSpec((1, 1, C), lambda i, t: (i, 0, 0))),
        compiler_params=pltpu.CompilerParams(
            dimension_semantics=("parallel", "arbitrary")),
    )(xf)
    out = pl.pallas_call(
        functools.partial(_in_norm_kernel, hw=hw, relu=relu),
        out_shape=jax.ShapeDtypeStruct((N, hw, C), jnp.float32),
        grid=(N, T),
        in_specs=[pl.BlockSpec((1, thw, C), lambda i, t: (i, t, 0)),
                  pl.BlockSpec((1, 1, C), lambda i, t: (i, 0, 0)),
                  pl.BlockSpec((1, 1, C), lambda i, t: (i, 0, 0))],
        out_specs=pl.BlockSpec((1, thw, C), lambda i, t: (i, t, 0)),
        compiler_params=pltpu.CompilerParams(
            dimension_semantics=("parallel", "parallel")),
    )(xf, s, q)
    return out.reshape(N, H, W, C)


_TILED_IN_OK = None


def _tiled_instance_norm_available():
    """Probe (compile + numerics) the tiled InstanceNorm path once."""
    global _TILED_IN_OK
    if _TILED_IN_OK is None:
        try:
            xt = jax.random.normal(jax.random.PRNGKey(1), (2, 40, 40, 32),
                                   jnp.float32)
            yt = jax.block_until_ready(
                _instance_norm_tiled(xt, relu=True, tile_rows=256))
            m = jnp.mean(xt, axis=(1, 2), keepdims=True)
            v = jnp.mean((xt - m) ** 2, axis=(1, 2), keepdims=True)
            ref = jnp.maximum((xt - m) * jax.lax.rsqrt(v + 1e-5), 0.0)
            _TILED_IN_OK = bool(jnp.allclose(yt, ref, atol=1e-3, rtol=1e-3))
        except Exception:
            _TILED_IN_OK = False
    return _TILED_IN_OK


def instance_norm(x, relu=False):
    """x: (N, H, W, C) -> instance-normalized (optionally ReLU'd), same shape."""
    N, H, W, C = x.shape
    hw = H * W
    if hw * C * 4 > _IN_SINGLE_BLOCK_BYTES and _tiled_instance_norm_available():
        return _instance_norm_tiled(x, relu=relu)
    xf = x.reshape(N, hw, C)
    out = pl.pallas_call(
        functools.partial(_in_single_kernel, relu=relu),
        out_shape=jax.ShapeDtypeStruct((N, hw, C), jnp.float32),
        grid=(N,),
        in_specs=[pl.BlockSpec((1, hw, C), lambda i: (i, 0, 0))],
        out_specs=pl.BlockSpec((1, hw, C), lambda i: (i, 0, 0)),
        compiler_params=pltpu.CompilerParams(dimension_semantics=("parallel",)),
    )(xf)
    return out.reshape(N, H, W, C)


# ----------------------------------------------------------------------------
# Pallas kernel 4: patchify gather (altcorr.patchify equivalent).
# Feature map stays in HBM (pl.ANY); each grid step issues G overlapping strided
# DMAs (one per patch) selected by scalar-prefetched (img, x, y) coords.
# ----------------------------------------------------------------------------
def _make_patchify_kernel(r, G):
    P = 2 * r + 1

    def kernel(coords_ref, fmap_hbm, o_ref, scratch, sems):
        i = pl.program_id(0)
        copies = []
        for g in range(G):
            img = coords_ref[i * G + g, 0]
            x = coords_ref[i * G + g, 1]
            y = coords_ref[i * G + g, 2]
            cp = pltpu.make_async_copy(
                fmap_hbm.at[pl.ds(img, 1), pl.ds(y - r, P), pl.ds(x - r, P), :],
                scratch.at[pl.ds(g, 1)],
                sems.at[g],
            )
            cp.start()
            copies.append(cp)
        for cp in copies:          # all G DMAs overlap before the first wait
            cp.wait()
        o_ref[...] = scratch[...]

    return kernel


def _patchify_impl(fmap, coords, r, G):
    n, h, w, C = fmap.shape
    Np = coords.shape[0]
    P = 2 * r + 1
    # clamp so every DMA window stays inside the feature map (OOB DMA is unchecked)
    img = jnp.clip(coords[:, 0], 0, n - 1)
    cx = jnp.clip(coords[:, 1], r, w - 1 - r)
    cy = jnp.clip(coords[:, 2], r, h - 1 - r)
    coords = jnp.stack([img, cx, cy], axis=-1).astype(jnp.int32)
    Npad = _round_up(Np, G)
    if Npad != Np:
        coords = jnp.concatenate(
            [coords, jnp.broadcast_to(coords[-1:], (Npad - Np, 3))], axis=0)
    out = pl.pallas_call(
        _make_patchify_kernel(r, G),
        out_shape=jax.ShapeDtypeStruct((Npad, P, P, C), fmap.dtype),
        grid_spec=pltpu.PrefetchScalarGridSpec(
            num_scalar_prefetch=1,
            grid=(Npad // G,),
            in_specs=[pl.BlockSpec(memory_space=pl.ANY)],
            out_specs=pl.BlockSpec((G, P, P, C), lambda i, coords: (i, 0, 0, 0)),
            scratch_shapes=[pltpu.VMEM((G, P, P, C), fmap.dtype),
                            pltpu.SemaphoreType.DMA((G,))],
        ),
        compiler_params=pltpu.CompilerParams(dimension_semantics=("parallel",)),
    )(coords, fmap)
    return out[:Np] if Npad != Np else out


_PATCH_GROUP_OK = None


def _patch_group():
    """Probe the batched (G=8) gather once; fall back to one patch per step."""
    global _PATCH_GROUP_OK
    if _PATCH_GROUP_OK is None:
        try:
            fm = jnp.zeros((2, 8, 8, 128), jnp.float32)
            cr = jnp.ones((PATCH_GROUP, 3), jnp.int32)
            jax.block_until_ready(_patchify_impl(fm, cr, 1, PATCH_GROUP))
            _PATCH_GROUP_OK = PATCH_GROUP
        except Exception:
            _PATCH_GROUP_OK = 1
    return _PATCH_GROUP_OK


def patchify(fmap, coords, r):
    """fmap: (n, h, w, C); coords: (Np, 3) int32 rows (img, x, y) -> (Np, P, P, C)."""
    return _patchify_impl(fmap, coords, r, _patch_group())


# ----------------------------------------------------------------------------
# Convolution dispatcher
# ----------------------------------------------------------------------------
def _im2col(x, kh, kw, stride, pad):
    if pad > 0:
        x = jnp.pad(x, ((0, 0), (pad, pad), (pad, pad), (0, 0)))
    N, Hp, Wp, C = x.shape
    Ho = (Hp - kh) // stride + 1
    Wo = (Wp - kw) // stride + 1
    cols = []
    for i in range(kh):
        for j in range(kw):
            cols.append(x[:, i:i + stride * Ho:stride, j:j + stride * Wo:stride, :])
    return jnp.concatenate(cols, axis=-1), Ho, Wo


def conv2d(x, w, b, stride=1, pad=0, relu=False, scale=None):
    """x: (N, H, W, Cin); w: (kh, kw, Cin, Cout); b: (Cout,)."""
    kh, kw, cin, cout = w.shape
    N, H, W, _ = x.shape
    if (kh == 3 and kw == 3 and stride == 1 and pad == 1 and W % 8 == 0
            and _direct_conv_available()):
        return _conv3x3_direct(x, w, b, relu=relu, scale=scale)
    if kh == 1 and kw == 1 and pad == 0:
        xs = x[:, ::stride, ::stride, :] if stride != 1 else x
        _, Ho, Wo, _ = xs.shape
        out = matmul_bias(xs.reshape(N * Ho * Wo, cin), w.reshape(cin, cout), b,
                          relu=relu, scale=scale)
        return out.reshape(N, Ho, Wo, cout)
    # TODO(synk): 7x7/s2 and 3x3/s2 convs still use (bf16) im2col; a strided
    # direct-conv kernel would remove the remaining activation duplication.
    cols, Ho, Wo = _im2col(x.astype(jnp.bfloat16), kh, kw, stride, pad)
    A = cols.reshape(N * Ho * Wo, kh * kw * cin)
    out = matmul_bias(A, w.reshape(kh * kw * cin, cout), b, relu=relu, scale=scale)
    return out.reshape(N, Ho, Wo, cout)


# ----------------------------------------------------------------------------
# BasicEncoder4 (DPVO extractor): conv7x7/s2 -> layer1(32) -> layer2(64,/2) -> conv1x1
# The Patchifier's final /4.0 is fused into the last matmul epilogue.
# ----------------------------------------------------------------------------
def basic_encoder4(x, params, norm_fn):
    use_in = norm_fn == "instance"

    def cnr(z, p, stride, pad, relu):
        if use_in:
            z = conv2d(z, *p, stride=stride, pad=pad, relu=False)
            return instance_norm(z, relu=relu)
        return conv2d(z, *p, stride=stride, pad=pad, relu=relu)

    def res_block(z, p, stride):
        y = cnr(z, p["c1"], stride, 1, True)
        y = cnr(y, p["c2"], 1, 1, True)
        if stride != 1:
            z = cnr(z, p["down"], stride, 0, False)
        return jax.nn.relu(z + y)

    y = cnr(x, params["conv1"], 2, 3, True)
    y = res_block(y, params["l1b1"], 1)
    y = res_block(y, params["l1b2"], 1)
    y = res_block(y, params["l2b1"], 2)
    y = res_block(y, params["l2b2"], 1)
    # final 1x1 projection; fuse the Patchifier's /4.0 into the matmul epilogue
    return conv2d(y, *params["conv2"], stride=1, pad=0, relu=False, scale=0.25)


def _conv_param(key, kh, kw, cin, cout):
    k1, k2 = jax.random.split(key)
    bound = (kh * kw * cin) ** -0.5
    w = jax.random.uniform(k1, (kh, kw, cin, cout), jnp.float32, -bound, bound)
    b = jax.random.uniform(k2, (cout,), jnp.float32, -bound, bound)
    return w, b


def init_encoder_params(key, out_dim):
    keys = jax.random.split(key, 6)

    def block(k, cin, cout, stride):
        ks = jax.random.split(k, 3)
        d = {"c1": _conv_param(ks[0], 3, 3, cin, cout),
             "c2": _conv_param(ks[1], 3, 3, cout, cout)}
        if stride != 1:
            d["down"] = _conv_param(ks[2], 1, 1, cin, cout)
        return d

    return {
        "conv1": _conv_param(keys[0], 7, 7, 3, 32),
        "l1b1": block(keys[1], 32, 32, 1),
        "l1b2": block(keys[2], 32, 32, 1),
        "l2b1": block(keys[3], 32, 64, 2),
        "l2b2": block(keys[4], 64, 64, 1),
        "conv2": _conv_param(keys[5], 1, 1, 64, out_dim),
    }


# ----------------------------------------------------------------------------
# Patchifier.forward (default path: gradient_bias=False, return_color=False,
#                     disps=None)
# ----------------------------------------------------------------------------
@functools.partial(jax.jit, static_argnames=("patches_per_image",))
def patchifier_forward(images, fnet_params, inet_params, key, patches_per_image=80):
    b, n, c, H, W = images.shape
    assert b == 1, "DPVO Patchifier assumes batch size 1 (uses fmap[0]/imap[0])"
    x = jnp.transpose(images.reshape(b * n, c, H, W), (0, 2, 3, 1))  # (n, H, W, 3)

    fmap = basic_encoder4(x, fnet_params, "instance")   # (n, h, w, 128), /4 fused
    imap = basic_encoder4(x, inet_params, "none")       # (n, h, w, DIM), /4 fused
    _, h, w, _ = fmap.shape

    kx, ky = jax.random.split(key)
    px = jax.random.randint(kx, (n, patches_per_image), 1, w - 1, dtype=jnp.int32)
    py = jax.random.randint(ky, (n, patches_per_image), 1, h - 1, dtype=jnp.int32)
    img_idx = jnp.repeat(jnp.arange(n, dtype=jnp.int32), patches_per_image)
    coords = jnp.stack([img_idx, px.reshape(-1), py.reshape(-1)], axis=-1)  # (Np, 3)

    r = (PATCH_SIZE - 1) // 2
    imap_p = patchify(imap, coords, 0)   # (Np, 1, 1, DIM)
    gmap = patchify(fmap, coords, r)     # (Np, 3, 3, 128)

    # coordinate/disparity patches are pure arithmetic of the coords (disps=None -> 1);
    # no gather kernel needed.  channels are (x, y, disp).
    Np = coords.shape[0]
    offs = jnp.arange(-r, r + 1, dtype=jnp.float32)
    cxf = px.reshape(-1).astype(jnp.float32)
    cyf = py.reshape(-1).astype(jnp.float32)
    patch_x = jnp.broadcast_to(cxf[:, None, None] + offs[None, None, :],
                               (Np, PATCH_SIZE, PATCH_SIZE))
    patch_y = jnp.broadcast_to(cyf[:, None, None] + offs[None, :, None],
                               (Np, PATCH_SIZE, PATCH_SIZE))
    patches = jnp.stack([patch_x, patch_y, jnp.ones_like(patch_x)], axis=-1)

    # back to PyTorch layouts
    fmap_out = jnp.transpose(fmap, (0, 3, 1, 2))[None]        # (1, n, 128, h, w)
    gmap_out = jnp.transpose(gmap, (0, 3, 1, 2))[None]        # (1, Np, 128, 3, 3)
    imap_out = jnp.transpose(imap_p, (0, 3, 1, 2))[None]      # (1, Np, DIM, 1, 1)
    patches_out = jnp.transpose(patches, (0, 3, 1, 2))[None]  # (1, Np, 3, 3, 3)
    return fmap_out, gmap_out, imap_out, patches_out, img_idx


if __name__ == "__main__":
    # resolve the optional fast paths up front (each probe falls back safely)
    _direct_conv_available()
    _patch_group()
    _tiled_instance_norm_available()

    key = jax.random.PRNGKey(0)
    k_img, k_f, k_i, k_coords = jax.random.split(key, 4)

    b, n, H, W = 1, 2, 32, 32
    ppi = 8
    images = jax.random.uniform(k_img, (b, n, 3, H, W), jnp.float32, -0.5, 0.5)

    fnet_params = init_encoder_params(k_f, 128)
    inet_params = init_encoder_params(k_i, DIM)

    fmap, gmap, imap, patches, index = patchifier_forward(
        images, fnet_params, inet_params, k_coords, patches_per_image=ppi)
    jax.block_until_ready((fmap, gmap, imap, patches, index))

    Np = n * ppi
    assert fmap.shape == (1, n, 128, H // 4, W // 4)
    assert gmap.shape == (1, Np, 128, 3, 3)
    assert imap.shape == (1, Np, DIM, 1, 1)
    assert patches.shape == (1, Np, 3, 3, 3)
    assert index.shape == (Np,)
    print("KERNEL_OK")
</pallas_src>

<mosaic_0001>
module attributes {stable_mosaic.version = 11 : i64} {
  func.func @_conv3x3_kernel(%arg0: i32, %arg1: i32, %arg2: memref<1x10x18x8xbf16, #tpu.memory_space<any>>, %arg3: memref<72x8xbf16, #tpu.memory_space<vmem>>, %arg4: memref<1x8xf32, #tpu.memory_space<vmem>>, %arg5: memref<1x8x16x8xf32, #tpu.memory_space<vmem>>, %arg6: memref<1x10x18x8xbf16, #tpu.memory_space<vmem>>, %arg7: memref<!tpu.dma_semaphore, #tpu.memory_space<semaphore_mem>>) attributes {dimension_semantics = [#tpu.dimension_semantics<parallel>, #tpu.dimension_semantics<parallel>], iteration_bounds = array<i64: 1, 1>, scalar_prefetch = 0 : i64, scratch_operands = 2 : i64, tpu.core_type = #tpu.core_type<tc>, window_params = [{}, {pipeline_mode = #tpu.pipeline_mode<synchronous>, transform_indices = @transform_1, window_bounds = array<i64: 72, 8>}, {pipeline_mode = #tpu.pipeline_mode<synchronous>, transform_indices = @transform_2, window_bounds = array<i64: 1, 8>}, {transform_indices = @transform_3, window_bounds = array<i64: 1, 8, 16, 8>}]} {
    %c8_i32 = arith.constant 8 : i32
    %0 = arith.muli %arg1, %c8_i32 : i32
    %c0_i32 = arith.constant 0 : i32
    %c0_i32_0 = arith.constant 0 : i32
    %1 = tpu.memref_slice %arg2[%arg0, %0, %c0_i32, %c0_i32_0] : memref<1x10x18x8xbf16, #tpu.memory_space<any>> -> memref<1x10x18x8xbf16, #tpu.memory_space<any>>
    tpu.enqueue_dma source(%1 : memref<1x10x18x8xbf16, #tpu.memory_space<any>>) target(%arg6 : memref<1x10x18x8xbf16, #tpu.memory_space<vmem>>) target_semaphore(%arg7 : memref<!tpu.dma_semaphore, #tpu.memory_space<semaphore_mem>>)
    %c0_i32_1 = arith.constant 0 : i32
    %c0_i32_2 = arith.constant 0 : i32
    %2 = tpu.memref_slice %arg2[%arg0, %0, %c0_i32_1, %c0_i32_2] : memref<1x10x18x8xbf16, #tpu.memory_space<any>> -> memref<1x10x18x8xbf16, #tpu.memory_space<any>>
    tpu.wait_dma2 semaphore(%arg7 : memref<!tpu.dma_semaphore, #tpu.memory_space<semaphore_mem>>) src(%2 : memref<1x10x18x8xbf16, #tpu.memory_space<any>>) dst(%arg6 : memref<1x10x18x8xbf16, #tpu.memory_space<vmem>>)
    %cst = arith.constant 0.000000e+00 : f32
    %3 = vector.broadcast %cst : f32 to vector<128x8xf32>
    %c0 = arith.constant 0 : index
    %c0_3 = arith.constant 0 : index
    %c0_4 = arith.constant 0 : index
    %c0_5 = arith.constant 0 : index
    %4 = vector.load %arg6[%c0, %c0_3, %c0_4, %c0_5] : memref<1x10x18x8xbf16, #tpu.memory_space<vmem>>, vector<1x8x16x8xbf16>
    %5 = vector.shape_cast %4 : vector<1x8x16x8xbf16> to vector<8x16x8xbf16>
    %6 = vector.shape_cast %5 : vector<8x16x8xbf16> to vector<128x8xbf16>
    %c0_6 = arith.constant 0 : index
    %c0_7 = arith.constant 0 : index
    %7 = vector.load %arg3[%c0_6, %c0_7] : memref<72x8xbf16, #tpu.memory_space<vmem>>, vector<8x8xbf16>
    %cst_8 = arith.constant dense<0.000000e+00> : vector<128x8xf32>
    %8 = tpu.matmul %6, %7, %cst_8 {dimension_numbers = #tpu.dot_dimension_numbers<[1], [0], [0], [1], [0, 0, 1, 1], [], []>} : vector<128x8xbf16>, vector<8x8xbf16>, vector<128x8xf32> -> vector<128x8xf32>
    %9 = arith.addf %3, %8 : vector<128x8xf32>
    %c0_9 = arith.constant 0 : index
    %c0_10 = arith.constant 0 : index
    %c1 = arith.constant 1 : index
    %c0_11 = arith.constant 0 : index
    %10 = vector.load %arg6[%c0_9, %c0_10, %c1, %c0_11] : memref<1x10x18x8xbf16, #tpu.memory_space<vmem>>, vector<1x8x16x8xbf16>
    %11 = vector.shape_cast %10 : vector<1x8x16x8xbf16> to vector<8x16x8xbf16>
    %12 = vector.shape_cast %11 : vector<8x16x8xbf16> to vector<128x8xbf16>
    %c8 = arith.constant 8 : index
    %c0_12 = arith.constant 0 : index
    %13 = vector.load %arg3[%c8, %c0_12] : memref<72x8xbf16, #tpu.memory_space<vmem>>, vector<8x8xbf16>
    %cst_13 = arith.constant dense<0.000000e+00> : vector<128x8xf32>
    %14 = tpu.matmul %12, %13, %cst_13 {dimension_numbers = #tpu.dot_dimension_numbers<[1], [0], [0], [1], [0, 0, 1, 1], [], []>} : vector<128x8xbf16>, vector<8x8xbf16>, vector<128x8xf32> -> vector<128x8xf32>
    %15 = arith.addf %9, %14 : vector<128x8xf32>
    %c0_14 = arith.constant 0 : index
    %c0_15 = arith.constant 0 : index
    %c2 = arith.constant 2 : index
    %c0_16 = arith.constant 0 : index
    %16 = vector.load %arg6[%c0_14, %c0_15, %c2, %c0_16] : memref<1x10x18x8xbf16, #tpu.memory_space<vmem>>, vector<1x8x16x8xbf16>
    %17 = vector.shape_cast %16 : vector<1x8x16x8xbf16> to vector<8x16x8xbf16>
    %18 = vector.shape_cast %17 : vector<8x16x8xbf16> to vector<128x8xbf16>
    %c16 = arith.constant 16 : index
    %c0_17 = arith.constant 0 : index
    %19 = vector.load %arg3[%c16, %c0_17] : memref<72x8xbf16, #tpu.memory_space<vmem>>, vector<8x8xbf16>
    %cst_18 = arith.constant dense<0.000000e+00> : vector<128x8xf32>
    %20 = tpu.matmul %18, %19, %cst_18 {dimension_numbers = #tpu.dot_dimension_numbers<[1], [0], [0], [1], [0, 0, 1, 1], [], []>} : vector<128x8xbf16>, vector<8x8xbf16>, vector<128x8xf32> -> vector<128x8xf32>
    %21 = arith.addf %15, %20 : vector<128x8xf32>
    %c0_19 = arith.constant 0 : index
    %c1_20 = arith.constant 1 : index
    %c0_21 = arith.constant 0 : index
    %c0_22 = arith.constant 0 : index
    %22 = vector.load %arg6[%c0_19, %c1_20, %c0_21, %c0_22] : memref<1x10x18x8xbf16, #tpu.memory_space<vmem>>, vector<1x8x16x8xbf16>
    %23 = vector.shape_cast %22 : vector<1x8x16x8xbf16> to vector<8x16x8xbf16>
    %24 = vector.shape_cast %23 : vector<8x16x8xbf16> to vector<128x8xbf16>
    %c24 = arith.constant 24 : index
    %c0_23 = arith.constant 0 : index
    %25 = vector.load %arg3[%c24, %c0_23] : memref<72x8xbf16, #tpu.memory_space<vmem>>, vector<8x8xbf16>
    %cst_24 = arith.constant dense<0.000000e+00> : vector<128x8xf32>
    %26 = tpu.matmul %24, %25, %cst_24 {dimension_numbers = #tpu.dot_dimension_numbers<[1], [0], [0], [1], [0, 0, 1, 1], [], []>} : vector<128x8xbf16>, vector<8x8xbf16>, vector<128x8xf32> -> vector<128x8xf32>
    %27 = arith.addf %21, %26 : vector<128x8xf32>
    %c0_25 = arith.constant 0 : index
    %c1_26 = arith.constant 1 : index
    %c1_27 = arith.constant 1 : index
    %c0_28 = arith.constant 0 : index
    %28 = vector.load %arg6[%c0_25, %c1_26, %c1_27, %c0_28] : memref<1x10x18x8xbf16, #tpu.memory_space<vmem>>, vector<1x8x16x8xbf16>
    %29 = vector.shape_cast %28 : vector<1x8x16x8xbf16> to vector<8x16x8xbf16>
    %30 = vector.shape_cast %29 : vector<8x16x8xbf16> to vector<128x8xbf16>
    %c32 = arith.constant 32 : index
    %c0_29 = arith.constant 0 : index
    %31 = vector.load %arg3[%c32, %c0_29] : memref<72x8xbf16, #tpu.memory_space<vmem>>, vector<8x8xbf16>
    %cst_30 = arith.constant dense<0.000000e+00> : vector<128x8xf32>
    %32 = tpu.matmul %30, %31, %cst_30 {dimension_numbers = #tpu.dot_dimension_numbers<[1], [0], [0], [1], [0, 0, 1, 1], [], []>} : vector<128x8xbf16>, vector<8x8xbf16>, vector<128x8xf32> -> vector<128x8xf32>
    %33 = arith.addf %27, %32 : vector<128x8xf32>
    %c0_31 = arith.constant 0 : index
    %c1_32 = arith.constant 1 : index
    %c2_33 = arith.constant 2 : index
    %c0_34 = arith.constant 0 : index
    %34 = vector.load %arg6[%c0_31, %c1_32, %c2_33, %c0_34] : memref<1x10x18x8xbf16, #tpu.memory_space<vmem>>, vector<1x8x16x8xbf16>
    %35 = vector.shape_cast %34 : vector<1x8x16x8xbf16> to vector<8x16x8xbf16>
    %36 = vector.shape_cast %35 : vector<8x16x8xbf16> to vector<128x8xbf16>
    %c40 = arith.constant 40 : index
    %c0_35 = arith.constant 0 : index
    %37 = vector.load %arg3[%c40, %c0_35] : memref<72x8xbf16, #tpu.memory_space<vmem>>, vector<8x8xbf16>
    %cst_36 = arith.constant dense<0.000000e+00> : vector<128x8xf32>
    %38 = tpu.matmul %36, %37, %cst_36 {dimension_numbers = #tpu.dot_dimension_numbers<[1], [0], [0], [1], [0, 0, 1, 1], [], []>} : vector<128x8xbf16>, vector<8x8xbf16>, vector<128x8xf32> -> vector<128x8xf32>
    %39 = arith.addf %33, %38 : vector<128x8xf32>
    %c0_37 = arith.constant 0 : index
    %c2_38 = arith.constant 2 : index
    %c0_39 = arith.constant 0 : index
    %c0_40 = arith.constant 0 : index
    %40 = vector.load %arg6[%c0_37, %c2_38, %c0_39, %c0_40] : memref<1x10x18x8xbf16, #tpu.memory_space<vmem>>, vector<1x8x16x8xbf16>
    %41 = vector.shape_cast %40 : vector<1x8x16x8xbf16> to vector<8x16x8xbf16>
    %42 = vector.shape_cast %41 : vector<8x16x8xbf16> to vector<128x8xbf16>
    %c48 = arith.constant 48 : index
    %c0_41 = arith.constant 0 : index
    %43 = vector.load %arg3[%c48, %c0_41] : memref<72x8xbf16, #tpu.memory_space<vmem>>, vector<8x8xbf16>
    %cst_42 = arith.constant dense<0.000000e+00> : vector<128x8xf32>
    %44 = tpu.matmul %42, %43, %cst_42 {dimension_numbers = #tpu.dot_dimension_numbers<[1], [0], [0], [1], [0, 0, 1, 1], [], []>} : vector<128x8xbf16>, vector<8x8xbf16>, vector<128x8xf32> -> vector<128x8xf32>
    %45 = arith.addf %39, %44 : vector<128x8xf32>
    %c0_43 = arith.constant 0 : index
    %c2_44 = arith.constant 2 : index
    %c1_45 = arith.constant 1 : index
    %c0_46 = arith.constant 0 : index
    %46 = vector.load %arg6[%c0_43, %c2_44, %c1_45, %c0_46] : memref<1x10x18x8xbf16, #tpu.memory_space<vmem>>, vector<1x8x16x8xbf16>
    %47 = vector.shape_cast %46 : vector<1x8x16x8xbf16> to vector<8x16x8xbf16>
    %48 = vector.shape_cast %47 : vector<8x16x8xbf16> to vector<128x8xbf16>
    %c56 = arith.constant 56 : index
    %c0_47 = arith.constant 0 : index
    %49 = vector.load %arg3[%c56, %c0_47] : memref<72x8xbf16, #tpu.memory_space<vmem>>, vector<8x8xbf16>
    %cst_48 = arith.constant dense<0.000000e+00> : vector<128x8xf32>
    %50 = tpu.matmul %48, %49, %cst_48 {dimension_numbers = #tpu.dot_dimension_numbers<[1], [0], [0], [1], [0, 0, 1, 1], [], []>} : vector<128x8xbf16>, vector<8x8xbf16>, vector<128x8xf32> -> vector<128x8xf32>
    %51 = arith.addf %45, %50 : vector<128x8xf32>
    %c0_49 = arith.constant 0 : index
    %c2_50 = arith.constant 2 : index
    %c2_51 = arith.constant 2 : index
    %c0_52 = arith.constant 0 : index
    %52 = vector.load %arg6[%c0_49, %c2_50, %c2_51, %c0_52] : memref<1x10x18x8xbf16, #tpu.memory_space<vmem>>, vector<1x8x16x8xbf16>
    %53 = vector.shape_cast %52 : vector<1x8x16x8xbf16> to vector<8x16x8xbf16>
    %54 = vector.shape_cast %53 : vector<8x16x8xbf16> to vector<128x8xbf16>
    %c64 = arith.constant 64 : index
    %c0_53 = arith.constant 0 : index
    %55 = vector.load %arg3[%c64, %c0_53] : memref<72x8xbf16, #tpu.memory_space<vmem>>, vector<8x8xbf16>
    %cst_54 = arith.constant dense<0.000000e+00> : vector<128x8xf32>
    %56 = tpu.matmul %54, %55, %cst_54 {dimension_numbers = #tpu.dot_dimension_numbers<[1], [0], [0], [1], [0, 0, 1, 1], [], []>} : vector<128x8xbf16>, vector<8x8xbf16>, vector<128x8xf32> -> vector<128x8xf32>
    %57 = arith.addf %51, %56 : vector<128x8xf32>
    %c0_55 = arith.constant 0 : index
    %c0_56 = arith.constant 0 : index
    %58 = vector.load %arg4[%c0_55, %c0_56] : memref<1x8xf32, #tpu.memory_space<vmem>>, vector<1x8xf32>
    %59 = vector.broadcast %58 : vector<1x8xf32> to vector<128x8xf32>
    %60 = arith.addf %57, %59 : vector<128x8xf32>
    %cst_57 = arith.constant 0.000000e+00 : f32
    %61 = vector.broadcast %cst_57 : f32 to vector<128x8xf32>
    %62 = arith.maximumf %60, %61 : vector<128x8xf32>
    %63 = vector.shape_cast %62 : vector<128x8xf32> to vector<1x8x16x8xf32>
    %c0_58 = arith.constant 0 : index
    %c0_59 = arith.constant 0 : index
    %c0_60 = arith.constant 0 : index
    %c0_61 = arith.constant 0 : index
    %64 = vector.load %arg5[%c0_58, %c0_59, %c0_60, %c0_61] : memref<1x8x16x8xf32, #tpu.memory_space<vmem>>, vector<1x8x16x8xf32>
    tpu.vector_store %arg5[%c0_58, %c0_59, %c0_60, %c0_61], %63 {strides = array<i32>} : memref<1x8x16x8xf32, #tpu.memory_space<vmem>>, vector<1x8x16x8xf32>,
    return
  }
  func.func @transform_1(%arg0: i32, %arg1: i32) -> (i32, i32) {
    %c0_i32 = arith.constant 0 : i32
    %c0_i32_0 = arith.constant 0 : i32
    %c0_i32_1 = arith.constant 0 : i32
    return %c0_i32, %c0_i32_0 : i32, i32
  }
  func.func @transform_2(%arg0: i32, %arg1: i32) -> (i32, i32) {
    %c0_i32 = arith.constant 0 : i32
    %c0_i32_0 = arith.constant 0 : i32
    %c0_i32_1 = arith.constant 0 : i32
    return %c0_i32, %c0_i32_0 : i32, i32
  }
  func.func @transform_3(%arg0: i32, %arg1: i32) -> (i32, i32, i32, i32) {
    %c0_i32 = arith.constant 0 : i32
    %c0_i32_0 = arith.constant 0 : i32
    %c0_i32_1 = arith.constant 0 : i32
    return %arg0, %arg1, %c0_i32, %c0_i32_0 : i32, i32, i32, i32
  }
}

module attributes {stable_mosaic.version = 11 : i64} {
  func.func @kernel(%arg0: i32, %arg1: memref<8x3xi32, #tpu.memory_space<smem>>, %arg2: memref<2x8x8x128xf32, #tpu.memory_space<any>>, %arg3: memref<8x3x3x128xf32, #tpu.memory_space<vmem>>, %arg4: memref<8x3x3x128xf32, #tpu.memory_space<vmem>>, %arg5: memref<8x!tpu.dma_semaphore, #tpu.memory_space<semaphore_mem>>) attributes {dimension_semantics = [#tpu.dimension_semantics<parallel>], iteration_bounds = array<i64: 1>, scalar_prefetch = 1 : i64, scratch_operands = 2 : i64, tpu.core_type = #tpu.core_type<tc>, window_params = [{}, {transform_indices = @transform_1, window_bounds = array<i64: 8, 3, 3, 128>}]} {
    %c8_i32 = arith.constant 8 : i32
    %0 = arith.muli %arg0, %c8_i32 : i32
    %c0_i32 = arith.constant 0 : i32
    %1 = arith.addi %0, %c0_i32 : i32
    %2 = arith.index_cast %1 : i32 to index
    %c0 = arith.constant 0 : index
    %3 = memref.load %arg1[%2, %c0] : memref<8x3xi32, #tpu.memory_space<smem>>
    %c8_i32_0 = arith.constant 8 : i32
    %4 = arith.muli %arg0, %c8_i32_0 : i32
    %c0_i32_1 = arith.constant 0 : i32
    %5 = arith.addi %4, %c0_i32_1 : i32
    %6 = arith.index_cast %5 : i32 to index
    %c1 = arith.constant 1 : index
    %7 = memref.load %arg1[%6, %c1] : memref<8x3xi32, #tpu.memory_space<smem>>
    %c8_i32_2 = arith.constant 8 : i32
    %8 = arith.muli %arg0, %c8_i32_2 : i32
    %c0_i32_3 = arith.constant 0 : i32
    %9 = arith.addi %8, %c0_i32_3 : i32
    %10 = arith.index_cast %9 : i32 to index
    %c2 = arith.constant 2 : index
    %11 = memref.load %arg1[%10, %c2] : memref<8x3xi32, #tpu.memory_space<smem>>
    %c1_i32 = arith.constant 1 : i32
    %12 = arith.subi %11, %c1_i32 : i32
    %c1_i32_4 = arith.constant 1 : i32
    %13 = arith.subi %7, %c1_i32_4 : i32
    %c0_i32_5 = arith.constant 0 : i32
    %c0_i32_6 = arith.constant 0 : i32
    %14 = tpu.memref_slice %arg2[%3, %12, %13, %c0_i32_6] : memref<2x8x8x128xf32, #tpu.memory_space<any>> -> memref<1x3x3x128xf32, #tpu.memory_space<any>>
    %c0_i32_7 = arith.constant 0 : i32
    %c0_i32_8 = arith.constant 0 : i32
    %c0_i32_9 = arith.constant 0 : i32
    %c0_i32_10 = arith.constant 0 : i32
    %15 = tpu.memref_slice %arg4[%c0_i32_7, %c0_i32_8, %c0_i32_9, %c0_i32_10] : memref<8x3x3x128xf32, #tpu.memory_space<vmem>> -> memref<1x3x3x128xf32, #tpu.memory_space<vmem>>
    %16 = tpu.memref_slice %arg5[%c0_i32_5] : memref<8x!tpu.dma_semaphore, #tpu.memory_space<semaphore_mem>> -> memref<1x!tpu.dma_semaphore, #tpu.memory_space<semaphore_mem>>
    %17 = tpu.memref_squeeze %16 : memref<1x!tpu.dma_semaphore, #tpu.memory_space<semaphore_mem>> -> memref<!tpu.dma_semaphore, #tpu.memory_space<semaphore_mem>>
    tpu.enqueue_dma source(%14 : memref<1x3x3x128xf32, #tpu.memory_space<any>>) target(%15 : memref<1x3x3x128xf32, #tpu.memory_space<vmem>>) target_semaphore(%17 : memref<!tpu.dma_semaphore, #tpu.memory_space<semaphore_mem>>)
    %c8_i32_11 = arith.constant 8 : i32
    %18 = arith.muli %arg0, %c8_i32_11 : i32
    %c1_i32_12 = arith.constant 1 : i32
    %19 = arith.addi %18, %c1_i32_12 : i32
    %20 = arith.index_cast %19 : i32 to index
    %c0_13 = arith.constant 0 : index
    %21 = memref.load %arg1[%20, %c0_13] : memref<8x3xi32, #tpu.memory_space<smem>>
    %c8_i32_14 = arith.constant 8 : i32
    %22 = arith.muli %arg0, %c8_i32_14 : i32
    %c1_i32_15 = arith.constant 1 : i32
    %23 = arith.addi %22, %c1_i32_15 : i32
    %24 = arith.index_cast %23 : i32 to index
    %c1_16 = arith.constant 1 : index
    %25 = memref.load %arg1[%24, %c1_16] : memref<8x3xi32, #tpu.memory_space<smem>>
    %c8_i32_17 = arith.constant 8 : i32
    %26 = arith.muli %arg0, %c8_i32_17 : i32
    %c1_i32_18 = arith.constant 1 : i32
    %27 = arith.addi %26, %c1_i32_18 : i32
    %28 = arith.index_cast %27 : i32 to index
    %c2_19 = arith.constant 2 : index
    %29 = memref.load %arg1[%28, %c2_19] : memref<8x3xi32, #tpu.memory_space<smem>>
    %c1_i32_20 = arith.constant 1 : i32
    %30 = arith.subi %29, %c1_i32_20 : i32
    %c1_i32_21 = arith.constant 1 : i32
    %31 = arith.subi %25, %c1_i32_21 : i32
    %c1_i32_22 = arith.constant 1 : i32
    %c0_i32_23 = arith.constant 0 : i32
    %32 = tpu.memref_slice %arg2[%21, %30, %31, %c0_i32_23] : memref<2x8x8x128xf32, #tpu.memory_space<any>> -> memref<1x3x3x128xf32, #tpu.memory_space<any>>
    %c1_i32_24 = arith.constant 1 : i32
    %c0_i32_25 = arith.constant 0 : i32
    %c0_i32_26 = arith.constant 0 : i32
    %c0_i32_27 = arith.constant 0 : i32
    %33 = tpu.memref_slice %arg4[%c1_i32_24, %c0_i32_25, %c0_i32_26, %c0_i32_27] : memref<8x3x3x128xf32, #tpu.memory_space<vmem>> -> memref<1x3x3x128xf32, #tpu.memory_space<vmem>>
    %34 = tpu.memref_slice %arg5[%c1_i32_22] : memref<8x!tpu.dma_semaphore, #tpu.memory_space<semaphore_mem>> -> memref<1x!tpu.dma_semaphore, #tpu.memory_space<semaphore_mem>>
    %35 = tpu.memref_squeeze %34 : memref<1x!tpu.dma_semaphore, #tpu.memory_space<semaphore_mem>> -> memref<!tpu.dma_semaphore, #tpu.memory_space<semaphore_mem>>
    tpu.enqueue_dma source(%32 : memref<1x3x3x128xf32, #tpu.memory_space<any>>) target(%33 : memref<1x3x3x128xf32, #tpu.memory_space<vmem>>) target_semaphore(%35 : memref<!tpu.dma_semaphore, #tpu.memory_space<semaphore_mem>>)
    %c8_i32_28 = arith.constant 8 : i32
    %36 = arith.muli %arg0, %c8_i32_28 : i32
    %c2_i32 = arith.constant 2 : i32
    %37 = arith.addi %36, %c2_i32 : i32
    %38 = arith.index_cast %37 : i32 to index
    %c0_29 = arith.constant 0 : index
    %39 = memref.load %arg1[%38, %c0_29] : memref<8x3xi32, #tpu.memory_space<smem>>
    %c8_i32_30 = arith.constant 8 : i32
    %40 = arith.muli %arg0, %c8_i32_30 : i32
    %c2_i32_31 = arith.constant 2 : i32
    %41 = arith.addi %40, %c2_i32_31 : i32
    %42 = arith.index_cast %41 : i32 to index
    %c1_32 = arith.constant 1 : index
    %43 = memref.load %arg1[%42, %c1_32] : memref<8x3xi32, #tpu.memory_space<smem>>
    %c8_i32_33 = arith.constant 8 : i32
    %44 = arith.muli %arg0, %c8_i32_33 : i32
    %c2_i32_34 = arith.constant 2 : i32
    %45 = arith.addi %44, %c2_i32_34 : i32
    %46 = arith.index_cast %45 : i32 to index
    %c2_35 = arith.constant 2 : index
    %47 = memref.load %arg1[%46, %c2_35] : memref<8x3xi32, #tpu.memory_space<smem>>
    %c1_i32_36 = arith.constant 1 : i32
    %48 = arith.subi %47, %c1_i32_36 : i32
    %c1_i32_37 = arith.constant 1 : i32
    %49 = arith.subi %43, %c1_i32_37 : i32
    %c2_i32_38 = arith.constant 2 : i32
    %c0_i32_39 = arith.constant 0 : i32
    %50 = tpu.memref_slice %arg2[%39, %48, %49, %c0_i32_39] : memref<2x8x8x128xf32, #tpu.memory_space<any>> -> memref<1x3x3x128xf32, #tpu.memory_space<any>>
    %c2_i32_40 = arith.constant 2 : i32
    %c0_i32_41 = arith.constant 0 : i32
    %c0_i32_42 = arith.constant 0 : i32
    %c0_i32_43 = arith.constant 0 : i32
    %51 = tpu.memref_slice %arg4[%c2_i32_40, %c0_i32_41, %c0_i32_42, %c0_i32_43] : memref<8x3x3x128xf32, #tpu.memory_space<vmem>> -> memref<1x3x3x128xf32, #tpu.memory_space<vmem>>
    %52 = tpu.memref_slice %arg5[%c2_i32_38] : memref<8x!tpu.dma_semaphore, #tpu.memory_space<semaphore_mem>> -> memref<1x!tpu.dma_semaphore, #tpu.memory_space<semaphore_mem>>
    %53 = tpu.memref_squeeze %52 : memref<1x!tpu.dma_semaphore, #tpu.memory_space<semaphore_mem>> -> memref<!tpu.dma_semaphore, #tpu.memory_space<semaphore_mem>>
    tpu.enqueue_dma source(%50 : memref<1x3x3x128xf32, #tpu.memory_space<any>>) target(%51 : memref<1x3x3x128xf32, #tpu.memory_space<vmem>>) target_semaphore(%53 : memref<!tpu.dma_semaphore, #tpu.memory_space<semaphore_mem>>)
    %c8_i32_44 = arith.constant 8 : i32
    %54 = arith.muli %arg0, %c8_i32_44 : i32
    %c3_i32 = arith.constant 3 : i32
    %55 = arith.addi %54, %c3_i32 : i32
    %56 = arith.index_cast %55 : i32 to index
    %c0_45 = arith.constant 0 : index
    %57 = memref.load %arg1[%56, %c0_45] : memref<8x3xi32, #tpu.memory_space<smem>>
    %c8_i32_46 = arith.constant 8 : i32
    %58 = arith.muli %arg0, %c8_i32_46 : i32
    %c3_i32_47 = arith.constant 3 : i32
    %59 = arith.addi %58, %c3_i32_47 : i32
    %60 = arith.index_cast %59 : i32 to index
    %c1_48 = arith.constant 1 : index
    %61 = memref.load %arg1[%60, %c1_48] : memref<8x3xi32, #tpu.memory_space<smem>>
    %c8_i32_49 = arith.constant 8 : i32
    %62 = arith.muli %arg0, %c8_i32_49 : i32
    %c3_i32_50 = arith.constant 3 : i32
    %63 = arith.addi %62, %c3_i32_50 : i32
    %64 = arith.index_cast %63 : i32 to index
    %c2_51 = arith.constant 2 : index
    %65 = memref.load %arg1[%64, %c2_51] : memref<8x3xi32, #tpu.memory_space<smem>>
    %c1_i32_52 = arith.constant 1 : i32
    %66 = arith.subi %65, %c1_i32_52 : i32
    %c1_i32_53 = arith.constant 1 : i32
    %67 = arith.subi %61, %c1_i32_53 : i32
    %c3_i32_54 = arith.constant 3 : i32
    %c0_i32_55 = arith.constant 0 : i32
    %68 = tpu.memref_slice %arg2[%57, %66, %67, %c0_i32_55] : memref<2x8x8x128xf32, #tpu.memory_space<any>> -> memref<1x3x3x128xf32, #tpu.memory_space<any>>
    %c3_i32_56 = arith.constant 3 : i32
    %c0_i32_57 = arith.constant 0 : i32
    %c0_i32_58 = arith.constant 0 : i32
    %c0_i32_59 = arith.constant 0 : i32
    %69 = tpu.memref_slice %arg4[%c3_i32_56, %c0_i32_57, %c0_i32_58, %c0_i32_59] : memref<8x3x3x128xf32, #tpu.memory_space<vmem>> -> memref<1x3x3x128xf32, #tpu.memory_space<vmem>>
    %70 = tpu.memref_slice %arg5[%c3_i32_54] : memref<8x!tpu.dma_semaphore, #tpu.memory_space<semaphore_mem>> -> memref<1x!tpu.dma_semaphore, #tpu.memory_space<semaphore_mem>>
    %71 = tpu.memref_squeeze %70 : memref<1x!tpu.dma_semaphore, #tpu.memory_space<semaphore_mem>> -> memref<!tpu.dma_semaphore, #tpu.memory_space<semaphore_mem>>
    tpu.enqueue_dma source(%68 : memref<1x3x3x128xf32, #tpu.memory_space<any>>) target(%69 : memref<1x3x3x128xf32, #tpu.memory_space<vmem>>) target_semaphore(%71 : memref<!tpu.dma_semaphore, #tpu.memory_space<semaphore_mem>>)
    %c8_i32_60 = arith.constant 8 : i32
    %72 = arith.muli %arg0, %c8_i32_60 : i32
    %c4_i32 = arith.constant 4 : i32
    %73 = arith.addi %72, %c4_i32 : i32
    %74 = arith.index_cast %73 : i32 to index
    %c0_61 = arith.constant 0 : index
    %75 = memref.load %arg1[%74, %c0_61] : memref<8x3xi32, #tpu.memory_space<smem>>
    %c8_i32_62 = arith.constant 8 : i32
    %76 = arith.muli %arg0, %c8_i32_62 : i32
    %c4_i32_63 = arith.constant 4 : i32
    %77 = arith.addi %76, %c4_i32_63 : i32
    %78 = arith.index_cast %77 : i32 to index
    %c1_64 = arith.constant 1 : index
    %79 = memref.load %arg1[%78, %c1_64] : memref<8x3xi32, #tpu.memory_space<smem>>
    %c8_i32_65 = arith.constant 8 : i32
    %80 = arith.muli %arg0, %c8_i32_65 : i32
    %c4_i32_66 = arith.constant 4 : i32
    %81 = arith.addi %80, %c4_i32_66 : i32
    %82 = arith.index_cast %81 : i32 to index
    %c2_67 = arith.constant 2 : index
    %83 = memref.load %arg1[%82, %c2_67] : memref<8x3xi32, #tpu.memory_space<smem>>
    %c1_i32_68 = arith.constant 1 : i32
    %84 = arith.subi %83, %c1_i32_68 : i32
    %c1_i32_69 = arith.constant 1 : i32
    %85 = arith.subi %79, %c1_i32_69 : i32
    %c4_i32_70 = arith.constant 4 : i32
    %c0_i32_71 = arith.constant 0 : i32
    %86 = tpu.memref_slice %arg2[%75, %84, %85, %c0_i32_71] : memref<2x8x8x128xf32, #tpu.memory_space<any>> -> memref<1x3x3x128xf32, #tpu.memory_space<any>>
    %c4_i32_72 = arith.constant 4 : i32
    %c0_i32_73 = arith.constant 0 : i32
    %c0_i32_74 = arith.constant 0 : i32
    %c0_i32_75 = arith.constant 0 : i32
    %87 = tpu.memref_slice %arg4[%c4_i32_72, %c0_i32_73, %c0_i32_74, %c0_i32_75] : memref<8x3x3x128xf32, #tpu.memory_space<vmem>> -> memref<1x3x3x128xf32, #tpu.memory_space<vmem>>
    %88 = tpu.memref_slice %arg5[%c4_i32_70] : memref<8x!tpu.dma_semaphore, #tpu.memory_space<semaphore_mem>> -> memref<1x!tpu.dma_semaphore, #tpu.memory_space<semaphore_mem>>
    %89 = tpu.memref_squeeze %88 : memref<1x!tpu.dma_semaphore, #tpu.memory_space<semaphore_mem>> -> memref<!tpu.dma_semaphore, #tpu.memory_space<semaphore_mem>>
    tpu.enqueue_dma source(%86 : memref<1x3x3x128xf32, #tpu.memory_space<any>>) target(%87 : memref<1x3x3x128xf32, #tpu.memory_space<vmem>>) target_semaphore(%89 : memref<!tpu.dma_semaphore, #tpu.memory_space<semaphore_mem>>)
    %c8_i32_76 = arith.constant 8 : i32
    %90 = arith.muli %arg0, %c8_i32_76 : i32
    %c5_i32 = arith.constant 5 : i32
    %91 = arith.addi %90, %c5_i32 : i32
    %92 = arith.index_cast %91 : i32 to index
    %c0_77 = arith.constant 0 : index
    %93 = memref.load %arg1[%92, %c0_77] : memref<8x3xi32, #tpu.memory_space<smem>>
    %c8_i32_78 = arith.constant 8 : i32
    %94 = arith.muli %arg0, %c8_i32_78 : i32
    %c5_i32_79 = arith.constant 5 : i32
    %95 = arith.addi %94, %c5_i32_79 : i32
    %96 = arith.index_cast %95 : i32 to index
    %c1_80 = arith.constant 1 : index
    %97 = memref.load %arg1[%96, %c1_80] : memref<8x3xi32, #tpu.memory_space<smem>>
    %c8_i32_81 = arith.constant 8 : i32
    %98 = arith.muli %arg0, %c8_i32_81 : i32
    %c5_i32_82 = arith.constant 5 : i32
    %99 = arith.addi %98, %c5_i32_82 : i32
    %100 = arith.index_cast %99 : i32 to index
    %c2_83 = arith.constant 2 : index
    %101 = memref.load %arg1[%100, %c2_83] : memref<8x3xi32, #tpu.memory_space<smem>>
    %c1_i32_84 = arith.constant 1 : i32
    %102 = arith.subi %101, %c1_i32_84 : i32
    %c1_i32_85 = arith.constant 1 : i32
    %103 = arith.subi %97, %c1_i32_85 : i32
    %c5_i32_86 = arith.constant 5 : i32
    %c0_i32_87 = arith.constant 0 : i32
    %104 = tpu.memref_slice %arg2[%93, %102, %103, %c0_i32_87] : memref<2x8x8x128xf32, #tpu.memory_space<any>> -> memref<1x3x3x128xf32, #tpu.memory_space<any>>
    %c5_i32_88 = arith.constant 5 : i32
    %c0_i32_89 = arith.constant 0 : i32
    %c0_i32_90 = arith.constant 0 : i32
    %c0_i32_91 = arith.constant 0 : i32
    %105 = tpu.memref_slice %arg4[%c5_i32_88, %c0_i32_89, %c0_i32_90, %c0_i32_91] : memref<8x3x3x128xf32, #tpu.memory_space<vmem>> -> memref<1x3x3x128xf32, #tpu.memory_space<vmem>>
    %106 = tpu.memref_slice %arg5[%c5_i32_86] : memref<8x!tpu.dma_semaphore, #tpu.memory_space<semaphore_mem>> -> memref<1x!tpu.dma_semaphore, #tpu.memory_space<semaphore_mem>>
    %107 = tpu.memref_squeeze %106 : memref<1x!tpu.dma_semaphore, #tpu.memory_space<semaphore_mem>> -> memref<!tpu.dma_semaphore, #tpu.memory_space<semaphore_mem>>
    tpu.enqueue_dma source(%104 : memref<1x3x3x128xf32, #tpu.memory_space<any>>) target(%105 : memref<1x3x3x128xf32, #tpu.memory_space<vmem>>) target_semaphore(%107 : memref<!tpu.dma_semaphore, #tpu.memory_space<semaphore_mem>>)
    %c8_i32_92 = arith.constant 8 : i32
    %108 = arith.muli %arg0, %c8_i32_92 : i32
    %c6_i32 = arith.constant 6 : i32
    %109 = arith.addi %108, %c6_i32 : i32
    %110 = arith.index_cast %109 : i32 to index
    %c0_93 = arith.constant 0 : index
    %111 = memref.load %arg1[%110, %c0_93] : memref<8x3xi32, #tpu.memory_space<smem>>
    %c8_i32_94 = arith.constant 8 : i32
    %112 = arith.muli %arg0, %c8_i32_94 : i32
    %c6_i32_95 = arith.constant 6 : i32
    %113 = arith.addi %112, %c6_i32_95 : i32
    %114 = arith.index_cast %113 : i32 to index
    %c1_96 = arith.constant 1 : index
    %115 = memref.load %arg1[%114, %c1_96] : memref<8x3xi32, #tpu.memory_space<smem>>
    %c8_i32_97 = arith.constant 8 : i32
    %116 = arith.muli %arg0, %c8_i32_97 : i32
    %c6_i32_98 = arith.constant 6 : i32
    %117 = arith.addi %116, %c6_i32_98 : i32
    %118 = arith.index_cast %117 : i32 to index
    %c2_99 = arith.constant 2 : index
    %119 = memref.load %arg1[%118, %c2_99] : memref<8x3xi32, #tpu.memory_space<smem>>
    %c1_i32_100 = arith.constant 1 : i32
    %120 = arith.subi %119, %c1_i32_100 : i32
    %c1_i32_101 = arith.constant 1 : i32
    %121 = arith.subi %115, %c1_i32_101 : i32
    %c6_i32_102 = arith.constant 6 : i32
    %c0_i32_103 = arith.constant 0 : i32
    %122 = tpu.memref_slice %arg2[%111, %120, %121, %c0_i32_103] : memref<2x8x8x128xf32, #tpu.memory_space<any>> -> memref<1x3x3x128xf32, #tpu.memory_space<any>>
    %c6_i32_104 = arith.constant 6 : i32
    %c0_i32_105 = arith.constant 0 : i32
    %c0_i32_106 = arith.constant 0 : i32
    %c0_i32_107 = arith.constant 0 : i32
    %123 = tpu.memref_slice %arg4[%c6_i32_104, %c0_i32_105, %c0_i32_106, %c0_i32_107] : memref<8x3x3x128xf32, #tpu.memory_space<vmem>> -> memref<1x3x3x128xf32, #tpu.memory_space<vmem>>
    %124 = tpu.memref_slice %arg5[%c6_i32_102] : memref<8x!tpu.dma_semaphore, #tpu.memory_space<semaphore_mem>> -> memref<1x!tpu.dma_semaphore, #tpu.memory_space<semaphore_mem>>
    %125 = tpu.memref_squeeze %124 : memref<1x!tpu.dma_semaphore, #tpu.memory_space<semaphore_mem>> -> memref<!tpu.dma_semaphore, #tpu.memory_space<semaphore_mem>>
    tpu.enqueue_dma source(%122 : memref<1x3x3x128xf32, #tpu.memory_space<any>>) target(%123 : memref<1x3x3x128xf32, #tpu.memory_space<vmem>>) target_semaphore(%125 : memref<!tpu.dma_semaphore, #tpu.memory_space<semaphore_mem>>)
    %c8_i32_108 = arith.constant 8 : i32
    %126 = arith.muli %arg0, %c8_i32_108 : i32
    %c7_i32 = arith.constant 7 : i32
    %127 = arith.addi %126, %c7_i32 : i32
    %128 = arith.index_cast %127 : i32 to index
    %c0_109 = arith.constant 0 : index
    %129 = memref.load %arg1[%128, %c0_109] : memref<8x3xi32, #tpu.memory_space<smem>>
    %c8_i32_110 = arith.constant 8 : i32
    %130 = arith.muli %arg0, %c8_i32_110 : i32
    %c7_i32_111 = arith.constant 7 : i32
    %131 = arith.addi %130, %c7_i32_111 : i32
    %132 = arith.index_cast %131 : i32 to index
    %c1_112 = arith.constant 1 : index
    %133 = memref.load %arg1[%132, %c1_112] : memref<8x3xi32, #tpu.memory_space<smem>>
    %c8_i32_113 = arith.constant 8 : i32
    %134 = arith.muli %arg0, %c8_i32_113 : i32
    %c7_i32_114 = arith.constant 7 : i32
    %135 = arith.addi %134, %c7_i32_114 : i32
    %136 = arith.index_cast %135 : i32 to index
    %c2_115 = arith.constant 2 : index
    %137 = memref.load %arg1[%136, %c2_115] : memref<8x3xi32, #tpu.memory_space<smem>>
    %c1_i32_116 = arith.constant 1 : i32
    %138 = arith.subi %137, %c1_i32_116 : i32
    %c1_i32_117 = arith.constant 1 : i32
    %139 = arith.subi %133, %c1_i32_117 : i32
    %c7_i32_118 = arith.constant 7 : i32
    %c0_i32_119 = arith.constant 0 : i32
    %140 = tpu.memref_slice %arg2[%129, %138, %139, %c0_i32_119] : memref<2x8x8x128xf32, #tpu.memory_space<any>> -> memref<1x3x3x128xf32, #tpu.memory_space<any>>
    %c7_i32_120 = arith.constant 7 : i32
    %c0_i32_121 = arith.constant 0 : i32
    %c0_i32_122 = arith.constant 0 : i32
    %c0_i32_123 = arith.constant 0 : i32
    %141 = tpu.memref_slice %arg4[%c7_i32_120, %c0_i32_121, %c0_i32_122, %c0_i32_123] : memref<8x3x3x128xf32, #tpu.memory_space<vmem>> -> memref<1x3x3x128xf32, #tpu.memory_space<vmem>>
    %142 = tpu.memref_slice %arg5[%c7_i32_118] : memref<8x!tpu.dma_semaphore, #tpu.memory_space<semaphore_mem>> -> memref<1x!tpu.dma_semaphore, #tpu.memory_space<semaphore_mem>>
    %143 = tpu.memref_squeeze %142 : memref<1x!tpu.dma_semaphore, #tpu.memory_space<semaphore_mem>> -> memref<!tpu.dma_semaphore, #tpu.memory_space<semaphore_mem>>
    tpu.enqueue_dma source(%140 : memref<1x3x3x128xf32, #tpu.memory_space<any>>) target(%141 : memref<1x3x3x128xf32, #tpu.memory_space<vmem>>) target_semaphore(%143 : memref<!tpu.dma_semaphore, #tpu.memory_space<semaphore_mem>>)
    %c0_i32_124 = arith.constant 0 : i32
    %c0_i32_125 = arith.constant 0 : i32
    %144 = tpu.memref_slice %arg2[%3, %12, %13, %c0_i32_125] : memref<2x8x8x128xf32, #tpu.memory_space<any>> -> memref<1x3x3x128xf32, #tpu.memory_space<any>>
    %c0_i32_126 = arith.constant 0 : i32
    %c0_i32_127 = arith.constant 0 : i32
    %c0_i32_128 = arith.constant 0 : i32
    %c0_i32_129 = arith.constant 0 : i32
    %145 = tpu.memref_slice %arg4[%c0_i32_126, %c0_i32_127, %c0_i32_128, %c0_i32_129] : memref<8x3x3x128xf32, #tpu.memory_space<vmem>> -> memref<1x3x3x128xf32, #tpu.memory_space<vmem>>
    %146 = tpu.memref_slice %arg5[%c0_i32_124] : memref<8x!tpu.dma_semaphore, #tpu.memory_space<semaphore_mem>> -> memref<1x!tpu.dma_semaphore, #tpu.memory_space<semaphore_mem>>
    %147 = tpu.memref_squeeze %146 : memref<1x!tpu.dma_semaphore, #tpu.memory_space<semaphore_mem>> -> memref<!tpu.dma_semaphore, #tpu.memory_space<semaphore_mem>>
    tpu.wait_dma2 semaphore(%147 : memref<!tpu.dma_semaphore, #tpu.memory_space<semaphore_mem>>) src(%144 : memref<1x3x3x128xf32, #tpu.memory_space<any>>) dst(%145 : memref<1x3x3x128xf32, #tpu.memory_space<vmem>>)
    %c1_i32_130 = arith.constant 1 : i32
    %c0_i32_131 = arith.constant 0 : i32
    %148 = tpu.memref_slice %arg2[%21, %30, %31, %c0_i32_131] : memref<2x8x8x128xf32, #tpu.memory_space<any>> -> memref<1x3x3x128xf32, #tpu.memory_space<any>>
    %c1_i32_132 = arith.constant 1 : i32
    %c0_i32_133 = arith.constant 0 : i32
    %c0_i32_134 = arith.constant 0 : i32
    %c0_i32_135 = arith.constant 0 : i32
    %149 = tpu.memref_slice %arg4[%c1_i32_132, %c0_i32_133, %c0_i32_134, %c0_i32_135] : memref<8x3x3x128xf32, #tpu.memory_space<vmem>> -> memref<1x3x3x128xf32, #tpu.memory_space<vmem>>
    %150 = tpu.memref_slice %arg5[%c1_i32_130] : memref<8x!tpu.dma_semaphore, #tpu.memory_space<semaphore_mem>> -> memref<1x!tpu.dma_semaphore, #tpu.memory_space<semaphore_mem>>
    %151 = tpu.memref_squeeze %150 : memref<1x!tpu.dma_semaphore, #tpu.memory_space<semaphore_mem>> -> memref<!tpu.dma_semaphore, #tpu.memory_space<semaphore_mem>>
    tpu.wait_dma2 semaphore(%151 : memref<!tpu.dma_semaphore, #tpu.memory_space<semaphore_mem>>) src(%148 : memref<1x3x3x128xf32, #tpu.memory_space<any>>) dst(%149 : memref<1x3x3x128xf32, #tpu.memory_space<vmem>>)
    %c2_i32_136 = arith.constant 2 : i32
    %c0_i32_137 = arith.constant 0 : i32
    %152 = tpu.memref_slice %arg2[%39, %48, %49, %c0_i32_137] : memref<2x8x8x128xf32, #tpu.memory_space<any>> -> memref<1x3x3x128xf32, #tpu.memory_space<any>>
    %c2_i32_138 = arith.constant 2 : i32
    %c0_i32_139 = arith.constant 0 : i32
    %c0_i32_140 = arith.constant 0 : i32
    %c0_i32_141 = arith.constant 0 : i32
    %153 = tpu.memref_slice %arg4[%c2_i32_138, %c0_i32_139, %c0_i32_140, %c0_i32_141] : memref<8x3x3x128xf32, #tpu.memory_space<vmem>> -> memref<1x3x3x128xf32, #tpu.memory_space<vmem>>
    %154 = tpu.memref_slice %arg5[%c2_i32_136] : memref<8x!tpu.dma_semaphore, #tpu.memory_space<semaphore_mem>> -> memref<1x!tpu.dma_semaphore, #tpu.memory_space<semaphore_mem>>
    %155 = tpu.memref_squeeze %154 : memref<1x!tpu.dma_semaphore, #tpu.memory_space<semaphore_mem>> -> memref<!tpu.dma_semaphore, #tpu.memory_space<semaphore_mem>>
    tpu.wait_dma2 semaphore(%155 : memref<!tpu.dma_semaphore, #tpu.memory_space<semaphore_mem>>) src(%152 : memref<1x3x3x128xf32, #tpu.memory_space<any>>) dst(%153 : memref<1x3x3x128xf32, #tpu.memory_space<vmem>>)
    %c3_i32_142 = arith.constant 3 : i32
    %c0_i32_143 = arith.constant 0 : i32
    %156 = tpu.memref_slice %arg2[%57, %66, %67, %c0_i32_143] : memref<2x8x8x128xf32, #tpu.memory_space<any>> -> memref<1x3x3x128xf32, #tpu.memory_space<any>>
    %c3_i32_144 = arith.constant 3 : i32
    %c0_i32_145 = arith.constant 0 : i32
    %c0_i32_146 = arith.constant 0 : i32
    %c0_i32_147 = arith.constant 0 : i32
    %157 = tpu.memref_slice %arg4[%c3_i32_144, %c0_i32_145, %c0_i32_146, %c0_i32_147] : memref<8x3x3x128xf32, #tpu.memory_space<vmem>> -> memref<1x3x3x128xf32, #tpu.memory_space<vmem>>
    %158 = tpu.memref_slice %arg5[%c3_i32_142] : memref<8x!tpu.dma_semaphore, #tpu.memory_space<semaphore_mem>> -> memref<1x!tpu.dma_semaphore, #tpu.memory_space<semaphore_mem>>
    %159 = tpu.memref_squeeze %158 : memref<1x!tpu.dma_semaphore, #tpu.memory_space<semaphore_mem>> -> memref<!tpu.dma_semaphore, #tpu.memory_space<semaphore_mem>>
    tpu.wait_dma2 semaphore(%159 : memref<!tpu.dma_semaphore, #tpu.memory_space<semaphore_mem>>) src(%156 : memref<1x3x3x128xf32, #tpu.memory_space<any>>) dst(%157 : memref<1x3x3x128xf32, #tpu.memory_space<vmem>>)
    %c4_i32_148 = arith.constant 4 : i32
    %c0_i32_149 = arith.constant 0 : i32
    %160 = tpu.memref_slice %arg2[%75, %84, %85, %c0_i32_149] : memref<2x8x8x128xf32, #tpu.memory_space<any>> -> memref<1x3x3x128xf32, #tpu.memory_space<any>>
    %c4_i32_150 = arith.constant 4 : i32
    %c0_i32_151 = arith.constant 0 : i32
    %c0_i32_152 = arith.constant 0 : i32
    %c0_i32_153 = arith.constant 0 : i32
    %161 = tpu.memref_slice %arg4[%c4_i32_150, %c0_i32_151, %c0_i32_152, %c0_i32_153] : memref<8x3x3x128xf32, #tpu.memory_space<vmem>> -> memref<1x3x3x128xf32, #tpu.memory_space<vmem>>
    %162 = tpu.memref_slice %arg5[%c4_i32_148] : memref<8x!tpu.dma_semaphore, #tpu.memory_space<semaphore_mem>> -> memref<1x!tpu.dma_semaphore, #tpu.memory_space<semaphore_mem>>
    %163 = tpu.memref_squeeze %162 : memref<1x!tpu.dma_semaphore, #tpu.memory_space<semaphore_mem>> -> memref<!tpu.dma_semaphore, #tpu.memory_space<semaphore_mem>>
    tpu.wait_dma2 semaphore(%163 : memref<!tpu.dma_semaphore, #tpu.memory_space<semaphore_mem>>) src(%160 : memref<1x3x3x128xf32, #tpu.memory_space<any>>) dst(%161 : memref<1x3x3x128xf32, #tpu.memory_space<vmem>>)
    %c5_i32_154 = arith.constant 5 : i32
    %c0_i32_155 = arith.constant 0 : i32
    %164 = tpu.memref_slice %arg2[%93, %102, %103, %c0_i32_155] : memref<2x8x8x128xf32, #tpu.memory_space<any>> -> memref<1x3x3x128xf32, #tpu.memory_space<any>>
    %c5_i32_156 = arith.constant 5 : i32
    %c0_i32_157 = arith.constant 0 : i32
    %c0_i32_158 = arith.constant 0 : i32
    %c0_i32_159 = arith.constant 0 : i32
    %165 = tpu.memref_slice %arg4[%c5_i32_156, %c0_i32_157, %c0_i32_158, %c0_i32_159] : memref<8x3x3x128xf32, #tpu.memory_space<vmem>> -> memref<1x3x3x128xf32, #tpu.memory_space<vmem>>
    %166 = tpu.memref_slice %arg5[%c5_i32_154] : memref<8x!tpu.dma_semaphore, #tpu.memory_space<semaphore_mem>> -> memref<1x!tpu.dma_semaphore, #tpu.memory_space<semaphore_mem>>
    %167 = tpu.memref_squeeze %166 : memref<1x!tpu.dma_semaphore, #tpu.memory_space<semaphore_mem>> -> memref<!tpu.dma_semaphore, #tpu.memory_space<semaphore_mem>>
    tpu.wait_dma2 semaphore(%167 : memref<!tpu.dma_semaphore, #tpu.memory_space<semaphore_mem>>) src(%164 : memref<1x3x3x128xf32, #tpu.memory_space<any>>) dst(%165 : memref<1x3x3x128xf32, #tpu.memory_space<vmem>>)
    %c6_i32_160 = arith.constant 6 : i32
    %c0_i32_161 = arith.constant 0 : i32
    %168 = tpu.memref_slice %arg2[%111, %120, %121, %c0_i32_161] : memref<2x8x8x128xf32, #tpu.memory_space<any>> -> memref<1x3x3x128xf32, #tpu.memory_space<any>>
    %c6_i32_162 = arith.constant 6 : i32
    %c0_i32_163 = arith.constant 0 : i32
    %c0_i32_164 = arith.constant 0 : i32
    %c0_i32_165 = arith.constant 0 : i32
    %169 = tpu.memref_slice %arg4[%c6_i32_162, %c0_i32_163, %c0_i32_164, %c0_i32_165] : memref<8x3x3x128xf32, #tpu.memory_space<vmem>> -> memref<1x3x3x128xf32, #tpu.memory_space<vmem>>
    %170 = tpu.memref_slice %arg5[%c6_i32_160] : memref<8x!tpu.dma_semaphore, #tpu.memory_space<semaphore_mem>> -> memref<1x!tpu.dma_semaphore, #tpu.memory_space<semaphore_mem>>
    %171 = tpu.memref_squeeze %170 : memref<1x!tpu.dma_semaphore, #tpu.memory_space<semaphore_mem>> -> memref<!tpu.dma_semaphore, #tpu.memory_space<semaphore_mem>>
    tpu.wait_dma2 semaphore(%171 : memref<!tpu.dma_semaphore, #tpu.memory_space<semaphore_mem>>) src(%168 : memref<1x3x3x128xf32, #tpu.memory_space<any>>) dst(%169 : memref<1x3x3x128xf32, #tpu.memory_space<vmem>>)
    %c7_i32_166 = arith.constant 7 : i32
    %c0_i32_167 = arith.constant 0 : i32
    %172 = tpu.memref_slice %arg2[%129, %138, %139, %c0_i32_167] : memref<2x8x8x128xf32, #tpu.memory_space<any>> -> memref<1x3x3x128xf32, #tpu.memory_space<any>>
    %c7_i32_168 = arith.constant 7 : i32
    %c0_i32_169 = arith.constant 0 : i32
    %c0_i32_170 = arith.constant 0 : i32
    %c0_i32_171 = arith.constant 0 : i32
    %173 = tpu.memref_slice %arg4[%c7_i32_168, %c0_i32_169, %c0_i32_170, %c0_i32_171] : memref<8x3x3x128xf32, #tpu.memory_space<vmem>> -> memref<1x3x3x128xf32, #tpu.memory_space<vmem>>
    %174 = tpu.memref_slice %arg5[%c7_i32_166] : memref<8x!tpu.dma_semaphore, #tpu.memory_space<semaphore_mem>> -> memref<1x!tpu.dma_semaphore, #tpu.memory_space<semaphore_mem>>
    %175 = tpu.memref_squeeze %174 : memref<1x!tpu.dma_semaphore, #tpu.memory_space<semaphore_mem>> -> memref<!tpu.dma_semaphore, #tpu.memory_space<semaphore_mem>>
    tpu.wait_dma2 semaphore(%175 : memref<!tpu.dma_semaphore, #tpu.memory_space<semaphore_mem>>) src(%172 : memref<1x3x3x128xf32, #tpu.memory_space<any>>) dst(%173 : memref<1x3x3x128xf32, #tpu.memory_space<vmem>>)
    %c0_172 = arith.constant 0 : index
    %c0_173 = arith.constant 0 : index
    %c0_174 = arith.constant 0 : index
    %c0_175 = arith.constant 0 : index
    %176 = vector.load %arg4[%c0_172, %c0_173, %c0_174, %c0_175] : memref<8x3x3x128xf32, #tpu.memory_space<vmem>>, vector<8x3x3x128xf32>
    %c0_176 = arith.constant 0 : index
    %c0_177 = arith.constant 0 : index
    %c0_178 = arith.constant 0 : index
    %c0_179 = arith.constant 0 : index
    %177 = vector.load %arg3[%c0_176, %c0_177, %c0_178, %c0_179] : memref<8x3x3x128xf32, #tpu.memory_space<vmem>>, vector<8x3x3x128xf32>
    tpu.vector_store %arg3[%c0_176, %c0_177, %c0_178, %c0_179], %176 {strides = array<i32>} : memref<8x3x3x128xf32, #tpu.memory_space<vmem>>, vector<8x3x3x128xf32>,
    return
  }
  func.func @transform_1(%arg0: i32, %arg1: memref<8x3xi32, #tpu.memory_space<smem>>) -> (i32, i32, i32, i32) {
    %c0_i32 = arith.constant 0 : i32
    %c0_i32_0 = arith.constant 0 : i32
    %c0_i32_1 = arith.constant 0 : i32
    %c0_i32_2 = arith.constant 0 : i32
    return %arg0, %c0_i32, %c0_i32_0, %c0_i32_1 : i32, i32, i32, i32
  }
}

module attributes {stable_mosaic.version = 11 : i64} {
  func.func @_in_stats_kernel(%arg0: i32, %arg1: i32, %arg2: memref<1x256x32xf32, #tpu.memory_space<vmem>>, %arg3: memref<1x1x32xf32, #tpu.memory_space<vmem>>, %arg4: memref<1x1x32xf32, #tpu.memory_space<vmem>>) attributes {dimension_semantics = [#tpu.dimension_semantics<parallel>, #tpu.dimension_semantics<arbitrary>], iteration_bounds = array<i64: 2, 7>, scalar_prefetch = 0 : i64, scratch_operands = 0 : i64, tpu.core_type = #tpu.core_type<tc>, window_params = [{transform_indices = @transform_0, window_bounds = array<i64: 1, 256, 32>}, {transform_indices = @transform_1, window_bounds = array<i64: 1, 1, 32>}, {transform_indices = @transform_2, window_bounds = array<i64: 1, 1, 32>}]} {
    %c0_i32 = arith.constant 0 : i32
    %0 = arith.cmpi eq, %arg1, %c0_i32 : i32
    %1 = arith.extui %0 : i1 to i32
    %c0_i32_0 = arith.constant 0 : i32
    %2 = arith.cmpi ne, %1, %c0_i32_0 : i32
    scf.if %2 {
      %cst_17 = arith.constant 0.000000e+00 : f32
      %30 = vector.broadcast %cst_17 : f32 to vector<1x1x32xf32>
      %c0_18 = arith.constant 0 : index
      %c0_19 = arith.constant 0 : index
      %c0_20 = arith.constant 0 : index
      %31 = vector.load %arg3[%c0_18, %c0_19, %c0_20] : memref<1x1x32xf32, #tpu.memory_space<vmem>>, vector<1x1x32xf32>
      tpu.vector_store %arg3[%c0_18, %c0_19, %c0_20], %30 {strides = array<i32>} : memref<1x1x32xf32, #tpu.memory_space<vmem>>, vector<1x1x32xf32>,
      %cst_21 = arith.constant 0.000000e+00 : f32
      %32 = vector.broadcast %cst_21 : f32 to vector<1x1x32xf32>
      %c0_22 = arith.constant 0 : index
      %c0_23 = arith.constant 0 : index
      %c0_24 = arith.constant 0 : index
      %33 = vector.load %arg4[%c0_22, %c0_23, %c0_24] : memref<1x1x32xf32, #tpu.memory_space<vmem>>, vector<1x1x32xf32>
      tpu.vector_store %arg4[%c0_22, %c0_23, %c0_24], %32 {strides = array<i32>} : memref<1x1x32xf32, #tpu.memory_space<vmem>>, vector<1x1x32xf32>,
    } else {
    }
    %c0 = arith.constant 0 : index
    %c0_1 = arith.constant 0 : index
    %c0_2 = arith.constant 0 : index
    %3 = vector.load %arg2[%c0, %c0_1, %c0_2] : memref<1x256x32xf32, #tpu.memory_space<vmem>>, vector<1x256x32xf32>
    %4 = vector.shape_cast %3 : vector<1x256x32xf32> to vector<256x32xf32>
    %5 = tpu.iota {dimensions = array<i32: 0>} : vector<256x32xi32>
    %c256_i32 = arith.constant 256 : i32
    %6 = arith.muli %arg1, %c256_i32 : i32
    %7 = vector.broadcast %6 : i32 to vector<256x32xi32>
    %8 = arith.addi %5, %7 : vector<256x32xi32>
    %c1600_i32 = arith.constant 1600 : i32
    %9 = vector.broadcast %c1600_i32 : i32 to vector<256x32xi32>
    %10 = arith.cmpi slt, %8, %9 : vector<256x32xi32>
    %cst = arith.constant 0.000000e+00 : f32
    %11 = vector.broadcast %cst : f32 to vector<256x32xf32>
    %12 = arith.select %10, %4, %11 : vector<256x32xi1>, vector<256x32xf32>
    %c0_3 = arith.constant 0 : index
    %c0_4 = arith.constant 0 : index
    %c0_5 = arith.constant 0 : index
    %13 = vector.load %arg3[%c0_3, %c0_4, %c0_5] : memref<1x1x32xf32, #tpu.memory_space<vmem>>, vector<1x1x32xf32>
    %14 = vector.shape_cast %13 : vector<1x1x32xf32> to vector<1x32xf32>
    %cst_6 = arith.constant dense<0.000000e+00> : vector<32xf32>
    %15 = vector.multi_reduction <add>, %12, %cst_6 [0] : vector<256x32xf32> to vector<32xf32>
    %16 = vector.shape_cast %15 : vector<32xf32> to vector<1x32xf32>
    %17 = arith.addf %14, %16 : vector<1x32xf32>
    %c0_7 = arith.constant 0 : index
    %c0_8 = arith.constant 0 : index
    %c0_9 = arith.constant 0 : index
    %18 = vector.load %arg3[%c0_7, %c0_8, %c0_9] : memref<1x1x32xf32, #tpu.memory_space<vmem>>, vector<1x1x32xf32>
    %19 = vector.shape_cast %18 : vector<1x1x32xf32> to vector<1x32xf32>
    %20 = vector.shape_cast %17 : vector<1x32xf32> to vector<1x1x32xf32>
    tpu.vector_store %arg3[%c0_7, %c0_8, %c0_9], %20 {strides = array<i32>} : memref<1x1x32xf32, #tpu.memory_space<vmem>>, vector<1x1x32xf32>,
    %c0_10 = arith.constant 0 : index
    %c0_11 = arith.constant 0 : index
    %c0_12 = arith.constant 0 : index
    %21 = vector.load %arg4[%c0_10, %c0_11, %c0_12] : memref<1x1x32xf32, #tpu.memory_space<vmem>>, vector<1x1x32xf32>
    %22 = vector.shape_cast %21 : vector<1x1x32xf32> to vector<1x32xf32>
    %23 = arith.mulf %12, %12 : vector<256x32xf32>
    %cst_13 = arith.constant dense<0.000000e+00> : vector<32xf32>
    %24 = vector.multi_reduction <add>, %23, %cst_13 [0] : vector<256x32xf32> to vector<32xf32>
    %25 = vector.shape_cast %24 : vector<32xf32> to vector<1x32xf32>
    %26 = arith.addf %22, %25 : vector<1x32xf32>
    %c0_14 = arith.constant 0 : index
    %c0_15 = arith.constant 0 : index
    %c0_16 = arith.constant 0 : index
    %27 = vector.load %arg4[%c0_14, %c0_15, %c0_16] : memref<1x1x32xf32, #tpu.memory_space<vmem>>, vector<1x1x32xf32>
    %28 = vector.shape_cast %27 : vector<1x1x32xf32> to vector<1x32xf32>
    %29 = vector.shape_cast %26 : vector<1x32xf32> to vector<1x1x32xf32>
    tpu.vector_store %arg4[%c0_14, %c0_15, %c0_16], %29 {strides = array<i32>} : memref<1x1x32xf32, #tpu.memory_space<vmem>>, vector<1x1x32xf32>,
    return
  }
  func.func @transform_0(%arg0: i32, %arg1: i32) -> (i32, i32, i32) {
    %c0_i32 = arith.constant 0 : i32
    %c0_i32_0 = arith.constant 0 : i32
    return %arg0, %arg1, %c0_i32 : i32, i32, i32
  }
  func.func @transform_1(%arg0: i32, %arg1: i32) -> (i32, i32, i32) {
    %c0_i32 = arith.constant 0 : i32
    %c0_i32_0 = arith.constant 0 : i32
    %c0_i32_1 = arith.constant 0 : i32
    return %arg0, %c0_i32, %c0_i32_0 : i32, i32, i32
  }
  func.func @transform_2(%arg0: i32, %arg1: i32) -> (i32, i32, i32) {
    %c0_i32 = arith.constant 0 : i32
    %c0_i32_0 = arith.constant 0 : i32
    %c0_i32_1 = arith.constant 0 : i32
    return %arg0, %c0_i32, %c0_i32_0 : i32, i32, i32
  }
}

module attributes {stable_mosaic.version = 11 : i64} {
  func.func @_matmul_bias_kernel(%arg0: i32, %arg1: memref<256x147xbf16, #tpu.memory_space<vmem>>, %arg2: memref<147x32xbf16, #tpu.memory_space<vmem>>, %arg3: memref<1x32xf32, #tpu.memory_space<vmem>>, %arg4: memref<256x32xf32, #tpu.memory_space<vmem>>) attributes {dimension_semantics = [#tpu.dimension_semantics<parallel>], iteration_bounds = array<i64: 2>, scalar_prefetch = 0 : i64, scratch_operands = 0 : i64, tpu.core_type = #tpu.core_type<tc>, window_params = [{transform_indices = @transform_0, window_bounds = array<i64: 256, 147>}, {pipeline_mode = #tpu.pipeline_mode<synchronous>, transform_indices = @transform_1, window_bounds = array<i64: 147, 32>}, {pipeline_mode = #tpu.pipeline_mode<synchronous>, transform_indices = @transform_2, window_bounds = array<i64: 1, 32>}, {transform_indices = @transform_3, window_bounds = array<i64: 256, 32>}]} {
    %c0 = arith.constant 0 : index
    %c0_0 = arith.constant 0 : index
    %0 = vector.load %arg1[%c0, %c0_0] : memref<256x147xbf16, #tpu.memory_space<vmem>>, vector<256x147xbf16>
    %c0_1 = arith.constant 0 : index
    %c0_2 = arith.constant 0 : index
    %1 = vector.load %arg2[%c0_1, %c0_2] : memref<147x32xbf16, #tpu.memory_space<vmem>>, vector<147x32xbf16>
    %cst = arith.constant dense<0.000000e+00> : vector<256x32xf32>
    %2 = tpu.matmul %0, %1, %cst {dimension_numbers = #tpu.dot_dimension_numbers<[1], [0], [0], [1], [0, 0, 1, 1], [], []>} : vector<256x147xbf16>, vector<147x32xbf16>, vector<256x32xf32> -> vector<256x32xf32>
    %c0_3 = arith.constant 0 : index
    %c0_4 = arith.constant 0 : index
    %3 = vector.load %arg3[%c0_3, %c0_4] : memref<1x32xf32, #tpu.memory_space<vmem>>, vector<1x32xf32>
    %4 = vector.broadcast %3 : vector<1x32xf32> to vector<256x32xf32>
    %5 = arith.addf %2, %4 : vector<256x32xf32>
    %cst_5 = arith.constant 0.000000e+00 : f32
    %6 = vector.broadcast %cst_5 : f32 to vector<256x32xf32>
    %7 = arith.maximumf %5, %6 : vector<256x32xf32>
    %c0_6 = arith.constant 0 : index
    %c0_7 = arith.constant 0 : index
    %8 = vector.load %arg4[%c0_6, %c0_7] : memref<256x32xf32, #tpu.memory_space<vmem>>, vector<256x32xf32>
    tpu.vector_store %arg4[%c0_6, %c0_7], %7 {strides = array<i32>} : memref<256x32xf32, #tpu.memory_space<vmem>>, vector<256x32xf32>,
    return
  }
  func.func @transform_0(%arg0: i32) -> (i32, i32) {
    %c0_i32 = arith.constant 0 : i32
    %c0_i32_0 = arith.constant 0 : i32
    return %arg0, %c0_i32 : i32, i32
  }
  func.func @transform_1(%arg0: i32) -> (i32, i32) {
    %c0_i32 = arith.constant 0 : i32
    %c0_i32_0 = arith.constant 0 : i32
    %c0_i32_1 = arith.constant 0 : i32
    return %c0_i32, %c0_i32_0 : i32, i32
  }
  func.func @transform_2(%arg0: i32) -> (i32, i32) {
    %c0_i32 = arith.constant 0 : i32
    %c0_i32_0 = arith.constant 0 : i32
    %c0_i32_1 = arith.constant 0 : i32
    return %c0_i32, %c0_i32_0 : i32, i32
  }
  func.func @transform_3(%arg0: i32) -> (i32, i32) {
    %c0_i32 = arith.constant 0 : i32
    %c0_i32_0 = arith.constant 0 : i32
    return %arg0, %c0_i32 : i32, i32
  }
}

module attributes {stable_mosaic.version = 11 : i64} {
  func.func @_matmul_bias_kernel(%arg0: i32, %arg1: memref<256x288xbf16, #tpu.memory_space<vmem>>, %arg2: memref<288x32xbf16, #tpu.memory_space<vmem>>, %arg3: memref<1x32xf32, #tpu.memory_space<vmem>>, %arg4: memref<256x32xf32, #tpu.memory_space<vmem>>) attributes {dimension_semantics = [#tpu.dimension_semantics<parallel>], iteration_bounds = array<i64: 2>, scalar_prefetch = 0 : i64, scratch_operands = 0 : i64, tpu.core_type = #tpu.core_type<tc>, window_params = [{transform_indices = @transform_0, window_bounds = array<i64: 256, 288>}, {pipeline_mode = #tpu.pipeline_mode<synchronous>, transform_indices = @transform_1, window_bounds = array<i64: 288, 32>}, {pipeline_mode = #tpu.pipeline_mode<synchronous>, transform_indices = @transform_2, window_bounds = array<i64: 1, 32>}, {transform_indices = @transform_3, window_bounds = array<i64: 256, 32>}]} {
    %c0 = arith.constant 0 : index
    %c0_0 = arith.constant 0 : index
    %0 = vector.load %arg1[%c0, %c0_0] : memref<256x288xbf16, #tpu.memory_space<vmem>>, vector<256x288xbf16>
    %c0_1 = arith.constant 0 : index
    %c0_2 = arith.constant 0 : index
    %1 = vector.load %arg2[%c0_1, %c0_2] : memref<288x32xbf16, #tpu.memory_space<vmem>>, vector<288x32xbf16>
    %cst = arith.constant dense<0.000000e+00> : vector<256x32xf32>
    %2 = tpu.matmul %0, %1, %cst {dimension_numbers = #tpu.dot_dimension_numbers<[1], [0], [0], [1], [0, 0, 1, 1], [], []>} : vector<256x288xbf16>, vector<288x32xbf16>, vector<256x32xf32> -> vector<256x32xf32>
    %c0_3 = arith.constant 0 : index
    %c0_4 = arith.constant 0 : index
    %3 = vector.load %arg3[%c0_3, %c0_4] : memref<1x32xf32, #tpu.memory_space<vmem>>, vector<1x32xf32>
    %4 = vector.broadcast %3 : vector<1x32xf32> to vector<256x32xf32>
    %5 = arith.addf %2, %4 : vector<256x32xf32>
    %cst_5 = arith.constant 0.000000e+00 : f32
    %6 = vector.broadcast %cst_5 : f32 to vector<256x32xf32>
    %7 = arith.maximumf %5, %6 : vector<256x32xf32>
    %c0_6 = arith.constant 0 : index
    %c0_7 = arith.constant 0 : index
    %8 = vector.load %arg4[%c0_6, %c0_7] : memref<256x32xf32, #tpu.memory_space<vmem>>, vector<256x32xf32>
    tpu.vector_store %arg4[%c0_6, %c0_7], %7 {strides = array<i32>} : memref<256x32xf32, #tpu.memory_space<vmem>>, vector<256x32xf32>,
    return
  }
  func.func @transform_0(%arg0: i32) -> (i32, i32) {
    %c0_i32 = arith.constant 0 : i32
    %c0_i32_0 = arith.constant 0 : i32
    return %arg0, %c0_i32 : i32, i32
  }
  func.func @transform_1(%arg0: i32) -> (i32, i32) {
    %c0_i32 = arith.constant 0 : i32
    %c0_i32_0 = arith.constant 0 : i32
    %c0_i32_1 = arith.constant 0 : i32
    return %c0_i32, %c0_i32_0 : i32, i32
  }
  func.func @transform_2(%arg0: i32) -> (i32, i32) {
    %c0_i32 = arith.constant 0 : i32
    %c0_i32_0 = arith.constant 0 : i32
    %c0_i32_1 = arith.constant 0 : i32
    return %c0_i32, %c0_i32_0 : i32, i32
  }
  func.func @transform_3(%arg0: i32) -> (i32, i32) {
    %c0_i32 = arith.constant 0 : i32
    %c0_i32_0 = arith.constant 0 : i32
    return %arg0, %c0_i32 : i32, i32
  }
}

module attributes {stable_mosaic.version = 11 : i64} {
  func.func @_matmul_bias_kernel(%arg0: i32, %arg1: memref<128x288xbf16, #tpu.memory_space<vmem>>, %arg2: memref<288x64xbf16, #tpu.memory_space<vmem>>, %arg3: memref<1x64xf32, #tpu.memory_space<vmem>>, %arg4: memref<128x64xf32, #tpu.memory_space<vmem>>) attributes {dimension_semantics = [#tpu.dimension_semantics<parallel>], iteration_bounds = array<i64: 1>, scalar_prefetch = 0 : i64, scratch_operands = 0 : i64, tpu.core_type = #tpu.core_type<tc>, window_params = [{transform_indices = @transform_0, window_bounds = array<i64: 128, 288>}, {pipeline_mode = #tpu.pipeline_mode<synchronous>, transform_indices = @transform_1, window_bounds = array<i64: 288, 64>}, {pipeline_mode = #tpu.pipeline_mode<synchronous>, transform_indices = @transform_2, window_bounds = array<i64: 1, 64>}, {transform_indices = @transform_3, window_bounds = array<i64: 128, 64>}]} {
    %c0 = arith.constant 0 : index
    %c0_0 = arith.constant 0 : index
    %0 = vector.load %arg1[%c0, %c0_0] : memref<128x288xbf16, #tpu.memory_space<vmem>>, vector<128x288xbf16>
    %c0_1 = arith.constant 0 : index
    %c0_2 = arith.constant 0 : index
    %1 = vector.load %arg2[%c0_1, %c0_2] : memref<288x64xbf16, #tpu.memory_space<vmem>>, vector<288x64xbf16>
    %cst = arith.constant dense<0.000000e+00> : vector<128x64xf32>
    %2 = tpu.matmul %0, %1, %cst {dimension_numbers = #tpu.dot_dimension_numbers<[1], [0], [0], [1], [0, 0, 1, 1], [], []>} : vector<128x288xbf16>, vector<288x64xbf16>, vector<128x64xf32> -> vector<128x64xf32>
    %c0_3 = arith.constant 0 : index
    %c0_4 = arith.constant 0 : index
    %3 = vector.load %arg3[%c0_3, %c0_4] : memref<1x64xf32, #tpu.memory_space<vmem>>, vector<1x64xf32>
    %4 = vector.broadcast %3 : vector<1x64xf32> to vector<128x64xf32>
    %5 = arith.addf %2, %4 : vector<128x64xf32>
    %cst_5 = arith.constant 0.000000e+00 : f32
    %6 = vector.broadcast %cst_5 : f32 to vector<128x64xf32>
    %7 = arith.maximumf %5, %6 : vector<128x64xf32>
    %c0_6 = arith.constant 0 : index
    %c0_7 = arith.constant 0 : index
    %8 = vector.load %arg4[%c0_6, %c0_7] : memref<128x64xf32, #tpu.memory_space<vmem>>, vector<128x64xf32>
    tpu.vector_store %arg4[%c0_6, %c0_7], %7 {strides = array<i32>} : memref<128x64xf32, #tpu.memory_space<vmem>>, vector<128x64xf32>,
    return
  }
  func.func @transform_0(%arg0: i32) -> (i32, i32) {
    %c0_i32 = arith.constant 0 : i32
    %c0_i32_0 = arith.constant 0 : i32
    return %arg0, %c0_i32 : i32, i32
  }
  func.func @transform_1(%arg0: i32) -> (i32, i32) {
    %c0_i32 = arith.constant 0 : i32
    %c0_i32_0 = arith.constant 0 : i32
    %c0_i32_1 = arith.constant 0 : i32
    return %c0_i32, %c0_i32_0 : i32, i32
  }
  func.func @transform_2(%arg0: i32) -> (i32, i32) {
    %c0_i32 = arith.constant 0 : i32
    %c0_i32_0 = arith.constant 0 : i32
    %c0_i32_1 = arith.constant 0 : i32
    return %c0_i32, %c0_i32_0 : i32, i32
  }
  func.func @transform_3(%arg0: i32) -> (i32, i32) {
    %c0_i32 = arith.constant 0 : i32
    %c0_i32_0 = arith.constant 0 : i32
    return %arg0, %c0_i32 : i32, i32
  }
}

module attributes {stable_mosaic.version = 11 : i64} {
  func.func @_matmul_bias_kernel(%arg0: i32, %arg1: memref<128x576xbf16, #tpu.memory_space<vmem>>, %arg2: memref<576x64xbf16, #tpu.memory_space<vmem>>, %arg3: memref<1x64xf32, #tpu.memory_space<vmem>>, %arg4: memref<128x64xf32, #tpu.memory_space<vmem>>) attributes {dimension_semantics = [#tpu.dimension_semantics<parallel>], iteration_bounds = array<i64: 1>, scalar_prefetch = 0 : i64, scratch_operands = 0 : i64, tpu.core_type = #tpu.core_type<tc>, window_params = [{transform_indices = @transform_0, window_bounds = array<i64: 128, 576>}, {pipeline_mode = #tpu.pipeline_mode<synchronous>, transform_indices = @transform_1, window_bounds = array<i64: 576, 64>}, {pipeline_mode = #tpu.pipeline_mode<synchronous>, transform_indices = @transform_2, window_bounds = array<i64: 1, 64>}, {transform_indices = @transform_3, window_bounds = array<i64: 128, 64>}]} {
    %c0 = arith.constant 0 : index
    %c0_0 = arith.constant 0 : index
    %0 = vector.load %arg1[%c0, %c0_0] : memref<128x576xbf16, #tpu.memory_space<vmem>>, vector<128x576xbf16>
    %c0_1 = arith.constant 0 : index
    %c0_2 = arith.constant 0 : index
    %1 = vector.load %arg2[%c0_1, %c0_2] : memref<576x64xbf16, #tpu.memory_space<vmem>>, vector<576x64xbf16>
    %cst = arith.constant dense<0.000000e+00> : vector<128x64xf32>
    %2 = tpu.matmul %0, %1, %cst {dimension_numbers = #tpu.dot_dimension_numbers<[1], [0], [0], [1], [0, 0, 1, 1], [], []>} : vector<128x576xbf16>, vector<576x64xbf16>, vector<128x64xf32> -> vector<128x64xf32>
    %c0_3 = arith.constant 0 : index
    %c0_4 = arith.constant 0 : index
    %3 = vector.load %arg3[%c0_3, %c0_4] : memref<1x64xf32, #tpu.memory_space<vmem>>, vector<1x64xf32>
    %4 = vector.broadcast %3 : vector<1x64xf32> to vector<128x64xf32>
    %5 = arith.addf %2, %4 : vector<128x64xf32>
    %cst_5 = arith.constant 0.000000e+00 : f32
    %6 = vector.broadcast %cst_5 : f32 to vector<128x64xf32>
    %7 = arith.maximumf %5, %6 : vector<128x64xf32>
    %c0_6 = arith.constant 0 : index
    %c0_7 = arith.constant 0 : index
    %8 = vector.load %arg4[%c0_6, %c0_7] : memref<128x64xf32, #tpu.memory_space<vmem>>, vector<128x64xf32>
    tpu.vector_store %arg4[%c0_6, %c0_7], %7 {strides = array<i32>} : memref<128x64xf32, #tpu.memory_space<vmem>>, vector<128x64xf32>,
    return
  }
  func.func @transform_0(%arg0: i32) -> (i32, i32) {
    %c0_i32 = arith.constant 0 : i32
    %c0_i32_0 = arith.constant 0 : i32
    return %arg0, %c0_i32 : i32, i32
  }
  func.func @transform_1(%arg0: i32) -> (i32, i32) {
    %c0_i32 = arith.constant 0 : i32
    %c0_i32_0 = arith.constant 0 : i32
    %c0_i32_1 = arith.constant 0 : i32
    return %c0_i32, %c0_i32_0 : i32, i32
  }
  func.func @transform_2(%arg0: i32) -> (i32, i32) {
    %c0_i32 = arith.constant 0 : i32
    %c0_i32_0 = arith.constant 0 : i32
    %c0_i32_1 = arith.constant 0 : i32
    return %c0_i32, %c0_i32_0 : i32, i32
  }
  func.func @transform_3(%arg0: i32) -> (i32, i32) {
    %c0_i32 = arith.constant 0 : i32
    %c0_i32_0 = arith.constant 0 : i32
    return %arg0, %c0_i32 : i32, i32
  }
}

module attributes {stable_mosaic.version = 11 : i64} {
  func.func @_matmul_bias_kernel(%arg0: i32, %arg1: memref<128x32xbf16, #tpu.memory_space<vmem>>, %arg2: memref<32x64xbf16, #tpu.memory_space<vmem>>, %arg3: memref<1x64xf32, #tpu.memory_space<vmem>>, %arg4: memref<128x64xf32, #tpu.memory_space<vmem>>) attributes {dimension_semantics = [#tpu.dimension_semantics<parallel>], iteration_bounds = array<i64: 1>, scalar_prefetch = 0 : i64, scratch_operands = 0 : i64, tpu.core_type = #tpu.core_type<tc>, window_params = [{transform_indices = @transform_0, window_bounds = array<i64: 128, 32>}, {pipeline_mode = #tpu.pipeline_mode<synchronous>, transform_indices = @transform_1, window_bounds = array<i64: 32, 64>}, {pipeline_mode = #tpu.pipeline_mode<synchronous>, transform_indices = @transform_2, window_bounds = array<i64: 1, 64>}, {transform_indices = @transform_3, window_bounds = array<i64: 128, 64>}]} {
    %c0 = arith.constant 0 : index
    %c0_0 = arith.constant 0 : index
    %0 = vector.load %arg1[%c0, %c0_0] : memref<128x32xbf16, #tpu.memory_space<vmem>>, vector<128x32xbf16>
    %c0_1 = arith.constant 0 : index
    %c0_2 = arith.constant 0 : index
    %1 = vector.load %arg2[%c0_1, %c0_2] : memref<32x64xbf16, #tpu.memory_space<vmem>>, vector<32x64xbf16>
    %cst = arith.constant dense<0.000000e+00> : vector<128x64xf32>
    %2 = tpu.matmul %0, %1, %cst {dimension_numbers = #tpu.dot_dimension_numbers<[1], [0], [0], [1], [0, 0, 1, 1], [], []>} : vector<128x32xbf16>, vector<32x64xbf16>, vector<128x64xf32> -> vector<128x64xf32>
    %c0_3 = arith.constant 0 : index
    %c0_4 = arith.constant 0 : index
    %3 = vector.load %arg3[%c0_3, %c0_4] : memref<1x64xf32, #tpu.memory_space<vmem>>, vector<1x64xf32>
    %4 = vector.broadcast %3 : vector<1x64xf32> to vector<128x64xf32>
    %5 = arith.addf %2, %4 : vector<128x64xf32>
    %c0_5 = arith.constant 0 : index
    %c0_6 = arith.constant 0 : index
    %6 = vector.load %arg4[%c0_5, %c0_6] : memref<128x64xf32, #tpu.memory_space<vmem>>, vector<128x64xf32>
    tpu.vector_store %arg4[%c0_5, %c0_6], %5 {strides = array<i32>} : memref<128x64xf32, #tpu.memory_space<vmem>>, vector<128x64xf32>,
    return
  }
  func.func @transform_0(%arg0: i32) -> (i32, i32) {
    %c0_i32 = arith.constant 0 : i32
    %c0_i32_0 = arith.constant 0 : i32
    return %arg0, %c0_i32 : i32, i32
  }
  func.func @transform_1(%arg0: i32) -> (i32, i32) {
    %c0_i32 = arith.constant 0 : i32
    %c0_i32_0 = arith.constant 0 : i32
    %c0_i32_1 = arith.constant 0 : i32
    return %c0_i32, %c0_i32_0 : i32, i32
  }
  func.func @transform_2(%arg0: i32) -> (i32, i32) {
    %c0_i32 = arith.constant 0 : i32
    %c0_i32_0 = arith.constant 0 : i32
    %c0_i32_1 = arith.constant 0 : i32
    return %c0_i32, %c0_i32_0 : i32, i32
  }
  func.func @transform_3(%arg0: i32) -> (i32, i32) {
    %c0_i32 = arith.constant 0 : i32
    %c0_i32_0 = arith.constant 0 : i32
    return %arg0, %c0_i32 : i32, i32
  }
}

module attributes {stable_mosaic.version = 11 : i64} {
  func.func @_matmul_bias_kernel(%arg0: i32, %arg1: memref<128x64xbf16, #tpu.memory_space<vmem>>, %arg2: memref<64x384xbf16, #tpu.memory_space<vmem>>, %arg3: memref<1x384xf32, #tpu.memory_space<vmem>>, %arg4: memref<128x384xf32, #tpu.memory_space<vmem>>) attributes {dimension_semantics = [#tpu.dimension_semantics<parallel>], iteration_bounds = array<i64: 1>, scalar_prefetch = 0 : i64, scratch_operands = 0 : i64, tpu.core_type = #tpu.core_type<tc>, window_params = [{transform_indices = @transform_0, window_bounds = array<i64: 128, 64>}, {pipeline_mode = #tpu.pipeline_mode<synchronous>, transform_indices = @transform_1, window_bounds = array<i64: 64, 384>}, {pipeline_mode = #tpu.pipeline_mode<synchronous>, transform_indices = @transform_2, window_bounds = array<i64: 1, 384>}, {transform_indices = @transform_3, window_bounds = array<i64: 128, 384>}]} {
    %c0 = arith.constant 0 : index
    %c0_0 = arith.constant 0 : index
    %0 = vector.load %arg1[%c0, %c0_0] : memref<128x64xbf16, #tpu.memory_space<vmem>>, vector<128x64xbf16>
    %c0_1 = arith.constant 0 : index
    %c0_2 = arith.constant 0 : index
    %1 = vector.load %arg2[%c0_1, %c0_2] : memref<64x384xbf16, #tpu.memory_space<vmem>>, vector<64x384xbf16>
    %cst = arith.constant dense<0.000000e+00> : vector<128x384xf32>
    %2 = tpu.matmul %0, %1, %cst {dimension_numbers = #tpu.dot_dimension_numbers<[1], [0], [0], [1], [0, 0, 1, 1], [], []>} : vector<128x64xbf16>, vector<64x384xbf16>, vector<128x384xf32> -> vector<128x384xf32>
    %c0_3 = arith.constant 0 : index
    %c0_4 = arith.constant 0 : index
    %3 = vector.load %arg3[%c0_3, %c0_4] : memref<1x384xf32, #tpu.memory_space<vmem>>, vector<1x384xf32>
    %4 = vector.broadcast %3 : vector<1x384xf32> to vector<128x384xf32>
    %5 = arith.addf %2, %4 : vector<128x384xf32>
    %cst_5 = arith.constant 2.500000e-01 : f32
    %6 = vector.broadcast %cst_5 : f32 to vector<128x384xf32>
    %7 = arith.mulf %5, %6 : vector<128x384xf32>
    %c0_6 = arith.constant 0 : index
    %c0_7 = arith.constant 0 : index
    %8 = vector.load %arg4[%c0_6, %c0_7] : memref<128x384xf32, #tpu.memory_space<vmem>>, vector<128x384xf32>
    tpu.vector_store %arg4[%c0_6, %c0_7], %7 {strides = array<i32>} : memref<128x384xf32, #tpu.memory_space<vmem>>, vector<128x384xf32>,
    return
  }
  func.func @transform_0(%arg0: i32) -> (i32, i32) {
    %c0_i32 = arith.constant 0 : i32
    %c0_i32_0 = arith.constant 0 : i32
    return %arg0, %c0_i32 : i32, i32
  }
  func.func @transform_1(%arg0: i32) -> (i32, i32) {
    %c0_i32 = arith.constant 0 : i32
    %c0_i32_0 = arith.constant 0 : i32
    %c0_i32_1 = arith.constant 0 : i32
    return %c0_i32, %c0_i32_0 : i32, i32
  }
  func.func @transform_2(%arg0: i32) -> (i32, i32) {
    %c0_i32 = arith.constant 0 : i32
    %c0_i32_0 = arith.constant 0 : i32
    %c0_i32_1 = arith.constant 0 : i32
    return %c0_i32, %c0_i32_0 : i32, i32
  }
  func.func @transform_3(%arg0: i32) -> (i32, i32) {
    %c0_i32 = arith.constant 0 : i32
    %c0_i32_0 = arith.constant 0 : i32
    return %arg0, %c0_i32 : i32, i32
  }
}

module attributes {stable_mosaic.version = 11 : i64} {
  func.func @kernel(%arg0: i32, %arg1: memref<16x3xi32, #tpu.memory_space<smem>>, %arg2: memref<2x8x8x384xf32, #tpu.memory_space<any>>, %arg3: memref<1x1x1x384xf32, #tpu.memory_space<vmem>>, %arg4: memref<1x1x1x384xf32, #tpu.memory_space<vmem>>, %arg5: memref<1x!tpu.dma_semaphore, #tpu.memory_space<semaphore_mem>>) attributes {dimension_semantics = [#tpu.dimension_semantics<parallel>], iteration_bounds = array<i64: 16>, scalar_prefetch = 1 : i64, scratch_operands = 2 : i64, tpu.core_type = #tpu.core_type<tc>, window_params = [{}, {transform_indices = @transform_1, window_bounds = array<i64: 1, 1, 1, 384>}]} {
    %c1_i32 = arith.constant 1 : i32
    %0 = arith.muli %arg0, %c1_i32 : i32
    %c0_i32 = arith.constant 0 : i32
    %1 = arith.addi %0, %c0_i32 : i32
    %2 = arith.index_cast %1 : i32 to index
    %c0 = arith.constant 0 : index
    %3 = memref.load %arg1[%2, %c0] : memref<16x3xi32, #tpu.memory_space<smem>>
    %c1_i32_0 = arith.constant 1 : i32
    %4 = arith.muli %arg0, %c1_i32_0 : i32
    %c0_i32_1 = arith.constant 0 : i32
    %5 = arith.addi %4, %c0_i32_1 : i32
    %6 = arith.index_cast %5 : i32 to index
    %c1 = arith.constant 1 : index
    %7 = memref.load %arg1[%6, %c1] : memref<16x3xi32, #tpu.memory_space<smem>>
    %c1_i32_2 = arith.constant 1 : i32
    %8 = arith.muli %arg0, %c1_i32_2 : i32
    %c0_i32_3 = arith.constant 0 : i32
    %9 = arith.addi %8, %c0_i32_3 : i32
    %10 = arith.index_cast %9 : i32 to index
    %c2 = arith.constant 2 : index
    %11 = memref.load %arg1[%10, %c2] : memref<16x3xi32, #tpu.memory_space<smem>>
    %c0_i32_4 = arith.constant 0 : i32
    %12 = arith.subi %11, %c0_i32_4 : i32
    %c0_i32_5 = arith.constant 0 : i32
    %13 = arith.subi %7, %c0_i32_5 : i32
    %c0_i32_6 = arith.constant 0 : i32
    %c0_i32_7 = arith.constant 0 : i32
    %14 = tpu.memref_slice %arg2[%3, %12, %13, %c0_i32_7] : memref<2x8x8x384xf32, #tpu.memory_space<any>> -> memref<1x1x1x384xf32, #tpu.memory_space<any>>
    %c0_i32_8 = arith.constant 0 : i32
    %c0_i32_9 = arith.constant 0 : i32
    %c0_i32_10 = arith.constant 0 : i32
    %c0_i32_11 = arith.constant 0 : i32
    %15 = tpu.memref_slice %arg4[%c0_i32_8, %c0_i32_9, %c0_i32_10, %c0_i32_11] : memref<1x1x1x384xf32, #tpu.memory_space<vmem>> -> memref<1x1x1x384xf32, #tpu.memory_space<vmem>>
    %16 = tpu.memref_slice %arg5[%c0_i32_6] : memref<1x!tpu.dma_semaphore, #tpu.memory_space<semaphore_mem>> -> memref<1x!tpu.dma_semaphore, #tpu.memory_space<semaphore_mem>>
    %17 = tpu.memref_squeeze %16 : memref<1x!tpu.dma_semaphore, #tpu.memory_space<semaphore_mem>> -> memref<!tpu.dma_semaphore, #tpu.memory_space<semaphore_mem>>
    tpu.enqueue_dma source(%14 : memref<1x1x1x384xf32, #tpu.memory_space<any>>) target(%15 : memref<1x1x1x384xf32, #tpu.memory_space<vmem>>) target_semaphore(%17 : memref<!tpu.dma_semaphore, #tpu.memory_space<semaphore_mem>>)
    %c0_i32_12 = arith.constant 0 : i32
    %c0_i32_13 = arith.constant 0 : i32
    %18 = tpu.memref_slice %arg2[%3, %12, %13, %c0_i32_13] : memref<2x8x8x384xf32, #tpu.memory_space<any>> -> memref<1x1x1x384xf32, #tpu.memory_space<any>>
    %c0_i32_14 = arith.constant 0 : i32
    %c0_i32_15 = arith.constant 0 : i32
    %c0_i32_16 = arith.constant 0 : i32
    %c0_i32_17 = arith.constant 0 : i32
    %19 = tpu.memref_slice %arg4[%c0_i32_14, %c0_i32_15, %c0_i32_16, %c0_i32_17] : memref<1x1x1x384xf32, #tpu.memory_space<vmem>> -> memref<1x1x1x384xf32, #tpu.memory_space<vmem>>
    %20 = tpu.memref_slice %arg5[%c0_i32_12] : memref<1x!tpu.dma_semaphore, #tpu.memory_space<semaphore_mem>> -> memref<1x!tpu.dma_semaphore, #tpu.memory_space<semaphore_mem>>
    %21 = tpu.memref_squeeze %20 : memref<1x!tpu.dma_semaphore, #tpu.memory_space<semaphore_mem>> -> memref<!tpu.dma_semaphore, #tpu.memory_space<semaphore_mem>>
    tpu.wait_dma2 semaphore(%21 : memref<!tpu.dma_semaphore, #tpu.memory_space<semaphore_mem>>) src(%18 : memref<1x1x1x384xf32, #tpu.memory_space<any>>) dst(%19 : memref<1x1x1x384xf32, #tpu.memory_space<vmem>>)
    %c0_18 = arith.constant 0 : index
    %c0_19 = arith.constant 0 : index
    %c0_20 = arith.constant 0 : index
    %c0_21 = arith.constant 0 : index
    %22 = vector.load %arg4[%c0_18, %c0_19, %c0_20, %c0_21] : memref<1x1x1x384xf32, #tpu.memory_space<vmem>>, vector<1x1x1x384xf32>
    %c0_22 = arith.constant 0 : index
    %c0_23 = arith.constant 0 : index
    %c0_24 = arith.constant 0 : index
    %c0_25 = arith.constant 0 : index
    %23 = vector.load %arg3[%c0_22, %c0_23, %c0_24, %c0_25] : memref<1x1x1x384xf32, #tpu.memory_space<vmem>>, vector<1x1x1x384xf32>
    tpu.vector_store %arg3[%c0_22, %c0_23, %c0_24, %c0_25], %22 {strides = array<i32>} : memref<1x1x1x384xf32, #tpu.memory_space<vmem>>, vector<1x1x1x384xf32>,
    return
  }
  func.func @transform_1(%arg0: i32, %arg1: memref<16x3xi32, #tpu.memory_space<smem>>) -> (i32, i32, i32, i32) {
    %c0_i32 = arith.constant 0 : i32
    %c0_i32_0 = arith.constant 0 : i32
    %c0_i32_1 = arith.constant 0 : i32
    %c0_i32_2 = arith.constant 0 : i32
    return %arg0, %c0_i32, %c0_i32_0, %c0_i32_1 : i32, i32, i32, i32
  }
}

module attributes {stable_mosaic.version = 11 : i64} {
  func.func @_matmul_bias_kernel(%arg0: i32, %arg1: memref<256x147xbf16, #tpu.memory_space<vmem>>, %arg2: memref<147x32xbf16, #tpu.memory_space<vmem>>, %arg3: memref<1x32xf32, #tpu.memory_space<vmem>>, %arg4: memref<256x32xf32, #tpu.memory_space<vmem>>) attributes {dimension_semantics = [#tpu.dimension_semantics<parallel>], iteration_bounds = array<i64: 2>, scalar_prefetch = 0 : i64, scratch_operands = 0 : i64, tpu.core_type = #tpu.core_type<tc>, window_params = [{transform_indices = @transform_0, window_bounds = array<i64: 256, 147>}, {pipeline_mode = #tpu.pipeline_mode<synchronous>, transform_indices = @transform_1, window_bounds = array<i64: 147, 32>}, {pipeline_mode = #tpu.pipeline_mode<synchronous>, transform_indices = @transform_2, window_bounds = array<i64: 1, 32>}, {transform_indices = @transform_3, window_bounds = array<i64: 256, 32>}]} {
    %c0 = arith.constant 0 : index
    %c0_0 = arith.constant 0 : index
    %0 = vector.load %arg1[%c0, %c0_0] : memref<256x147xbf16, #tpu.memory_space<vmem>>, vector<256x147xbf16>
    %c0_1 = arith.constant 0 : index
    %c0_2 = arith.constant 0 : index
    %1 = vector.load %arg2[%c0_1, %c0_2] : memref<147x32xbf16, #tpu.memory_space<vmem>>, vector<147x32xbf16>
    %cst = arith.constant dense<0.000000e+00> : vector<256x32xf32>
    %2 = tpu.matmul %0, %1, %cst {dimension_numbers = #tpu.dot_dimension_numbers<[1], [0], [0], [1], [0, 0, 1, 1], [], []>} : vector<256x147xbf16>, vector<147x32xbf16>, vector<256x32xf32> -> vector<256x32xf32>
    %c0_3 = arith.constant 0 : index
    %c0_4 = arith.constant 0 : index
    %3 = vector.load %arg3[%c0_3, %c0_4] : memref<1x32xf32, #tpu.memory_space<vmem>>, vector<1x32xf32>
    %4 = vector.broadcast %3 : vector<1x32xf32> to vector<256x32xf32>
    %5 = arith.addf %2, %4 : vector<256x32xf32>
    %c0_5 = arith.constant 0 : index
    %c0_6 = arith.constant 0 : index
    %6 = vector.load %arg4[%c0_5, %c0_6] : memref<256x32xf32, #tpu.memory_space<vmem>>, vector<256x32xf32>
    tpu.vector_store %arg4[%c0_5, %c0_6], %5 {strides = array<i32>} : memref<256x32xf32, #tpu.memory_space<vmem>>, vector<256x32xf32>,
    return
  }
  func.func @transform_0(%arg0: i32) -> (i32, i32) {
    %c0_i32 = arith.constant 0 : i32
    %c0_i32_0 = arith.constant 0 : i32
    return %arg0, %c0_i32 : i32, i32
  }
  func.func @transform_1(%arg0: i32) -> (i32, i32) {
    %c0_i32 = arith.constant 0 : i32
    %c0_i32_0 = arith.constant 0 : i32
    %c0_i32_1 = arith.constant 0 : i32
    return %c0_i32, %c0_i32_0 : i32, i32
  }
  func.func @transform_2(%arg0: i32) -> (i32, i32) {
    %c0_i32 = arith.constant 0 : i32
    %c0_i32_0 = arith.constant 0 : i32
    %c0_i32_1 = arith.constant 0 : i32
    return %c0_i32, %c0_i32_0 : i32, i32
  }
  func.func @transform_3(%arg0: i32) -> (i32, i32) {
    %c0_i32 = arith.constant 0 : i32
    %c0_i32_0 = arith.constant 0 : i32
    return %arg0, %c0_i32 : i32, i32
  }
}

module attributes {stable_mosaic.version = 11 : i64} {
  func.func @_matmul_bias_kernel(%arg0: i32, %arg1: memref<256x288xbf16, #tpu.memory_space<vmem>>, %arg2: memref<288x32xbf16, #tpu.memory_space<vmem>>, %arg3: memref<1x32xf32, #tpu.memory_space<vmem>>, %arg4: memref<256x32xf32, #tpu.memory_space<vmem>>) attributes {dimension_semantics = [#tpu.dimension_semantics<parallel>], iteration_bounds = array<i64: 2>, scalar_prefetch = 0 : i64, scratch_operands = 0 : i64, tpu.core_type = #tpu.core_type<tc>, window_params = [{transform_indices = @transform_0, window_bounds = array<i64: 256, 288>}, {pipeline_mode = #tpu.pipeline_mode<synchronous>, transform_indices = @transform_1, window_bounds = array<i64: 288, 32>}, {pipeline_mode = #tpu.pipeline_mode<synchronous>, transform_indices = @transform_2, window_bounds = array<i64: 1, 32>}, {transform_indices = @transform_3, window_bounds = array<i64: 256, 32>}]} {
    %c0 = arith.constant 0 : index
    %c0_0 = arith.constant 0 : index
    %0 = vector.load %arg1[%c0, %c0_0] : memref<256x288xbf16, #tpu.memory_space<vmem>>, vector<256x288xbf16>
    %c0_1 = arith.constant 0 : index
    %c0_2 = arith.constant 0 : index
    %1 = vector.load %arg2[%c0_1, %c0_2] : memref<288x32xbf16, #tpu.memory_space<vmem>>, vector<288x32xbf16>
    %cst = arith.constant dense<0.000000e+00> : vector<256x32xf32>
    %2 = tpu.matmul %0, %1, %cst {dimension_numbers = #tpu.dot_dimension_numbers<[1], [0], [0], [1], [0, 0, 1, 1], [], []>} : vector<256x288xbf16>, vector<288x32xbf16>, vector<256x32xf32> -> vector<256x32xf32>
    %c0_3 = arith.constant 0 : index
    %c0_4 = arith.constant 0 : index
    %3 = vector.load %arg3[%c0_3, %c0_4] : memref<1x32xf32, #tpu.memory_space<vmem>>, vector<1x32xf32>
    %4 = vector.broadcast %3 : vector<1x32xf32> to vector<256x32xf32>
    %5 = arith.addf %2, %4 : vector<256x32xf32>
    %c0_5 = arith.constant 0 : index
    %c0_6 = arith.constant 0 : index
    %6 = vector.load %arg4[%c0_5, %c0_6] : memref<256x32xf32, #tpu.memory_space<vmem>>, vector<256x32xf32>
    tpu.vector_store %arg4[%c0_5, %c0_6], %5 {strides = array<i32>} : memref<256x32xf32, #tpu.memory_space<vmem>>, vector<256x32xf32>,
    return
  }
  func.func @transform_0(%arg0: i32) -> (i32, i32) {
    %c0_i32 = arith.constant 0 : i32
    %c0_i32_0 = arith.constant 0 : i32
    return %arg0, %c0_i32 : i32, i32
  }
  func.func @transform_1(%arg0: i32) -> (i32, i32) {
    %c0_i32 = arith.constant 0 : i32
    %c0_i32_0 = arith.constant 0 : i32
    %c0_i32_1 = arith.constant 0 : i32
    return %c0_i32, %c0_i32_0 : i32, i32
  }
  func.func @transform_2(%arg0: i32) -> (i32, i32) {
    %c0_i32 = arith.constant 0 : i32
    %c0_i32_0 = arith.constant 0 : i32
    %c0_i32_1 = arith.constant 0 : i32
    return %c0_i32, %c0_i32_0 : i32, i32
  }
  func.func @transform_3(%arg0: i32) -> (i32, i32) {
    %c0_i32 = arith.constant 0 : i32
    %c0_i32_0 = arith.constant 0 : i32
    return %arg0, %c0_i32 : i32, i32
  }
}

module attributes {stable_mosaic.version = 11 : i64} {
  func.func @_in_single_kernel(%arg0: i32, %arg1: memref<1x256x32xf32, #tpu.memory_space<vmem>>, %arg2: memref<1x256x32xf32, #tpu.memory_space<vmem>>) attributes {dimension_semantics = [#tpu.dimension_semantics<parallel>], iteration_bounds = array<i64: 2>, scalar_prefetch = 0 : i64, scratch_operands = 0 : i64, tpu.core_type = #tpu.core_type<tc>, window_params = [{transform_indices = @transform_0, window_bounds = array<i64: 1, 256, 32>}, {transform_indices = @transform_1, window_bounds = array<i64: 1, 256, 32>}]} {
    %c0 = arith.constant 0 : index
    %c0_0 = arith.constant 0 : index
    %c0_1 = arith.constant 0 : index
    %0 = vector.load %arg1[%c0, %c0_0, %c0_1] : memref<1x256x32xf32, #tpu.memory_space<vmem>>, vector<1x256x32xf32>
    %1 = vector.shape_cast %0 : vector<1x256x32xf32> to vector<256x32xf32>
    %cst = arith.constant dense<0.000000e+00> : vector<32xf32>
    %2 = vector.multi_reduction <add>, %1, %cst [0] : vector<256x32xf32> to vector<32xf32>
    %3 = vector.shape_cast %2 : vector<32xf32> to vector<1x32xf32>
    %cst_2 = arith.constant 2.560000e+02 : f32
    %4 = vector.broadcast %cst_2 : f32 to vector<1x32xf32>
    %5 = arith.divf %3, %4 : vector<1x32xf32>
    %6 = vector.broadcast %5 : vector<1x32xf32> to vector<256x32xf32>
    %7 = arith.subf %1, %6 : vector<256x32xf32>
    %8 = arith.mulf %7, %7 : vector<256x32xf32>
    %cst_3 = arith.constant dense<0.000000e+00> : vector<32xf32>
    %9 = vector.multi_reduction <add>, %8, %cst_3 [0] : vector<256x32xf32> to vector<32xf32>
    %10 = vector.shape_cast %9 : vector<32xf32> to vector<1x32xf32>
    %cst_4 = arith.constant 2.560000e+02 : f32
    %11 = vector.broadcast %cst_4 : f32 to vector<1x32xf32>
    %12 = arith.divf %10, %11 : vector<1x32xf32>
    %cst_5 = arith.constant 9.99999974E-6 : f32
    %13 = vector.broadcast %cst_5 : f32 to vector<1x32xf32>
    %14 = arith.addf %12, %13 : vector<1x32xf32>
    %15 = math.rsqrt %14 : vector<1x32xf32>
    %16 = vector.broadcast %15 : vector<1x32xf32> to vector<256x32xf32>
    %17 = arith.mulf %7, %16 : vector<256x32xf32>
    %cst_6 = arith.constant 0.000000e+00 : f32
    %18 = vector.broadcast %cst_6 : f32 to vector<256x32xf32>
    %19 = arith.maximumf %17, %18 : vector<256x32xf32>
    %c0_7 = arith.constant 0 : index
    %c0_8 = arith.constant 0 : index
    %c0_9 = arith.constant 0 : index
    %20 = vector.load %arg2[%c0_7, %c0_8, %c0_9] : memref<1x256x32xf32, #tpu.memory_space<vmem>>, vector<1x256x32xf32>
    %21 = vector.shape_cast %20 : vector<1x256x32xf32> to vector<256x32xf32>
    %22 = vector.shape_cast %19 : vector<256x32xf32> to vector<1x256x32xf32>
    tpu.vector_store %arg2[%c0_7, %c0_8, %c0_9], %22 {strides = array<i32>} : memref<1x256x32xf32, #tpu.memory_space<vmem>>, vector<1x256x32xf32>,
    return
  }
  func.func @transform_0(%arg0: i32) -> (i32, i32, i32) {
    %c0_i32 = arith.constant 0 : i32
    %c0_i32_0 = arith.constant 0 : i32
    %c0_i32_1 = arith.constant 0 : i32
    return %arg0, %c0_i32, %c0_i32_0 : i32, i32, i32
  }
  func.func @transform_1(%arg0: i32) -> (i32, i32, i32) {
    %c0_i32 = arith.constant 0 : i32
    %c0_i32_0 = arith.constant 0 : i32
    %c0_i32_1 = arith.constant 0 : i32
    return %arg0, %c0_i32, %c0_i32_0 : i32, i32, i32
  }
}

module attributes {stable_mosaic.version = 11 : i64} {
  func.func @_matmul_bias_kernel(%arg0: i32, %arg1: memref<128x288xbf16, #tpu.memory_space<vmem>>, %arg2: memref<288x64xbf16, #tpu.memory_space<vmem>>, %arg3: memref<1x64xf32, #tpu.memory_space<vmem>>, %arg4: memref<128x64xf32, #tpu.memory_space<vmem>>) attributes {dimension_semantics = [#tpu.dimension_semantics<parallel>], iteration_bounds = array<i64: 1>, scalar_prefetch = 0 : i64, scratch_operands = 0 : i64, tpu.core_type = #tpu.core_type<tc>, window_params = [{transform_indices = @transform_0, window_bounds = array<i64: 128, 288>}, {pipeline_mode = #tpu.pipeline_mode<synchronous>, transform_indices = @transform_1, window_bounds = array<i64: 288, 64>}, {pipeline_mode = #tpu.pipeline_mode<synchronous>, transform_indices = @transform_2, window_bounds = array<i64: 1, 64>}, {transform_indices = @transform_3, window_bounds = array<i64: 128, 64>}]} {
    %c0 = arith.constant 0 : index
    %c0_0 = arith.constant 0 : index
    %0 = vector.load %arg1[%c0, %c0_0] : memref<128x288xbf16, #tpu.memory_space<vmem>>, vector<128x288xbf16>
    %c0_1 = arith.constant 0 : index
    %c0_2 = arith.constant 0 : index
    %1 = vector.load %arg2[%c0_1, %c0_2] : memref<288x64xbf16, #tpu.memory_space<vmem>>, vector<288x64xbf16>
    %cst = arith.constant dense<0.000000e+00> : vector<128x64xf32>
    %2 = tpu.matmul %0, %1, %cst {dimension_numbers = #tpu.dot_dimension_numbers<[1], [0], [0], [1], [0, 0, 1, 1], [], []>} : vector<128x288xbf16>, vector<288x64xbf16>, vector<128x64xf32> -> vector<128x64xf32>
    %c0_3 = arith.constant 0 : index
    %c0_4 = arith.constant 0 : index
    %3 = vector.load %arg3[%c0_3, %c0_4] : memref<1x64xf32, #tpu.memory_space<vmem>>, vector<1x64xf32>
    %4 = vector.broadcast %3 : vector<1x64xf32> to vector<128x64xf32>
    %5 = arith.addf %2, %4 : vector<128x64xf32>
    %c0_5 = arith.constant 0 : index
    %c0_6 = arith.constant 0 : index
    %6 = vector.load %arg4[%c0_5, %c0_6] : memref<128x64xf32, #tpu.memory_space<vmem>>, vector<128x64xf32>
    tpu.vector_store %arg4[%c0_5, %c0_6], %5 {strides = array<i32>} : memref<128x64xf32, #tpu.memory_space<vmem>>, vector<128x64xf32>,
    return
  }
  func.func @transform_0(%arg0: i32) -> (i32, i32) {
    %c0_i32 = arith.constant 0 : i32
    %c0_i32_0 = arith.constant 0 : i32
    return %arg0, %c0_i32 : i32, i32
  }
  func.func @transform_1(%arg0: i32) -> (i32, i32) {
    %c0_i32 = arith.constant 0 : i32
    %c0_i32_0 = arith.constant 0 : i32
    %c0_i32_1 = arith.constant 0 : i32
    return %c0_i32, %c0_i32_0 : i32, i32
  }
  func.func @transform_2(%arg0: i32) -> (i32, i32) {
    %c0_i32 = arith.constant 0 : i32
    %c0_i32_0 = arith.constant 0 : i32
    %c0_i32_1 = arith.constant 0 : i32
    return %c0_i32, %c0_i32_0 : i32, i32
  }
  func.func @transform_3(%arg0: i32) -> (i32, i32) {
    %c0_i32 = arith.constant 0 : i32
    %c0_i32_0 = arith.constant 0 : i32
    return %arg0, %c0_i32 : i32, i32
  }
}

module attributes {stable_mosaic.version = 11 : i64} {
  func.func @_in_single_kernel(%arg0: i32, %arg1: memref<1x64x64xf32, #tpu.memory_space<vmem>>, %arg2: memref<1x64x64xf32, #tpu.memory_space<vmem>>) attributes {dimension_semantics = [#tpu.dimension_semantics<parallel>], iteration_bounds = array<i64: 2>, scalar_prefetch = 0 : i64, scratch_operands = 0 : i64, tpu.core_type = #tpu.core_type<tc>, window_params = [{transform_indices = @transform_0, window_bounds = array<i64: 1, 64, 64>}, {transform_indices = @transform_1, window_bounds = array<i64: 1, 64, 64>}]} {
    %c0 = arith.constant 0 : index
    %c0_0 = arith.constant 0 : index
    %c0_1 = arith.constant 0 : index
    %0 = vector.load %arg1[%c0, %c0_0, %c0_1] : memref<1x64x64xf32, #tpu.memory_space<vmem>>, vector<1x64x64xf32>
    %1 = vector.shape_cast %0 : vector<1x64x64xf32> to vector<64x64xf32>
    %cst = arith.constant dense<0.000000e+00> : vector<64xf32>
    %2 = vector.multi_reduction <add>, %1, %cst [0] : vector<64x64xf32> to vector<64xf32>
    %3 = vector.shape_cast %2 : vector<64xf32> to vector<1x64xf32>
    %cst_2 = arith.constant 6.400000e+01 : f32
    %4 = vector.broadcast %cst_2 : f32 to vector<1x64xf32>
    %5 = arith.divf %3, %4 : vector<1x64xf32>
    %6 = vector.broadcast %5 : vector<1x64xf32> to vector<64x64xf32>
    %7 = arith.subf %1, %6 : vector<64x64xf32>
    %8 = arith.mulf %7, %7 : vector<64x64xf32>
    %cst_3 = arith.constant dense<0.000000e+00> : vector<64xf32>
    %9 = vector.multi_reduction <add>, %8, %cst_3 [0] : vector<64x64xf32> to vector<64xf32>
    %10 = vector.shape_cast %9 : vector<64xf32> to vector<1x64xf32>
    %cst_4 = arith.constant 6.400000e+01 : f32
    %11 = vector.broadcast %cst_4 : f32 to vector<1x64xf32>
    %12 = arith.divf %10, %11 : vector<1x64xf32>
    %cst_5 = arith.constant 9.99999974E-6 : f32
    %13 = vector.broadcast %cst_5 : f32 to vector<1x64xf32>
    %14 = arith.addf %12, %13 : vector<1x64xf32>
    %15 = math.rsqrt %14 : vector<1x64xf32>
    %16 = vector.broadcast %15 : vector<1x64xf32> to vector<64x64xf32>
    %17 = arith.mulf %7, %16 : vector<64x64xf32>
    %cst_6 = arith.constant 0.000000e+00 : f32
    %18 = vector.broadcast %cst_6 : f32 to vector<64x64xf32>
    %19 = arith.maximumf %17, %18 : vector<64x64xf32>
    %c0_7 = arith.constant 0 : index
    %c0_8 = arith.constant 0 : index
    %c0_9 = arith.constant 0 : index
    %20 = vector.load %arg2[%c0_7, %c0_8, %c0_9] : memref<1x64x64xf32, #tpu.memory_space<vmem>>, vector<1x64x64xf32>
    %21 = vector.shape_cast %20 : vector<1x64x64xf32> to vector<64x64xf32>
    %22 = vector.shape_cast %19 : vector<64x64xf32> to vector<1x64x64xf32>
    tpu.vector_store %arg2[%c0_7, %c0_8, %c0_9], %22 {strides = array<i32>} : memref<1x64x64xf32, #tpu.memory_space<vmem>>, vector<1x64x64xf32>,
    return
  }
  func.func @transform_0(%arg0: i32) -> (i32, i32, i32) {
    %c0_i32 = arith.constant 0 : i32
    %c0_i32_0 = arith.constant 0 : i32
    %c0_i32_1 = arith.constant 0 : i32
    return %arg0, %c0_i32, %c0_i32_0 : i32, i32, i32
  }
  func.func @transform_1(%arg0: i32) -> (i32, i32, i32) {
    %c0_i32 = arith.constant 0 : i32
    %c0_i32_0 = arith.constant 0 : i32
    %c0_i32_1 = arith.constant 0 : i32
    return %arg0, %c0_i32, %c0_i32_0 : i32, i32, i32
  }
}

module attributes {stable_mosaic.version = 11 : i64} {
  func.func @_in_single_kernel(%arg0: i32, %arg1: memref<1x64x64xf32, #tpu.memory_space<vmem>>, %arg2: memref<1x64x64xf32, #tpu.memory_space<vmem>>) attributes {dimension_semantics = [#tpu.dimension_semantics<parallel>], iteration_bounds = array<i64: 2>, scalar_prefetch = 0 : i64, scratch_operands = 0 : i64, tpu.core_type = #tpu.core_type<tc>, window_params = [{transform_indices = @transform_0, window_bounds = array<i64: 1, 64, 64>}, {transform_indices = @transform_1, window_bounds = array<i64: 1, 64, 64>}]} {
    %c0 = arith.constant 0 : index
    %c0_0 = arith.constant 0 : index
    %c0_1 = arith.constant 0 : index
    %0 = vector.load %arg1[%c0, %c0_0, %c0_1] : memref<1x64x64xf32, #tpu.memory_space<vmem>>, vector<1x64x64xf32>
    %1 = vector.shape_cast %0 : vector<1x64x64xf32> to vector<64x64xf32>
    %cst = arith.constant dense<0.000000e+00> : vector<64xf32>
    %2 = vector.multi_reduction <add>, %1, %cst [0] : vector<64x64xf32> to vector<64xf32>
    %3 = vector.shape_cast %2 : vector<64xf32> to vector<1x64xf32>
    %cst_2 = arith.constant 6.400000e+01 : f32
    %4 = vector.broadcast %cst_2 : f32 to vector<1x64xf32>
    %5 = arith.divf %3, %4 : vector<1x64xf32>
    %6 = vector.broadcast %5 : vector<1x64xf32> to vector<64x64xf32>
    %7 = arith.subf %1, %6 : vector<64x64xf32>
    %8 = arith.mulf %7, %7 : vector<64x64xf32>
    %cst_3 = arith.constant dense<0.000000e+00> : vector<64xf32>
    %9 = vector.multi_reduction <add>, %8, %cst_3 [0] : vector<64x64xf32> to vector<64xf32>
    %10 = vector.shape_cast %9 : vector<64xf32> to vector<1x64xf32>
    %cst_4 = arith.constant 6.400000e+01 : f32
    %11 = vector.broadcast %cst_4 : f32 to vector<1x64xf32>
    %12 = arith.divf %10, %11 : vector<1x64xf32>
    %cst_5 = arith.constant 9.99999974E-6 : f32
    %13 = vector.broadcast %cst_5 : f32 to vector<1x64xf32>
    %14 = arith.addf %12, %13 : vector<1x64xf32>
    %15 = math.rsqrt %14 : vector<1x64xf32>
    %16 = vector.broadcast %15 : vector<1x64xf32> to vector<64x64xf32>
    %17 = arith.mulf %7, %16 : vector<64x64xf32>
    %c0_6 = arith.constant 0 : index
    %c0_7 = arith.constant 0 : index
    %c0_8 = arith.constant 0 : index
    %18 = vector.load %arg2[%c0_6, %c0_7, %c0_8] : memref<1x64x64xf32, #tpu.memory_space<vmem>>, vector<1x64x64xf32>
    %19 = vector.shape_cast %18 : vector<1x64x64xf32> to vector<64x64xf32>
    %20 = vector.shape_cast %17 : vector<64x64xf32> to vector<1x64x64xf32>
    tpu.vector_store %arg2[%c0_6, %c0_7, %c0_8], %20 {strides = array<i32>} : memref<1x64x64xf32, #tpu.memory_space<vmem>>, vector<1x64x64xf32>,
    return
  }
  func.func @transform_0(%arg0: i32) -> (i32, i32, i32) {
    %c0_i32 = arith.constant 0 : i32
    %c0_i32_0 = arith.constant 0 : i32
    %c0_i32_1 = arith.constant 0 : i32
    return %arg0, %c0_i32, %c0_i32_0 : i32, i32, i32
  }
  func.func @transform_1(%arg0: i32) -> (i32, i32, i32) {
    %c0_i32 = arith.constant 0 : i32
    %c0_i32_0 = arith.constant 0 : i32
    %c0_i32_1 = arith.constant 0 : i32
    return %arg0, %c0_i32, %c0_i32_0 : i32, i32, i32
  }
}

module attributes {stable_mosaic.version = 11 : i64} {
  func.func @_matmul_bias_kernel(%arg0: i32, %arg1: memref<128x576xbf16, #tpu.memory_space<vmem>>, %arg2: memref<576x64xbf16, #tpu.memory_space<vmem>>, %arg3: memref<1x64xf32, #tpu.memory_space<vmem>>, %arg4: memref<128x64xf32, #tpu.memory_space<vmem>>) attributes {dimension_semantics = [#tpu.dimension_semantics<parallel>], iteration_bounds = array<i64: 1>, scalar_prefetch = 0 : i64, scratch_operands = 0 : i64, tpu.core_type = #tpu.core_type<tc>, window_params = [{transform_indices = @transform_0, window_bounds = array<i64: 128, 576>}, {pipeline_mode = #tpu.pipeline_mode<synchronous>, transform_indices = @transform_1, window_bounds = array<i64: 576, 64>}, {pipeline_mode = #tpu.pipeline_mode<synchronous>, transform_indices = @transform_2, window_bounds = array<i64: 1, 64>}, {transform_indices = @transform_3, window_bounds = array<i64: 128, 64>}]} {
    %c0 = arith.constant 0 : index
    %c0_0 = arith.constant 0 : index
    %0 = vector.load %arg1[%c0, %c0_0] : memref<128x576xbf16, #tpu.memory_space<vmem>>, vector<128x576xbf16>
    %c0_1 = arith.constant 0 : index
    %c0_2 = arith.constant 0 : index
    %1 = vector.load %arg2[%c0_1, %c0_2] : memref<576x64xbf16, #tpu.memory_space<vmem>>, vector<576x64xbf16>
    %cst = arith.constant dense<0.000000e+00> : vector<128x64xf32>
    %2 = tpu.matmul %0, %1, %cst {dimension_numbers = #tpu.dot_dimension_numbers<[1], [0], [0], [1], [0, 0, 1, 1], [], []>} : vector<128x576xbf16>, vector<576x64xbf16>, vector<128x64xf32> -> vector<128x64xf32>
    %c0_3 = arith.constant 0 : index
    %c0_4 = arith.constant 0 : index
    %3 = vector.load %arg3[%c0_3, %c0_4] : memref<1x64xf32, #tpu.memory_space<vmem>>, vector<1x64xf32>
    %4 = vector.broadcast %3 : vector<1x64xf32> to vector<128x64xf32>
    %5 = arith.addf %2, %4 : vector<128x64xf32>
    %c0_5 = arith.constant 0 : index
    %c0_6 = arith.constant 0 : index
    %6 = vector.load %arg4[%c0_5, %c0_6] : memref<128x64xf32, #tpu.memory_space<vmem>>, vector<128x64xf32>
    tpu.vector_store %arg4[%c0_5, %c0_6], %5 {strides = array<i32>} : memref<128x64xf32, #tpu.memory_space<vmem>>, vector<128x64xf32>,
    return
  }
  func.func @transform_0(%arg0: i32) -> (i32, i32) {
    %c0_i32 = arith.constant 0 : i32
    %c0_i32_0 = arith.constant 0 : i32
    return %arg0, %c0_i32 : i32, i32
  }
  func.func @transform_1(%arg0: i32) -> (i32, i32) {
    %c0_i32 = arith.constant 0 : i32
    %c0_i32_0 = arith.constant 0 : i32
    %c0_i32_1 = arith.constant 0 : i32
    return %c0_i32, %c0_i32_0 : i32, i32
  }
  func.func @transform_2(%arg0: i32) -> (i32, i32) {
    %c0_i32 = arith.constant 0 : i32
    %c0_i32_0 = arith.constant 0 : i32
    %c0_i32_1 = arith.constant 0 : i32
    return %c0_i32, %c0_i32_0 : i32, i32
  }
  func.func @transform_3(%arg0: i32) -> (i32, i32) {
    %c0_i32 = arith.constant 0 : i32
    %c0_i32_0 = arith.constant 0 : i32
    return %arg0, %c0_i32 : i32, i32
  }
}

module attributes {stable_mosaic.version = 11 : i64} {
  func.func @_matmul_bias_kernel(%arg0: i32, %arg1: memref<128x64xbf16, #tpu.memory_space<vmem>>, %arg2: memref<64x128xbf16, #tpu.memory_space<vmem>>, %arg3: memref<1x128xf32, #tpu.memory_space<vmem>>, %arg4: memref<128x128xf32, #tpu.memory_space<vmem>>) attributes {dimension_semantics = [#tpu.dimension_semantics<parallel>], iteration_bounds = array<i64: 1>, scalar_prefetch = 0 : i64, scratch_operands = 0 : i64, tpu.core_type = #tpu.core_type<tc>, window_params = [{transform_indices = @transform_0, window_bounds = array<i64: 128, 64>}, {pipeline_mode = #tpu.pipeline_mode<synchronous>, transform_indices = @transform_1, window_bounds = array<i64: 64, 128>}, {pipeline_mode = #tpu.pipeline_mode<synchronous>, transform_indices = @transform_2, window_bounds = array<i64: 1, 128>}, {transform_indices = @transform_3, window_bounds = array<i64: 128, 128>}]} {
    %c0 = arith.constant 0 : index
    %c0_0 = arith.constant 0 : index
    %0 = vector.load %arg1[%c0, %c0_0] : memref<128x64xbf16, #tpu.memory_space<vmem>>, vector<128x64xbf16>
    %c0_1 = arith.constant 0 : index
    %c0_2 = arith.constant 0 : index
    %1 = vector.load %arg2[%c0_1, %c0_2] : memref<64x128xbf16, #tpu.memory_space<vmem>>, vector<64x128xbf16>
    %cst = arith.constant dense<0.000000e+00> : vector<128x128xf32>
    %2 = tpu.matmul %0, %1, %cst {dimension_numbers = #tpu.dot_dimension_numbers<[1], [0], [0], [1], [0, 0, 1, 1], [], []>} : vector<128x64xbf16>, vector<64x128xbf16>, vector<128x128xf32> -> vector<128x128xf32>
    %c0_3 = arith.constant 0 : index
    %c0_4 = arith.constant 0 : index
    %3 = vector.load %arg3[%c0_3, %c0_4] : memref<1x128xf32, #tpu.memory_space<vmem>>, vector<1x128xf32>
    %4 = vector.broadcast %3 : vector<1x128xf32> to vector<128x128xf32>
    %5 = arith.addf %2, %4 : vector<128x128xf32>
    %cst_5 = arith.constant 2.500000e-01 : f32
    %6 = vector.broadcast %cst_5 : f32 to vector<128x128xf32>
    %7 = arith.mulf %5, %6 : vector<128x128xf32>
    %c0_6 = arith.constant 0 : index
    %c0_7 = arith.constant 0 : index
    %8 = vector.load %arg4[%c0_6, %c0_7] : memref<128x128xf32, #tpu.memory_space<vmem>>, vector<128x128xf32>
    tpu.vector_store %arg4[%c0_6, %c0_7], %7 {strides = array<i32>} : memref<128x128xf32, #tpu.memory_space<vmem>>, vector<128x128xf32>,
    return
  }
  func.func @transform_0(%arg0: i32) -> (i32, i32) {
    %c0_i32 = arith.constant 0 : i32
    %c0_i32_0 = arith.constant 0 : i32
    return %arg0, %c0_i32 : i32, i32
  }
  func.func @transform_1(%arg0: i32) -> (i32, i32) {
    %c0_i32 = arith.constant 0 : i32
    %c0_i32_0 = arith.constant 0 : i32
    %c0_i32_1 = arith.constant 0 : i32
    return %c0_i32, %c0_i32_0 : i32, i32
  }
  func.func @transform_2(%arg0: i32) -> (i32, i32) {
    %c0_i32 = arith.constant 0 : i32
    %c0_i32_0 = arith.constant 0 : i32
    %c0_i32_1 = arith.constant 0 : i32
    return %c0_i32, %c0_i32_0 : i32, i32
  }
  func.func @transform_3(%arg0: i32) -> (i32, i32) {
    %c0_i32 = arith.constant 0 : i32
    %c0_i32_0 = arith.constant 0 : i32
    return %arg0, %c0_i32 : i32, i32
  }
}

module attributes {stable_mosaic.version = 11 : i64} {
  func.func @kernel(%arg0: i32, %arg1: memref<16x3xi32, #tpu.memory_space<smem>>, %arg2: memref<2x8x8x128xf32, #tpu.memory_space<any>>, %arg3: memref<1x3x3x128xf32, #tpu.memory_space<vmem>>, %arg4: memref<1x3x3x128xf32, #tpu.memory_space<vmem>>, %arg5: memref<1x!tpu.dma_semaphore, #tpu.memory_space<semaphore_mem>>) attributes {dimension_semantics = [#tpu.dimension_semantics<parallel>], iteration_bounds = array<i64: 16>, scalar_prefetch = 1 : i64, scratch_operands = 2 : i64, tpu.core_type = #tpu.core_type<tc>, window_params = [{}, {transform_indices = @transform_1, window_bounds = array<i64: 1, 3, 3, 128>}]} {
    %c1_i32 = arith.constant 1 : i32
    %0 = arith.muli %arg0, %c1_i32 : i32
    %c0_i32 = arith.constant 0 : i32
    %1 = arith.addi %0, %c0_i32 : i32
    %2 = arith.index_cast %1 : i32 to index
    %c0 = arith.constant 0 : index
    %3 = memref.load %arg1[%2, %c0] : memref<16x3xi32, #tpu.memory_space<smem>>
    %c1_i32_0 = arith.constant 1 : i32
    %4 = arith.muli %arg0, %c1_i32_0 : i32
    %c0_i32_1 = arith.constant 0 : i32
    %5 = arith.addi %4, %c0_i32_1 : i32
    %6 = arith.index_cast %5 : i32 to index
    %c1 = arith.constant 1 : index
    %7 = memref.load %arg1[%6, %c1] : memref<16x3xi32, #tpu.memory_space<smem>>
    %c1_i32_2 = arith.constant 1 : i32
    %8 = arith.muli %arg0, %c1_i32_2 : i32
    %c0_i32_3 = arith.constant 0 : i32
    %9 = arith.addi %8, %c0_i32_3 : i32
    %10 = arith.index_cast %9 : i32 to index
    %c2 = arith.constant 2 : index
    %11 = memref.load %arg1[%10, %c2] : memref<16x3xi32, #tpu.memory_space<smem>>
    %c1_i32_4 = arith.constant 1 : i32
    %12 = arith.subi %11, %c1_i32_4 : i32
    %c1_i32_5 = arith.constant 1 : i32
    %13 = arith.subi %7, %c1_i32_5 : i32
    %c0_i32_6 = arith.constant 0 : i32
    %c0_i32_7 = arith.constant 0 : i32
    %14 = tpu.memref_slice %arg2[%3, %12, %13, %c0_i32_7] : memref<2x8x8x128xf32, #tpu.memory_space<any>> -> memref<1x3x3x128xf32, #tpu.memory_space<any>>
    %c0_i32_8 = arith.constant 0 : i32
    %c0_i32_9 = arith.constant 0 : i32
    %c0_i32_10 = arith.constant 0 : i32
    %c0_i32_11 = arith.constant 0 : i32
    %15 = tpu.memref_slice %arg4[%c0_i32_8, %c0_i32_9, %c0_i32_10, %c0_i32_11] : memref<1x3x3x128xf32, #tpu.memory_space<vmem>> -> memref<1x3x3x128xf32, #tpu.memory_space<vmem>>
    %16 = tpu.memref_slice %arg5[%c0_i32_6] : memref<1x!tpu.dma_semaphore, #tpu.memory_space<semaphore_mem>> -> memref<1x!tpu.dma_semaphore, #tpu.memory_space<semaphore_mem>>
    %17 = tpu.memref_squeeze %16 : memref<1x!tpu.dma_semaphore, #tpu.memory_space<semaphore_mem>> -> memref<!tpu.dma_semaphore, #tpu.memory_space<semaphore_mem>>
    tpu.enqueue_dma source(%14 : memref<1x3x3x128xf32, #tpu.memory_space<any>>) target(%15 : memref<1x3x3x128xf32, #tpu.memory_space<vmem>>) target_semaphore(%17 : memref<!tpu.dma_semaphore, #tpu.memory_space<semaphore_mem>>)
    %c0_i32_12 = arith.constant 0 : i32
    %c0_i32_13 = arith.constant 0 : i32
    %18 = tpu.memref_slice %arg2[%3, %12, %13, %c0_i32_13] : memref<2x8x8x128xf32, #tpu.memory_space<any>> -> memref<1x3x3x128xf32, #tpu.memory_space<any>>
    %c0_i32_14 = arith.constant 0 : i32
    %c0_i32_15 = arith.constant 0 : i32
    %c0_i32_16 = arith.constant 0 : i32
    %c0_i32_17 = arith.constant 0 : i32
    %19 = tpu.memref_slice %arg4[%c0_i32_14, %c0_i32_15, %c0_i32_16, %c0_i32_17] : memref<1x3x3x128xf32, #tpu.memory_space<vmem>> -> memref<1x3x3x128xf32, #tpu.memory_space<vmem>>
    %20 = tpu.memref_slice %arg5[%c0_i32_12] : memref<1x!tpu.dma_semaphore, #tpu.memory_space<semaphore_mem>> -> memref<1x!tpu.dma_semaphore, #tpu.memory_space<semaphore_mem>>
    %21 = tpu.memref_squeeze %20 : memref<1x!tpu.dma_semaphore, #tpu.memory_space<semaphore_mem>> -> memref<!tpu.dma_semaphore, #tpu.memory_space<semaphore_mem>>
    tpu.wait_dma2 semaphore(%21 : memref<!tpu.dma_semaphore, #tpu.memory_space<semaphore_mem>>) src(%18 : memref<1x3x3x128xf32, #tpu.memory_space<any>>) dst(%19 : memref<1x3x3x128xf32, #tpu.memory_space<vmem>>)
    %c0_18 = arith.constant 0 : index
    %c0_19 = arith.constant 0 : index
    %c0_20 = arith.constant 0 : index
    %c0_21 = arith.constant 0 : index
    %22 = vector.load %arg4[%c0_18, %c0_19, %c0_20, %c0_21] : memref<1x3x3x128xf32, #tpu.memory_space<vmem>>, vector<1x3x3x128xf32>
    %c0_22 = arith.constant 0 : index
    %c0_23 = arith.constant 0 : index
    %c0_24 = arith.constant 0 : index
    %c0_25 = arith.constant 0 : index
    %23 = vector.load %arg3[%c0_22, %c0_23, %c0_24, %c0_25] : memref<1x3x3x128xf32, #tpu.memory_space<vmem>>, vector<1x3x3x128xf32>
    tpu.vector_store %arg3[%c0_22, %c0_23, %c0_24, %c0_25], %22 {strides = array<i32>} : memref<1x3x3x128xf32, #tpu.memory_space<vmem>>, vector<1x3x3x128xf32>,
    return
  }
  func.func @transform_1(%arg0: i32, %arg1: memref<16x3xi32, #tpu.memory_space<smem>>) -> (i32, i32, i32, i32) {
    %c0_i32 = arith.constant 0 : i32
    %c0_i32_0 = arith.constant 0 : i32
    %c0_i32_1 = arith.constant 0 : i32
    %c0_i32_2 = arith.constant 0 : i32
    return %arg0, %c0_i32, %c0_i32_0, %c0_i32_1 : i32, i32, i32, i32
  }
}

</mosaic_0001>

<llo_original>
// kernel: tpu_custom_call.1
$region0: #{tpu_custom_call.1}
  #allocation0 [shape = 'u32[]', space=smem, size = 0x4, offset = 0x4, fixed_abs, tag = 'smem constant byte address 0x4 - core index']
  #allocation1 [shape = 'u32[144,128]{1,0:T(1,128)}', space=vmem, size = 0x12000, scoped, tag = 'internal scratch']
  #allocation2 [shape = 'f32[8,3,3,128]{3,2,1,0:T(4,128)}', space=vmem, size = 0xc000, scoped, tag = 'scratch operand']
  #allocation3 [shape = 's32[8]{0}', space=sflag, size = 0x20, scoped, tag = 'scratch operand']
  #allocation4 [shape = 's32[1]{0}', space=sflag, size = 0x4, scoped, tag = 'scoped memory for tpu_custom_call.1']
  #allocation5 [shape = 'u8[4096]{0}', space=smem, size = 0x1000, scoped, tag = 'prefetched SMEM operand 0']
  #allocation6 [shape = 's32[]', space=sflag, size = 0x4, offset = 0, fixed_abs, tag = 'sflag constant byte address 0x0 - dummy sync flag']
  #allocation7 [shape = 's32[]', space=sflag, size = 0x4, offset = 0, fixed_abs, tag = 'sflag constant byte address 0x0 - dummy sync flag']
  #allocation8 [shape = 's32[]', space=sflag, size = 0x4, offset = 0, fixed_abs, tag = 'sflag constant byte address 0x0 - dummy sync flag']
  #allocation9 [shape = 's32[]', space=sflag, size = 0x4, offset = 0, fixed_abs, tag = 'sflag constant byte address 0x0 - dummy sync flag']
  #allocation10 [shape = 's32[]', space=sflag, size = 0x4, offset = 0, fixed_abs, tag = 'sflag constant byte address 0x0 - dummy sync flag']
  #allocation11 [shape = 's32[]', space=sflag, size = 0x4, offset = 0, fixed_abs, tag = 'sflag constant byte address 0x0 - dummy sync flag']
  #allocation12 [shape = 's32[]', space=sflag, size = 0x4, offset = 0, fixed_abs, tag = 'sflag constant byte address 0x0 - dummy sync flag']
  #allocation13 [shape = 's32[]', space=sflag, size = 0x4, offset = 0, fixed_abs, tag = 'sflag constant byte address 0x0 - dummy sync flag']
  %s0 = inlined_call_operand.vmem [shape: s32[8,3], index: 0, kind: input, shape index: {}]
  %s1 = inlined_call_operand.hbm [shape: f32[2,8,8,128], index: 1, kind: input, shape index: {}]
  %s2 = inlined_call_operand.vmem [shape: f32[8,3,3,128], index: 2, kind: output, shape index: {}]
  %s3 = sld [smem:[#allocation0]]
  $region10: #{tpu_custom_call.1} parent=0
    _
  %s5 = ssub.s32 1, %s3
  %s6 = scalar_select 0, %s5, %s3
  %s7 = sshll.u32 %s0, 4
  %s8 = int_to_ptr.vmem [resolvable:$true] %s7
  %10 = dma.vmem_to_smem %s8, 128, [#allocation5], [#allocation4]
  %11 = dma.done [#allocation4], 128
  %12 = sfence
  %s13 = smul.u32 0, 8
  %s14 = smul.u32 %s13, 128
  %s15 = sld [smem:[#allocation5 + %s14]]
  %s16 = sadd.s32 %s14, 1
  %s17 = sld [smem:[#allocation5 + %s16]]
  %s18 = sadd.s32 %s14, 2
  %s19 = sld [smem:[#allocation5 + %s18]]
  %s20 = ssub.s32 %s19, 1
  %s21 = ssub.s32 %s17, 1
  %s22 = smul.u32 %s20, 8
  %s23 = sadd.s32 %s21, %s22
  %s24 = smul.u32 %s15, 64
  %s25 = sadd.s32 %s23, %s24
  %s26 = smul.addr %s25, 16
  %s27 = scalar_lea.hbm %s1, %s26
  %s29 = sshll.u32 [#allocation2], 4
  %s30 = int_to_ptr.vmem [resolvable:$true] %s29
  %32 = dma.hbm_to_vmem [thread:$0]  %s27, 144, %s30, [#allocation3], 128, 64, 3
  %s33 = sadd.s32 %s13, 1
  %s34 = smul.u32 %s33, 128
  %s35 = sld [smem:[#allocation5 + %s34]]
  %s36 = sadd.s32 %s34, 1
  %s37 = sld [smem:[#allocation5 + %s36]]
  %s38 = sadd.s32 %s34, 2
  %s39 = sld [smem:[#allocation5 + %s38]]
  %s40 = ssub.s32 %s39, 1
  %s41 = ssub.s32 %s37, 1
  %s42 = smul.u32 %s40, 8
  %s43 = sadd.s32 %s41, %s42
  %s44 = smul.u32 %s35, 64
  %s45 = sadd.s32 %s43, %s44
  %s46 = smul.addr %s45, 16
  %s47 = scalar_lea.hbm %s1, %s46
  %s48 = scalar_lea.vmem [#allocation2], 12
  %s49 = scalar_lea.sflag [#allocation3], 1
  %s51 = sshll.u32 %s48, 4
  %s52 = int_to_ptr.vmem [resolvable:$true] %s51
  %54 = dma.hbm_to_vmem [thread:$0]  %s47, 144, %s52, %s49, 128, 64, 3
  %s55 = sadd.s32 %s13, 2
  %s56 = smul.u32 %s55, 128
  %s57 = sld [smem:[#allocation5 + %s56]]
  %s58 = sadd.s32 %s56, 1
  %s59 = sld [smem:[#allocation5 + %s58]]
  %s60 = sadd.s32 %s56, 2
  %s61 = sld [smem:[#allocation5 + %s60]]
  %s62 = ssub.s32 %s61, 1
  %s63 = ssub.s32 %s59, 1
  %s64 = smul.u32 %s62, 8
  %s65 = sadd.s32 %s63, %s64
  %s66 = smul.u32 %s57, 64
  %s67 = sadd.s32 %s65, %s66
  %s68 = smul.addr %s67, 16
  %s69 = scalar_lea.hbm %s1, %s68
  %s70 = scalar_lea.vmem [#allocation2], 24
  %s71 = scalar_lea.sflag [#allocation3], 2
  %s73 = sshll.u32 %s70, 4
  %s74 = int_to_ptr.vmem [resolvable:$true] %s73
  %76 = dma.hbm_to_vmem [thread:$0]  %s69, 144, %s74, %s71, 128, 64, 3
  %s77 = sadd.s32 %s13, 3
  %s78 = smul.u32 %s77, 128
  %s79 = sld [smem:[#allocation5 + %s78]]
  %s80 = sadd.s32 %s78, 1
  %s81 = sld [smem:[#allocation5 + %s80]]
  %s82 = sadd.s32 %s78, 2
  %s83 = sld [smem:[#allocation5 + %s82]]
  %s84 = ssub.s32 %s83, 1
  %s85 = ssub.s32 %s81, 1
  %s86 = smul.u32 %s84, 8
  %s87 = sadd.s32 %s85, %s86
  %s88 = smul.u32 %s79, 64
  %s89 = sadd.s32 %s87, %s88
  %s90 = smul.addr %s89, 16
  %s91 = scalar_lea.hbm %s1, %s90
  %s92 = scalar_lea.vmem [#allocation2], 36
  %s93 = scalar_lea.sflag [#allocation3], 3
  %s95 = sshll.u32 %s92, 4
  %s96 = int_to_ptr.vmem [resolvable:$true] %s95
  %98 = dma.hbm_to_vmem [thread:$0]  %s91, 144, %s96, %s93, 128, 64, 3
  %s99 = sadd.s32 %s13, 4
  %s100 = smul.u32 %s99, 128
  %s101 = sld [smem:[#allocation5 + %s100]]
  %s102 = sadd.s32 %s100, 1
  %s103 = sld [smem:[#allocation5 + %s102]]
  %s104 = sadd.s32 %s100, 2
  %s105 = sld [smem:[#allocation5 + %s104]]
  %s106 = ssub.s32 %s105, 1
  %s107 = ssub.s32 %s103, 1
  %s108 = smul.u32 %s106, 8
  %s109 = sadd.s32 %s107, %s108
  %s110 = smul.u32 %s101, 64
  %s111 = sadd.s32 %s109, %s110
  %s112 = smul.addr %s111, 16
  %s113 = scalar_lea.hbm %s1, %s112
  %s114 = scalar_lea.vmem [#allocation2], 48
  %s115 = scalar_lea.sflag [#allocation3], 4
  %s117 = sshll.u32 %s114, 4
  %s118 = int_to_ptr.vmem [resolvable:$true] %s117
  %120 = dma.hbm_to_vmem [thread:$0]  %s113, 144, %s118, %s115, 128, 64, 3
  %s121 = sadd.s32 %s13, 5
  %s122 = smul.u32 %s121, 128
  %s123 = sld [smem:[#allocation5 + %s122]]
  %s124 = sadd.s32 %s122, 1
  %s125 = sld [smem:[#allocation5 + %s124]]
  %s126 = sadd.s32 %s122, 2
  %s127 = sld [smem:[#allocation5 + %s126]]
  %s128 = ssub.s32 %s127, 1
  %s129 = ssub.s32 %s125, 1
  %s130 = smul.u32 %s128, 8
  %s131 = sadd.s32 %s129, %s130
  %s132 = smul.u32 %s123, 64
  %s133 = sadd.s32 %s131, %s132
  %s134 = smul.addr %s133, 16
  %s135 = scalar_lea.hbm %s1, %s134
  %s136 = scalar_lea.vmem [#allocation2], 60
  %s137 = scalar_lea.sflag [#allocation3], 5
  %s139 = sshll.u32 %s136, 4
  %s140 = int_to_ptr.vmem [resolvable:$true] %s139
  %142 = dma.hbm_to_vmem [thread:$0]  %s135, 144, %s140, %s137, 128, 64, 3
  %s143 = sadd.s32 %s13, 6
  %s144 = smul.u32 %s143, 128
  %s145 = sld [smem:[#allocation5 + %s144]]
  %s146 = sadd.s32 %s144, 1
  %s147 = sld [smem:[#allocation5 + %s146]]
  %s148 = sadd.s32 %s144, 2
  %s149 = sld [smem:[#allocation5 + %s148]]
  %s150 = ssub.s32 %s149, 1
  %s151 = ssub.s32 %s147, 1
  %s152 = smul.u32 %s150, 8
  %s153 = sadd.s32 %s151, %s152
  %s154 = smul.u32 %s145, 64
  %s155 = sadd.s32 %s153, %s154
  %s156 = smul.addr %s155, 16
  %s157 = scalar_lea.hbm %s1, %s156
  %s158 = scalar_lea.vmem [#allocation2], 72
  %s159 = scalar_lea.sflag [#allocation3], 6
  %s161 = sshll.u32 %s158, 4
  %s162 = int_to_ptr.vmem [resolvable:$true] %s161
  %164 = dma.hbm_to_vmem [thread:$0]  %s157, 144, %s162, %s159, 128, 64, 3
  %s165 = sadd.s32 %s13, 7
  %s166 = smul.u32 %s165, 128
  %s167 = sld [smem:[#allocation5 + %s166]]
  %s168 = sadd.s32 %s166, 1
  %s169 = sld [smem:[#allocation5 + %s168]]
  %s170 = sadd.s32 %s166, 2
  %s171 = sld [smem:[#allocation5 + %s170]]
  %s172 = ssub.s32 %s171, 1
  %s173 = ssub.s32 %s169, 1
  %s174 = smul.u32 %s172, 8
  %s175 = sadd.s32 %s173, %s174
  %s176 = smul.u32 %s167, 64
  %s177 = sadd.s32 %s175, %s176
  %s178 = smul.addr %s177, 16
  %s179 = scalar_lea.hbm %s1, %s178
  %s180 = scalar_lea.vmem [#allocation2], 84
  %s181 = scalar_lea.sflag [#allocation3], 7
  %s183 = sshll.u32 %s180, 4
  %s184 = int_to_ptr.vmem [resolvable:$true] %s183
  %186 = dma.hbm_to_vmem [thread:$0]  %s179, 144, %s184, %s181, 128, 64, 3
  %s187 = smul.u32 1, 3
  %s188 = smul.u32 %s187, 3
  %s189 = smul.u32 %s188, 1
  %s190 = sshll.u32 %s189, 4
  %191 = dma.done [#allocation3], %s190
  %s192 = sshll.u32 %s189, 4
  %193 = dma.done %s49, %s192
  %s194 = sshll.u32 %s189, 4
  %195 = dma.done %s71, %s194
  %s196 = sshll.u32 %s189, 4
  %197 = dma.done %s93, %s196
  %s198 = sshll.u32 %s189, 4
  %199 = dma.done %s115, %s198
  %s200 = sshll.u32 %s189, 4
  %201 = dma.done %s137, %s200
  %s202 = sshll.u32 %s189, 4
  %203 = dma.done %s159, %s202
  %s204 = sshll.u32 %s189, 4
  %205 = dma.done %s181, %s204
  %v206 = vld [vmem:[#allocation2] sm:$0x7]
  %v207 = vld [vmem:[#allocation2 + $0x4] sm:$0x7]
  %v208 = vld [vmem:[#allocation2 + $0x8] sm:$0x7]
  %v209 = vld [vmem:[#allocation2 + $0xc] sm:$0x7]
  %v210 = vld [vmem:[#allocation2 + $0x10] sm:$0x7]
  %v211 = vld [vmem:[#allocation2 + $0x14] sm:$0x7]
  %v212 = vld [vmem:[#allocation2 + $0x18] sm:$0x7]
  %v213 = vld [vmem:[#allocation2 + $0x1c] sm:$0x7]
  %v214 = vld [vmem:[#allocation2 + $0x20] sm:$0x7]
  %v215 = vld [vmem:[#allocation2 + $0x24] sm:$0x7]
  %v216 = vld [vmem:[#allocation2 + $0x28] sm:$0x7]
  %v217 = vld [vmem:[#allocation2 + $0x2c] sm:$0x7]
  %v218 = vld [vmem:[#allocation2 + $0x30] sm:$0x7]
  %v219 = vld [vmem:[#allocation2 + $0x34] sm:$0x7]
  %v220 = vld [vmem:[#allocation2 + $0x38] sm:$0x7]
  %v221 = vld [vmem:[#allocation2 + $0x3c] sm:$0x7]
  %v222 = vld [vmem:[#allocation2 + $0x40] sm:$0x7]
  %v223 = vld [vmem:[#allocation2 + $0x44] sm:$0x7]
  %v224 = vld [vmem:[#allocation2 + $0x48] sm:$0x7]
  %v225 = vld [vmem:[#allocation2 + $0x4c] sm:$0x7]
  %v226 = vld [vmem:[#allocation2 + $0x50] sm:$0x7]
  %v227 = vld [vmem:[#allocation2 + $0x54] sm:$0x7]
  %v228 = vld [vmem:[#allocation2 + $0x58] sm:$0x7]
  %v229 = vld [vmem:[#allocation2 + $0x5c] sm:$0x7]
  %230 = vst [vmem:[%s2] sm:$0x7] %v206
  %231 = vst [vmem:[%s2 + $0x4] sm:$0x7] %v207
  %232 = vst [vmem:[%s2 + $0x8] sm:$0x7] %v208
  %233 = vst [vmem:[%s2 + $0xc] sm:$0x7] %v209
  %234 = vst [vmem:[%s2 + $0x10] sm:$0x7] %v210
  %235 = vst [vmem:[%s2 + $0x14] sm:$0x7] %v211
  %236 = vst [vmem:[%s2 + $0x18] sm:$0x7] %v212
  %237 = vst [vmem:[%s2 + $0x1c] sm:$0x7] %v213
  %238 = vst [vmem:[%s2 + $0x20] sm:$0x7] %v214
  %239 = vst [vmem:[%s2 + $0x24] sm:$0x7] %v215
  %240 = vst [vmem:[%s2 + $0x28] sm:$0x7] %v216
  %241 = vst [vmem:[%s2 + $0x2c] sm:$0x7] %v217
  %242 = vst [vmem:[%s2 + $0x30] sm:$0x7] %v218
  %243 = vst [vmem:[%s2 + $0x34] sm:$0x7] %v219
  %244 = vst [vmem:[%s2 + $0x38] sm:$0x7] %v220
  %245 = vst [vmem:[%s2 + $0x3c] sm:$0x7] %v221
  %246 = vst [vmem:[%s2 + $0x40] sm:$0x7] %v222
  %247 = vst [vmem:[%s2 + $0x44] sm:$0x7] %v223
  %248 = vst [vmem:[%s2 + $0x48] sm:$0x7] %v224
  %249 = vst [vmem:[%s2 + $0x4c] sm:$0x7] %v225
  %250 = vst [vmem:[%s2 + $0x50] sm:$0x7] %v226
  %251 = vst [vmem:[%s2 + $0x54] sm:$0x7] %v227
  %252 = vst [vmem:[%s2 + $0x58] sm:$0x7] %v228
  %253 = vst [vmem:[%s2 + $0x5c] sm:$0x7] %v229
  // Predicated region
  $region2: #{tpu_custom_call.1} parent=0 // pred_check
    _
  $region3: #{tpu_custom_call.1} parent=0 // pred_check_branch
    %255 = sbr.rel (0) target = $region5
  $region4: #{tpu_custom_call.1} parent=0 // pred_region
    _
  $region5: #{tpu_custom_call.1} parent=0 // pred_fallthru
    _
  // Predicated region
  $region6: #{tpu_custom_call.1} parent=0 // pred_check
    _
  $region7: #{tpu_custom_call.1} parent=0 // pred_check_branch
    %257 = sbr.rel (0) target = $region9
  $region8: #{tpu_custom_call.1} parent=0 // pred_region
    _
  $region9: #{tpu_custom_call.1} parent=0 // pred_fallthru
    _
  %258 = vsyncmov [#allocation3]
  %s259 = vpop.sfrf %258
  %p260 = scmp.eq.s32.totalorder %s259, 0
  %p261 = pneg %p260
  %263 = shalt.err (%p261)
  %s264 = scalar_lea.sflag [#allocation3], 1
  %265 = vsyncmov %s264
  %s266 = vpop.sfrf %265
  %p267 = scmp.eq.s32.totalorder %s266, 0
  %p268 = pneg %p267
  %270 = shalt.err (%p268)
  %s271 = scalar_lea.sflag [#allocation3], 2
  %272 = vsyncmov %s271
  %s273 = vpop.sfrf %272
  %p274 = scmp.eq.s32.totalorder %s273, 0
  %p275 = pneg %p274
  %277 = shalt.err (%p275)
  %s278 = scalar_lea.sflag [#allocation3], 3
  %279 = vsyncmov %s278
  %s280 = vpop.sfrf %279
  %p281 = scmp.eq.s32.totalorder %s280, 0
  %p282 = pneg %p281
  %284 = shalt.err (%p282)
  %s285 = scalar_lea.sflag [#allocation3], 4
  %286 = vsyncmov %s285
  %s287 = vpop.sfrf %286
  %p288 = scmp.eq.s32.totalorder %s287, 0
  %p289 = pneg %p288
  %291 = shalt.err (%p289)
  %s292 = scalar_lea.sflag [#allocation3], 5
  %293 = vsyncmov %s292
  %s294 = vpop.sfrf %293
  %p295 = scmp.eq.s32.totalorder %s294, 0
  %p296 = pneg %p295
  %298 = shalt.err (%p296)
  %s299 = scalar_lea.sflag [#allocation3], 6
  %300 = vsyncmov %s299
  %s301 = vpop.sfrf %300
  %p302 = scmp.eq.s32.totalorder %s301, 0
  %p303 = pneg %p302
  %305 = shalt.err (%p303)
  %s306 = scalar_lea.sflag [#allocation3], 7
  %307 = vsyncmov %s306
  %s308 = vpop.sfrf %307
  %p309 = scmp.eq.s32.totalorder %s308, 0
  %p310 = pneg %p309
  %312 = shalt.err (%p310)

// kernel: tpu_custom_call.1
$region0: #{tpu_custom_call.1}
  #allocation0 [shape = 'u32[]', space=smem, size = 0x4, offset = 0x4, fixed_abs, tag = 'smem constant byte address 0x4 - core index']
  #allocation1 [shape = 'u32[144,128]{1,0:T(1,128)}', space=vmem, size = 0x12000, scoped, tag = 'internal scratch']
  %s0 = inlined_call_operand.vmem [shape: f32[2,1600,32], index: 0, kind: input, shape index: {}]
  %s1 = inlined_call_operand.hbm [shape: f32[2,1,32], index: 1, kind: output, shape index: {0}]
  %s2 = inlined_call_operand.hbm [shape: f32[2,1,32], index: 2, kind: output, shape index: {1}]
  %3 = xla_tuple %s1, %s2
  %s4 = sld [smem:[#allocation0]]
  $region49: #{tpu_custom_call.1} parent=0
    _
  %s6 = ssub.s32 1, %s4
  %s7 = scalar_select 0, %s6, %s4
  $region1: #{tpu_custom_call.1} parent=0
    #allocation2 [shape = 'u8[1024]{0}', space=vmem, size = 0x400, scoped, tag = 'output window, operand 0']
    #allocation3 [shape = 's32[2]{0}', space=sflag, size = 0x8, scoped, tag = 'scoped memory for tpu_custom_call.1']
    #allocation4 [shape = 'u8[1024]{0}', space=vmem, size = 0x400, scoped, tag = 'output window, operand 1']
    #allocation5 [shape = 's32[2]{0}', space=sflag, size = 0x8, scoped, tag = 'scoped memory for tpu_custom_call.1']
    %8 = vsyncpa [#allocation3], 0
    %s9 = scalar_lea.sflag [#allocation3], 1
    %10 = vsyncpa %s9, 0
    %11 = vsyncpa [#allocation5], 0
    %s12 = scalar_lea.sflag [#allocation5], 1
    %13 = vsyncpa %s12, 0
    loop: start=0, step=1, limit=16
    $region2: #{tpu_custom_call.1} parent=1 // loop_pre_header
      _
    $region3: #{tpu_custom_call.1} parent=1 // loop_header
      %s15 = sphi 0, %s19
      %p16 = scmp.ge.s32.totalorder %s15, 16
      %s22 = sphi 0, %s34
      %s23 = sphi 0, %s30
      %s24 = sphi 0, %s22
      %s25 = sphi 0, %s23
      %s26 = sphi 0, %s24
      %s27 = sphi 0, %s25
      %s39 = sphi 0, %s41
      %s42 = sphi 0, %s39
      %s43 = sphi 0, %s42
      %s59 = sphi 0, %s43
      %s65 = sphi 0, %s67
      %s68 = sphi 0, %s65
      %s69 = sphi 0, %s68
      %s85 = sphi 0, %s69
      %s91 = sphi 0, %s93
      %s94 = sphi 0, %s91
      %s95 = sphi 0, %s94
      %s111 = sphi 0, %s95
    $region4: #{tpu_custom_call.1} parent=1 // loop_header_branch
      %18 = sbr.rel (%p16) target = $region8
    $region5: #{tpu_custom_call.1} parent=1 // loop_body
      %s20 = ssub.s32 %s15, 1
      %s21 = ssub.s32 %s15, 2
      %s28 = sadd.s32 1, %s23
      %p29 = scmp.ge.s32.totalorder %s28, 7
      %s30 = scalar_select %p29, 0, %s28
      %s31 = sadd.s32 1, %s22
      %s32 = scalar_select %p29, %s31, %s22
      %p33 = scmp.ge.s32.totalorder %s32, 2
      %s34 = scalar_select %p33, 0, %s32
      %s35 = ssub.s32 %s22, %s34
      %s36 = ssub.s32 %s23, %s30
      %s37 = sor.u32 %s35, %s36
      %p38 = scmp.eq.s32.totalorder %s37, 0
      %s40 = sadd.s32 %s39, 1
      %s41 = scalar_select %p38, %s39, %s40
      %p44 = pneg %p38
      %p45 = scmp.eq.s32.totalorder %s15, 13
      %p46 = por %p44, %p45
      %p47 = scmp.ne.s32.totalorder %s39, %s42
      %p48 = scmp.eq.s32.totalorder %s15, 0
      %p49 = por %p47, %p48
      %p50 = scmp.ne.s32.totalorder %s39, %s42
      %p51 = scmp.eq.s32.totalorder %s20, 13
      %p52 = por %p50, %p51
      %p53 = scmp.ne.s32.totalorder %s42, %s43
      %p54 = scmp.eq.s32.totalorder %s20, 0
      %p55 = por %p53, %p54
      %p56 = scmp.ne.s32.totalorder %s42, %s43
      %p57 = scmp.eq.s32.totalorder %s21, 13
      %p58 = por %p56, %p57
      %p60 = scmp.ne.s32.totalorder %s43, %s59
      %p61 = scmp.eq.s32.totalorder %s21, 0
      %p62 = por %p60, %p61
      %s63 = ssub.s32 %s22, %s34
      %p64 = scmp.eq.s32.totalorder %s63, 0
      %s66 = sadd.s32 %s65, 1
      %s67 = scalar_select %p64, %s65, %s66
      %p70 = pneg %p64
      %p71 = scmp.eq.s32.totalorder %s15, 13
      %p72 = por %p70, %p71
      %p73 = scmp.ne.s32.totalorder %s65, %s68
      %p74 = scmp.eq.s32.totalorder %s15, 0
      %p75 = por %p73, %p74
      %p76 = scmp.ne.s32.totalorder %s65, %s68
      %p77 = scmp.eq.s32.totalorder %s20, 13
      %p78 = por %p76, %p77
      %p79 = scmp.ne.s32.totalorder %s68, %s69
      %p80 = scmp.eq.s32.totalorder %s20, 0
      %p81 = por %p79, %p80
      %p82 = scmp.ne.s32.totalorder %s68, %s69
      %p83 = scmp.eq.s32.totalorder %s21, 13
      %p84 = por %p82, %p83
      %p86 = scmp.ne.s32.totalorder %s69, %s85
      %p87 = scmp.eq.s32.totalorder %s21, 0
      %p88 = por %p86, %p87
      %s89 = ssub.s32 %s22, %s34
      %p90 = scmp.eq.s32.totalorder %s89, 0
      %s92 = sadd.s32 %s91, 1
      %s93 = scalar_select %p90, %s91, %s92
      %p96 = pneg %p90
      %p97 = scmp.eq.s32.totalorder %s15, 13
      %p98 = por %p96, %p97
      %p99 = scmp.ne.s32.totalorder %s91, %s94
      %p100 = scmp.eq.s32.totalorder %s15, 0
      %p101 = por %p99, %p100
      %p102 = scmp.ne.s32.totalorder %s91, %s94
      %p103 = scmp.eq.s32.totalorder %s20, 13
      %p104 = por %p102, %p103
      %p105 = scmp.ne.s32.totalorder %s94, %s95
      %p106 = scmp.eq.s32.totalorder %s20, 0
      %p107 = por %p105, %p106
      %p108 = scmp.ne.s32.totalorder %s94, %s95
      %p109 = scmp.eq.s32.totalorder %s21, 13
      %p110 = por %p108, %p109
      %p112 = scmp.ne.s32.totalorder %s95, %s111
      %p113 = scmp.eq.s32.totalorder %s21, 0
      %p114 = por %p112, %p113
      %p115 = scmp.le.s32.totalorder 1, %s15
      %p116 = scmp.lt.s32.totalorder %s15, 15
      %p117 = pnand %p115, %p116
      %p118 = pneg %p117
      // Predicated region
      $region9: #{tpu_custom_call.1} parent=5 // pred_check
        _
      $region10: #{tpu_custom_call.1} parent=5 // pred_check_branch
        %120 = sbr.rel (%p117) target = $region12
      $region11: #{tpu_custom_call.1} parent=5 // pred_region
        %s121 = ssub.s32 %s15, 1
      $region12: #{tpu_custom_call.1} parent=5 // pred_fallthru
        _
      %p122 = scmp.lt.s32.totalorder %s15, 14
      // Predicated region
      $region13: #{tpu_custom_call.1} parent=5 // pred_check
        %p123 = pneg %p122
      $region14: #{tpu_custom_call.1} parent=5 // pred_check_branch
        %125 = sbr.rel (%p123) target = $region16
      $region15: #{tpu_custom_call.1} parent=5 // pred_region
        // Predicated region
        $region17: #{tpu_custom_call.1} parent=15 // pred_check
          %p126 = pneg %p49
        $region18: #{tpu_custom_call.1} parent=15 // pred_check_branch
          %128 = sbr.rel (%p126) target = $region20
        $region19: #{tpu_custom_call.1} parent=15 // pred_region
          %s129 = smul.u32 32, %s23
          %s130 = ssub.s32 200, %s129
          %p131 = scmp.lt.s32.totalorder %s130, 32
          %s132 = scalar_select %p131, %s130, 32
          %s133 = smul.u32 128, %s132
          %p134 = scmp.lt.s32.totalorder %s22, 1
          %s135 = scalar_select %p134, %s22, 1
          %p136 = scmp.lt.s32.totalorder %s129, 199
          %s137 = scalar_select %p136, %s129, 199
          %s138 = smul.addr %s135, 200
          %s139 = sadd.s32 %s137, %s138
          %s140 = smul.addr %s139, 8
          %s141 = scalar_lea.vmem %s0, %s140
          %s142 = smul.u32 32, %s23
          %s143 = ssub.s32 200, %s142
          %p144 = scmp.lt.s32.totalorder %s143, 32
          %s145 = scalar_select %p144, %s143, 32
          %s146 = smul.u32 128, %s145
        $region20: #{tpu_custom_call.1} parent=15 // pred_fallthru
          _
      $region16: #{tpu_custom_call.1} parent=5 // pred_fallthru
        _
      %p147 = scmp.le.s32.totalorder 1, %s15
      %p148 = scmp.lt.s32.totalorder %s15, 15
      %p149 = pnand %p147, %p148
      %p150 = pneg %p149
      // Predicated region
      $region21: #{tpu_custom_call.1} parent=5 // pred_check
        _
      $region22: #{tpu_custom_call.1} parent=5 // pred_check_branch
        %152 = sbr.rel (%p149) target = $region24
      $region23: #{tpu_custom_call.1} parent=5 // pred_region
        %s153 = ssub.s32 %s15, 1
        %s154 = smul.u32 32, %s25
        %s155 = ssub.s32 200, %s154
        %p156 = scmp.lt.s32.totalorder %s155, 32
        %s157 = scalar_select %p156, %s155, 32
        %s158 = smul.u32 128, %s157
        %p159 = scmp.lt.s32.totalorder %s24, 1
        %s160 = scalar_select %p159, %s24, 1
        %p161 = scmp.lt.s32.totalorder %s154, 199
        %s162 = scalar_select %p161, %s154, 199
        %s163 = smul.addr %s160, 200
        %s164 = sadd.s32 %s162, %s163
        %s165 = smul.addr %s164, 8
        %s166 = scalar_lea.vmem %s0, %s165
        %p167 = pneg %p55
        %p168 = pneg %p52
        %p169 = pneg %p81
        %p170 = pneg %p78
        %s171 = sand.u32 %s68, 1
        %s172 = scalar_lea.sflag [#allocation3], %s171
        %s173 = sand.u32 %s68, 1
        %s174 = scalar_lea.vmem [#allocation2], %s173
        %p175 = pneg %p107
        %p176 = pneg %p104
        %s177 = sand.u32 %s94, 1
        %s178 = scalar_lea.sflag [#allocation5], %s177
        %s179 = sand.u32 %s94, 1
        %s180 = scalar_lea.vmem [#allocation4], %s179
        %s181 = smul.u32 32, %s25
        %s182 = ssub.s32 200, %s181
        %p183 = scmp.lt.s32.totalorder %s182, 32
        %s184 = scalar_select %p183, %s182, 32
        %s185 = smul.u32 128, %s184
        %p186 = scmp.lt.s32.totalorder %s24, 1
        %s187 = scalar_select %p186, %s24, 1
        %p188 = scmp.lt.s32.totalorder %s181, 199
        %s189 = scalar_select %p188, %s181, 199
        %s190 = smul.addr %s187, 200
        %s191 = sadd.s32 %s189, %s190
        %s192 = smul.addr %s191, 8
        %s193 = scalar_lea.vmem %s0, %s192
        %s194 = smul.u32 32, %s25
        %s195 = ssub.s32 200, %s194
        %p196 = scmp.lt.s32.totalorder %s195, 32
        %s197 = scalar_select %p196, %s195, 32
        %s198 = smul.u32 128, %s197
        %p199 = scmp.eq.s32.totalorder %s25, 0
        // Predicated region
        $region25: #{tpu_custom_call.1} parent=23 // pred_check
          %p200 = pneg %p199
        $region26: #{tpu_custom_call.1} parent=23 // pred_check_branch
          %202 = sbr.rel (%p200) target = $region28
        $region27: #{tpu_custom_call.1} parent=23 // pred_region
          %vm203 = vcmask 253952
          %204 = vst.msk [vmem:[%s174] sm:$0x1] %vm203, 0.0
          %205 = vst.msk [vmem:[%s180] sm:$0x1] %vm203, 0.0
        $region28: #{tpu_custom_call.1} parent=23 // pred_fallthru
          _
        %v206 = vld [vmem:[%s193] sm:$0xff]
        %v207 = vld [vmem:[%s193 + $0x8] sm:$0xff]
        %v208 = vld [vmem:[%s193 + $0x10] sm:$0xff]
        %v209 = vld [vmem:[%s193 + $0x18] sm:$0xff]
        %v210 = vld [vmem:[%s193 + $0x20] sm:$0xff]
        %v211 = vld [vmem:[%s193 + $0x28] sm:$0xff]
        %v212 = vld [vmem:[%s193 + $0x30] sm:$0xff]
        %v213 = vld [vmem:[%s193 + $0x38] sm:$0xff]
        %v214 = vld [vmem:[%s193 + $0x40] sm:$0xff]
        %v215 = vld [vmem:[%s193 + $0x48] sm:$0xff]
        %v216 = vld [vmem:[%s193 + $0x50] sm:$0xff]
        %v217 = vld [vmem:[%s193 + $0x58] sm:$0xff]
        %v218 = vld [vmem:[%s193 + $0x60] sm:$0xff]
        %v219 = vld [vmem:[%s193 + $0x68] sm:$0xff]
        %v220 = vld [vmem:[%s193 + $0x70] sm:$0xff]
        %v221 = vld [vmem:[%s193 + $0x78] sm:$0xff]
        %v222 = vld [vmem:[%s193 + $0x80] sm:$0xff]
        %v223 = vld [vmem:[%s193 + $0x88] sm:$0xff]
        %v224 = vld [vmem:[%s193 + $0x90] sm:$0xff]
        %v225 = vld [vmem:[%s193 + $0x98] sm:$0xff]
        %v226 = vld [vmem:[%s193 + $0xa0] sm:$0xff]
        %v227 = vld [vmem:[%s193 + $0xa8] sm:$0xff]
        %v228 = vld [vmem:[%s193 + $0xb0] sm:$0xff]
        %v229 = vld [vmem:[%s193 + $0xb8] sm:$0xff]
        %v230 = vld [vmem:[%s193 + $0xc0] sm:$0xff]
        %v231 = vld [vmem:[%s193 + $0xc8] sm:$0xff]
        %v232 = vld [vmem:[%s193 + $0xd0] sm:$0xff]
        %v233 = vld [vmem:[%s193 + $0xd8] sm:$0xff]
        %v234 = vld [vmem:[%s193 + $0xe0] sm:$0xff]
        %v235 = vld [vmem:[%s193 + $0xe8] sm:$0xff]
        %v236 = vld [vmem:[%s193 + $0xf0] sm:$0xff]
        %v237 = vld [vmem:[%s193 + $0xf8] sm:$0xff]
        %v238 = vlaneseq
        %v239 = vshrl.u32 %v238, 7
        %v240 = vadd.s32 %v239, 8
        %v241 = vadd.s32 %v239, 16
        %v242 = vadd.s32 %v239, 24
        %v243 = vadd.s32 %v239, 32
        %v244 = vadd.s32 %v239, 40
        %v245 = vadd.s32 %v239, 48
        %v246 = vadd.s32 %v239, 56
        %v247 = vadd.s32 %v239, 64
        %v248 = vadd.s32 %v239, 72
        %v249 = vadd.s32 %v239, 80
        %v250 = vadd.s32 %v239, 88
        %v251 = vadd.s32 %v239, 96
        %v252 = vadd.s32 %v239, 104
        %v253 = vadd.s32 %v239, 112
        %v254 = vadd.s32 %v239, 120
        %v255 = vadd.s32 %v239, 128
        %v256 = vadd.s32 %v239, 136
        %v257 = vadd.s32 %v239, 144
        %v258 = vadd.s32 %v239, 152
        %v259 = vadd.s32 %v239, 160
        %v260 = vadd.s32 %v239, 168
        %v261 = vadd.s32 %v239, 176
        %v262 = vadd.s32 %v239, 184
        %v263 = vadd.s32 %v239, 192
        %v264 = vadd.s32 %v239, 200
        %v265 = vadd.s32 %v239, 208
        %v266 = vadd.s32 %v239, 216
        %v267 = vadd.s32 %v239, 224
        %v268 = vadd.s32 %v239, 232
        %v269 = vadd.s32 %v239, 240
        %v270 = vadd.s32 %v239, 248
        %s271 = smul.u32 %s25, 256
        %v272 = vstv %s271
        %v273 = vadd.s32 %v239, %v272
        %v274 = vadd.s32 %v240, %v272
        %v275 = vadd.s32 %v241, %v272
        %v276 = vadd.s32 %v242, %v272
        %v277 = vadd.s32 %v243, %v272
        %v278 = vadd.s32 %v244, %v272
        %v279 = vadd.s32 %v245, %v272
        %v280 = vadd.s32 %v246, %v272
        %v281 = vadd.s32 %v247, %v272
        %v282 = vadd.s32 %v248, %v272
        %v283 = vadd.s32 %v249, %v272
        %v284 = vadd.s32 %v250, %v272
        %v285 = vadd.s32 %v251, %v272
        %v286 = vadd.s32 %v252, %v272
        %v287 = vadd.s32 %v253, %v272
        %v288 = vadd.s32 %v254, %v272
        %v289 = vadd.s32 %v255, %v272
        %v290 = vadd.s32 %v256, %v272
        %v291 = vadd.s32 %v257, %v272
        %v292 = vadd.s32 %v258, %v272
        %v293 = vadd.s32 %v259, %v272
        %v294 = vadd.s32 %v260, %v272
        %v295 = vadd.s32 %v261, %v272
        %v296 = vadd.s32 %v262, %v272
        %v297 = vadd.s32 %v263, %v272
        %v298 = vadd.s32 %v264, %v272
        %v299 = vadd.s32 %v265, %v272
        %v300 = vadd.s32 %v266, %v272
        %v301 = vadd.s32 %v267, %v272
        %v302 = vadd.s32 %v268, %v272
        %v303 = vadd.s32 %v269, %v272
        %v304 = vadd.s32 %v270, %v272
        %vm305 = vcmp.lt.s32.totalorder %v273, 1600
        %vm306 = vcmp.lt.s32.totalorder %v274, 1600
        %vm307 = vcmp.lt.s32.totalorder %v275, 1600
        %vm308 = vcmp.lt.s32.totalorder %v276, 1600
        %vm309 = vcmp.lt.s32.totalorder %v277, 1600
        %vm310 = vcmp.lt.s32.totalorder %v278, 1600
        %vm311 = vcmp.lt.s32.totalorder %v279, 1600
        %vm312 = vcmp.lt.s32.totalorder %v280, 1600
        %vm313 = vcmp.lt.s32.totalorder %v281, 1600
        %vm314 = vcmp.lt.s32.totalorder %v282, 1600
        %vm315 = vcmp.lt.s32.totalorder %v283, 1600
        %vm316 = vcmp.lt.s32.totalorder %v284, 1600
        %vm317 = vcmp.lt.s32.totalorder %v285, 1600
        %vm318 = vcmp.lt.s32.totalorder %v286, 1600
        %vm319 = vcmp.lt.s32.totalorder %v287, 1600
        %vm320 = vcmp.lt.s32.totalorder %v288, 1600
        %vm321 = vcmp.lt.s32.totalorder %v289, 1600
        %vm322 = vcmp.lt.s32.totalorder %v290, 1600
        %vm323 = vcmp.lt.s32.totalorder %v291, 1600
        %vm324 = vcmp.lt.s32.totalorder %v292, 1600
        %vm325 = vcmp.lt.s32.totalorder %v293, 1600
        %vm326 = vcmp.lt.s32.totalorder %v294, 1600
        %vm327 = vcmp.lt.s32.totalorder %v295, 1600
        %vm328 = vcmp.lt.s32.totalorder %v296, 1600
        %vm329 = vcmp.lt.s32.totalorder %v297, 1600
        %vm330 = vcmp.lt.s32.totalorder %v298, 1600
        %vm331 = vcmp.lt.s32.totalorder %v299, 1600
        %vm332 = vcmp.lt.s32.totalorder %v300, 1600
        %vm333 = vcmp.lt.s32.totalorder %v301, 1600
        %vm334 = vcmp.lt.s32.totalorder %v302, 1600
        %vm335 = vcmp.lt.s32.totalorder %v303, 1600
        %vm336 = vcmp.lt.s32.totalorder %v304, 1600
        %v337 = vsel %vm305, %v206, 0.0
        %v338 = vsel %vm306, %v207, 0.0
        %v339 = vsel %vm307, %v208, 0.0
        %v340 = vsel %vm308, %v209, 0.0
        %v341 = vsel %vm309, %v210, 0.0
        %v342 = vsel %vm310, %v211, 0.0
        %v343 = vsel %vm311, %v212, 0.0
        %v344 = vsel %vm312, %v213, 0.0
        %v345 = vsel %vm313, %v214, 0.0
        %v346 = vsel %vm314, %v215, 0.0
        %v347 = vsel %vm315, %v216, 0.0
        %v348 = vsel %vm316, %v217, 0.0
        %v349 = vsel %vm317, %v218, 0.0
        %v350 = vsel %vm318, %v219, 0.0
        %v351 = vsel %vm319, %v220, 0.0
        %v352 = vsel %vm320, %v221, 0.0
        %v353 = vsel %vm321, %v222, 0.0
        %v354 = vsel %vm322, %v223, 0.0
        %v355 = vsel %vm323, %v224, 0.0
        %v356 = vsel %vm324, %v225, 0.0
        %v357 = vsel %vm325, %v226, 0.0
        %v358 = vsel %vm326, %v227, 0.0
        %v359 = vsel %vm327, %v228, 0.0
        %v360 = vsel %vm328, %v229, 0.0
        %v361 = vsel %vm329, %v230, 0.0
        %v362 = vsel %vm330, %v231, 0.0
        %v363 = vsel %vm331, %v232, 0.0
        %v364 = vsel %vm332, %v233, 0.0
        %v365 = vsel %vm333, %v234, 0.0
        %v366 = vsel %vm334, %v235, 0.0
        %v367 = vsel %vm335, %v236, 0.0
        %v368 = vsel %vm336, %v237, 0.0
        %v369 = vld [vmem:[%s174] sm:$0x1]
        %vm370 = vcmask 261120
        %v371 = vsel %vm370, %v337, 0.0
        %v372 = vsel %vm370, %v338, 0.0
        %v373 = vadd.f32 %v371, %v372
        %v374 = vsel %vm370, %v339, 0.0
        %v375 = vadd.f32 %v373, %v374
        %v376 = vsel %vm370, %v340, 0.0
        %v377 = vadd.f32 %v375, %v376
        %v378 = vsel %vm370, %v341, 0.0
        %v379 = vadd.f32 %v377, %v378
        %v380 = vsel %vm370, %v342, 0.0
        %v381 = vadd.f32 %v379, %v380
        %v382 = vsel %vm370, %v343, 0.0
        %v383 = vadd.f32 %v381, %v382
        %v384 = vsel %vm370, %v344, 0.0
        %v385 = vadd.f32 %v383, %v384
        %v386 = vsel %vm370, %v345, 0.0
        %v387 = vadd.f32 %v385, %v386
        %v388 = vsel %vm370, %v346, 0.0
        %v389 = vadd.f32 %v387, %v388
        %v390 = vsel %vm370, %v347, 0.0
        %v391 = vadd.f32 %v389, %v390
        %v392 = vsel %vm370, %v348, 0.0
        %v393 = vadd.f32 %v391, %v392
        %v394 = vsel %vm370, %v349, 0.0
        %v395 = vadd.f32 %v393, %v394
        %v396 = vsel %vm370, %v350, 0.0
        %v397 = vadd.f32 %v395, %v396
        %v398 = vsel %vm370, %v351, 0.0
        %v399 = vadd.f32 %v397, %v398
        %v400 = vsel %vm370, %v352, 0.0
        %v401 = vadd.f32 %v399, %v400
        %v402 = vsel %vm370, %v353, 0.0
        %v403 = vadd.f32 %v401, %v402
        %v404 = vsel %vm370, %v354, 0.0
        %v405 = vadd.f32 %v403, %v404
        %v406 = vsel %vm370, %v355, 0.0
        %v407 = vadd.f32 %v405, %v406
        %v408 = vsel %vm370, %v356, 0.0
        %v409 = vadd.f32 %v407, %v408
        %v410 = vsel %vm370, %v357, 0.0
        %v411 = vadd.f32 %v409, %v410
        %v412 = vsel %vm370, %v358, 0.0
        %v413 = vadd.f32 %v411, %v412
        %v414 = vsel %vm370, %v359, 0.0
        %v415 = vadd.f32 %v413, %v414
        %v416 = vsel %vm370, %v360, 0.0
        %v417 = vadd.f32 %v415, %v416
        %v418 = vsel %vm370, %v361, 0.0
        %v419 = vadd.f32 %v417, %v418
        %v420 = vsel %vm370, %v362, 0.0
        %v421 = vadd.f32 %v419, %v420
        %v422 = vsel %vm370, %v363, 0.0
        %v423 = vadd.f32 %v421, %v422
        %v424 = vsel %vm370, %v364, 0.0
        %v425 = vadd.f32 %v423, %v424
        %v426 = vsel %vm370, %v365, 0.0
        %v427 = vadd.f32 %v425, %v426
        %v428 = vsel %vm370, %v366, 0.0
        %v429 = vadd.f32 %v427, %v428
        %v430 = vsel %vm370, %v367, 0.0
        %v431 = vadd.f32 %v429, %v430
        %v432 = vsel %vm370, %v368, 0.0
        %v433 = vadd.f32 %v431, %v432
        %v434 = vrot.slane %v433, 4
        %v435 = vadd.f32 %v433, %v434
        %v436 = vrot.slane %v435, 2
        %v437 = vadd.f32 %v435, %v436
        %v438 = vrot.slane %v437, 1
        %v439 = vadd.f32 %v437, %v438
        %v440 = vadd.f32 %v369, %v439
        %vm441 = vcmask 253952
        %442 = vst.msk [vmem:[%s174] sm:$0x1] %vm441, %v440
        %v443 = vld [vmem:[%s180] sm:$0x1]
        %v444 = vmul.f32 %v337, %v337
        %v445 = vmul.f32 %v338, %v338
        %v446 = vmul.f32 %v339, %v339
        %v447 = vmul.f32 %v340, %v340
        %v448 = vmul.f32 %v341, %v341
        %v449 = vmul.f32 %v342, %v342
        %v450 = vmul.f32 %v343, %v343
        %v451 = vmul.f32 %v344, %v344
        %v452 = vmul.f32 %v345, %v345
        %v453 = vmul.f32 %v346, %v346
        %v454 = vmul.f32 %v347, %v347
        %v455 = vmul.f32 %v348, %v348
        %v456 = vmul.f32 %v349, %v349
        %v457 = vmul.f32 %v350, %v350
        %v458 = vmul.f32 %v351, %v351
        %v459 = vmul.f32 %v352, %v352
        %v460 = vmul.f32 %v353, %v353
        %v461 = vmul.f32 %v354, %v354
        %v462 = vmul.f32 %v355, %v355
        %v463 = vmul.f32 %v356, %v356
        %v464 = vmul.f32 %v357, %v357
        %v465 = vmul.f32 %v358, %v358
        %v466 = vmul.f32 %v359, %v359
        %v467 = vmul.f32 %v360, %v360
        %v468 = vmul.f32 %v361, %v361
        %v469 = vmul.f32 %v362, %v362
        %v470 = vmul.f32 %v363, %v363
        %v471 = vmul.f32 %v364, %v364
        %v472 = vmul.f32 %v365, %v365
        %v473 = vmul.f32 %v366, %v366
        %v474 = vmul.f32 %v367, %v367
        %v475 = vmul.f32 %v368, %v368
        %v476 = vsel %vm370, %v444, 0.0
        %v477 = vsel %vm370, %v445, 0.0
        %v478 = vadd.f32 %v476, %v477
        %v479 = vsel %vm370, %v446, 0.0
        %v480 = vadd.f32 %v478, %v479
        %v481 = vsel %vm370, %v447, 0.0
        %v482 = vadd.f32 %v480, %v481
        %v483 = vsel %vm370, %v448, 0.0
        %v484 = vadd.f32 %v482, %v483
        %v485 = vsel %vm370, %v449, 0.0
        %v486 = vadd.f32 %v484, %v485
        %v487 = vsel %vm370, %v450, 0.0
        %v488 = vadd.f32 %v486, %v487
        %v489 = vsel %vm370, %v451, 0.0
        %v490 = vadd.f32 %v488, %v489
        %v491 = vsel %vm370, %v452, 0.0
        %v492 = vadd.f32 %v490, %v491
        %v493 = vsel %vm370, %v453, 0.0
        %v494 = vadd.f32 %v492, %v493
        %v495 = vsel %vm370, %v454, 0.0
        %v496 = vadd.f32 %v494, %v495
        %v497 = vsel %vm370, %v455, 0.0
        %v498 = vadd.f32 %v496, %v497
        %v499 = vsel %vm370, %v456, 0.0
        %v500 = vadd.f32 %v498, %v499
        %v501 = vsel %vm370, %v457, 0.0
        %v502 = vadd.f32 %v500, %v501
        %v503 = vsel %vm370, %v458, 0.0
        %v504 = vadd.f32 %v502, %v503
        %v505 = vsel %vm370, %v459, 0.0
        %v506 = vadd.f32 %v504, %v505
        %v507 = vsel %vm370, %v460, 0.0
        %v508 = vadd.f32 %v506, %v507
        %v509 = vsel %vm370, %v461, 0.0
        %v510 = vadd.f32 %v508, %v509
        %v511 = vsel %vm370, %v462, 0.0
        %v512 = vadd.f32 %v510, %v511
        %v513 = vsel %vm370, %v463, 0.0
        %v514 = vadd.f32 %v512, %v513
        %v515 = vsel %vm370, %v464, 0.0
        %v516 = vadd.f32 %v514, %v515
        %v517 = vsel %vm370, %v465, 0.0
        %v518 = vadd.f32 %v516, %v517
        %v519 = vsel %vm370, %v466, 0.0
        %v520 = vadd.f32 %v518, %v519
        %v521 = vsel %vm370, %v467, 0.0
        %v522 = vadd.f32 %v520, %v521
        %v523 = vsel %vm370, %v468, 0.0
        %v524 = vadd.f32 %v522, %v523
        %v525 = vsel %vm370, %v469, 0.0
        %v526 = vadd.f32 %v524, %v525
        %v527 = vsel %vm370, %v470, 0.0
        %v528 = vadd.f32 %v526, %v527
        %v529 = vsel %vm370, %v471, 0.0
        %v530 = vadd.f32 %v528, %v529
        %v531 = vsel %vm370, %v472, 0.0
        %v532 = vadd.f32 %v530, %v531
        %v533 = vsel %vm370, %v473, 0.0
        %v534 = vadd.f32 %v532, %v533
        %v535 = vsel %vm370, %v474, 0.0
        %v536 = vadd.f32 %v534, %v535
        %v537 = vsel %vm370, %v475, 0.0
        %v538 = vadd.f32 %v536, %v537
        %v539 = vrot.slane %v538, 4
        %v540 = vadd.f32 %v538, %v539
        %v541 = vrot.slane %v540, 2
        %v542 = vadd.f32 %v540, %v541
        %v543 = vrot.slane %v542, 1
        %v544 = vadd.f32 %v542, %v543
        %v545 = vadd.f32 %v443, %v544
        %546 = vst.msk [vmem:[%s180] sm:$0x1] %vm441, %v545
        %s547 = sand.u32 %s68, 1
        %s548 = scalar_lea.sflag [#allocation3], %s547
        %s549 = sand.u32 %s68, 1
        %s550 = scalar_lea.vmem [#allocation2], %s549
        %s551 = sand.u32 %s94, 1
        %s552 = scalar_lea.sflag [#allocation5], %s551
        %s553 = sand.u32 %s94, 1
        %s554 = scalar_lea.vmem [#allocation4], %s553
        // Predicated region
        $region29: #{tpu_custom_call.1} parent=23 // pred_check
          %p555 = pneg %p78
        $region30: #{tpu_custom_call.1} parent=23 // pred_check_branch
          %557 = sbr.rel (%p555) target = $region32
        $region31: #{tpu_custom_call.1} parent=23 // pred_region
          %s559 = ssub.s32 16, 16
          %560 = vsyncadd %s548, %s559
          %s561 = smul.addr %s24, 16
          %s562 = scalar_lea.hbm %s1, %s561
          %s564 = sshll.u32 %s550, 4
          %s565 = int_to_ptr.vmem [resolvable:$true] %s564
          %567 = dma.vmem_to_hbm [thread:$0]  %s565, 16, %s562, %s548
        $region32: #{tpu_custom_call.1} parent=23 // pred_fallthru
          _
        // Predicated region
        $region33: #{tpu_custom_call.1} parent=23 // pred_check
          %p568 = pneg %p104
        $region34: #{tpu_custom_call.1} parent=23 // pred_check_branch
          %570 = sbr.rel (%p568) target = $region36
        $region35: #{tpu_custom_call.1} parent=23 // pred_region
          %s572 = ssub.s32 16, 16
          %573 = vsyncadd %s552, %s572
          %s574 = smul.addr %s24, 16
          %s575 = scalar_lea.hbm %s2, %s574
          %s577 = sshll.u32 %s554, 4
          %s578 = int_to_ptr.vmem [resolvable:$true] %s577
          %580 = dma.vmem_to_hbm [thread:$0]  %s578, 16, %s575, %s552
        $region36: #{tpu_custom_call.1} parent=23 // pred_fallthru
          _
      $region24: #{tpu_custom_call.1} parent=5 // pred_fallthru
        _
      %p581 = scmp.le.s32.totalorder 2, %s15
      // Predicated region
      $region37: #{tpu_custom_call.1} parent=5 // pred_check
        %p582 = pneg %p581
      $region38: #{tpu_custom_call.1} parent=5 // pred_check_branch
        %584 = sbr.rel (%p582) target = $region40
      $region39: #{tpu_custom_call.1} parent=5 // pred_region
        %s585 = ssub.s32 %s15, 2
        // Predicated region
        $region41: #{tpu_custom_call.1} parent=39 // pred_check
          %p586 = pneg %p84
        $region42: #{tpu_custom_call.1} parent=39 // pred_check_branch
          %588 = sbr.rel (%p586) target = $region44
        $region43: #{tpu_custom_call.1} parent=39 // pred_region
          %s589 = sand.u32 %s69, 1
          %s590 = scalar_lea.sflag [#allocation3], %s589
          %s591 = sand.u32 %s69, 1
          %s592 = scalar_lea.vmem [#allocation2], %s591
          %593 = dma.done %s590, 16
        $region44: #{tpu_custom_call.1} parent=39 // pred_fallthru
          _
        // Predicated region
        $region45: #{tpu_custom_call.1} parent=39 // pred_check
          %p594 = pneg %p110
        $region46: #{tpu_custom_call.1} parent=39 // pred_check_branch
          %596 = sbr.rel (%p594) target = $region48
        $region47: #{tpu_custom_call.1} parent=39 // pred_region
          %s597 = sand.u32 %s95, 1
          %s598 = scalar_lea.sflag [#allocation5], %s597
          %s599 = sand.u32 %s95, 1
          %s600 = scalar_lea.vmem [#allocation4], %s599
          %601 = dma.done %s598, 16
        $region48: #{tpu_custom_call.1} parent=39 // pred_fallthru
          _
      $region40: #{tpu_custom_call.1} parent=5 // pred_fallthru
        _
    $region6: #{tpu_custom_call.1} parent=1 // loop_footer
      %s19 = sadd.s32 1, %s15
    $region7: #{tpu_custom_call.1} parent=1 // loop_footer_branch
      %14 = sbr.rel target = $region3
    $region8: #{tpu_custom_call.1} parent=1 // loop_exit
      _
    %602 = vsyncpa [#allocation3], 1
    %s603 = scalar_lea.sflag [#allocation3], 1
    %604 = vsyncpa %s603, 1
    %605 = vsyncpa [#allocation5], 1
    %s606 = scalar_lea.sflag [#allocation5], 1
    %607 = vsyncpa %s606, 1

// kernel: patchifier_forward.58
$region0: #{patchifier_forward.58}
  #allocation0 [shape = 'u32[]', space=smem, size = 0x4, offset = 0x4, fixed_abs, tag = 'smem constant byte address 0x4 - core index']
  #allocation1 [shape = 'u32[144,128]{1,0:T(1,128)}', space=vmem, size = 0x12000, scoped, tag = 'internal scratch']
  %s0 = inlined_call_operand.vmem [shape: bf16[512,147], index: 0, kind: input, shape index: {}]
  %s1 = inlined_call_operand.vmem [shape: bf16[147,32], index: 1, kind: input, shape index: {}]
  %s2 = inlined_call_operand.vmem [shape: f32[1,32], index: 2, kind: input, shape index: {}]
  %s3 = inlined_call_operand.vmem [shape: f32[512,32], index: 3, kind: output, shape index: {}]
  %s4 = sld [smem:[#allocation0]]
  $region45: #{patchifier_forward.58} parent=0
    _
  %s6 = ssub.s32 1, %s4
  %s7 = scalar_select 0, %s6, %s4
  loop: start=0, step=1, limit=4
  $region2: #{patchifier_forward.58} parent=0 // loop_pre_header
    _
  $region3: #{patchifier_forward.58} parent=0 // loop_header
    %s9 = sphi 0, %s13
    %p10 = scmp.ge.s32.totalorder %s9, 4
    %s19 = sphi 0, %s21
    %s22 = sphi 0, %s19
    %s23 = sphi 0, %s22
    %s39 = sphi 0, %s23
    %s43 = sphi 0, %s43
    %s45 = sphi 0, %s43
    %s46 = sphi 0, %s45
    %s60 = sphi 0, %s46
    %s64 = sphi 0, %s64
    %s66 = sphi 0, %s64
    %s67 = sphi 0, %s66
    %s81 = sphi 0, %s67
    %s87 = sphi 0, %s89
    %s90 = sphi 0, %s87
    %s91 = sphi 0, %s90
    %s107 = sphi 0, %s91
  $region4: #{patchifier_forward.58} parent=0 // loop_header_branch
    %12 = sbr.rel (%p10) target = $region8
  $region5: #{patchifier_forward.58} parent=0 // loop_body
    %s14 = ssub.s32 %s9, 1
    %s15 = ssub.s32 %s9, 2
    %s16 = sadd.s32 %s9, 1
    %s17 = ssub.s32 %s9, %s16
    %p18 = scmp.eq.s32.totalorder %s17, 0
    %s20 = sadd.s32 %s19, 1
    %s21 = scalar_select %p18, %s19, %s20
    %p24 = pneg %p18
    %p25 = scmp.eq.s32.totalorder %s9, 1
    %p26 = por %p24, %p25
    %p27 = scmp.ne.s32.totalorder %s19, %s22
    %p28 = scmp.eq.s32.totalorder %s9, 0
    %p29 = por %p27, %p28
    %p30 = scmp.ne.s32.totalorder %s19, %s22
    %p31 = scmp.eq.s32.totalorder %s14, 1
    %p32 = por %p30, %p31
    %p33 = scmp.ne.s32.totalorder %s22, %s23
    %p34 = scmp.eq.s32.totalorder %s14, 0
    %p35 = por %p33, %p34
    %p36 = scmp.ne.s32.totalorder %s22, %s23
    %p37 = scmp.eq.s32.totalorder %s15, 1
    %p38 = por %p36, %p37
    %p40 = scmp.ne.s32.totalorder %s23, %s39
    %p41 = scmp.eq.s32.totalorder %s15, 0
    %p42 = por %p40, %p41
    %s44 = sadd.s32 %s43, 1
    %p47 = scmp.eq.s32.totalorder %s9, 1
    %p48 = scmp.ne.s32.totalorder %s43, %s45
    %p49 = scmp.eq.s32.totalorder %s9, 0
    %p50 = por %p48, %p49
    %p51 = scmp.ne.s32.totalorder %s43, %s45
    %p52 = scmp.eq.s32.totalorder %s14, 1
    %p53 = por %p51, %p52
    %p54 = scmp.ne.s32.totalorder %s45, %s46
    %p55 = scmp.eq.s32.totalorder %s14, 0
    %p56 = por %p54, %p55
    %p57 = scmp.ne.s32.totalorder %s45, %s46
    %p58 = scmp.eq.s32.totalorder %s15, 1
    %p59 = por %p57, %p58
    %p61 = scmp.ne.s32.totalorder %s46, %s60
    %p62 = scmp.eq.s32.totalorder %s15, 0
    %p63 = por %p61, %p62
    %s65 = sadd.s32 %s64, 1
    %p68 = scmp.eq.s32.totalorder %s9, 1
    %p69 = scmp.ne.s32.totalorder %s64, %s66
    %p70 = scmp.eq.s32.totalorder %s9, 0
    %p71 = por %p69, %p70
    %p72 = scmp.ne.s32.totalorder %s64, %s66
    %p73 = scmp.eq.s32.totalorder %s14, 1
    %p74 = por %p72, %p73
    %p75 = scmp.ne.s32.totalorder %s66, %s67
    %p76 = scmp.eq.s32.totalorder %s14, 0
    %p77 = por %p75, %p76
    %p78 = scmp.ne.s32.totalorder %s66, %s67
    %p79 = scmp.eq.s32.totalorder %s15, 1
    %p80 = por %p78, %p79
    %p82 = scmp.ne.s32.totalorder %s67, %s81
    %p83 = scmp.eq.s32.totalorder %s15, 0
    %p84 = por %p82, %p83
    %s85 = ssub.s32 %s9, %s16
    %p86 = scmp.eq.s32.totalorder %s85, 0
    %s88 = sadd.s32 %s87, 1
    %s89 = scalar_select %p86, %s87, %s88
    %p92 = pneg %p86
    %p93 = scmp.eq.s32.totalorder %s9, 1
    %p94 = por %p92, %p93
    %p95 = scmp.ne.s32.totalorder %s87, %s90
    %p96 = scmp.eq.s32.totalorder %s9, 0
    %p97 = por %p95, %p96
    %p98 = scmp.ne.s32.totalorder %s87, %s90
    %p99 = scmp.eq.s32.totalorder %s14, 1
    %p100 = por %p98, %p99
    %p101 = scmp.ne.s32.totalorder %s90, %s91
    %p102 = scmp.eq.s32.totalorder %s14, 0
    %p103 = por %p101, %p102
    %p104 = scmp.ne.s32.totalorder %s90, %s91
    %p105 = scmp.eq.s32.totalorder %s15, 1
    %p106 = por %p104, %p105
    %p108 = scmp.ne.s32.totalorder %s91, %s107
    %p109 = scmp.eq.s32.totalorder %s15, 0
    %p110 = por %p108, %p109
    %p111 = scmp.le.s32.totalorder 1, %s9
    %p112 = scmp.lt.s32.totalorder %s9, 3
    %p113 = pnand %p111, %p112
    %p114 = pneg %p113
    // Predicated region
    $region9: #{patchifier_forward.58} parent=5 // pred_check
      _
    $region10: #{patchifier_forward.58} parent=5 // pred_check_branch
      %116 = sbr.rel (%p113) target = $region12
    $region11: #{patchifier_forward.58} parent=5 // pred_region
      %s117 = ssub.s32 %s9, 1
      // Predicated region
      $region13: #{patchifier_forward.58} parent=11 // pred_check
        %p118 = pneg %p56
      $region14: #{patchifier_forward.58} parent=11 // pred_check_branch
        %120 = sbr.rel (%p118) target = $region16
      $region15: #{patchifier_forward.58} parent=11 // pred_region
        _
      $region16: #{patchifier_forward.58} parent=11 // pred_fallthru
        _
      // Predicated region
      $region17: #{patchifier_forward.58} parent=11 // pred_check
        %p121 = pneg %p77
      $region18: #{patchifier_forward.58} parent=11 // pred_check_branch
        %123 = sbr.rel (%p121) target = $region20
      $region19: #{patchifier_forward.58} parent=11 // pred_region
        _
      $region20: #{patchifier_forward.58} parent=11 // pred_fallthru
        _
    $region12: #{patchifier_forward.58} parent=5 // pred_fallthru
      _
    %p124 = scmp.lt.s32.totalorder %s9, 2
    // Predicated region
    $region21: #{patchifier_forward.58} parent=5 // pred_check
      %p125 = pneg %p124
    $region22: #{patchifier_forward.58} parent=5 // pred_check_branch
      %127 = sbr.rel (%p125) target = $region24
    $region23: #{patchifier_forward.58} parent=5 // pred_region
      // Predicated region
      $region25: #{patchifier_forward.58} parent=23 // pred_check
        %p128 = pneg %p29
      $region26: #{patchifier_forward.58} parent=23 // pred_check_branch
        %130 = sbr.rel (%p128) target = $region28
      $region27: #{patchifier_forward.58} parent=23 // pred_region
        %s131 = smul.u32 32, %s9
        %p132 = scmp.lt.s32.totalorder %s131, 63
        %s133 = scalar_select %p132, %s131, 63
        %s134 = smul.addr %s133, 2
        %s135 = smul.addr %s134, 4
        %s136 = scalar_lea.vmem %s0, %s135
        %s137 = smul.u32 32, %s9
      $region28: #{patchifier_forward.58} parent=23 // pred_fallthru
        _
    $region24: #{patchifier_forward.58} parent=5 // pred_fallthru
      _
    %p138 = scmp.le.s32.totalorder 1, %s9
    %p139 = scmp.lt.s32.totalorder %s9, 3
    %p140 = pnand %p138, %p139
    %p141 = pneg %p140
    // Predicated region
    $region29: #{patchifier_forward.58} parent=5 // pred_check
      _
    $region30: #{patchifier_forward.58} parent=5 // pred_check_branch
      %143 = sbr.rel (%p140) target = $region32
    $region31: #{patchifier_forward.58} parent=5 // pred_region
      %s144 = ssub.s32 %s9, 1
      %s145 = smul.u32 32, %s14
      %p146 = scmp.lt.s32.totalorder %s145, 63
      %s147 = scalar_select %p146, %s145, 63
      %s148 = smul.addr %s147, 2
      %s149 = smul.addr %s148, 4
      %s150 = scalar_lea.vmem %s0, %s149
      %p151 = pneg %p35
      %p152 = pneg %p32
      %p153 = pneg %p56
      %p154 = pneg %p53
      %p155 = pneg %p77
      %p156 = pneg %p74
      %p157 = pneg %p103
      %p158 = pneg %p100
      %s159 = smul.u32 32, %s14
      %p160 = scmp.lt.s32.totalorder %s159, 63
      %s161 = scalar_select %p160, %s159, 63
      %s162 = smul.addr %s161, 8
      %s163 = scalar_lea.vmem %s3, %s162
      %s164 = smul.u32 32, %s14
      %p165 = scmp.lt.s32.totalorder %s164, 63
      %s166 = scalar_select %p165, %s164, 63
      %s167 = smul.addr %s166, 2
      %s168 = smul.addr %s167, 4
      %s169 = scalar_lea.vmem %s0, %s168
      %s170 = smul.u32 32, %s14
      %s171 = smul.u32 32, %s14
      %p172 = scmp.lt.s32.totalorder %s171, 63
      %s173 = scalar_select %p172, %s171, 63
      %s174 = smul.addr %s173, 8
      %s175 = scalar_lea.vmem %s3, %s174
      %s176 = smul.u32 32, %s14
      %v178 = vld [vmem:[%s169] sm:$0xff]
      %v179 = vld [vmem:[%s169 + $0x8] sm:$0xff]
      %v180 = vld [vmem:[%s169 + $0x10] sm:$0xff]
      %v181 = vld [vmem:[%s169 + $0x18] sm:$0xff]
      %v182 = vld [vmem:[%s169 + $0x20] sm:$0xff]
      %v183 = vld [vmem:[%s169 + $0x28] sm:$0xff]
      %v184 = vld [vmem:[%s169 + $0x30] sm:$0xff]
      %v185 = vld [vmem:[%s169 + $0x38] sm:$0xff]
      %v186 = vld [vmem:[%s169 + $0x40] sm:$0xff]
      %v187 = vld [vmem:[%s169 + $0x48] sm:$0xff]
      %v188 = vld [vmem:[%s169 + $0x50] sm:$0xff]
      %v189 = vld [vmem:[%s169 + $0x58] sm:$0xff]
      %v190 = vld [vmem:[%s169 + $0x60] sm:$0xff]
      %v191 = vld [vmem:[%s169 + $0x68] sm:$0xff]
      %v192 = vld [vmem:[%s169 + $0x70] sm:$0xff]
      %v193 = vld [vmem:[%s169 + $0x78] sm:$0xff]
      %v194 = vld [vmem:[%s169 + $0x80] sm:$0xff]
      %v195 = vld [vmem:[%s169 + $0x88] sm:$0xff]
      %v196 = vld [vmem:[%s169 + $0x90] sm:$0xff]
      %v197 = vld [vmem:[%s169 + $0x98] sm:$0xff]
      %v198 = vld [vmem:[%s169 + $0xa0] sm:$0xff]
      %v199 = vld [vmem:[%s169 + $0xa8] sm:$0xff]
      %v200 = vld [vmem:[%s169 + $0xb0] sm:$0xff]
      %v201 = vld [vmem:[%s169 + $0xb8] sm:$0xff]
      %v202 = vld [vmem:[%s169 + $0xc0] sm:$0xff]
      %v203 = vld [vmem:[%s169 + $0xc8] sm:$0xff]
      %v204 = vld [vmem:[%s169 + $0xd0] sm:$0xff]
      %v205 = vld [vmem:[%s169 + $0xd8] sm:$0xff]
      %v206 = vld [vmem:[%s169 + $0xe0] sm:$0xff]
      %v207 = vld [vmem:[%s169 + $0xe8] sm:$0xff]
      %v208 = vld [vmem:[%s169 + $0xf0] sm:$0xff]
      %v209 = vld [vmem:[%s169 + $0xf8] sm:$0xff]
      %v210 = vld [vmem:[%s1] sm:$0xf]
      %v211 = vld [vmem:[%s1 + $0x4] sm:$0xf]
      %v212 = vld [vmem:[%s1 + $0x8] sm:$0xf]
      %v213 = vld [vmem:[%s1 + $0xc] sm:$0xf]
      %v214 = vld [vmem:[%s1 + $0x10] sm:$0xf]
      %v215 = vld [vmem:[%s1 + $0x14] sm:$0xf]
      %v216 = vld [vmem:[%s1 + $0x18] sm:$0xf]
      %v217 = vld [vmem:[%s1 + $0x1c] sm:$0xf]
      %v218 = vld [vmem:[%s1 + $0x20] sm:$0xf]
      %v219 = vld [vmem:[%s1 + $0x24] sm:$0xf]
      %v220 = vld [vmem:[%s1 + $0x28] sm:$0xf]
      %v221 = vld [vmem:[%s1 + $0x2c] sm:$0xf]
      %v222 = vld [vmem:[%s1 + $0x30] sm:$0xf]
      %v223 = vld [vmem:[%s1 + $0x34] sm:$0xf]
      %v224 = vld [vmem:[%s1 + $0x38] sm:$0xf]
      %v225 = vld [vmem:[%s1 + $0x3c] sm:$0xf]
      %v226 = vld [vmem:[%s1 + $0x40] sm:$0xf]
      %v227 = vld [vmem:[%s1 + $0x44] sm:$0xf]
      %v228 = vld [vmem:[%s1 + $0x48] sm:$0x3]
      %v229 = vld [vmem:[%s2] sm:$0x1]
      %v231 = vlaneseq
      %v232 = vshrl.u32 %v231, 7
      %v233 = vsub.s32 0, %v232
      %v234 = vrot.slane %v229, %v233
      %v268 = vunpack.c.l.b16 %v178
      %v269 = vunpack.c.h.b16 %v178
      %v270 = vunpack.c.l.b16 %v179
      %v271 = vunpack.c.h.b16 %v179
      %v272 = vunpack.c.l.b16 %v180
      %v273 = vunpack.c.h.b16 %v180
      %v274 = vunpack.c.l.b16 %v181
      %v275 = vunpack.c.h.b16 %v181
      %v276 = vunpack.c.l.b16 %v182
      %v277 = vunpack.c.h.b16 %v182
      %v278 = vunpack.c.l.b16 %v183
      %v279 = vunpack.c.h.b16 %v183
      %v280 = vunpack.c.l.b16 %v184
      %v281 = vunpack.c.h.b16 %v184
      %v282 = vunpack.c.l.b16 %v185
      %v283 = vunpack.c.h.b16 %v185
      %v284 = vunpack.c.l.b16 %v186
      %v285 = vunpack.c.h.b16 %v186
      %v286 = vunpack.c.l.b16 %v187
      %v287 = vunpack.c.h.b16 %v187
      %v288 = vunpack.c.l.b16 %v188
      %v289 = vunpack.c.h.b16 %v188
      %v290 = vunpack.c.l.b16 %v189
      %v291 = vunpack.c.h.b16 %v189
      %v292 = vunpack.c.l.b16 %v190
      %v293 = vunpack.c.h.b16 %v190
      %v294 = vunpack.c.l.b16 %v191
      %v295 = vunpack.c.h.b16 %v191
      %v296 = vunpack.c.l.b16 %v192
      %v297 = vunpack.c.h.b16 %v192
      %v298 = vunpack.c.l.b16 %v193
      %v299 = vunpack.c.h.b16 %v193
      %v300 = vunpack.c.l.b16 %v194
      %v301 = vunpack.c.h.b16 %v194
      %v302 = vunpack.c.l.b16 %v195
      %v303 = vunpack.c.h.b16 %v195
      %v304 = vunpack.c.l.b16 %v196
      %v305 = vunpack.c.h.b16 %v196
      %v306 = vunpack.c.l.b16 %v197
      %v307 = vunpack.c.h.b16 %v197
      %v308 = vunpack.c.l.b16 %v198
      %v309 = vunpack.c.h.b16 %v198
      %v310 = vunpack.c.l.b16 %v199
      %v311 = vunpack.c.h.b16 %v199
      %v312 = vunpack.c.l.b16 %v200
      %v313 = vunpack.c.h.b16 %v200
      %v314 = vunpack.c.l.b16 %v201
      %v315 = vunpack.c.h.b16 %v201
      %v316 = vunpack.c.l.b16 %v202
      %v317 = vunpack.c.h.b16 %v202
      %v318 = vunpack.c.l.b16 %v203
      %v319 = vunpack.c.h.b16 %v203
      %v320 = vunpack.c.l.b16 %v204
      %v321 = vunpack.c.h.b16 %v204
      %v322 = vunpack.c.l.b16 %v205
      %v323 = vunpack.c.h.b16 %v205
      %v324 = vunpack.c.l.b16 %v206
      %v325 = vunpack.c.h.b16 %v206
      %v326 = vunpack.c.l.b16 %v207
      %v327 = vunpack.c.h.b16 %v207
      %v328 = vunpack.c.l.b16 %v208
      %v329 = vunpack.c.h.b16 %v208
      %v330 = vunpack.c.l.b16 %v209
      %v331 = vunpack.c.h.b16 %v209
      %v332 = vpack.c.b16 %v270, %v268
      %v333 = vpack.c.b16 %v271, %v269
      %v334 = vpack.c.b16 %v274, %v272
      %v335 = vpack.c.b16 %v275, %v273
      %v336 = vpack.c.b16 %v278, %v276
      %v337 = vpack.c.b16 %v279, %v277
      %v338 = vpack.c.b16 %v282, %v280
      %v339 = vpack.c.b16 %v283, %v281
      %v340 = vpack.c.b16 %v286, %v284
      %v341 = vpack.c.b16 %v287, %v285
      %v342 = vpack.c.b16 %v290, %v288
      %v343 = vpack.c.b16 %v291, %v289
      %v344 = vpack.c.b16 %v294, %v292
      %v345 = vpack.c.b16 %v295, %v293
      %v346 = vpack.c.b16 %v298, %v296
      %v347 = vpack.c.b16 %v299, %v297
      %v348 = vpack.c.b16 %v302, %v300
      %v349 = vpack.c.b16 %v303, %v301
      %v350 = vpack.c.b16 %v306, %v304
      %v351 = vpack.c.b16 %v307, %v305
      %v352 = vpack.c.b16 %v310, %v308
      %v353 = vpack.c.b16 %v311, %v309
      %v354 = vpack.c.b16 %v314, %v312
      %v355 = vpack.c.b16 %v315, %v313
      %v356 = vpack.c.b16 %v318, %v316
      %v357 = vpack.c.b16 %v319, %v317
      %v358 = vpack.c.b16 %v322, %v320
      %v359 = vpack.c.b16 %v323, %v321
      %v360 = vpack.c.b16 %v326, %v324
      %v361 = vpack.c.b16 %v327, %v325
      %v362 = vpack.c.b16 %v330, %v328
      %v363 = vpack.c.b16 %v331, %v329
      %v399 = vunpack.c.l.b16 %v210
      %v400 = vunpack.c.l.b16 %v211
      %v401 = vunpack.c.l.b16 %v212
      %v402 = vunpack.c.l.b16 %v213
      %v403 = vunpack.c.l.b16 %v214
      %v404 = vunpack.c.l.b16 %v215
      %v405 = vunpack.c.l.b16 %v216
      %v406 = vunpack.c.l.b16 %v217
      %v407 = vunpack.c.l.b16 %v218
      %v408 = vunpack.c.l.b16 %v219
      %v409 = vunpack.c.l.b16 %v220
      %v410 = vunpack.c.l.b16 %v221
      %v411 = vunpack.c.l.b16 %v222
      %v412 = vunpack.c.l.b16 %v223
      %v413 = vunpack.c.l.b16 %v224
      %v414 = vunpack.c.l.b16 %v225
      %v415 = vunpack.c.l.b16 %v226
      %v416 = vunpack.c.l.b16 %v227
      %v417 = vunpack.c.l.b16 %v228
      %v418 = vpack.c.b16 %v400, %v399
      %v419 = vpack.c.b16 %v402, %v401
      %v420 = vpack.c.b16 %v404, %v403
      %v421 = vpack.c.b16 %v406, %v405
      %v422 = vpack.c.b16 %v408, %v407
      %v423 = vpack.c.b16 %v410, %v409
      %v424 = vpack.c.b16 %v412, %v411
      %v425 = vpack.c.b16 %v414, %v413
      %v426 = vpack.c.b16 %v416, %v415
      %v427 = vpack.c.b16 %v417, %v417
      %vm437 = vcmask 154624
      %v439 = vsel %vm437, %v333, 0
      %v442 = vsel %vm437, %v335, 0
      %v445 = vsel %vm437, %v337, 0
      %v448 = vsel %vm437, %v339, 0
      %v451 = vsel %vm437, %v341, 0
      %v454 = vsel %vm437, %v343, 0
      %v457 = vsel %vm437, %v345, 0
      %v460 = vsel %vm437, %v347, 0
      %v463 = vsel %vm437, %v349, 0
      %v466 = vsel %vm437, %v351, 0
      %v469 = vsel %vm437, %v353, 0
      %v472 = vsel %vm437, %v355, 0
      %v475 = vsel %vm437, %v357, 0
      %v478 = vsel %vm437, %v359, 0
      %v481 = vsel %vm437, %v361, 0
      %v484 = vsel %vm437, %v363, 0
      %vm486 = vcmask 1040384
      %vm487 = vcmask 1041408
      %v488 = vsel %vm486, 4294967295, 65535
      %v489 = vsel %vm487, %v488, 0
      %v491 = vand.u32 %v427, %v489
      %493 = vmatprep.subr.bf16.mxu0 0
      %494 = vmatpush1.bf16.msra.mxu0 %v425
      %495 = vmatprep.subr.bf16.mxu0 0
      %496 = vmatpush1.bf16.msra.mxu0 %v424
      %497 = vmatprep.subr.bf16.mxu0 0
      %498 = vmatpush1.bf16.msra.mxu0 %v423
      %499 = vmatprep.subr.bf16.mxu0 0
      %500 = vmatpush1.bf16.msra.mxu0 %v422
      %501 = vmatprep.subr.bf16.mxu0 0
      %502 = vmatpush1.bf16.msra.mxu0 %v421
      %503 = vmatprep.subr.bf16.mxu0 0
      %504 = vmatpush1.bf16.msra.mxu0 %v420
      %505 = vmatprep.subr.bf16.mxu0 0
      %506 = vmatpush1.bf16.msra.mxu0 %v419
      %507 = vmatprep.subr.bf16.mxu0 0
      %508 = vmatpush1.bf16.msra.mxu0 %v418
      %509 = vmatprep.subr.bf16.mxu0 0
      %510 = vmatpush2.bf16.msra.mxu0 0
      %511 = vmatprep.subr.bf16.mxu0 0
      %512 = vmatpush2.bf16.msra.mxu0 0
      %513 = vmatprep.subr.bf16.mxu0 0
      %514 = vmatpush2.bf16.msra.mxu0 0
      %515 = vmatprep.subr.bf16.mxu0 0
      %516 = vmatpush2.bf16.msra.mxu0 0
      %517 = vmatprep.subr.bf16.mxu0 0
      %518 = vmatpush2.bf16.msra.mxu0 0
      %519 = vmatprep.subr.bf16.mxu0 0
      %520 = vmatpush2.bf16.msra.mxu0 0
      %521 = vmatprep.subr.bf16.mxu0 0
      %522 = vmatpush2.bf16.msra.mxu0 %v491
      %523 = vmatprep.subr.bf16.mxu0 0
      %524 = vmatpush2.bf16.msra.mxu0 %v426
      %525 = vmatprep.mubr.bf16.mxu0 %v439
      %526 = vmatmul.mubr.bf16.gmra.mxu0 %v332
      %v527 = vpop.f32.mrf.mxu0
      %v528 = vadd.f32 %v234, %v527
      %v529 = vpop.f32.mrf.mxu0
      %v530 = vpop.f32.mrf.mxu0
      %v531 = vadd.f32 %v234, %v530
      %v532 = vpop.f32.mrf.mxu0
      %533 = vmatprep.mubr.bf16.mxu0 %v442
      %534 = vmatmul.mubr.bf16.gmra.mxu0 %v334
      %v535 = vpop.f32.mrf.mxu0
      %v536 = vadd.f32 %v234, %v535
      %v537 = vpop.f32.mrf.mxu0
      %v538 = vpop.f32.mrf.mxu0
      %v539 = vadd.f32 %v234, %v538
      %v540 = vpop.f32.mrf.mxu0
      %541 = vmatprep.mubr.bf16.mxu0 %v445
      %542 = vmatmul.mubr.bf16.gmra.mxu0 %v336
      %v543 = vpop.f32.mrf.mxu0
      %v544 = vadd.f32 %v234, %v543
      %v545 = vpop.f32.mrf.mxu0
      %v546 = vpop.f32.mrf.mxu0
      %v547 = vadd.f32 %v234, %v546
      %v548 = vpop.f32.mrf.mxu0
      %549 = vmatprep.mubr.bf16.mxu0 %v448
      %550 = vmatmul.mubr.bf16.gmra.mxu0 %v338
      %v551 = vpop.f32.mrf.mxu0
      %v552 = vadd.f32 %v234, %v551
      %v553 = vpop.f32.mrf.mxu0
      %v554 = vpop.f32.mrf.mxu0
      %v555 = vadd.f32 %v234, %v554
      %v556 = vpop.f32.mrf.mxu0
      %557 = vmatprep.mubr.bf16.mxu0 %v451
      %558 = vmatmul.mubr.bf16.gmra.mxu0 %v340
      %v559 = vpop.f32.mrf.mxu0
      %v560 = vadd.f32 %v234, %v559
      %v561 = vpop.f32.mrf.mxu0
      %v562 = vpop.f32.mrf.mxu0
      %v563 = vadd.f32 %v234, %v562
      %v564 = vpop.f32.mrf.mxu0
      %565 = vmatprep.mubr.bf16.mxu0 %v454
      %566 = vmatmul.mubr.bf16.gmra.mxu0 %v342
      %v567 = vpop.f32.mrf.mxu0
      %v568 = vadd.f32 %v234, %v567
      %v569 = vpop.f32.mrf.mxu0
      %v570 = vpop.f32.mrf.mxu0
      %v571 = vadd.f32 %v234, %v570
      %v572 = vpop.f32.mrf.mxu0
      %573 = vmatprep.mubr.bf16.mxu0 %v457
      %574 = vmatmul.mubr.bf16.gmra.mxu0 %v344
      %v575 = vpop.f32.mrf.mxu0
      %v576 = vadd.f32 %v234, %v575
      %v577 = vpop.f32.mrf.mxu0
      %v578 = vpop.f32.mrf.mxu0
      %v579 = vadd.f32 %v234, %v578
      %v580 = vpop.f32.mrf.mxu0
      %581 = vmatprep.mubr.bf16.mxu0 %v460
      %582 = vmatmul.mubr.bf16.gmra.mxu0 %v346
      %v583 = vpop.f32.mrf.mxu0
      %v584 = vadd.f32 %v234, %v583
      %v585 = vpop.f32.mrf.mxu0
      %v586 = vpop.f32.mrf.mxu0
      %v587 = vadd.f32 %v234, %v586
      %v588 = vpop.f32.mrf.mxu0
      %589 = vmatprep.mubr.bf16.mxu0 %v463
      %590 = vmatmul.mubr.bf16.gmra.mxu0 %v348
      %v591 = vpop.f32.mrf.mxu0
      %v592 = vadd.f32 %v234, %v591
      %v593 = vpop.f32.mrf.mxu0
      %v594 = vpop.f32.mrf.mxu0
      %v595 = vadd.f32 %v234, %v594
      %v596 = vpop.f32.mrf.mxu0
      %597 = vmatprep.mubr.bf16.mxu0 %v466
      %598 = vmatmul.mubr.bf16.gmra.mxu0 %v350
      %v599 = vpop.f32.mrf.mxu0
      %v600 = vadd.f32 %v234, %v599
      %v601 = vpop.f32.mrf.mxu0
      %v602 = vpop.f32.mrf.mxu0
      %v603 = vadd.f32 %v234, %v602
      %v604 = vpop.f32.mrf.mxu0
      %605 = vmatprep.mubr.bf16.mxu0 %v469
      %606 = vmatmul.mubr.bf16.gmra.mxu0 %v352
      %v607 = vpop.f32.mrf.mxu0
      %v608 = vadd.f32 %v234, %v607
      %v609 = vpop.f32.mrf.mxu0
      %v610 = vpop.f32.mrf.mxu0
      %v611 = vadd.f32 %v234, %v610
      %v612 = vpop.f32.mrf.mxu0
      %613 = vmatprep.mubr.bf16.mxu0 %v472
      %614 = vmatmul.mubr.bf16.gmra.mxu0 %v354
      %v615 = vpop.f32.mrf.mxu0
      %v616 = vadd.f32 %v234, %v615
      %v617 = vpop.f32.mrf.mxu0
      %v618 = vpop.f32.mrf.mxu0
      %v619 = vadd.f32 %v234, %v618
      %v620 = vpop.f32.mrf.mxu0
      %621 = vmatprep.mubr.bf16.mxu0 %v475
      %622 = vmatmul.mubr.bf16.gmra.mxu0 %v356
      %v623 = vpop.f32.mrf.mxu0
      %v624 = vadd.f32 %v234, %v623
      %v625 = vpop.f32.mrf.mxu0
      %v626 = vpop.f32.mrf.mxu0
      %v627 = vadd.f32 %v234, %v626
      %v628 = vpop.f32.mrf.mxu0
      %629 = vmatprep.mubr.bf16.mxu0 %v478
      %630 = vmatmul.mubr.bf16.gmra.mxu0 %v358
      %v631 = vpop.f32.mrf.mxu0
      %v632 = vadd.f32 %v234, %v631
      %v633 = vpop.f32.mrf.mxu0
      %v634 = vpop.f32.mrf.mxu0
      %v635 = vadd.f32 %v234, %v634
      %v636 = vpop.f32.mrf.mxu0
      %637 = vmatprep.mubr.bf16.mxu0 %v481
      %638 = vmatmul.mubr.bf16.gmra.mxu0 %v360
      %v639 = vpop.f32.mrf.mxu0
      %v640 = vadd.f32 %v234, %v639
      %v641 = vpop.f32.mrf.mxu0
      %v642 = vpop.f32.mrf.mxu0
      %v643 = vadd.f32 %v234, %v642
      %v644 = vpop.f32.mrf.mxu0
      %645 = vmatprep.mubr.bf16.mxu0 %v484
      %646 = vmatmul.mubr.bf16.gmra.mxu0 %v362
      %v647 = vpop.f32.mrf.mxu0
      %v648 = vadd.f32 %v234, %v647
      %v649 = vpop.f32.mrf.mxu0
      %v650 = vpop.f32.mrf.mxu0
      %v651 = vadd.f32 %v234, %v650
      %v652 = vpop.f32.mrf.mxu0
      %653 = vdwg.mxu0
      %v654 = vmax.f32 %v528, 0.0
      %v655 = vmax.f32 %v531, 0.0
      %v656 = vmax.f32 %v536, 0.0
      %v657 = vmax.f32 %v539, 0.0
      %v658 = vmax.f32 %v544, 0.0
      %v659 = vmax.f32 %v547, 0.0
      %v660 = vmax.f32 %v552, 0.0
      %v661 = vmax.f32 %v555, 0.0
      %v662 = vmax.f32 %v560, 0.0
      %v663 = vmax.f32 %v563, 0.0
      %v664 = vmax.f32 %v568, 0.0
      %v665 = vmax.f32 %v571, 0.0
      %v666 = vmax.f32 %v576, 0.0
      %v667 = vmax.f32 %v579, 0.0
      %v668 = vmax.f32 %v584, 0.0
      %v669 = vmax.f32 %v587, 0.0
      %v670 = vmax.f32 %v592, 0.0
      %v671 = vmax.f32 %v595, 0.0
      %v672 = vmax.f32 %v600, 0.0
      %v673 = vmax.f32 %v603, 0.0
      %v674 = vmax.f32 %v608, 0.0
      %v675 = vmax.f32 %v611, 0.0
      %v676 = vmax.f32 %v616, 0.0
      %v677 = vmax.f32 %v619, 0.0
      %v678 = vmax.f32 %v624, 0.0
      %v679 = vmax.f32 %v627, 0.0
      %v680 = vmax.f32 %v632, 0.0
      %v681 = vmax.f32 %v635, 0.0
      %v682 = vmax.f32 %v640, 0.0
      %v683 = vmax.f32 %v643, 0.0
      %v684 = vmax.f32 %v648, 0.0
      %v685 = vmax.f32 %v651, 0.0
      %vm686 = vcmask 261120
      %687 = vst.msk [vmem:[%s175] sm:$0xff] %vm686, %v654
      %688 = vst.msk [vmem:[%s175 + $0x8] sm:$0xff] %vm686, %v655
      %689 = vst.msk [vmem:[%s175 + $0x10] sm:$0xff] %vm686, %v656
      %690 = vst.msk [vmem:[%s175 + $0x18] sm:$0xff] %vm686, %v657
      %691 = vst.msk [vmem:[%s175 + $0x20] sm:$0xff] %vm686, %v658
      %692 = vst.msk [vmem:[%s175 + $0x28] sm:$0xff] %vm686, %v659
      %693 = vst.msk [vmem:[%s175 + $0x30] sm:$0xff] %vm686, %v660
      %694 = vst.msk [vmem:[%s175 + $0x38] sm:$0xff] %vm686, %v661
      %695 = vst.msk [vmem:[%s175 + $0x40] sm:$0xff] %vm686, %v662
      %696 = vst.msk [vmem:[%s175 + $0x48] sm:$0xff] %vm686, %v663
      %697 = vst.msk [vmem:[%s175 + $0x50] sm:$0xff] %vm686, %v664
      %698 = vst.msk [vmem:[%s175 + $0x58] sm:$0xff] %vm686, %v665
      %699 = vst.msk [vmem:[%s175 + $0x60] sm:$0xff] %vm686, %v666
      %700 = vst.msk [vmem:[%s175 + $0x68] sm:$0xff] %vm686, %v667
      %701 = vst.msk [vmem:[%s175 + $0x70] sm:$0xff] %vm686, %v668
      %702 = vst.msk [vmem:[%s175 + $0x78] sm:$0xff] %vm686, %v669
      %703 = vst.msk [vmem:[%s175 + $0x80] sm:$0xff] %vm686, %v670
      %704 = vst.msk [vmem:[%s175 + $0x88] sm:$0xff] %vm686, %v671
      %705 = vst.msk [vmem:[%s175 + $0x90] sm:$0xff] %vm686, %v672
      %706 = vst.msk [vmem:[%s175 + $0x98] sm:$0xff] %vm686, %v673
      %707 = vst.msk [vmem:[%s175 + $0xa0] sm:$0xff] %vm686, %v674
      %708 = vst.msk [vmem:[%s175 + $0xa8] sm:$0xff] %vm686, %v675
      %709 = vst.msk [vmem:[%s175 + $0xb0] sm:$0xff] %vm686, %v676
      %710 = vst.msk [vmem:[%s175 + $0xb8] sm:$0xff] %vm686, %v677
      %711 = vst.msk [vmem:[%s175 + $0xc0] sm:$0xff] %vm686, %v678
      %712 = vst.msk [vmem:[%s175 + $0xc8] sm:$0xff] %vm686, %v679
      %713 = vst.msk [vmem:[%s175 + $0xd0] sm:$0xff] %vm686, %v680
      %714 = vst.msk [vmem:[%s175 + $0xd8] sm:$0xff] %vm686, %v681
      %715 = vst.msk [vmem:[%s175 + $0xe0] sm:$0xff] %vm686, %v682
      %716 = vst.msk [vmem:[%s175 + $0xe8] sm:$0xff] %vm686, %v683
      %717 = vst.msk [vmem:[%s175 + $0xf0] sm:$0xff] %vm686, %v684
      %718 = vst.msk [vmem:[%s175 + $0xf8] sm:$0xff] %vm686, %v685
      %s719 = smul.u32 32, %s14
      %p720 = scmp.lt.s32.totalorder %s719, 63
      %s721 = scalar_select %p720, %s719, 63
      %s722 = smul.addr %s721, 8
      %s723 = scalar_lea.vmem %s3, %s722
      // Predicated region
      $region33: #{patchifier_forward.58} parent=31 // pred_check
        %p724 = pneg %p100
      $region34: #{patchifier_forward.58} parent=31 // pred_check_branch
        %726 = sbr.rel (%p724) target = $region36
      $region35: #{patchifier_forward.58} parent=31 // pred_region
        %s727 = smul.u32 32, %s14
      $region36: #{patchifier_forward.58} parent=31 // pred_fallthru
        _
    $region32: #{patchifier_forward.58} parent=5 // pred_fallthru
      _
    %p728 = scmp.le.s32.totalorder 2, %s9
    // Predicated region
    $region37: #{patchifier_forward.58} parent=5 // pred_check
      %p729 = pneg %p728
    $region38: #{patchifier_forward.58} parent=5 // pred_check_branch
      %731 = sbr.rel (%p729) target = $region40
    $region39: #{patchifier_forward.58} parent=5 // pred_region
      %s732 = ssub.s32 %s9, 2
      // Predicated region
      $region41: #{patchifier_forward.58} parent=39 // pred_check
        %p733 = pneg %p106
      $region42: #{patchifier_forward.58} parent=39 // pred_check_branch
        %735 = sbr.rel (%p733) target = $region44
      $region43: #{patchifier_forward.58} parent=39 // pred_region
        %s736 = smul.u32 32, %s15
        %p737 = scmp.lt.s32.totalorder %s736, 63
        %s738 = scalar_select %p737, %s736, 63
        %s739 = smul.addr %s738, 8
        %s740 = scalar_lea.vmem %s3, %s739
      $region44: #{patchifier_forward.58} parent=39 // pred_fallthru
        _
    $region40: #{patchifier_forward.58} parent=5 // pred_fallthru
      _
  $region6: #{patchifier_forward.58} parent=0 // loop_footer
    %s13 = sadd.s32 1, %s9
  $region7: #{patchifier_forward.58} parent=0 // loop_footer_branch
    %8 = sbr.rel target = $region3
  $region8: #{patchifier_forward.58} parent=0 // loop_exit
    _

// kernel: patchifier_forward.59
$region0: #{patchifier_forward.59}
  #allocation0 [shape = 'u32[]', space=smem, size = 0x4, offset = 0x4, fixed_abs, tag = 'smem constant byte address 0x4 - core index']
  #allocation1 [shape = 'u32[144,128]{1,0:T(1,128)}', space=vmem, size = 0x12000, scoped, tag = 'internal scratch']
  %s0 = inlined_call_operand.vmem [shape: bf16[512,288], index: 0, kind: input, shape index: {}]
  %s1 = inlined_call_operand.vmem [shape: bf16[288,32], index: 1, kind: input, shape index: {}]
  %s2 = inlined_call_operand.vmem [shape: f32[1,32], index: 2, kind: input, shape index: {}]
  %s3 = inlined_call_operand.vmem [shape: f32[512,32], index: 3, kind: output, shape index: {}]
  %s4 = sld [smem:[#allocation0]]
  $region45: #{patchifier_forward.59} parent=0
    _
  %s6 = ssub.s32 1, %s4
  %s7 = scalar_select 0, %s6, %s4
  loop: start=0, step=1, limit=4
  $region2: #{patchifier_forward.59} parent=0 // loop_pre_header
    _
  $region3: #{patchifier_forward.59} parent=0 // loop_header
    %s9 = sphi 0, %s13
    %p10 = scmp.ge.s32.totalorder %s9, 4
    %s19 = sphi 0, %s21
    %s22 = sphi 0, %s19
    %s23 = sphi 0, %s22
    %s39 = sphi 0, %s23
    %s43 = sphi 0, %s43
    %s45 = sphi 0, %s43
    %s46 = sphi 0, %s45
    %s60 = sphi 0, %s46
    %s64 = sphi 0, %s64
    %s66 = sphi 0, %s64
    %s67 = sphi 0, %s66
    %s81 = sphi 0, %s67
    %s87 = sphi 0, %s89
    %s90 = sphi 0, %s87
    %s91 = sphi 0, %s90
    %s107 = sphi 0, %s91
  $region4: #{patchifier_forward.59} parent=0 // loop_header_branch
    %12 = sbr.rel (%p10) target = $region8
  $region5: #{patchifier_forward.59} parent=0 // loop_body
    %s14 = ssub.s32 %s9, 1
    %s15 = ssub.s32 %s9, 2
    %s16 = sadd.s32 %s9, 1
    %s17 = ssub.s32 %s9, %s16
    %p18 = scmp.eq.s32.totalorder %s17, 0
    %s20 = sadd.s32 %s19, 1
    %s21 = scalar_select %p18, %s19, %s20
    %p24 = pneg %p18
    %p25 = scmp.eq.s32.totalorder %s9, 1
    %p26 = por %p24, %p25
    %p27 = scmp.ne.s32.totalorder %s19, %s22
    %p28 = scmp.eq.s32.totalorder %s9, 0
    %p29 = por %p27, %p28
    %p30 = scmp.ne.s32.totalorder %s19, %s22
    %p31 = scmp.eq.s32.totalorder %s14, 1
    %p32 = por %p30, %p31
    %p33 = scmp.ne.s32.totalorder %s22, %s23
    %p34 = scmp.eq.s32.totalorder %s14, 0
    %p35 = por %p33, %p34
    %p36 = scmp.ne.s32.totalorder %s22, %s23
    %p37 = scmp.eq.s32.totalorder %s15, 1
    %p38 = por %p36, %p37
    %p40 = scmp.ne.s32.totalorder %s23, %s39
    %p41 = scmp.eq.s32.totalorder %s15, 0
    %p42 = por %p40, %p41
    %s44 = sadd.s32 %s43, 1
    %p47 = scmp.eq.s32.totalorder %s9, 1
    %p48 = scmp.ne.s32.totalorder %s43, %s45
    %p49 = scmp.eq.s32.totalorder %s9, 0
    %p50 = por %p48, %p49
    %p51 = scmp.ne.s32.totalorder %s43, %s45
    %p52 = scmp.eq.s32.totalorder %s14, 1
    %p53 = por %p51, %p52
    %p54 = scmp.ne.s32.totalorder %s45, %s46
    %p55 = scmp.eq.s32.totalorder %s14, 0
    %p56 = por %p54, %p55
    %p57 = scmp.ne.s32.totalorder %s45, %s46
    %p58 = scmp.eq.s32.totalorder %s15, 1
    %p59 = por %p57, %p58
    %p61 = scmp.ne.s32.totalorder %s46, %s60
    %p62 = scmp.eq.s32.totalorder %s15, 0
    %p63 = por %p61, %p62
    %s65 = sadd.s32 %s64, 1
    %p68 = scmp.eq.s32.totalorder %s9, 1
    %p69 = scmp.ne.s32.totalorder %s64, %s66
    %p70 = scmp.eq.s32.totalorder %s9, 0
    %p71 = por %p69, %p70
    %p72 = scmp.ne.s32.totalorder %s64, %s66
    %p73 = scmp.eq.s32.totalorder %s14, 1
    %p74 = por %p72, %p73
    %p75 = scmp.ne.s32.totalorder %s66, %s67
    %p76 = scmp.eq.s32.totalorder %s14, 0
    %p77 = por %p75, %p76
    %p78 = scmp.ne.s32.totalorder %s66, %s67
    %p79 = scmp.eq.s32.totalorder %s15, 1
    %p80 = por %p78, %p79
    %p82 = scmp.ne.s32.totalorder %s67, %s81
    %p83 = scmp.eq.s32.totalorder %s15, 0
    %p84 = por %p82, %p83
    %s85 = ssub.s32 %s9, %s16
    %p86 = scmp.eq.s32.totalorder %s85, 0
    %s88 = sadd.s32 %s87, 1
    %s89 = scalar_select %p86, %s87, %s88
    %p92 = pneg %p86
    %p93 = scmp.eq.s32.totalorder %s9, 1
    %p94 = por %p92, %p93
    %p95 = scmp.ne.s32.totalorder %s87, %s90
    %p96 = scmp.eq.s32.totalorder %s9, 0
    %p97 = por %p95, %p96
    %p98 = scmp.ne.s32.totalorder %s87, %s90
    %p99 = scmp.eq.s32.totalorder %s14, 1
    %p100 = por %p98, %p99
    %p101 = scmp.ne.s32.totalorder %s90, %s91
    %p102 = scmp.eq.s32.totalorder %s14, 0
    %p103 = por %p101, %p102
    %p104 = scmp.ne.s32.totalorder %s90, %s91
    %p105 = scmp.eq.s32.totalorder %s15, 1
    %p106 = por %p104, %p105
    %p108 = scmp.ne.s32.totalorder %s91, %s107
    %p109 = scmp.eq.s32.totalorder %s15, 0
    %p110 = por %p108, %p109
    %p111 = scmp.le.s32.totalorder 1, %s9
    %p112 = scmp.lt.s32.totalorder %s9, 3
    %p113 = pnand %p111, %p112
    %p114 = pneg %p113
    // Predicated region
    $region9: #{patchifier_forward.59} parent=5 // pred_check
      _
    $region10: #{patchifier_forward.59} parent=5 // pred_check_branch
      %116 = sbr.rel (%p113) target = $region12
    $region11: #{patchifier_forward.59} parent=5 // pred_region
      %s117 = ssub.s32 %s9, 1
      // Predicated region
      $region13: #{patchifier_forward.59} parent=11 // pred_check
        %p118 = pneg %p56
      $region14: #{patchifier_forward.59} parent=11 // pred_check_branch
        %120 = sbr.rel (%p118) target = $region16
      $region15: #{patchifier_forward.59} parent=11 // pred_region
        _
      $region16: #{patchifier_forward.59} parent=11 // pred_fallthru
        _
      // Predicated region
      $region17: #{patchifier_forward.59} parent=11 // pred_check
        %p121 = pneg %p77
      $region18: #{patchifier_forward.59} parent=11 // pred_check_branch
        %123 = sbr.rel (%p121) target = $region20
      $region19: #{patchifier_forward.59} parent=11 // pred_region
        _
      $region20: #{patchifier_forward.59} parent=11 // pred_fallthru
        _
    $region12: #{patchifier_forward.59} parent=5 // pred_fallthru
      _
    %p124 = scmp.lt.s32.totalorder %s9, 2
    // Predicated region
    $region21: #{patchifier_forward.59} parent=5 // pred_check
      %p125 = pneg %p124
    $region22: #{patchifier_forward.59} parent=5 // pred_check_branch
      %127 = sbr.rel (%p125) target = $region24
    $region23: #{patchifier_forward.59} parent=5 // pred_region
      // Predicated region
      $region25: #{patchifier_forward.59} parent=23 // pred_check
        %p128 = pneg %p29
      $region26: #{patchifier_forward.59} parent=23 // pred_check_branch
        %130 = sbr.rel (%p128) target = $region28
      $region27: #{patchifier_forward.59} parent=23 // pred_region
        %s131 = smul.u32 32, %s9
        %p132 = scmp.lt.s32.totalorder %s131, 63
        %s133 = scalar_select %p132, %s131, 63
        %s134 = smul.addr %s133, 3
        %s135 = smul.addr %s134, 4
        %s136 = scalar_lea.vmem %s0, %s135
        %s137 = smul.u32 32, %s9
      $region28: #{patchifier_forward.59} parent=23 // pred_fallthru
        _
    $region24: #{patchifier_forward.59} parent=5 // pred_fallthru
      _
    %p138 = scmp.le.s32.totalorder 1, %s9
    %p139 = scmp.lt.s32.totalorder %s9, 3
    %p140 = pnand %p138, %p139
    %p141 = pneg %p140
    // Predicated region
    $region29: #{patchifier_forward.59} parent=5 // pred_check
      _
    $region30: #{patchifier_forward.59} parent=5 // pred_check_branch
      %143 = sbr.rel (%p140) target = $region32
    $region31: #{patchifier_forward.59} parent=5 // pred_region
      %s144 = ssub.s32 %s9, 1
      %s145 = smul.u32 32, %s14
      %p146 = scmp.lt.s32.totalorder %s145, 63
      %s147 = scalar_select %p146, %s145, 63
      %s148 = smul.addr %s147, 3
      %s149 = smul.addr %s148, 4
      %s150 = scalar_lea.vmem %s0, %s149
      %p151 = pneg %p35
      %p152 = pneg %p32
      %p153 = pneg %p56
      %p154 = pneg %p53
      %p155 = pneg %p77
      %p156 = pneg %p74
      %p157 = pneg %p103
      %p158 = pneg %p100
      %s159 = smul.u32 32, %s14
      %p160 = scmp.lt.s32.totalorder %s159, 63
      %s161 = scalar_select %p160, %s159, 63
      %s162 = smul.addr %s161, 8
      %s163 = scalar_lea.vmem %s3, %s162
      %s164 = smul.u32 32, %s14
      %p165 = scmp.lt.s32.totalorder %s164, 63
      %s166 = scalar_select %p165, %s164, 63
      %s167 = smul.addr %s166, 3
      %s168 = smul.addr %s167, 4
      %s169 = scalar_lea.vmem %s0, %s168
      %s170 = smul.u32 32, %s14
      %s171 = smul.u32 32, %s14
      %p172 = scmp.lt.s32.totalorder %s171, 63
      %s173 = scalar_select %p172, %s171, 63
      %s174 = smul.addr %s173, 8
      %s175 = scalar_lea.vmem %s3, %s174
      %s176 = smul.u32 32, %s14
      %v178 = vld [vmem:[%s169] sm:$0xff]
      %v179 = vld [vmem:[%s169 + $0x8] sm:$0xf]
      %v180 = vld [vmem:[%s169 + $0xc] sm:$0xff]
      %v181 = vld [vmem:[%s169 + $0x14] sm:$0xf]
      %v182 = vld [vmem:[%s169 + $0x18] sm:$0xff]
      %v183 = vld [vmem:[%s169 + $0x20] sm:$0xf]
      %v184 = vld [vmem:[%s169 + $0x24] sm:$0xff]
      %v185 = vld [vmem:[%s169 + $0x2c] sm:$0xf]
      %v186 = vld [vmem:[%s169 + $0x30] sm:$0xff]
      %v187 = vld [vmem:[%s169 + $0x38] sm:$0xf]
      %v188 = vld [vmem:[%s169 + $0x3c] sm:$0xff]
      %v189 = vld [vmem:[%s169 + $0x44] sm:$0xf]
      %v190 = vld [vmem:[%s169 + $0x48] sm:$0xff]
      %v191 = vld [vmem:[%s169 + $0x50] sm:$0xf]
      %v192 = vld [vmem:[%s169 + $0x54] sm:$0xff]
      %v193 = vld [vmem:[%s169 + $0x5c] sm:$0xf]
      %v194 = vld [vmem:[%s169 + $0x60] sm:$0xff]
      %v195 = vld [vmem:[%s169 + $0x68] sm:$0xf]
      %v196 = vld [vmem:[%s169 + $0x6c] sm:$0xff]
      %v197 = vld [vmem:[%s169 + $0x74] sm:$0xf]
      %v198 = vld [vmem:[%s169 + $0x78] sm:$0xff]
      %v199 = vld [vmem:[%s169 + $0x80] sm:$0xf]
      %v200 = vld [vmem:[%s169 + $0x84] sm:$0xff]
      %v201 = vld [vmem:[%s169 + $0x8c] sm:$0xf]
      %v202 = vld [vmem:[%s169 + $0x90] sm:$0xff]
      %v203 = vld [vmem:[%s169 + $0x98] sm:$0xf]
      %v204 = vld [vmem:[%s169 + $0x9c] sm:$0xff]
      %v205 = vld [vmem:[%s169 + $0xa4] sm:$0xf]
      %v206 = vld [vmem:[%s169 + $0xa8] sm:$0xff]
      %v207 = vld [vmem:[%s169 + $0xb0] sm:$0xf]
      %v208 = vld [vmem:[%s169 + $0xb4] sm:$0xff]
      %v209 = vld [vmem:[%s169 + $0xbc] sm:$0xf]
      %v210 = vld [vmem:[%s169 + $0xc0] sm:$0xff]
      %v211 = vld [vmem:[%s169 + $0xc8] sm:$0xf]
      %v212 = vld [vmem:[%s169 + $0xcc] sm:$0xff]
      %v213 = vld [vmem:[%s169 + $0xd4] sm:$0xf]
      %v214 = vld [vmem:[%s169 + $0xd8] sm:$0xff]
      %v215 = vld [vmem:[%s169 + $0xe0] sm:$0xf]
      %v216 = vld [vmem:[%s169 + $0xe4] sm:$0xff]
      %v217 = vld [vmem:[%s169 + $0xec] sm:$0xf]
      %v218 = vld [vmem:[%s169 + $0xf0] sm:$0xff]
      %v219 = vld [vmem:[%s169 + $0xf8] sm:$0xf]
      %v220 = vld [vmem:[%s169 + $0xfc] sm:$0xff]
      %v221 = vld [vmem:[%s169 + $0x104] sm:$0xf]
      %v222 = vld [vmem:[%s169 + $0x108] sm:$0xff]
      %v223 = vld [vmem:[%s169 + $0x110] sm:$0xf]
      %v224 = vld [vmem:[%s169 + $0x114] sm:$0xff]
      %v225 = vld [vmem:[%s169 + $0x11c] sm:$0xf]
      %v226 = vld [vmem:[%s169 + $0x120] sm:$0xff]
      %v227 = vld [vmem:[%s169 + $0x128] sm:$0xf]
      %v228 = vld [vmem:[%s169 + $0x12c] sm:$0xff]
      %v229 = vld [vmem:[%s169 + $0x134] sm:$0xf]
      %v230 = vld [vmem:[%s169 + $0x138] sm:$0xff]
      %v231 = vld [vmem:[%s169 + $0x140] sm:$0xf]
      %v232 = vld [vmem:[%s169 + $0x144] sm:$0xff]
      %v233 = vld [vmem:[%s169 + $0x14c] sm:$0xf]
      %v234 = vld [vmem:[%s169 + $0x150] sm:$0xff]
      %v235 = vld [vmem:[%s169 + $0x158] sm:$0xf]
      %v236 = vld [vmem:[%s169 + $0x15c] sm:$0xff]
      %v237 = vld [vmem:[%s169 + $0x164] sm:$0xf]
      %v238 = vld [vmem:[%s169 + $0x168] sm:$0xff]
      %v239 = vld [vmem:[%s169 + $0x170] sm:$0xf]
      %v240 = vld [vmem:[%s169 + $0x174] sm:$0xff]
      %v241 = vld [vmem:[%s169 + $0x17c] sm:$0xf]
      %v242 = vld [vmem:[%s1] sm:$0xf]
      %v243 = vld [vmem:[%s1 + $0x4] sm:$0xf]
      %v244 = vld [vmem:[%s1 + $0x8] sm:$0xf]
      %v245 = vld [vmem:[%s1 + $0xc] sm:$0xf]
      %v246 = vld [vmem:[%s1 + $0x10] sm:$0xf]
      %v247 = vld [vmem:[%s1 + $0x14] sm:$0xf]
      %v248 = vld [vmem:[%s1 + $0x18] sm:$0xf]
      %v249 = vld [vmem:[%s1 + $0x1c] sm:$0xf]
      %v250 = vld [vmem:[%s1 + $0x20] sm:$0xf]
      %v251 = vld [vmem:[%s1 + $0x24] sm:$0xf]
      %v252 = vld [vmem:[%s1 + $0x28] sm:$0xf]
      %v253 = vld [vmem:[%s1 + $0x2c] sm:$0xf]
      %v254 = vld [vmem:[%s1 + $0x30] sm:$0xf]
      %v255 = vld [vmem:[%s1 + $0x34] sm:$0xf]
      %v256 = vld [vmem:[%s1 + $0x38] sm:$0xf]
      %v257 = vld [vmem:[%s1 + $0x3c] sm:$0xf]
      %v258 = vld [vmem:[%s1 + $0x40] sm:$0xf]
      %v259 = vld [vmem:[%s1 + $0x44] sm:$0xf]
      %v260 = vld [vmem:[%s1 + $0x48] sm:$0xf]
      %v261 = vld [vmem:[%s1 + $0x4c] sm:$0xf]
      %v262 = vld [vmem:[%s1 + $0x50] sm:$0xf]
      %v263 = vld [vmem:[%s1 + $0x54] sm:$0xf]
      %v264 = vld [vmem:[%s1 + $0x58] sm:$0xf]
      %v265 = vld [vmem:[%s1 + $0x5c] sm:$0xf]
      %v266 = vld [vmem:[%s1 + $0x60] sm:$0xf]
      %v267 = vld [vmem:[%s1 + $0x64] sm:$0xf]
      %v268 = vld [vmem:[%s1 + $0x68] sm:$0xf]
      %v269 = vld [vmem:[%s1 + $0x6c] sm:$0xf]
      %v270 = vld [vmem:[%s1 + $0x70] sm:$0xf]
      %v271 = vld [vmem:[%s1 + $0x74] sm:$0xf]
      %v272 = vld [vmem:[%s1 + $0x78] sm:$0xf]
      %v273 = vld [vmem:[%s1 + $0x7c] sm:$0xf]
      %v274 = vld [vmem:[%s1 + $0x80] sm:$0xf]
      %v275 = vld [vmem:[%s1 + $0x84] sm:$0xf]
      %v276 = vld [vmem:[%s1 + $0x88] sm:$0xf]
      %v277 = vld [vmem:[%s1 + $0x8c] sm:$0xf]
      %v278 = vld [vmem:[%s2] sm:$0x1]
      %v280 = vlaneseq
      %v281 = vshrl.u32 %v280, 7
      %v282 = vsub.s32 0, %v281
      %v283 = vrot.slane %v278, %v282
      %v349 = vunpack.c.l.b16 %v178
      %v350 = vunpack.c.h.b16 %v178
      %v351 = vunpack.c.l.b16 %v179
      %v352 = vunpack.c.l.b16 %v180
      %v353 = vunpack.c.h.b16 %v180
      %v354 = vunpack.c.l.b16 %v181
      %v355 = vunpack.c.l.b16 %v182
      %v356 = vunpack.c.h.b16 %v182
      %v357 = vunpack.c.l.b16 %v183
      %v358 = vunpack.c.l.b16 %v184
      %v359 = vunpack.c.h.b16 %v184
      %v360 = vunpack.c.l.b16 %v185
      %v361 = vunpack.c.l.b16 %v186
      %v362 = vunpack.c.h.b16 %v186
      %v363 = vunpack.c.l.b16 %v187
      %v364 = vunpack.c.l.b16 %v188
      %v365 = vunpack.c.h.b16 %v188
      %v366 = vunpack.c.l.b16 %v189
      %v367 = vunpack.c.l.b16 %v190
      %v368 = vunpack.c.h.b16 %v190
      %v369 = vunpack.c.l.b16 %v191
      %v370 = vunpack.c.l.b16 %v192
      %v371 = vunpack.c.h.b16 %v192
      %v372 = vunpack.c.l.b16 %v193
      %v373 = vunpack.c.l.b16 %v194
      %v374 = vunpack.c.h.b16 %v194
      %v375 = vunpack.c.l.b16 %v195
      %v376 = vunpack.c.l.b16 %v196
      %v377 = vunpack.c.h.b16 %v196
      %v378 = vunpack.c.l.b16 %v197
      %v379 = vunpack.c.l.b16 %v198
      %v380 = vunpack.c.h.b16 %v198
      %v381 = vunpack.c.l.b16 %v199
      %v382 = vunpack.c.l.b16 %v200
      %v383 = vunpack.c.h.b16 %v200
      %v384 = vunpack.c.l.b16 %v201
      %v385 = vunpack.c.l.b16 %v202
      %v386 = vunpack.c.h.b16 %v202
      %v387 = vunpack.c.l.b16 %v203
      %v388 = vunpack.c.l.b16 %v204
      %v389 = vunpack.c.h.b16 %v204
      %v390 = vunpack.c.l.b16 %v205
      %v391 = vunpack.c.l.b16 %v206
      %v392 = vunpack.c.h.b16 %v206
      %v393 = vunpack.c.l.b16 %v207
      %v394 = vunpack.c.l.b16 %v208
      %v395 = vunpack.c.h.b16 %v208
      %v396 = vunpack.c.l.b16 %v209
      %v397 = vunpack.c.l.b16 %v210
      %v398 = vunpack.c.h.b16 %v210
      %v399 = vunpack.c.l.b16 %v211
      %v400 = vunpack.c.l.b16 %v212
      %v401 = vunpack.c.h.b16 %v212
      %v402 = vunpack.c.l.b16 %v213
      %v403 = vunpack.c.l.b16 %v214
      %v404 = vunpack.c.h.b16 %v214
      %v405 = vunpack.c.l.b16 %v215
      %v406 = vunpack.c.l.b16 %v216
      %v407 = vunpack.c.h.b16 %v216
      %v408 = vunpack.c.l.b16 %v217
      %v409 = vunpack.c.l.b16 %v218
      %v410 = vunpack.c.h.b16 %v218
      %v411 = vunpack.c.l.b16 %v219
      %v412 = vunpack.c.l.b16 %v220
      %v413 = vunpack.c.h.b16 %v220
      %v414 = vunpack.c.l.b16 %v221
      %v415 = vunpack.c.l.b16 %v222
      %v416 = vunpack.c.h.b16 %v222
      %v417 = vunpack.c.l.b16 %v223
      %v418 = vunpack.c.l.b16 %v224
      %v419 = vunpack.c.h.b16 %v224
      %v420 = vunpack.c.l.b16 %v225
      %v421 = vunpack.c.l.b16 %v226
      %v422 = vunpack.c.h.b16 %v226
      %v423 = vunpack.c.l.b16 %v227
      %v424 = vunpack.c.l.b16 %v228
      %v425 = vunpack.c.h.b16 %v228
      %v426 = vunpack.c.l.b16 %v229
      %v427 = vunpack.c.l.b16 %v230
      %v428 = vunpack.c.h.b16 %v230
      %v429 = vunpack.c.l.b16 %v231
      %v430 = vunpack.c.l.b16 %v232
      %v431 = vunpack.c.h.b16 %v232
      %v432 = vunpack.c.l.b16 %v233
      %v433 = vunpack.c.l.b16 %v234
      %v434 = vunpack.c.h.b16 %v234
      %v435 = vunpack.c.l.b16 %v235
      %v436 = vunpack.c.l.b16 %v236
      %v437 = vunpack.c.h.b16 %v236
      %v438 = vunpack.c.l.b16 %v237
      %v439 = vunpack.c.l.b16 %v238
      %v440 = vunpack.c.h.b16 %v238
      %v441 = vunpack.c.l.b16 %v239
      %v442 = vunpack.c.l.b16 %v240
      %v443 = vunpack.c.h.b16 %v240
      %v444 = vunpack.c.l.b16 %v241
      %v445 = vpack.c.b16 %v352, %v349
      %v446 = vpack.c.b16 %v353, %v350
      %v447 = vpack.c.b16 %v354, %v351
      %v448 = vpack.c.b16 %v358, %v355
      %v449 = vpack.c.b16 %v359, %v356
      %v450 = vpack.c.b16 %v360, %v357
      %v451 = vpack.c.b16 %v364, %v361
      %v452 = vpack.c.b16 %v365, %v362
      %v453 = vpack.c.b16 %v366, %v363
      %v454 = vpack.c.b16 %v370, %v367
      %v455 = vpack.c.b16 %v371, %v368
      %v456 = vpack.c.b16 %v372, %v369
      %v457 = vpack.c.b16 %v376, %v373
      %v458 = vpack.c.b16 %v377, %v374
      %v459 = vpack.c.b16 %v378, %v375
      %v460 = vpack.c.b16 %v382, %v379
      %v461 = vpack.c.b16 %v383, %v380
      %v462 = vpack.c.b16 %v384, %v381
      %v463 = vpack.c.b16 %v388, %v385
      %v464 = vpack.c.b16 %v389, %v386
      %v465 = vpack.c.b16 %v390, %v387
      %v466 = vpack.c.b16 %v394, %v391
      %v467 = vpack.c.b16 %v395, %v392
      %v468 = vpack.c.b16 %v396, %v393
      %v469 = vpack.c.b16 %v400, %v397
      %v470 = vpack.c.b16 %v401, %v398
      %v471 = vpack.c.b16 %v402, %v399
      %v472 = vpack.c.b16 %v406, %v403
      %v473 = vpack.c.b16 %v407, %v404
      %v474 = vpack.c.b16 %v408, %v405
      %v475 = vpack.c.b16 %v412, %v409
      %v476 = vpack.c.b16 %v413, %v410
      %v477 = vpack.c.b16 %v414, %v411
      %v478 = vpack.c.b16 %v418, %v415
      %v479 = vpack.c.b16 %v419, %v416
      %v480 = vpack.c.b16 %v420, %v417
      %v481 = vpack.c.b16 %v424, %v421
      %v482 = vpack.c.b16 %v425, %v422
      %v483 = vpack.c.b16 %v426, %v423
      %v484 = vpack.c.b16 %v430, %v427
      %v485 = vpack.c.b16 %v431, %v428
      %v486 = vpack.c.b16 %v432, %v429
      %v487 = vpack.c.b16 %v436, %v433
      %v488 = vpack.c.b16 %v437, %v434
      %v489 = vpack.c.b16 %v438, %v435
      %v490 = vpack.c.b16 %v442, %v439
      %v491 = vpack.c.b16 %v443, %v440
      %v492 = vpack.c.b16 %v444, %v441
      %v561 = vunpack.c.l.b16 %v242
      %v562 = vunpack.c.l.b16 %v243
      %v563 = vunpack.c.l.b16 %v244
      %v564 = vunpack.c.l.b16 %v245
      %v565 = vunpack.c.l.b16 %v246
      %v566 = vunpack.c.l.b16 %v247
      %v567 = vunpack.c.l.b16 %v248
      %v568 = vunpack.c.l.b16 %v249
      %v569 = vunpack.c.l.b16 %v250
      %v570 = vunpack.c.l.b16 %v251
      %v571 = vunpack.c.l.b16 %v252
      %v572 = vunpack.c.l.b16 %v253
      %v573 = vunpack.c.l.b16 %v254
      %v574 = vunpack.c.l.b16 %v255
      %v575 = vunpack.c.l.b16 %v256
      %v576 = vunpack.c.l.b16 %v257
      %v577 = vunpack.c.l.b16 %v258
      %v578 = vunpack.c.l.b16 %v259
      %v579 = vunpack.c.l.b16 %v260
      %v580 = vunpack.c.l.b16 %v261
      %v581 = vunpack.c.l.b16 %v262
      %v582 = vunpack.c.l.b16 %v263
      %v583 = vunpack.c.l.b16 %v264
      %v584 = vunpack.c.l.b16 %v265
      %v585 = vunpack.c.l.b16 %v266
      %v586 = vunpack.c.l.b16 %v267
      %v587 = vunpack.c.l.b16 %v268
      %v588 = vunpack.c.l.b16 %v269
      %v589 = vunpack.c.l.b16 %v270
      %v590 = vunpack.c.l.b16 %v271
      %v591 = vunpack.c.l.b16 %v272
      %v592 = vunpack.c.l.b16 %v273
      %v593 = vunpack.c.l.b16 %v274
      %v594 = vunpack.c.l.b16 %v275
      %v595 = vunpack.c.l.b16 %v276
      %v596 = vunpack.c.l.b16 %v277
      %v597 = vpack.c.b16 %v562, %v561
      %v598 = vpack.c.b16 %v564, %v563
      %v599 = vpack.c.b16 %v566, %v565
      %v600 = vpack.c.b16 %v568, %v567
      %v601 = vpack.c.b16 %v570, %v569
      %v602 = vpack.c.b16 %v572, %v571
      %v603 = vpack.c.b16 %v574, %v573
      %v604 = vpack.c.b16 %v576, %v575
      %v605 = vpack.c.b16 %v578, %v577
      %v606 = vpack.c.b16 %v580, %v579
      %v607 = vpack.c.b16 %v582, %v581
      %v608 = vpack.c.b16 %v584, %v583
      %v609 = vpack.c.b16 %v586, %v585
      %v610 = vpack.c.b16 %v588, %v587
      %v611 = vpack.c.b16 %v590, %v589
      %v612 = vpack.c.b16 %v592, %v591
      %v613 = vpack.c.b16 %v594, %v593
      %v614 = vpack.c.b16 %v596, %v595
      %vm633 = vcmask 261120
      %v635 = vsel %vm633, %v447, 0
      %v638 = vsel %vm633, %v450, 0
      %v641 = vsel %vm633, %v453, 0
      %v644 = vsel %vm633, %v456, 0
      %v647 = vsel %vm633, %v459, 0
      %v650 = vsel %vm633, %v462, 0
      %v653 = vsel %vm633, %v465, 0
      %v656 = vsel %vm633, %v468, 0
      %v659 = vsel %vm633, %v471, 0
      %v662 = vsel %vm633, %v474, 0
      %v665 = vsel %vm633, %v477, 0
      %v668 = vsel %vm633, %v480, 0
      %v671 = vsel %vm633, %v483, 0
      %v674 = vsel %vm633, %v486, 0
      %v677 = vsel %vm633, %v489, 0
      %v680 = vsel %vm633, %v492, 0
      %682 = vmatprep.subr.bf16.mxu0 0
      %683 = vmatpush1.bf16.msra.mxu0 %v604
      %684 = vmatprep.subr.bf16.mxu0 0
      %685 = vmatpush1.bf16.msra.mxu0 %v603
      %686 = vmatprep.subr.bf16.mxu0 0
      %687 = vmatpush1.bf16.msra.mxu0 %v602
      %688 = vmatprep.subr.bf16.mxu0 0
      %689 = vmatpush1.bf16.msra.mxu0 %v601
      %690 = vmatprep.subr.bf16.mxu0 0
      %691 = vmatpush1.bf16.msra.mxu0 %v600
      %692 = vmatprep.subr.bf16.mxu0 0
      %693 = vmatpush1.bf16.msra.mxu0 %v599
      %694 = vmatprep.subr.bf16.mxu0 0
      %695 = vmatpush1.bf16.msra.mxu0 %v598
      %696 = vmatprep.subr.bf16.mxu0 0
      %697 = vmatpush1.bf16.msra.mxu0 %v597
      %698 = vmatprep.subr.bf16.mxu0 0
      %699 = vmatpush2.bf16.msra.mxu0 %v612
      %700 = vmatprep.subr.bf16.mxu0 0
      %701 = vmatpush2.bf16.msra.mxu0 %v611
      %702 = vmatprep.subr.bf16.mxu0 0
      %703 = vmatpush2.bf16.msra.mxu0 %v610
      %704 = vmatprep.subr.bf16.mxu0 0
      %705 = vmatpush2.bf16.msra.mxu0 %v609
      %706 = vmatprep.subr.bf16.mxu0 0
      %707 = vmatpush2.bf16.msra.mxu0 %v608
      %708 = vmatprep.subr.bf16.mxu0 0
      %709 = vmatpush2.bf16.msra.mxu0 %v607
      %710 = vmatprep.subr.bf16.mxu0 0
      %711 = vmatpush2.bf16.msra.mxu0 %v606
      %712 = vmatprep.subr.bf16.mxu0 0
      %713 = vmatpush2.bf16.msra.mxu0 %v605
      %714 = vmatprep.mubr.bf16.mxu0 %v446
      %715 = vmatmul.mubr.bf16.gmra.mxu0 %v445
      %v716 = vpop.f32.mrf.mxu0
      %v717 = vadd.f32 %v283, %v716
      %v718 = vpop.f32.mrf.mxu0
      %v719 = vpop.f32.mrf.mxu0
      %v720 = vadd.f32 %v283, %v719
      %v721 = vpop.f32.mrf.mxu0
      %722 = vmatprep.mubr.bf16.mxu0 %v449
      %723 = vmatmul.mubr.bf16.gmra.mxu0 %v448
      %v724 = vpop.f32.mrf.mxu0
      %v725 = vadd.f32 %v283, %v724
      %v726 = vpop.f32.mrf.mxu0
      %v727 = vpop.f32.mrf.mxu0
      %v728 = vadd.f32 %v283, %v727
      %v729 = vpop.f32.mrf.mxu0
      %730 = vmatprep.mubr.bf16.mxu0 %v452
      %731 = vmatmul.mubr.bf16.gmra.mxu0 %v451
      %v732 = vpop.f32.mrf.mxu0
      %v733 = vadd.f32 %v283, %v732
      %v734 = vpop.f32.mrf.mxu0
      %v735 = vpop.f32.mrf.mxu0
      %v736 = vadd.f32 %v283, %v735
      %v737 = vpop.f32.mrf.mxu0
      %738 = vmatprep.mubr.bf16.mxu0 %v455
      %739 = vmatmul.mubr.bf16.gmra.mxu0 %v454
      %v740 = vpop.f32.mrf.mxu0
      %v741 = vadd.f32 %v283, %v740
      %v742 = vpop.f32.mrf.mxu0
      %v743 = vpop.f32.mrf.mxu0
      %v744 = vadd.f32 %v283, %v743
      %v745 = vpop.f32.mrf.mxu0
      %746 = vmatprep.mubr.bf16.mxu0 %v458
      %747 = vmatmul.mubr.bf16.gmra.mxu0 %v457
      %v748 = vpop.f32.mrf.mxu0
      %v749 = vadd.f32 %v283, %v748
      %v750 = vpop.f32.mrf.mxu0
      %v751 = vpop.f32.mrf.mxu0
      %v752 = vadd.f32 %v283, %v751
      %v753 = vpop.f32.mrf.mxu0
      %754 = vmatprep.mubr.bf16.mxu0 %v461
      %755 = vmatmul.mubr.bf16.gmra.mxu0 %v460
      %v756 = vpop.f32.mrf.mxu0
      %v757 = vadd.f32 %v283, %v756
      %v758 = vpop.f32.mrf.mxu0
      %v759 = vpop.f32.mrf.mxu0
      %v760 = vadd.f32 %v283, %v759
      %v761 = vpop.f32.mrf.mxu0
      %762 = vmatprep.mubr.bf16.mxu0 %v464
      %763 = vmatmul.mubr.bf16.gmra.mxu0 %v463
      %v764 = vpop.f32.mrf.mxu0
      %v765 = vadd.f32 %v283, %v764
      %v766 = vpop.f32.mrf.mxu0
      %v767 = vpop.f32.mrf.mxu0
      %v768 = vadd.f32 %v283, %v767
      %v769 = vpop.f32.mrf.mxu0
      %770 = vmatprep.mubr.bf16.mxu0 %v467
      %771 = vmatmul.mubr.bf16.gmra.mxu0 %v466
      %v772 = vpop.f32.mrf.mxu0
      %v773 = vadd.f32 %v283, %v772
      %v774 = vpop.f32.mrf.mxu0
      %v775 = vpop.f32.mrf.mxu0
      %v776 = vadd.f32 %v283, %v775
      %v777 = vpop.f32.mrf.mxu0
      %778 = vmatprep.mubr.bf16.mxu0 %v470
      %779 = vmatmul.mubr.bf16.gmra.mxu0 %v469
      %v780 = vpop.f32.mrf.mxu0
      %v781 = vadd.f32 %v283, %v780
      %v782 = vpop.f32.mrf.mxu0
      %v783 = vpop.f32.mrf.mxu0
      %v784 = vadd.f32 %v283, %v783
      %v785 = vpop.f32.mrf.mxu0
      %786 = vmatprep.mubr.bf16.mxu0 %v473
      %787 = vmatmul.mubr.bf16.gmra.mxu0 %v472
      %v788 = vpop.f32.mrf.mxu0
      %v789 = vadd.f32 %v283, %v788
      %v790 = vpop.f32.mrf.mxu0
      %v791 = vpop.f32.mrf.mxu0
      %v792 = vadd.f32 %v283, %v791
      %v793 = vpop.f32.mrf.mxu0
      %794 = vmatprep.mubr.bf16.mxu0 %v476
      %795 = vmatmul.mubr.bf16.gmra.mxu0 %v475
      %v796 = vpop.f32.mrf.mxu0
      %v797 = vadd.f32 %v283, %v796
      %v798 = vpop.f32.mrf.mxu0
      %v799 = vpop.f32.mrf.mxu0
      %v800 = vadd.f32 %v283, %v799
      %v801 = vpop.f32.mrf.mxu0
      %802 = vmatprep.mubr.bf16.mxu0 %v479
      %803 = vmatmul.mubr.bf16.gmra.mxu0 %v478
      %v804 = vpop.f32.mrf.mxu0
      %v805 = vadd.f32 %v283, %v804
      %v806 = vpop.f32.mrf.mxu0
      %v807 = vpop.f32.mrf.mxu0
      %v808 = vadd.f32 %v283, %v807
      %v809 = vpop.f32.mrf.mxu0
      %810 = vmatprep.mubr.bf16.mxu0 %v482
      %811 = vmatmul.mubr.bf16.gmra.mxu0 %v481
      %v812 = vpop.f32.mrf.mxu0
      %v813 = vadd.f32 %v283, %v812
      %v814 = vpop.f32.mrf.mxu0
      %v815 = vpop.f32.mrf.mxu0
      %v816 = vadd.f32 %v283, %v815
      %v817 = vpop.f32.mrf.mxu0
      %818 = vmatprep.mubr.bf16.mxu0 %v485
      %819 = vmatmul.mubr.bf16.gmra.mxu0 %v484
      %v820 = vpop.f32.mrf.mxu0
      %v821 = vadd.f32 %v283, %v820
      %v822 = vpop.f32.mrf.mxu0
      %v823 = vpop.f32.mrf.mxu0
      %v824 = vadd.f32 %v283, %v823
      %v825 = vpop.f32.mrf.mxu0
      %826 = vmatprep.mubr.bf16.mxu0 %v488
      %827 = vmatmul.mubr.bf16.gmra.mxu0 %v487
      %v828 = vpop.f32.mrf.mxu0
      %v829 = vadd.f32 %v283, %v828
      %v830 = vpop.f32.mrf.mxu0
      %v831 = vpop.f32.mrf.mxu0
      %v832 = vadd.f32 %v283, %v831
      %v833 = vpop.f32.mrf.mxu0
      %834 = vmatprep.mubr.bf16.mxu0 %v491
      %835 = vmatmul.mubr.bf16.gmra.mxu0 %v490
      %v836 = vpop.f32.mrf.mxu0
      %v837 = vadd.f32 %v283, %v836
      %v838 = vpop.f32.mrf.mxu0
      %v839 = vpop.f32.mrf.mxu0
      %v840 = vadd.f32 %v283, %v839
      %v841 = vpop.f32.mrf.mxu0
      %842 = vdwg.mxu0
      %843 = vmatprep.subr.bf16.mxu0 0
      %844 = vmatpush1.bf16.msra.mxu0 0
      %845 = vmatprep.subr.bf16.mxu0 0
      %846 = vmatpush1.bf16.msra.mxu0 0
      %847 = vmatprep.subr.bf16.mxu0 0
      %848 = vmatpush1.bf16.msra.mxu0 0
      %849 = vmatprep.subr.bf16.mxu0 0
      %850 = vmatpush1.bf16.msra.mxu0 0
      %851 = vmatprep.subr.bf16.mxu0 0
      %852 = vmatpush1.bf16.msra.mxu0 0
      %853 = vmatprep.subr.bf16.mxu0 0
      %854 = vmatpush1.bf16.msra.mxu0 0
      %855 = vmatprep.subr.bf16.mxu0 0
      %856 = vmatpush1.bf16.msra.mxu0 %v614
      %857 = vmatprep.subr.bf16.mxu0 0
      %858 = vmatpush1.bf16.msra.mxu0 %v613
      %859 = vmatprep.subr.bf16.mxu0 0
      %860 = vmatpush2.bf16.msra.mxu0 0
      %861 = vmatprep.subr.bf16.mxu0 0
      %862 = vmatpush2.bf16.msra.mxu0 0
      %863 = vmatprep.subr.bf16.mxu0 0
      %864 = vmatpush2.bf16.msra.mxu0 0
      %865 = vmatprep.subr.bf16.mxu0 0
      %866 = vmatpush2.bf16.msra.mxu0 0
      %867 = vmatprep.subr.bf16.mxu0 0
      %868 = vmatpush2.bf16.msra.mxu0 0
      %869 = vmatprep.subr.bf16.mxu0 0
      %870 = vmatpush2.bf16.msra.mxu0 0
      %871 = vmatprep.subr.bf16.mxu0 0
      %872 = vmatpush2.bf16.msra.mxu0 0
      %873 = vmatprep.subr.bf16.mxu0 0
      %874 = vmatpush2.bf16.msra.mxu0 0
      %875 = vmatprep.mubr.bf16.mxu0 0
      %876 = vmatmul.mubr.bf16.gmra.mxu0 %v635
      %v877 = vpop.f32.mrf.mxu0
      %v878 = vadd.f32 %v717, %v877
      %v879 = vpop.f32.mrf.mxu0
      %v880 = vpop.f32.mrf.mxu0
      %v881 = vadd.f32 %v720, %v880
      %v882 = vpop.f32.mrf.mxu0
      %883 = vmatprep.mubr.bf16.mxu0 0
      %884 = vmatmul.mubr.bf16.gmra.mxu0 %v638
      %v885 = vpop.f32.mrf.mxu0
      %v886 = vadd.f32 %v725, %v885
      %v887 = vpop.f32.mrf.mxu0
      %v888 = vpop.f32.mrf.mxu0
      %v889 = vadd.f32 %v728, %v888
      %v890 = vpop.f32.mrf.mxu0
      %891 = vmatprep.mubr.bf16.mxu0 0
      %892 = vmatmul.mubr.bf16.gmra.mxu0 %v641
      %v893 = vpop.f32.mrf.mxu0
      %v894 = vadd.f32 %v733, %v893
      %v895 = vpop.f32.mrf.mxu0
      %v896 = vpop.f32.mrf.mxu0
      %v897 = vadd.f32 %v736, %v896
      %v898 = vpop.f32.mrf.mxu0
      %899 = vmatprep.mubr.bf16.mxu0 0
      %900 = vmatmul.mubr.bf16.gmra.mxu0 %v644
      %v901 = vpop.f32.mrf.mxu0
      %v902 = vadd.f32 %v741, %v901
      %v903 = vpop.f32.mrf.mxu0
      %v904 = vpop.f32.mrf.mxu0
      %v905 = vadd.f32 %v744, %v904
      %v906 = vpop.f32.mrf.mxu0
      %907 = vmatprep.mubr.bf16.mxu0 0
      %908 = vmatmul.mubr.bf16.gmra.mxu0 %v647
      %v909 = vpop.f32.mrf.mxu0
      %v910 = vadd.f32 %v749, %v909
      %v911 = vpop.f32.mrf.mxu0
      %v912 = vpop.f32.mrf.mxu0
      %v913 = vadd.f32 %v752, %v912
      %v914 = vpop.f32.mrf.mxu0
      %915 = vmatprep.mubr.bf16.mxu0 0
      %916 = vmatmul.mubr.bf16.gmra.mxu0 %v650
      %v917 = vpop.f32.mrf.mxu0
      %v918 = vadd.f32 %v757, %v917
      %v919 = vpop.f32.mrf.mxu0
      %v920 = vpop.f32.mrf.mxu0
      %v921 = vadd.f32 %v760, %v920
      %v922 = vpop.f32.mrf.mxu0
      %923 = vmatprep.mubr.bf16.mxu0 0
      %924 = vmatmul.mubr.bf16.gmra.mxu0 %v653
      %v925 = vpop.f32.mrf.mxu0
      %v926 = vadd.f32 %v765, %v925
      %v927 = vpop.f32.mrf.mxu0
      %v928 = vpop.f32.mrf.mxu0
      %v929 = vadd.f32 %v768, %v928
      %v930 = vpop.f32.mrf.mxu0
      %931 = vmatprep.mubr.bf16.mxu0 0
      %932 = vmatmul.mubr.bf16.gmra.mxu0 %v656
      %v933 = vpop.f32.mrf.mxu0
      %v934 = vadd.f32 %v773, %v933
      %v935 = vpop.f32.mrf.mxu0
      %v936 = vpop.f32.mrf.mxu0
      %v937 = vadd.f32 %v776, %v936
      %v938 = vpop.f32.mrf.mxu0
      %939 = vmatprep.mubr.bf16.mxu0 0
      %940 = vmatmul.mubr.bf16.gmra.mxu0 %v659
      %v941 = vpop.f32.mrf.mxu0
      %v942 = vadd.f32 %v781, %v941
      %v943 = vpop.f32.mrf.mxu0
      %v944 = vpop.f32.mrf.mxu0
      %v945 = vadd.f32 %v784, %v944
      %v946 = vpop.f32.mrf.mxu0
      %947 = vmatprep.mubr.bf16.mxu0 0
      %948 = vmatmul.mubr.bf16.gmra.mxu0 %v662
      %v949 = vpop.f32.mrf.mxu0
      %v950 = vadd.f32 %v789, %v949
      %v951 = vpop.f32.mrf.mxu0
      %v952 = vpop.f32.mrf.mxu0
      %v953 = vadd.f32 %v792, %v952
      %v954 = vpop.f32.mrf.mxu0
      %955 = vmatprep.mubr.bf16.mxu0 0
      %956 = vmatmul.mubr.bf16.gmra.mxu0 %v665
      %v957 = vpop.f32.mrf.mxu0
      %v958 = vadd.f32 %v797, %v957
      %v959 = vpop.f32.mrf.mxu0
      %v960 = vpop.f32.mrf.mxu0
      %v961 = vadd.f32 %v800, %v960
      %v962 = vpop.f32.mrf.mxu0
      %963 = vmatprep.mubr.bf16.mxu0 0
      %964 = vmatmul.mubr.bf16.gmra.mxu0 %v668
      %v965 = vpop.f32.mrf.mxu0
      %v966 = vadd.f32 %v805, %v965
      %v967 = vpop.f32.mrf.mxu0
      %v968 = vpop.f32.mrf.mxu0
      %v969 = vadd.f32 %v808, %v968
      %v970 = vpop.f32.mrf.mxu0
      %971 = vmatprep.mubr.bf16.mxu0 0
      %972 = vmatmul.mubr.bf16.gmra.mxu0 %v671
      %v973 = vpop.f32.mrf.mxu0
      %v974 = vadd.f32 %v813, %v973
      %v975 = vpop.f32.mrf.mxu0
      %v976 = vpop.f32.mrf.mxu0
      %v977 = vadd.f32 %v816, %v976
      %v978 = vpop.f32.mrf.mxu0
      %979 = vmatprep.mubr.bf16.mxu0 0
      %980 = vmatmul.mubr.bf16.gmra.mxu0 %v674
      %v981 = vpop.f32.mrf.mxu0
      %v982 = vadd.f32 %v821, %v981
      %v983 = vpop.f32.mrf.mxu0
      %v984 = vpop.f32.mrf.mxu0
      %v985 = vadd.f32 %v824, %v984
      %v986 = vpop.f32.mrf.mxu0
      %987 = vmatprep.mubr.bf16.mxu0 0
      %988 = vmatmul.mubr.bf16.gmra.mxu0 %v677
      %v989 = vpop.f32.mrf.mxu0
      %v990 = vadd.f32 %v829, %v989
      %v991 = vpop.f32.mrf.mxu0
      %v992 = vpop.f32.mrf.mxu0
      %v993 = vadd.f32 %v832, %v992
      %v994 = vpop.f32.mrf.mxu0
      %995 = vmatprep.mubr.bf16.mxu0 0
      %996 = vmatmul.mubr.bf16.gmra.mxu0 %v680
      %v997 = vpop.f32.mrf.mxu0
      %v998 = vadd.f32 %v837, %v997
      %v999 = vpop.f32.mrf.mxu0
      %v1000 = vpop.f32.mrf.mxu0
      %v1001 = vadd.f32 %v840, %v1000
      %v1002 = vpop.f32.mrf.mxu0
      %1003 = vdwg.mxu0
      %v1004 = vmax.f32 %v878, 0.0
      %v1005 = vmax.f32 %v881, 0.0
      %v1006 = vmax.f32 %v886, 0.0
      %v1007 = vmax.f32 %v889, 0.0
      %v1008 = vmax.f32 %v894, 0.0
      %v1009 = vmax.f32 %v897, 0.0
      %v1010 = vmax.f32 %v902, 0.0
      %v1011 = vmax.f32 %v905, 0.0
      %v1012 = vmax.f32 %v910, 0.0
      %v1013 = vmax.f32 %v913, 0.0
      %v1014 = vmax.f32 %v918, 0.0
      %v1015 = vmax.f32 %v921, 0.0
      %v1016 = vmax.f32 %v926, 0.0
      %v1017 = vmax.f32 %v929, 0.0
      %v1018 = vmax.f32 %v934, 0.0
      %v1019 = vmax.f32 %v937, 0.0
      %v1020 = vmax.f32 %v942, 0.0
      %v1021 = vmax.f32 %v945, 0.0
      %v1022 = vmax.f32 %v950, 0.0
      %v1023 = vmax.f32 %v953, 0.0
      %v1024 = vmax.f32 %v958, 0.0
      %v1025 = vmax.f32 %v961, 0.0
      %v1026 = vmax.f32 %v966, 0.0
      %v1027 = vmax.f32 %v969, 0.0
      %v1028 = vmax.f32 %v974, 0.0
      %v1029 = vmax.f32 %v977, 0.0
      %v1030 = vmax.f32 %v982, 0.0
      %v1031 = vmax.f32 %v985, 0.0
      %v1032 = vmax.f32 %v990, 0.0
      %v1033 = vmax.f32 %v993, 0.0
      %v1034 = vmax.f32 %v998, 0.0
      %v1035 = vmax.f32 %v1001, 0.0
      %1036 = vst.msk [vmem:[%s175] sm:$0xff] %vm633, %v1004
      %1037 = vst.msk [vmem:[%s175 + $0x8] sm:$0xff] %vm633, %v1005
      %1038 = vst.msk [vmem:[%s175 + $0x10] sm:$0xff] %vm633, %v1006
      %1039 = vst.msk [vmem:[%s175 + $0x18] sm:$0xff] %vm633, %v1007
      %1040 = vst.msk [vmem:[%s175 + $0x20] sm:$0xff] %vm633, %v1008
      %1041 = vst.msk [vmem:[%s175 + $0x28] sm:$0xff] %vm633, %v1009
      %1042 = vst.msk [vmem:[%s175 + $0x30] sm:$0xff] %vm633, %v1010
      %1043 = vst.msk [vmem:[%s175 + $0x38] sm:$0xff] %vm633, %v1011
      %1044 = vst.msk [vmem:[%s175 + $0x40] sm:$0xff] %vm633, %v1012
      %1045 = vst.msk [vmem:[%s175 + $0x48] sm:$0xff] %vm633, %v1013
      %1046 = vst.msk [vmem:[%s175 + $0x50] sm:$0xff] %vm633, %v1014
      %1047 = vst.msk [vmem:[%s175 + $0x58] sm:$0xff] %vm633, %v1015
      %1048 = vst.msk [vmem:[%s175 + $0x60] sm:$0xff] %vm633, %v1016
      %1049 = vst.msk [vmem:[%s175 + $0x68] sm:$0xff] %vm633, %v1017
      %1050 = vst.msk [vmem:[%s175 + $0x70] sm:$0xff] %vm633, %v1018
      %1051 = vst.msk [vmem:[%s175 + $0x78] sm:$0xff] %vm633, %v1019
      %1052 = vst.msk [vmem:[%s175 + $0x80] sm:$0xff] %vm633, %v1020
      %1053 = vst.msk [vmem:[%s175 + $0x88] sm:$0xff] %vm633, %v1021
      %1054 = vst.msk [vmem:[%s175 + $0x90] sm:$0xff] %vm633, %v1022
      %1055 = vst.msk [vmem:[%s175 + $0x98] sm:$0xff] %vm633, %v1023
      %1056 = vst.msk [vmem:[%s175 + $0xa0] sm:$0xff] %vm633, %v1024
      %1057 = vst.msk [vmem:[%s175 + $0xa8] sm:$0xff] %vm633, %v1025
      %1058 = vst.msk [vmem:[%s175 + $0xb0] sm:$0xff] %vm633, %v1026
      %1059 = vst.msk [vmem:[%s175 + $0xb8] sm:$0xff] %vm633, %v1027
      %1060 = vst.msk [vmem:[%s175 + $0xc0] sm:$0xff] %vm633, %v1028
      %1061 = vst.msk [vmem:[%s175 + $0xc8] sm:$0xff] %vm633, %v1029
      %1062 = vst.msk [vmem:[%s175 + $0xd0] sm:$0xff] %vm633, %v1030
      %1063 = vst.msk [vmem:[%s175 + $0xd8] sm:$0xff] %vm633, %v1031
      %1064 = vst.msk [vmem:[%s175 + $0xe0] sm:$0xff] %vm633, %v1032
      %1065 = vst.msk [vmem:[%s175 + $0xe8] sm:$0xff] %vm633, %v1033
      %1066 = vst.msk [vmem:[%s175 + $0xf0] sm:$0xff] %vm633, %v1034
      %1067 = vst.msk [vmem:[%s175 + $0xf8] sm:$0xff] %vm633, %v1035
      %s1068 = smul.u32 32, %s14
      %p1069 = scmp.lt.s32.totalorder %s1068, 63
      %s1070 = scalar_select %p1069, %s1068, 63
      %s1071 = smul.addr %s1070, 8
      %s1072 = scalar_lea.vmem %s3, %s1071
      // Predicated region
      $region33: #{patchifier_forward.59} parent=31 // pred_check
        %p1073 = pneg %p100
      $region34: #{patchifier_forward.59} parent=31 // pred_check_branch
        %1075 = sbr.rel (%p1073) target = $region36
      $region35: #{patchifier_forward.59} parent=31 // pred_region
        %s1076 = smul.u32 32, %s14
      $region36: #{patchifier_forward.59} parent=31 // pred_fallthru
        _
    $region32: #{patchifier_forward.59} parent=5 // pred_fallthru
      _
    %p1077 = scmp.le.s32.totalorder 2, %s9
    // Predicated region
    $region37: #{patchifier_forward.59} parent=5 // pred_check
      %p1078 = pneg %p1077
    $region38: #{patchifier_forward.59} parent=5 // pred_check_branch
      %1080 = sbr.rel (%p1078) target = $region40
    $region39: #{patchifier_forward.59} parent=5 // pred_region
      %s1081 = ssub.s32 %s9, 2
      // Predicated region
      $region41: #{patchifier_forward.59} parent=39 // pred_check
        %p1082 = pneg %p106
      $region42: #{patchifier_forward.59} parent=39 // pred_check_branch
        %1084 = sbr.rel (%p1082) target = $region44
      $region43: #{patchifier_forward.59} parent=39 // pred_region
        %s1085 = smul.u32 32, %s15
        %p1086 = scmp.lt.s32.totalorder %s1085, 63
        %s1087 = scalar_select %p1086, %s1085, 63
        %s1088 = smul.addr %s1087, 8
        %s1089 = scalar_lea.vmem %s3, %s1088
      $region44: #{patchifier_forward.59} parent=39 // pred_fallthru
        _
    $region40: #{patchifier_forward.59} parent=5 // pred_fallthru
      _
  $region6: #{patchifier_forward.59} parent=0 // loop_footer
    %s13 = sadd.s32 1, %s9
  $region7: #{patchifier_forward.59} parent=0 // loop_footer_branch
    %8 = sbr.rel target = $region3
  $region8: #{patchifier_forward.59} parent=0 // loop_exit
    _

// kernel: patchifier_forward.64
$region0: #{patchifier_forward.64}
  #allocation0 [shape = 'u32[]', space=smem, size = 0x4, offset = 0x4, fixed_abs, tag = 'smem constant byte address 0x4 - core index']
  #allocation1 [shape = 'u32[144,128]{1,0:T(1,128)}', space=vmem, size = 0x12000, scoped, tag = 'internal scratch']
  %s0 = inlined_call_operand.vmem [shape: bf16[128,288], index: 0, kind: input, shape index: {}]
  %s1 = inlined_call_operand.vmem [shape: bf16[288,64], index: 1, kind: input, shape index: {}]
  %s2 = inlined_call_operand.vmem [shape: f32[1,64], index: 2, kind: input, shape index: {}]
  %s3 = inlined_call_operand.vmem [shape: f32[128,64], index: 3, kind: output, shape index: {}]
  %s4 = sld [smem:[#allocation0]]
  $region22: #{patchifier_forward.64} parent=0
    _
  %s6 = ssub.s32 1, %s4
  %s7 = scalar_select 0, %s6, %s4
  // Predicated region
  $region2: #{patchifier_forward.64} parent=0 // pred_check
    _
  $region3: #{patchifier_forward.64} parent=0 // pred_check_branch
    %9 = sbr.rel (0) target = $region5
  $region4: #{patchifier_forward.64} parent=0 // pred_region
    _
  $region5: #{patchifier_forward.64} parent=0 // pred_fallthru
    _
  // Predicated region
  $region6: #{patchifier_forward.64} parent=0 // pred_check
    _
  $region7: #{patchifier_forward.64} parent=0 // pred_check_branch
    %11 = sbr.rel (0) target = $region9
  $region8: #{patchifier_forward.64} parent=0 // pred_region
    _
  $region9: #{patchifier_forward.64} parent=0 // pred_fallthru
    _
  // Predicated region
  $region10: #{patchifier_forward.64} parent=0 // pred_check
    _
  $region11: #{patchifier_forward.64} parent=0 // pred_check_branch
    %13 = sbr.rel (0) target = $region13
  $region12: #{patchifier_forward.64} parent=0 // pred_region
    _
  $region13: #{patchifier_forward.64} parent=0 // pred_fallthru
    _
  %v15 = vld [vmem:[%s0] sm:$0xff]
  %v16 = vld [vmem:[%s0 + $0x8] sm:$0xf]
  %v17 = vld [vmem:[%s0 + $0xc] sm:$0xff]
  %v18 = vld [vmem:[%s0 + $0x14] sm:$0xf]
  %v19 = vld [vmem:[%s0 + $0x18] sm:$0xff]
  %v20 = vld [vmem:[%s0 + $0x20] sm:$0xf]
  %v21 = vld [vmem:[%s0 + $0x24] sm:$0xff]
  %v22 = vld [vmem:[%s0 + $0x2c] sm:$0xf]
  %v23 = vld [vmem:[%s0 + $0x30] sm:$0xff]
  %v24 = vld [vmem:[%s0 + $0x38] sm:$0xf]
  %v25 = vld [vmem:[%s0 + $0x3c] sm:$0xff]
  %v26 = vld [vmem:[%s0 + $0x44] sm:$0xf]
  %v27 = vld [vmem:[%s0 + $0x48] sm:$0xff]
  %v28 = vld [vmem:[%s0 + $0x50] sm:$0xf]
  %v29 = vld [vmem:[%s0 + $0x54] sm:$0xff]
  %v30 = vld [vmem:[%s0 + $0x5c] sm:$0xf]
  %v31 = vld [vmem:[%s0 + $0x60] sm:$0xff]
  %v32 = vld [vmem:[%s0 + $0x68] sm:$0xf]
  %v33 = vld [vmem:[%s0 + $0x6c] sm:$0xff]
  %v34 = vld [vmem:[%s0 + $0x74] sm:$0xf]
  %v35 = vld [vmem:[%s0 + $0x78] sm:$0xff]
  %v36 = vld [vmem:[%s0 + $0x80] sm:$0xf]
  %v37 = vld [vmem:[%s0 + $0x84] sm:$0xff]
  %v38 = vld [vmem:[%s0 + $0x8c] sm:$0xf]
  %v39 = vld [vmem:[%s0 + $0x90] sm:$0xff]
  %v40 = vld [vmem:[%s0 + $0x98] sm:$0xf]
  %v41 = vld [vmem:[%s0 + $0x9c] sm:$0xff]
  %v42 = vld [vmem:[%s0 + $0xa4] sm:$0xf]
  %v43 = vld [vmem:[%s0 + $0xa8] sm:$0xff]
  %v44 = vld [vmem:[%s0 + $0xb0] sm:$0xf]
  %v45 = vld [vmem:[%s0 + $0xb4] sm:$0xff]
  %v46 = vld [vmem:[%s0 + $0xbc] sm:$0xf]
  %v47 = vld [vmem:[%s1] sm:$0xf]
  %v48 = vld [vmem:[%s1 + $0x4] sm:$0xf]
  %v49 = vld [vmem:[%s1 + $0x8] sm:$0xf]
  %v50 = vld [vmem:[%s1 + $0xc] sm:$0xf]
  %v51 = vld [vmem:[%s1 + $0x10] sm:$0xf]
  %v52 = vld [vmem:[%s1 + $0x14] sm:$0xf]
  %v53 = vld [vmem:[%s1 + $0x18] sm:$0xf]
  %v54 = vld [vmem:[%s1 + $0x1c] sm:$0xf]
  %v55 = vld [vmem:[%s1 + $0x20] sm:$0xf]
  %v56 = vld [vmem:[%s1 + $0x24] sm:$0xf]
  %v57 = vld [vmem:[%s1 + $0x28] sm:$0xf]
  %v58 = vld [vmem:[%s1 + $0x2c] sm:$0xf]
  %v59 = vld [vmem:[%s1 + $0x30] sm:$0xf]
  %v60 = vld [vmem:[%s1 + $0x34] sm:$0xf]
  %v61 = vld [vmem:[%s1 + $0x38] sm:$0xf]
  %v62 = vld [vmem:[%s1 + $0x3c] sm:$0xf]
  %v63 = vld [vmem:[%s1 + $0x40] sm:$0xf]
  %v64 = vld [vmem:[%s1 + $0x44] sm:$0xf]
  %v65 = vld [vmem:[%s1 + $0x48] sm:$0xf]
  %v66 = vld [vmem:[%s1 + $0x4c] sm:$0xf]
  %v67 = vld [vmem:[%s1 + $0x50] sm:$0xf]
  %v68 = vld [vmem:[%s1 + $0x54] sm:$0xf]
  %v69 = vld [vmem:[%s1 + $0x58] sm:$0xf]
  %v70 = vld [vmem:[%s1 + $0x5c] sm:$0xf]
  %v71 = vld [vmem:[%s1 + $0x60] sm:$0xf]
  %v72 = vld [vmem:[%s1 + $0x64] sm:$0xf]
  %v73 = vld [vmem:[%s1 + $0x68] sm:$0xf]
  %v74 = vld [vmem:[%s1 + $0x6c] sm:$0xf]
  %v75 = vld [vmem:[%s1 + $0x70] sm:$0xf]
  %v76 = vld [vmem:[%s1 + $0x74] sm:$0xf]
  %v77 = vld [vmem:[%s1 + $0x78] sm:$0xf]
  %v78 = vld [vmem:[%s1 + $0x7c] sm:$0xf]
  %v79 = vld [vmem:[%s1 + $0x80] sm:$0xf]
  %v80 = vld [vmem:[%s1 + $0x84] sm:$0xf]
  %v81 = vld [vmem:[%s1 + $0x88] sm:$0xf]
  %v82 = vld [vmem:[%s1 + $0x8c] sm:$0xf]
  %v83 = vld [vmem:[%s2] sm:$0x1]
  %v85 = vlaneseq
  %v86 = vshrl.u32 %v85, 7
  %v87 = vsub.s32 0, %v86
  %v88 = vrot.slane %v83, %v87
  %v122 = vunpack.c.l.b16 %v15
  %v123 = vunpack.c.h.b16 %v15
  %v124 = vunpack.c.l.b16 %v16
  %v125 = vunpack.c.l.b16 %v17
  %v126 = vunpack.c.h.b16 %v17
  %v127 = vunpack.c.l.b16 %v18
  %v128 = vunpack.c.l.b16 %v19
  %v129 = vunpack.c.h.b16 %v19
  %v130 = vunpack.c.l.b16 %v20
  %v131 = vunpack.c.l.b16 %v21
  %v132 = vunpack.c.h.b16 %v21
  %v133 = vunpack.c.l.b16 %v22
  %v134 = vunpack.c.l.b16 %v23
  %v135 = vunpack.c.h.b16 %v23
  %v136 = vunpack.c.l.b16 %v24
  %v137 = vunpack.c.l.b16 %v25
  %v138 = vunpack.c.h.b16 %v25
  %v139 = vunpack.c.l.b16 %v26
  %v140 = vunpack.c.l.b16 %v27
  %v141 = vunpack.c.h.b16 %v27
  %v142 = vunpack.c.l.b16 %v28
  %v143 = vunpack.c.l.b16 %v29
  %v144 = vunpack.c.h.b16 %v29
  %v145 = vunpack.c.l.b16 %v30
  %v146 = vunpack.c.l.b16 %v31
  %v147 = vunpack.c.h.b16 %v31
  %v148 = vunpack.c.l.b16 %v32
  %v149 = vunpack.c.l.b16 %v33
  %v150 = vunpack.c.h.b16 %v33
  %v151 = vunpack.c.l.b16 %v34
  %v152 = vunpack.c.l.b16 %v35
  %v153 = vunpack.c.h.b16 %v35
  %v154 = vunpack.c.l.b16 %v36
  %v155 = vunpack.c.l.b16 %v37
  %v156 = vunpack.c.h.b16 %v37
  %v157 = vunpack.c.l.b16 %v38
  %v158 = vunpack.c.l.b16 %v39
  %v159 = vunpack.c.h.b16 %v39
  %v160 = vunpack.c.l.b16 %v40
  %v161 = vunpack.c.l.b16 %v41
  %v162 = vunpack.c.h.b16 %v41
  %v163 = vunpack.c.l.b16 %v42
  %v164 = vunpack.c.l.b16 %v43
  %v165 = vunpack.c.h.b16 %v43
  %v166 = vunpack.c.l.b16 %v44
  %v167 = vunpack.c.l.b16 %v45
  %v168 = vunpack.c.h.b16 %v45
  %v169 = vunpack.c.l.b16 %v46
  %v170 = vpack.c.b16 %v125, %v122
  %v171 = vpack.c.b16 %v126, %v123
  %v172 = vpack.c.b16 %v127, %v124
  %v173 = vpack.c.b16 %v131, %v128
  %v174 = vpack.c.b16 %v132, %v129
  %v175 = vpack.c.b16 %v133, %v130
  %v176 = vpack.c.b16 %v137, %v134
  %v177 = vpack.c.b16 %v138, %v135
  %v178 = vpack.c.b16 %v139, %v136
  %v179 = vpack.c.b16 %v143, %v140
  %v180 = vpack.c.b16 %v144, %v141
  %v181 = vpack.c.b16 %v145, %v142
  %v182 = vpack.c.b16 %v149, %v146
  %v183 = vpack.c.b16 %v150, %v147
  %v184 = vpack.c.b16 %v151, %v148
  %v185 = vpack.c.b16 %v155, %v152
  %v186 = vpack.c.b16 %v156, %v153
  %v187 = vpack.c.b16 %v157, %v154
  %v188 = vpack.c.b16 %v161, %v158
  %v189 = vpack.c.b16 %v162, %v159
  %v190 = vpack.c.b16 %v163, %v160
  %v191 = vpack.c.b16 %v167, %v164
  %v192 = vpack.c.b16 %v168, %v165
  %v193 = vpack.c.b16 %v169, %v166
  %v246 = vunpack.c.l.b16 %v47
  %v247 = vunpack.c.l.b16 %v48
  %v248 = vunpack.c.l.b16 %v49
  %v249 = vunpack.c.l.b16 %v50
  %v250 = vunpack.c.l.b16 %v51
  %v251 = vunpack.c.l.b16 %v52
  %v252 = vunpack.c.l.b16 %v53
  %v253 = vunpack.c.l.b16 %v54
  %v254 = vunpack.c.l.b16 %v55
  %v255 = vunpack.c.l.b16 %v56
  %v256 = vunpack.c.l.b16 %v57
  %v257 = vunpack.c.l.b16 %v58
  %v258 = vunpack.c.l.b16 %v59
  %v259 = vunpack.c.l.b16 %v60
  %v260 = vunpack.c.l.b16 %v61
  %v261 = vunpack.c.l.b16 %v62
  %v262 = vunpack.c.l.b16 %v63
  %v263 = vunpack.c.l.b16 %v64
  %v264 = vunpack.c.l.b16 %v65
  %v265 = vunpack.c.l.b16 %v66
  %v266 = vunpack.c.l.b16 %v67
  %v267 = vunpack.c.l.b16 %v68
  %v268 = vunpack.c.l.b16 %v69
  %v269 = vunpack.c.l.b16 %v70
  %v270 = vunpack.c.l.b16 %v71
  %v271 = vunpack.c.l.b16 %v72
  %v272 = vunpack.c.l.b16 %v73
  %v273 = vunpack.c.l.b16 %v74
  %v274 = vunpack.c.l.b16 %v75
  %v275 = vunpack.c.l.b16 %v76
  %v276 = vunpack.c.l.b16 %v77
  %v277 = vunpack.c.l.b16 %v78
  %v278 = vunpack.c.l.b16 %v79
  %v279 = vunpack.c.l.b16 %v80
  %v280 = vunpack.c.l.b16 %v81
  %v281 = vunpack.c.l.b16 %v82
  %v282 = vpack.c.b16 %v247, %v246
  %v283 = vpack.c.b16 %v249, %v248
  %v284 = vpack.c.b16 %v251, %v250
  %v285 = vpack.c.b16 %v253, %v252
  %v286 = vpack.c.b16 %v255, %v254
  %v287 = vpack.c.b16 %v257, %v256
  %v288 = vpack.c.b16 %v259, %v258
  %v289 = vpack.c.b16 %v261, %v260
  %v290 = vpack.c.b16 %v263, %v262
  %v291 = vpack.c.b16 %v265, %v264
  %v292 = vpack.c.b16 %v267, %v266
  %v293 = vpack.c.b16 %v269, %v268
  %v294 = vpack.c.b16 %v271, %v270
  %v295 = vpack.c.b16 %v273, %v272
  %v296 = vpack.c.b16 %v275, %v274
  %v297 = vpack.c.b16 %v277, %v276
  %v298 = vpack.c.b16 %v279, %v278
  %v299 = vpack.c.b16 %v281, %v280
  %vm318 = vcmask 261120
  %v320 = vsel %vm318, %v172, 0
  %v323 = vsel %vm318, %v175, 0
  %v326 = vsel %vm318, %v178, 0
  %v329 = vsel %vm318, %v181, 0
  %v332 = vsel %vm318, %v184, 0
  %v335 = vsel %vm318, %v187, 0
  %v338 = vsel %vm318, %v190, 0
  %v341 = vsel %vm318, %v193, 0
  %343 = vmatprep.subr.bf16.mxu0 0
  %344 = vmatpush1.bf16.msra.mxu0 %v289
  %345 = vmatprep.subr.bf16.mxu0 0
  %346 = vmatpush1.bf16.msra.mxu0 %v288
  %347 = vmatprep.subr.bf16.mxu0 0
  %348 = vmatpush1.bf16.msra.mxu0 %v287
  %349 = vmatprep.subr.bf16.mxu0 0
  %350 = vmatpush1.bf16.msra.mxu0 %v286
  %351 = vmatprep.subr.bf16.mxu0 0
  %352 = vmatpush1.bf16.msra.mxu0 %v285
  %353 = vmatprep.subr.bf16.mxu0 0
  %354 = vmatpush1.bf16.msra.mxu0 %v284
  %355 = vmatprep.subr.bf16.mxu0 0
  %356 = vmatpush1.bf16.msra.mxu0 %v283
  %357 = vmatprep.subr.bf16.mxu0 0
  %358 = vmatpush1.bf16.msra.mxu0 %v282
  %359 = vmatprep.subr.bf16.mxu0 0
  %360 = vmatpush2.bf16.msra.mxu0 %v297
  %361 = vmatprep.subr.bf16.mxu0 0
  %362 = vmatpush2.bf16.msra.mxu0 %v296
  %363 = vmatprep.subr.bf16.mxu0 0
  %364 = vmatpush2.bf16.msra.mxu0 %v295
  %365 = vmatprep.subr.bf16.mxu0 0
  %366 = vmatpush2.bf16.msra.mxu0 %v294
  %367 = vmatprep.subr.bf16.mxu0 0
  %368 = vmatpush2.bf16.msra.mxu0 %v293
  %369 = vmatprep.subr.bf16.mxu0 0
  %370 = vmatpush2.bf16.msra.mxu0 %v292
  %371 = vmatprep.subr.bf16.mxu0 0
  %372 = vmatpush2.bf16.msra.mxu0 %v291
  %373 = vmatprep.subr.bf16.mxu0 0
  %374 = vmatpush2.bf16.msra.mxu0 %v290
  %375 = vmatprep.mubr.bf16.mxu0 %v171
  %376 = vmatmul.mubr.bf16.gmra.mxu0 %v170
  %v377 = vpop.f32.mrf.mxu0
  %v378 = vadd.f32 %v88, %v377
  %v379 = vpop.f32.mrf.mxu0
  %v380 = vpop.f32.mrf.mxu0
  %v381 = vadd.f32 %v88, %v380
  %v382 = vpop.f32.mrf.mxu0
  %383 = vmatprep.mubr.bf16.mxu0 %v174
  %384 = vmatmul.mubr.bf16.gmra.mxu0 %v173
  %v385 = vpop.f32.mrf.mxu0
  %v386 = vadd.f32 %v88, %v385
  %v387 = vpop.f32.mrf.mxu0
  %v388 = vpop.f32.mrf.mxu0
  %v389 = vadd.f32 %v88, %v388
  %v390 = vpop.f32.mrf.mxu0
  %391 = vmatprep.mubr.bf16.mxu0 %v177
  %392 = vmatmul.mubr.bf16.gmra.mxu0 %v176
  %v393 = vpop.f32.mrf.mxu0
  %v394 = vadd.f32 %v88, %v393
  %v395 = vpop.f32.mrf.mxu0
  %v396 = vpop.f32.mrf.mxu0
  %v397 = vadd.f32 %v88, %v396
  %v398 = vpop.f32.mrf.mxu0
  %399 = vmatprep.mubr.bf16.mxu0 %v180
  %400 = vmatmul.mubr.bf16.gmra.mxu0 %v179
  %v401 = vpop.f32.mrf.mxu0
  %v402 = vadd.f32 %v88, %v401
  %v403 = vpop.f32.mrf.mxu0
  %v404 = vpop.f32.mrf.mxu0
  %v405 = vadd.f32 %v88, %v404
  %v406 = vpop.f32.mrf.mxu0
  %407 = vmatprep.mubr.bf16.mxu0 %v183
  %408 = vmatmul.mubr.bf16.gmra.mxu0 %v182
  %v409 = vpop.f32.mrf.mxu0
  %v410 = vadd.f32 %v88, %v409
  %v411 = vpop.f32.mrf.mxu0
  %v412 = vpop.f32.mrf.mxu0
  %v413 = vadd.f32 %v88, %v412
  %v414 = vpop.f32.mrf.mxu0
  %415 = vmatprep.mubr.bf16.mxu0 %v186
  %416 = vmatmul.mubr.bf16.gmra.mxu0 %v185
  %v417 = vpop.f32.mrf.mxu0
  %v418 = vadd.f32 %v88, %v417
  %v419 = vpop.f32.mrf.mxu0
  %v420 = vpop.f32.mrf.mxu0
  %v421 = vadd.f32 %v88, %v420
  %v422 = vpop.f32.mrf.mxu0
  %423 = vmatprep.mubr.bf16.mxu0 %v189
  %424 = vmatmul.mubr.bf16.gmra.mxu0 %v188
  %v425 = vpop.f32.mrf.mxu0
  %v426 = vadd.f32 %v88, %v425
  %v427 = vpop.f32.mrf.mxu0
  %v428 = vpop.f32.mrf.mxu0
  %v429 = vadd.f32 %v88, %v428
  %v430 = vpop.f32.mrf.mxu0
  %431 = vmatprep.mubr.bf16.mxu0 %v192
  %432 = vmatmul.mubr.bf16.gmra.mxu0 %v191
  %v433 = vpop.f32.mrf.mxu0
  %v434 = vadd.f32 %v88, %v433
  %v435 = vpop.f32.mrf.mxu0
  %v436 = vpop.f32.mrf.mxu0
  %v437 = vadd.f32 %v88, %v436
  %v438 = vpop.f32.mrf.mxu0
  %439 = vdwg.mxu0
  %440 = vmatprep.subr.bf16.mxu0 0
  %441 = vmatpush1.bf16.msra.mxu0 0
  %442 = vmatprep.subr.bf16.mxu0 0
  %443 = vmatpush1.bf16.msra.mxu0 0
  %444 = vmatprep.subr.bf16.mxu0 0
  %445 = vmatpush1.bf16.msra.mxu0 0
  %446 = vmatprep.subr.bf16.mxu0 0
  %447 = vmatpush1.bf16.msra.mxu0 0
  %448 = vmatprep.subr.bf16.mxu0 0
  %449 = vmatpush1.bf16.msra.mxu0 0
  %450 = vmatprep.subr.bf16.mxu0 0
  %451 = vmatpush1.bf16.msra.mxu0 0
  %452 = vmatprep.subr.bf16.mxu0 0
  %453 = vmatpush1.bf16.msra.mxu0 %v299
  %454 = vmatprep.subr.bf16.mxu0 0
  %455 = vmatpush1.bf16.msra.mxu0 %v298
  %456 = vmatprep.subr.bf16.mxu0 0
  %457 = vmatpush2.bf16.msra.mxu0 0
  %458 = vmatprep.subr.bf16.mxu0 0
  %459 = vmatpush2.bf16.msra.mxu0 0
  %460 = vmatprep.subr.bf16.mxu0 0
  %461 = vmatpush2.bf16.msra.mxu0 0
  %462 = vmatprep.subr.bf16.mxu0 0
  %463 = vmatpush2.bf16.msra.mxu0 0
  %464 = vmatprep.subr.bf16.mxu0 0
  %465 = vmatpush2.bf16.msra.mxu0 0
  %466 = vmatprep.subr.bf16.mxu0 0
  %467 = vmatpush2.bf16.msra.mxu0 0
  %468 = vmatprep.subr.bf16.mxu0 0
  %469 = vmatpush2.bf16.msra.mxu0 0
  %470 = vmatprep.subr.bf16.mxu0 0
  %471 = vmatpush2.bf16.msra.mxu0 0
  %472 = vmatprep.mubr.bf16.mxu0 0
  %473 = vmatmul.mubr.bf16.gmra.mxu0 %v320
  %v474 = vpop.f32.mrf.mxu0
  %v475 = vadd.f32 %v378, %v474
  %v476 = vpop.f32.mrf.mxu0
  %v477 = vpop.f32.mrf.mxu0
  %v478 = vadd.f32 %v381, %v477
  %v479 = vpop.f32.mrf.mxu0
  %480 = vmatprep.mubr.bf16.mxu0 0
  %481 = vmatmul.mubr.bf16.gmra.mxu0 %v323
  %v482 = vpop.f32.mrf.mxu0
  %v483 = vadd.f32 %v386, %v482
  %v484 = vpop.f32.mrf.mxu0
  %v485 = vpop.f32.mrf.mxu0
  %v486 = vadd.f32 %v389, %v485
  %v487 = vpop.f32.mrf.mxu0
  %488 = vmatprep.mubr.bf16.mxu0 0
  %489 = vmatmul.mubr.bf16.gmra.mxu0 %v326
  %v490 = vpop.f32.mrf.mxu0
  %v491 = vadd.f32 %v394, %v490
  %v492 = vpop.f32.mrf.mxu0
  %v493 = vpop.f32.mrf.mxu0
  %v494 = vadd.f32 %v397, %v493
  %v495 = vpop.f32.mrf.mxu0
  %496 = vmatprep.mubr.bf16.mxu0 0
  %497 = vmatmul.mubr.bf16.gmra.mxu0 %v329
  %v498 = vpop.f32.mrf.mxu0
  %v499 = vadd.f32 %v402, %v498
  %v500 = vpop.f32.mrf.mxu0
  %v501 = vpop.f32.mrf.mxu0
  %v502 = vadd.f32 %v405, %v501
  %v503 = vpop.f32.mrf.mxu0
  %504 = vmatprep.mubr.bf16.mxu0 0
  %505 = vmatmul.mubr.bf16.gmra.mxu0 %v332
  %v506 = vpop.f32.mrf.mxu0
  %v507 = vadd.f32 %v410, %v506
  %v508 = vpop.f32.mrf.mxu0
  %v509 = vpop.f32.mrf.mxu0
  %v510 = vadd.f32 %v413, %v509
  %v511 = vpop.f32.mrf.mxu0
  %512 = vmatprep.mubr.bf16.mxu0 0
  %513 = vmatmul.mubr.bf16.gmra.mxu0 %v335
  %v514 = vpop.f32.mrf.mxu0
  %v515 = vadd.f32 %v418, %v514
  %v516 = vpop.f32.mrf.mxu0
  %v517 = vpop.f32.mrf.mxu0
  %v518 = vadd.f32 %v421, %v517
  %v519 = vpop.f32.mrf.mxu0
  %520 = vmatprep.mubr.bf16.mxu0 0
  %521 = vmatmul.mubr.bf16.gmra.mxu0 %v338
  %v522 = vpop.f32.mrf.mxu0
  %v523 = vadd.f32 %v426, %v522
  %v524 = vpop.f32.mrf.mxu0
  %v525 = vpop.f32.mrf.mxu0
  %v526 = vadd.f32 %v429, %v525
  %v527 = vpop.f32.mrf.mxu0
  %528 = vmatprep.mubr.bf16.mxu0 0
  %529 = vmatmul.mubr.bf16.gmra.mxu0 %v341
  %v530 = vpop.f32.mrf.mxu0
  %v531 = vadd.f32 %v434, %v530
  %v532 = vpop.f32.mrf.mxu0
  %v533 = vpop.f32.mrf.mxu0
  %v534 = vadd.f32 %v437, %v533
  %v535 = vpop.f32.mrf.mxu0
  %536 = vdwg.mxu0
  %v537 = vmax.f32 %v475, 0.0
  %v538 = vmax.f32 %v478, 0.0
  %v539 = vmax.f32 %v483, 0.0
  %v540 = vmax.f32 %v486, 0.0
  %v541 = vmax.f32 %v491, 0.0
  %v542 = vmax.f32 %v494, 0.0
  %v543 = vmax.f32 %v499, 0.0
  %v544 = vmax.f32 %v502, 0.0
  %v545 = vmax.f32 %v507, 0.0
  %v546 = vmax.f32 %v510, 0.0
  %v547 = vmax.f32 %v515, 0.0
  %v548 = vmax.f32 %v518, 0.0
  %v549 = vmax.f32 %v523, 0.0
  %v550 = vmax.f32 %v526, 0.0
  %v551 = vmax.f32 %v531, 0.0
  %v552 = vmax.f32 %v534, 0.0
  %vm553 = vcmask 523264
  %554 = vst.msk [vmem:[%s3] sm:$0xff] %vm553, %v537
  %555 = vst.msk [vmem:[%s3 + $0x8] sm:$0xff] %vm553, %v538
  %556 = vst.msk [vmem:[%s3 + $0x10] sm:$0xff] %vm553, %v539
  %557 = vst.msk [vmem:[%s3 + $0x18] sm:$0xff] %vm553, %v540
  %558 = vst.msk [vmem:[%s3 + $0x20] sm:$0xff] %vm553, %v541
  %559 = vst.msk [vmem:[%s3 + $0x28] sm:$0xff] %vm553, %v542
  %560 = vst.msk [vmem:[%s3 + $0x30] sm:$0xff] %vm553, %v543
  %561 = vst.msk [vmem:[%s3 + $0x38] sm:$0xff] %vm553, %v544
  %562 = vst.msk [vmem:[%s3 + $0x40] sm:$0xff] %vm553, %v545
  %563 = vst.msk [vmem:[%s3 + $0x48] sm:$0xff] %vm553, %v546
  %564 = vst.msk [vmem:[%s3 + $0x50] sm:$0xff] %vm553, %v547
  %565 = vst.msk [vmem:[%s3 + $0x58] sm:$0xff] %vm553, %v548
  %566 = vst.msk [vmem:[%s3 + $0x60] sm:$0xff] %vm553, %v549
  %567 = vst.msk [vmem:[%s3 + $0x68] sm:$0xff] %vm553, %v550
  %568 = vst.msk [vmem:[%s3 + $0x70] sm:$0xff] %vm553, %v551
  %569 = vst.msk [vmem:[%s3 + $0x78] sm:$0xff] %vm553, %v552
  // Predicated region
  $region14: #{patchifier_forward.64} parent=0 // pred_check
    _
  $region15: #{patchifier_forward.64} parent=0 // pred_check_branch
    %571 = sbr.rel (0) target = $region17
  $region16: #{patchifier_forward.64} parent=0 // pred_region
    _
  $region17: #{patchifier_forward.64} parent=0 // pred_fallthru
    _
  // Predicated region
  $region18: #{patchifier_forward.64} parent=0 // pred_check
    _
  $region19: #{patchifier_forward.64} parent=0 // pred_check_branch
    %573 = sbr.rel (0) target = $region21
  $region20: #{patchifier_forward.64} parent=0 // pred_region
    _
  $region21: #{patchifier_forward.64} parent=0 // pred_fallthru
    _

// kernel: patchifier_forward.65
$region0: #{patchifier_forward.65}
  #allocation0 [shape = 'u32[]', space=smem, size = 0x4, offset = 0x4, fixed_abs, tag = 'smem constant byte address 0x4 - core index']
  #allocation1 [shape = 'u32[144,128]{1,0:T(1,128)}', space=vmem, size = 0x12000, scoped, tag = 'internal scratch']
  %s0 = inlined_call_operand.vmem [shape: bf16[128,576], index: 0, kind: input, shape index: {}]
  %s1 = inlined_call_operand.vmem [shape: bf16[576,64], index: 1, kind: input, shape index: {}]
  %s2 = inlined_call_operand.vmem [shape: f32[1,64], index: 2, kind: input, shape index: {}]
  %s3 = inlined_call_operand.vmem [shape: f32[128,64], index: 3, kind: output, shape index: {}]
  %s4 = sld [smem:[#allocation0]]
  $region22: #{patchifier_forward.65} parent=0
    _
  %s6 = ssub.s32 1, %s4
  %s7 = scalar_select 0, %s6, %s4
  // Predicated region
  $region2: #{patchifier_forward.65} parent=0 // pred_check
    _
  $region3: #{patchifier_forward.65} parent=0 // pred_check_branch
    %9 = sbr.rel (0) target = $region5
  $region4: #{patchifier_forward.65} parent=0 // pred_region
    _
  $region5: #{patchifier_forward.65} parent=0 // pred_fallthru
    _
  // Predicated region
  $region6: #{patchifier_forward.65} parent=0 // pred_check
    _
  $region7: #{patchifier_forward.65} parent=0 // pred_check_branch
    %11 = sbr.rel (0) target = $region9
  $region8: #{patchifier_forward.65} parent=0 // pred_region
    _
  $region9: #{patchifier_forward.65} parent=0 // pred_fallthru
    _
  // Predicated region
  $region10: #{patchifier_forward.65} parent=0 // pred_check
    _
  $region11: #{patchifier_forward.65} parent=0 // pred_check_branch
    %13 = sbr.rel (0) target = $region13
  $region12: #{patchifier_forward.65} parent=0 // pred_region
    _
  $region13: #{patchifier_forward.65} parent=0 // pred_fallthru
    _
  %v15 = vld [vmem:[%s0] sm:$0xff]
  %v16 = vld [vmem:[%s0 + $0x8] sm:$0xff]
  %v17 = vld [vmem:[%s0 + $0x10] sm:$0xf]
  %v18 = vld [vmem:[%s0 + $0x14] sm:$0xff]
  %v19 = vld [vmem:[%s0 + $0x1c] sm:$0xff]
  %v20 = vld [vmem:[%s0 + $0x24] sm:$0xf]
  %v21 = vld [vmem:[%s0 + $0x28] sm:$0xff]
  %v22 = vld [vmem:[%s0 + $0x30] sm:$0xff]
  %v23 = vld [vmem:[%s0 + $0x38] sm:$0xf]
  %v24 = vld [vmem:[%s0 + $0x3c] sm:$0xff]
  %v25 = vld [vmem:[%s0 + $0x44] sm:$0xff]
  %v26 = vld [vmem:[%s0 + $0x4c] sm:$0xf]
  %v27 = vld [vmem:[%s0 + $0x50] sm:$0xff]
  %v28 = vld [vmem:[%s0 + $0x58] sm:$0xff]
  %v29 = vld [vmem:[%s0 + $0x60] sm:$0xf]
  %v30 = vld [vmem:[%s0 + $0x64] sm:$0xff]
  %v31 = vld [vmem:[%s0 + $0x6c] sm:$0xff]
  %v32 = vld [vmem:[%s0 + $0x74] sm:$0xf]
  %v33 = vld [vmem:[%s0 + $0x78] sm:$0xff]
  %v34 = vld [vmem:[%s0 + $0x80] sm:$0xff]
  %v35 = vld [vmem:[%s0 + $0x88] sm:$0xf]
  %v36 = vld [vmem:[%s0 + $0x8c] sm:$0xff]
  %v37 = vld [vmem:[%s0 + $0x94] sm:$0xff]
  %v38 = vld [vmem:[%s0 + $0x9c] sm:$0xf]
  %v39 = vld [vmem:[%s0 + $0xa0] sm:$0xff]
  %v40 = vld [vmem:[%s0 + $0xa8] sm:$0xff]
  %v41 = vld [vmem:[%s0 + $0xb0] sm:$0xf]
  %v42 = vld [vmem:[%s0 + $0xb4] sm:$0xff]
  %v43 = vld [vmem:[%s0 + $0xbc] sm:$0xff]
  %v44 = vld [vmem:[%s0 + $0xc4] sm:$0xf]
  %v45 = vld [vmem:[%s0 + $0xc8] sm:$0xff]
  %v46 = vld [vmem:[%s0 + $0xd0] sm:$0xff]
  %v47 = vld [vmem:[%s0 + $0xd8] sm:$0xf]
  %v48 = vld [vmem:[%s0 + $0xdc] sm:$0xff]
  %v49 = vld [vmem:[%s0 + $0xe4] sm:$0xff]
  %v50 = vld [vmem:[%s0 + $0xec] sm:$0xf]
  %v51 = vld [vmem:[%s0 + $0xf0] sm:$0xff]
  %v52 = vld [vmem:[%s0 + $0xf8] sm:$0xff]
  %v53 = vld [vmem:[%s0 + $0x100] sm:$0xf]
  %v54 = vld [vmem:[%s0 + $0x104] sm:$0xff]
  %v55 = vld [vmem:[%s0 + $0x10c] sm:$0xff]
  %v56 = vld [vmem:[%s0 + $0x114] sm:$0xf]
  %v57 = vld [vmem:[%s0 + $0x118] sm:$0xff]
  %v58 = vld [vmem:[%s0 + $0x120] sm:$0xff]
  %v59 = vld [vmem:[%s0 + $0x128] sm:$0xf]
  %v60 = vld [vmem:[%s0 + $0x12c] sm:$0xff]
  %v61 = vld [vmem:[%s0 + $0x134] sm:$0xff]
  %v62 = vld [vmem:[%s0 + $0x13c] sm:$0xf]
  %v63 = vld [vmem:[%s1] sm:$0xf]
  %v64 = vld [vmem:[%s1 + $0x4] sm:$0xf]
  %v65 = vld [vmem:[%s1 + $0x8] sm:$0xf]
  %v66 = vld [vmem:[%s1 + $0xc] sm:$0xf]
  %v67 = vld [vmem:[%s1 + $0x10] sm:$0xf]
  %v68 = vld [vmem:[%s1 + $0x14] sm:$0xf]
  %v69 = vld [vmem:[%s1 + $0x18] sm:$0xf]
  %v70 = vld [vmem:[%s1 + $0x1c] sm:$0xf]
  %v71 = vld [vmem:[%s1 + $0x20] sm:$0xf]
  %v72 = vld [vmem:[%s1 + $0x24] sm:$0xf]
  %v73 = vld [vmem:[%s1 + $0x28] sm:$0xf]
  %v74 = vld [vmem:[%s1 + $0x2c] sm:$0xf]
  %v75 = vld [vmem:[%s1 + $0x30] sm:$0xf]
  %v76 = vld [vmem:[%s1 + $0x34] sm:$0xf]
  %v77 = vld [vmem:[%s1 + $0x38] sm:$0xf]
  %v78 = vld [vmem:[%s1 + $0x3c] sm:$0xf]
  %v79 = vld [vmem:[%s1 + $0x40] sm:$0xf]
  %v80 = vld [vmem:[%s1 + $0x44] sm:$0xf]
  %v81 = vld [vmem:[%s1 + $0x48] sm:$0xf]
  %v82 = vld [vmem:[%s1 + $0x4c] sm:$0xf]
  %v83 = vld [vmem:[%s1 + $0x50] sm:$0xf]
  %v84 = vld [vmem:[%s1 + $0x54] sm:$0xf]
  %v85 = vld [vmem:[%s1 + $0x58] sm:$0xf]
  %v86 = vld [vmem:[%s1 + $0x5c] sm:$0xf]
  %v87 = vld [vmem:[%s1 + $0x60] sm:$0xf]
  %v88 = vld [vmem:[%s1 + $0x64] sm:$0xf]
  %v89 = vld [vmem:[%s1 + $0x68] sm:$0xf]
  %v90 = vld [vmem:[%s1 + $0x6c] sm:$0xf]
  %v91 = vld [vmem:[%s1 + $0x70] sm:$0xf]
  %v92 = vld [vmem:[%s1 + $0x74] sm:$0xf]
  %v93 = vld [vmem:[%s1 + $0x78] sm:$0xf]
  %v94 = vld [vmem:[%s1 + $0x7c] sm:$0xf]
  %v95 = vld [vmem:[%s1 + $0x80] sm:$0xf]
  %v96 = vld [vmem:[%s1 + $0x84] sm:$0xf]
  %v97 = vld [vmem:[%s1 + $0x88] sm:$0xf]
  %v98 = vld [vmem:[%s1 + $0x8c] sm:$0xf]
  %v99 = vld [vmem:[%s1 + $0x90] sm:$0xf]
  %v100 = vld [vmem:[%s1 + $0x94] sm:$0xf]
  %v101 = vld [vmem:[%s1 + $0x98] sm:$0xf]
  %v102 = vld [vmem:[%s1 + $0x9c] sm:$0xf]
  %v103 = vld [vmem:[%s1 + $0xa0] sm:$0xf]
  %v104 = vld [vmem:[%s1 + $0xa4] sm:$0xf]
  %v105 = vld [vmem:[%s1 + $0xa8] sm:$0xf]
  %v106 = vld [vmem:[%s1 + $0xac] sm:$0xf]
  %v107 = vld [vmem:[%s1 + $0xb0] sm:$0xf]
  %v108 = vld [vmem:[%s1 + $0xb4] sm:$0xf]
  %v109 = vld [vmem:[%s1 + $0xb8] sm:$0xf]
  %v110 = vld [vmem:[%s1 + $0xbc] sm:$0xf]
  %v111 = vld [vmem:[%s1 + $0xc0] sm:$0xf]
  %v112 = vld [vmem:[%s1 + $0xc4] sm:$0xf]
  %v113 = vld [vmem:[%s1 + $0xc8] sm:$0xf]
  %v114 = vld [vmem:[%s1 + $0xcc] sm:$0xf]
  %v115 = vld [vmem:[%s1 + $0xd0] sm:$0xf]
  %v116 = vld [vmem:[%s1 + $0xd4] sm:$0xf]
  %v117 = vld [vmem:[%s1 + $0xd8] sm:$0xf]
  %v118 = vld [vmem:[%s1 + $0xdc] sm:$0xf]
  %v119 = vld [vmem:[%s1 + $0xe0] sm:$0xf]
  %v120 = vld [vmem:[%s1 + $0xe4] sm:$0xf]
  %v121 = vld [vmem:[%s1 + $0xe8] sm:$0xf]
  %v122 = vld [vmem:[%s1 + $0xec] sm:$0xf]
  %v123 = vld [vmem:[%s1 + $0xf0] sm:$0xf]
  %v124 = vld [vmem:[%s1 + $0xf4] sm:$0xf]
  %v125 = vld [vmem:[%s1 + $0xf8] sm:$0xf]
  %v126 = vld [vmem:[%s1 + $0xfc] sm:$0xf]
  %v127 = vld [vmem:[%s1 + $0x100] sm:$0xf]
  %v128 = vld [vmem:[%s1 + $0x104] sm:$0xf]
  %v129 = vld [vmem:[%s1 + $0x108] sm:$0xf]
  %v130 = vld [vmem:[%s1 + $0x10c] sm:$0xf]
  %v131 = vld [vmem:[%s1 + $0x110] sm:$0xf]
  %v132 = vld [vmem:[%s1 + $0x114] sm:$0xf]
  %v133 = vld [vmem:[%s1 + $0x118] sm:$0xf]
  %v134 = vld [vmem:[%s1 + $0x11c] sm:$0xf]
  %v135 = vld [vmem:[%s2] sm:$0x1]
  %v137 = vlaneseq
  %v138 = vshrl.u32 %v137, 7
  %v139 = vsub.s32 0, %v138
  %v140 = vrot.slane %v135, %v139
  %v190 = vunpack.c.l.b16 %v15
  %v191 = vunpack.c.h.b16 %v15
  %v192 = vunpack.c.l.b16 %v16
  %v193 = vunpack.c.h.b16 %v16
  %v194 = vunpack.c.l.b16 %v17
  %v195 = vunpack.c.l.b16 %v18
  %v196 = vunpack.c.h.b16 %v18
  %v197 = vunpack.c.l.b16 %v19
  %v198 = vunpack.c.h.b16 %v19
  %v199 = vunpack.c.l.b16 %v20
  %v200 = vunpack.c.l.b16 %v21
  %v201 = vunpack.c.h.b16 %v21
  %v202 = vunpack.c.l.b16 %v22
  %v203 = vunpack.c.h.b16 %v22
  %v204 = vunpack.c.l.b16 %v23
  %v205 = vunpack.c.l.b16 %v24
  %v206 = vunpack.c.h.b16 %v24
  %v207 = vunpack.c.l.b16 %v25
  %v208 = vunpack.c.h.b16 %v25
  %v209 = vunpack.c.l.b16 %v26
  %v210 = vunpack.c.l.b16 %v27
  %v211 = vunpack.c.h.b16 %v27
  %v212 = vunpack.c.l.b16 %v28
  %v213 = vunpack.c.h.b16 %v28
  %v214 = vunpack.c.l.b16 %v29
  %v215 = vunpack.c.l.b16 %v30
  %v216 = vunpack.c.h.b16 %v30
  %v217 = vunpack.c.l.b16 %v31
  %v218 = vunpack.c.h.b16 %v31
  %v219 = vunpack.c.l.b16 %v32
  %v220 = vunpack.c.l.b16 %v33
  %v221 = vunpack.c.h.b16 %v33
  %v222 = vunpack.c.l.b16 %v34
  %v223 = vunpack.c.h.b16 %v34
  %v224 = vunpack.c.l.b16 %v35
  %v225 = vunpack.c.l.b16 %v36
  %v226 = vunpack.c.h.b16 %v36
  %v227 = vunpack.c.l.b16 %v37
  %v228 = vunpack.c.h.b16 %v37
  %v229 = vunpack.c.l.b16 %v38
  %v230 = vunpack.c.l.b16 %v39
  %v231 = vunpack.c.h.b16 %v39
  %v232 = vunpack.c.l.b16 %v40
  %v233 = vunpack.c.h.b16 %v40
  %v234 = vunpack.c.l.b16 %v41
  %v235 = vunpack.c.l.b16 %v42
  %v236 = vunpack.c.h.b16 %v42
  %v237 = vunpack.c.l.b16 %v43
  %v238 = vunpack.c.h.b16 %v43
  %v239 = vunpack.c.l.b16 %v44
  %v240 = vunpack.c.l.b16 %v45
  %v241 = vunpack.c.h.b16 %v45
  %v242 = vunpack.c.l.b16 %v46
  %v243 = vunpack.c.h.b16 %v46
  %v244 = vunpack.c.l.b16 %v47
  %v245 = vunpack.c.l.b16 %v48
  %v246 = vunpack.c.h.b16 %v48
  %v247 = vunpack.c.l.b16 %v49
  %v248 = vunpack.c.h.b16 %v49
  %v249 = vunpack.c.l.b16 %v50
  %v250 = vunpack.c.l.b16 %v51
  %v251 = vunpack.c.h.b16 %v51
  %v252 = vunpack.c.l.b16 %v52
  %v253 = vunpack.c.h.b16 %v52
  %v254 = vunpack.c.l.b16 %v53
  %v255 = vunpack.c.l.b16 %v54
  %v256 = vunpack.c.h.b16 %v54
  %v257 = vunpack.c.l.b16 %v55
  %v258 = vunpack.c.h.b16 %v55
  %v259 = vunpack.c.l.b16 %v56
  %v260 = vunpack.c.l.b16 %v57
  %v261 = vunpack.c.h.b16 %v57
  %v262 = vunpack.c.l.b16 %v58
  %v263 = vunpack.c.h.b16 %v58
  %v264 = vunpack.c.l.b16 %v59
  %v265 = vunpack.c.l.b16 %v60
  %v266 = vunpack.c.h.b16 %v60
  %v267 = vunpack.c.l.b16 %v61
  %v268 = vunpack.c.h.b16 %v61
  %v269 = vunpack.c.l.b16 %v62
  %v270 = vpack.c.b16 %v195, %v190
  %v271 = vpack.c.b16 %v196, %v191
  %v272 = vpack.c.b16 %v197, %v192
  %v273 = vpack.c.b16 %v198, %v193
  %v274 = vpack.c.b16 %v199, %v194
  %v275 = vpack.c.b16 %v205, %v200
  %v276 = vpack.c.b16 %v206, %v201
  %v277 = vpack.c.b16 %v207, %v202
  %v278 = vpack.c.b16 %v208, %v203
  %v279 = vpack.c.b16 %v209, %v204
  %v280 = vpack.c.b16 %v215, %v210
  %v281 = vpack.c.b16 %v216, %v211
  %v282 = vpack.c.b16 %v217, %v212
  %v283 = vpack.c.b16 %v218, %v213
  %v284 = vpack.c.b16 %v219, %v214
  %v285 = vpack.c.b16 %v225, %v220
  %v286 = vpack.c.b16 %v226, %v221
  %v287 = vpack.c.b16 %v227, %v222
  %v288 = vpack.c.b16 %v228, %v223
  %v289 = vpack.c.b16 %v229, %v224
  %v290 = vpack.c.b16 %v235, %v230
  %v291 = vpack.c.b16 %v236, %v231
  %v292 = vpack.c.b16 %v237, %v232
  %v293 = vpack.c.b16 %v238, %v233
  %v294 = vpack.c.b16 %v239, %v234
  %v295 = vpack.c.b16 %v245, %v240
  %v296 = vpack.c.b16 %v246, %v241
  %v297 = vpack.c.b16 %v247, %v242
  %v298 = vpack.c.b16 %v248, %v243
  %v299 = vpack.c.b16 %v249, %v244
  %v300 = vpack.c.b16 %v255, %v250
  %v301 = vpack.c.b16 %v256, %v251
  %v302 = vpack.c.b16 %v257, %v252
  %v303 = vpack.c.b16 %v258, %v253
  %v304 = vpack.c.b16 %v259, %v254
  %v305 = vpack.c.b16 %v265, %v260
  %v306 = vpack.c.b16 %v266, %v261
  %v307 = vpack.c.b16 %v267, %v262
  %v308 = vpack.c.b16 %v268, %v263
  %v309 = vpack.c.b16 %v269, %v264
  %v414 = vunpack.c.l.b16 %v63
  %v415 = vunpack.c.l.b16 %v64
  %v416 = vunpack.c.l.b16 %v65
  %v417 = vunpack.c.l.b16 %v66
  %v418 = vunpack.c.l.b16 %v67
  %v419 = vunpack.c.l.b16 %v68
  %v420 = vunpack.c.l.b16 %v69
  %v421 = vunpack.c.l.b16 %v70
  %v422 = vunpack.c.l.b16 %v71
  %v423 = vunpack.c.l.b16 %v72
  %v424 = vunpack.c.l.b16 %v73
  %v425 = vunpack.c.l.b16 %v74
  %v426 = vunpack.c.l.b16 %v75
  %v427 = vunpack.c.l.b16 %v76
  %v428 = vunpack.c.l.b16 %v77
  %v429 = vunpack.c.l.b16 %v78
  %v430 = vunpack.c.l.b16 %v79
  %v431 = vunpack.c.l.b16 %v80
  %v432 = vunpack.c.l.b16 %v81
  %v433 = vunpack.c.l.b16 %v82
  %v434 = vunpack.c.l.b16 %v83
  %v435 = vunpack.c.l.b16 %v84
  %v436 = vunpack.c.l.b16 %v85
  %v437 = vunpack.c.l.b16 %v86
  %v438 = vunpack.c.l.b16 %v87
  %v439 = vunpack.c.l.b16 %v88
  %v440 = vunpack.c.l.b16 %v89
  %v441 = vunpack.c.l.b16 %v90
  %v442 = vunpack.c.l.b16 %v91
  %v443 = vunpack.c.l.b16 %v92
  %v444 = vunpack.c.l.b16 %v93
  %v445 = vunpack.c.l.b16 %v94
  %v446 = vunpack.c.l.b16 %v95
  %v447 = vunpack.c.l.b16 %v96
  %v448 = vunpack.c.l.b16 %v97
  %v449 = vunpack.c.l.b16 %v98
  %v450 = vunpack.c.l.b16 %v99
  %v451 = vunpack.c.l.b16 %v100
  %v452 = vunpack.c.l.b16 %v101
  %v453 = vunpack.c.l.b16 %v102
  %v454 = vunpack.c.l.b16 %v103
  %v455 = vunpack.c.l.b16 %v104
  %v456 = vunpack.c.l.b16 %v105
  %v457 = vunpack.c.l.b16 %v106
  %v458 = vunpack.c.l.b16 %v107
  %v459 = vunpack.c.l.b16 %v108
  %v460 = vunpack.c.l.b16 %v109
  %v461 = vunpack.c.l.b16 %v110
  %v462 = vunpack.c.l.b16 %v111
  %v463 = vunpack.c.l.b16 %v112
  %v464 = vunpack.c.l.b16 %v113
  %v465 = vunpack.c.l.b16 %v114
  %v466 = vunpack.c.l.b16 %v115
  %v467 = vunpack.c.l.b16 %v116
  %v468 = vunpack.c.l.b16 %v117
  %v469 = vunpack.c.l.b16 %v118
  %v470 = vunpack.c.l.b16 %v119
  %v471 = vunpack.c.l.b16 %v120
  %v472 = vunpack.c.l.b16 %v121
  %v473 = vunpack.c.l.b16 %v122
  %v474 = vunpack.c.l.b16 %v123
  %v475 = vunpack.c.l.b16 %v124
  %v476 = vunpack.c.l.b16 %v125
  %v477 = vunpack.c.l.b16 %v126
  %v478 = vunpack.c.l.b16 %v127
  %v479 = vunpack.c.l.b16 %v128
  %v480 = vunpack.c.l.b16 %v129
  %v481 = vunpack.c.l.b16 %v130
  %v482 = vunpack.c.l.b16 %v131
  %v483 = vunpack.c.l.b16 %v132
  %v484 = vunpack.c.l.b16 %v133
  %v485 = vunpack.c.l.b16 %v134
  %v486 = vpack.c.b16 %v415, %v414
  %v487 = vpack.c.b16 %v417, %v416
  %v488 = vpack.c.b16 %v419, %v418
  %v489 = vpack.c.b16 %v421, %v420
  %v490 = vpack.c.b16 %v423, %v422
  %v491 = vpack.c.b16 %v425, %v424
  %v492 = vpack.c.b16 %v427, %v426
  %v493 = vpack.c.b16 %v429, %v428
  %v494 = vpack.c.b16 %v431, %v430
  %v495 = vpack.c.b16 %v433, %v432
  %v496 = vpack.c.b16 %v435, %v434
  %v497 = vpack.c.b16 %v437, %v436
  %v498 = vpack.c.b16 %v439, %v438
  %v499 = vpack.c.b16 %v441, %v440
  %v500 = vpack.c.b16 %v443, %v442
  %v501 = vpack.c.b16 %v445, %v444
  %v502 = vpack.c.b16 %v447, %v446
  %v503 = vpack.c.b16 %v449, %v448
  %v504 = vpack.c.b16 %v451, %v450
  %v505 = vpack.c.b16 %v453, %v452
  %v506 = vpack.c.b16 %v455, %v454
  %v507 = vpack.c.b16 %v457, %v456
  %v508 = vpack.c.b16 %v459, %v458
  %v509 = vpack.c.b16 %v461, %v460
  %v510 = vpack.c.b16 %v463, %v462
  %v511 = vpack.c.b16 %v465, %v464
  %v512 = vpack.c.b16 %v467, %v466
  %v513 = vpack.c.b16 %v469, %v468
  %v514 = vpack.c.b16 %v471, %v470
  %v515 = vpack.c.b16 %v473, %v472
  %v516 = vpack.c.b16 %v475, %v474
  %v517 = vpack.c.b16 %v477, %v476
  %v518 = vpack.c.b16 %v479, %v478
  %v519 = vpack.c.b16 %v481, %v480
  %v520 = vpack.c.b16 %v483, %v482
  %v521 = vpack.c.b16 %v485, %v484
  %vm558 = vcmask 523264
  %v560 = vsel %vm558, %v274, 0
  %v563 = vsel %vm558, %v279, 0
  %v566 = vsel %vm558, %v284, 0
  %v569 = vsel %vm558, %v289, 0
  %v572 = vsel %vm558, %v294, 0
  %v575 = vsel %vm558, %v299, 0
  %v578 = vsel %vm558, %v304, 0
  %v581 = vsel %vm558, %v309, 0
  %583 = vmatprep.subr.bf16.mxu0 0
  %584 = vmatpush1.bf16.msra.mxu0 %v493
  %585 = vmatprep.subr.bf16.mxu0 0
  %586 = vmatpush1.bf16.msra.mxu0 %v492
  %587 = vmatprep.subr.bf16.mxu0 0
  %588 = vmatpush1.bf16.msra.mxu0 %v491
  %589 = vmatprep.subr.bf16.mxu0 0
  %590 = vmatpush1.bf16.msra.mxu0 %v490
  %591 = vmatprep.subr.bf16.mxu0 0
  %592 = vmatpush1.bf16.msra.mxu0 %v489
  %593 = vmatprep.subr.bf16.mxu0 0
  %594 = vmatpush1.bf16.msra.mxu0 %v488
  %595 = vmatprep.subr.bf16.mxu0 0
  %596 = vmatpush1.bf16.msra.mxu0 %v487
  %597 = vmatprep.subr.bf16.mxu0 0
  %598 = vmatpush1.bf16.msra.mxu0 %v486
  %599 = vmatprep.subr.bf16.mxu0 0
  %600 = vmatpush2.bf16.msra.mxu0 %v501
  %601 = vmatprep.subr.bf16.mxu0 0
  %602 = vmatpush2.bf16.msra.mxu0 %v500
  %603 = vmatprep.subr.bf16.mxu0 0
  %604 = vmatpush2.bf16.msra.mxu0 %v499
  %605 = vmatprep.subr.bf16.mxu0 0
  %606 = vmatpush2.bf16.msra.mxu0 %v498
  %607 = vmatprep.subr.bf16.mxu0 0
  %608 = vmatpush2.bf16.msra.mxu0 %v497
  %609 = vmatprep.subr.bf16.mxu0 0
  %610 = vmatpush2.bf16.msra.mxu0 %v496
  %611 = vmatprep.subr.bf16.mxu0 0
  %612 = vmatpush2.bf16.msra.mxu0 %v495
  %613 = vmatprep.subr.bf16.mxu0 0
  %614 = vmatpush2.bf16.msra.mxu0 %v494
  %615 = vmatprep.mubr.bf16.mxu0 %v271
  %616 = vmatmul.mubr.bf16.gmra.mxu0 %v270
  %v617 = vpop.f32.mrf.mxu0
  %v618 = vadd.f32 %v140, %v617
  %v619 = vpop.f32.mrf.mxu0
  %v620 = vpop.f32.mrf.mxu0
  %v621 = vadd.f32 %v140, %v620
  %v622 = vpop.f32.mrf.mxu0
  %623 = vmatprep.mubr.bf16.mxu0 %v276
  %624 = vmatmul.mubr.bf16.gmra.mxu0 %v275
  %v625 = vpop.f32.mrf.mxu0
  %v626 = vadd.f32 %v140, %v625
  %v627 = vpop.f32.mrf.mxu0
  %v628 = vpop.f32.mrf.mxu0
  %v629 = vadd.f32 %v140, %v628
  %v630 = vpop.f32.mrf.mxu0
  %631 = vmatprep.mubr.bf16.mxu0 %v281
  %632 = vmatmul.mubr.bf16.gmra.mxu0 %v280
  %v633 = vpop.f32.mrf.mxu0
  %v634 = vadd.f32 %v140, %v633
  %v635 = vpop.f32.mrf.mxu0
  %v636 = vpop.f32.mrf.mxu0
  %v637 = vadd.f32 %v140, %v636
  %v638 = vpop.f32.mrf.mxu0
  %639 = vmatprep.mubr.bf16.mxu0 %v286
  %640 = vmatmul.mubr.bf16.gmra.mxu0 %v285
  %v641 = vpop.f32.mrf.mxu0
  %v642 = vadd.f32 %v140, %v641
  %v643 = vpop.f32.mrf.mxu0
  %v644 = vpop.f32.mrf.mxu0
  %v645 = vadd.f32 %v140, %v644
  %v646 = vpop.f32.mrf.mxu0
  %647 = vmatprep.mubr.bf16.mxu0 %v291
  %648 = vmatmul.mubr.bf16.gmra.mxu0 %v290
  %v649 = vpop.f32.mrf.mxu0
  %v650 = vadd.f32 %v140, %v649
  %v651 = vpop.f32.mrf.mxu0
  %v652 = vpop.f32.mrf.mxu0
  %v653 = vadd.f32 %v140, %v652
  %v654 = vpop.f32.mrf.mxu0
  %655 = vmatprep.mubr.bf16.mxu0 %v296
  %656 = vmatmul.mubr.bf16.gmra.mxu0 %v295
  %v657 = vpop.f32.mrf.mxu0
  %v658 = vadd.f32 %v140, %v657
  %v659 = vpop.f32.mrf.mxu0
  %v660 = vpop.f32.mrf.mxu0
  %v661 = vadd.f32 %v140, %v660
  %v662 = vpop.f32.mrf.mxu0
  %663 = vmatprep.mubr.bf16.mxu0 %v301
  %664 = vmatmul.mubr.bf16.gmra.mxu0 %v300
  %v665 = vpop.f32.mrf.mxu0
  %v666 = vadd.f32 %v140, %v665
  %v667 = vpop.f32.mrf.mxu0
  %v668 = vpop.f32.mrf.mxu0
  %v669 = vadd.f32 %v140, %v668
  %v670 = vpop.f32.mrf.mxu0
  %671 = vmatprep.mubr.bf16.mxu0 %v306
  %672 = vmatmul.mubr.bf16.gmra.mxu0 %v305
  %v673 = vpop.f32.mrf.mxu0
  %v674 = vadd.f32 %v140, %v673
  %v675 = vpop.f32.mrf.mxu0
  %v676 = vpop.f32.mrf.mxu0
  %v677 = vadd.f32 %v140, %v676
  %v678 = vpop.f32.mrf.mxu0
  %679 = vdwg.mxu0
  %680 = vmatprep.subr.bf16.mxu0 0
  %681 = vmatpush1.bf16.msra.mxu0 %v509
  %682 = vmatprep.subr.bf16.mxu0 0
  %683 = vmatpush1.bf16.msra.mxu0 %v508
  %684 = vmatprep.subr.bf16.mxu0 0
  %685 = vmatpush1.bf16.msra.mxu0 %v507
  %686 = vmatprep.subr.bf16.mxu0 0
  %687 = vmatpush1.bf16.msra.mxu0 %v506
  %688 = vmatprep.subr.bf16.mxu0 0
  %689 = vmatpush1.bf16.msra.mxu0 %v505
  %690 = vmatprep.subr.bf16.mxu0 0
  %691 = vmatpush1.bf16.msra.mxu0 %v504
  %692 = vmatprep.subr.bf16.mxu0 0
  %693 = vmatpush1.bf16.msra.mxu0 %v503
  %694 = vmatprep.subr.bf16.mxu0 0
  %695 = vmatpush1.bf16.msra.mxu0 %v502
  %696 = vmatprep.subr.bf16.mxu0 0
  %697 = vmatpush2.bf16.msra.mxu0 %v517
  %698 = vmatprep.subr.bf16.mxu0 0
  %699 = vmatpush2.bf16.msra.mxu0 %v516
  %700 = vmatprep.subr.bf16.mxu0 0
  %701 = vmatpush2.bf16.msra.mxu0 %v515
  %702 = vmatprep.subr.bf16.mxu0 0
  %703 = vmatpush2.bf16.msra.mxu0 %v514
  %704 = vmatprep.subr.bf16.mxu0 0
  %705 = vmatpush2.bf16.msra.mxu0 %v513
  %706 = vmatprep.subr.bf16.mxu0 0
  %707 = vmatpush2.bf16.msra.mxu0 %v512
  %708 = vmatprep.subr.bf16.mxu0 0
  %709 = vmatpush2.bf16.msra.mxu0 %v511
  %710 = vmatprep.subr.bf16.mxu0 0
  %711 = vmatpush2.bf16.msra.mxu0 %v510
  %712 = vmatprep.mubr.bf16.mxu0 %v273
  %713 = vmatmul.mubr.bf16.gmra.mxu0 %v272
  %v714 = vpop.f32.mrf.mxu0
  %v715 = vadd.f32 %v618, %v714
  %v716 = vpop.f32.mrf.mxu0
  %v717 = vpop.f32.mrf.mxu0
  %v718 = vadd.f32 %v621, %v717
  %v719 = vpop.f32.mrf.mxu0
  %720 = vmatprep.mubr.bf16.mxu0 %v278
  %721 = vmatmul.mubr.bf16.gmra.mxu0 %v277
  %v722 = vpop.f32.mrf.mxu0
  %v723 = vadd.f32 %v626, %v722
  %v724 = vpop.f32.mrf.mxu0
  %v725 = vpop.f32.mrf.mxu0
  %v726 = vadd.f32 %v629, %v725
  %v727 = vpop.f32.mrf.mxu0
  %728 = vmatprep.mubr.bf16.mxu0 %v283
  %729 = vmatmul.mubr.bf16.gmra.mxu0 %v282
  %v730 = vpop.f32.mrf.mxu0
  %v731 = vadd.f32 %v634, %v730
  %v732 = vpop.f32.mrf.mxu0
  %v733 = vpop.f32.mrf.mxu0
  %v734 = vadd.f32 %v637, %v733
  %v735 = vpop.f32.mrf.mxu0
  %736 = vmatprep.mubr.bf16.mxu0 %v288
  %737 = vmatmul.mubr.bf16.gmra.mxu0 %v287
  %v738 = vpop.f32.mrf.mxu0
  %v739 = vadd.f32 %v642, %v738
  %v740 = vpop.f32.mrf.mxu0
  %v741 = vpop.f32.mrf.mxu0
  %v742 = vadd.f32 %v645, %v741
  %v743 = vpop.f32.mrf.mxu0
  %744 = vmatprep.mubr.bf16.mxu0 %v293
  %745 = vmatmul.mubr.bf16.gmra.mxu0 %v292
  %v746 = vpop.f32.mrf.mxu0
  %v747 = vadd.f32 %v650, %v746
  %v748 = vpop.f32.mrf.mxu0
  %v749 = vpop.f32.mrf.mxu0
  %v750 = vadd.f32 %v653, %v749
  %v751 = vpop.f32.mrf.mxu0
  %752 = vmatprep.mubr.bf16.mxu0 %v298
  %753 = vmatmul.mubr.bf16.gmra.mxu0 %v297
  %v754 = vpop.f32.mrf.mxu0
  %v755 = vadd.f32 %v658, %v754
  %v756 = vpop.f32.mrf.mxu0
  %v757 = vpop.f32.mrf.mxu0
  %v758 = vadd.f32 %v661, %v757
  %v759 = vpop.f32.mrf.mxu0
  %760 = vmatprep.mubr.bf16.mxu0 %v303
  %761 = vmatmul.mubr.bf16.gmra.mxu0 %v302
  %v762 = vpop.f32.mrf.mxu0
  %v763 = vadd.f32 %v666, %v762
  %v764 = vpop.f32.mrf.mxu0
  %v765 = vpop.f32.mrf.mxu0
  %v766 = vadd.f32 %v669, %v765
  %v767 = vpop.f32.mrf.mxu0
  %768 = vmatprep.mubr.bf16.mxu0 %v308
  %769 = vmatmul.mubr.bf16.gmra.mxu0 %v307
  %v770 = vpop.f32.mrf.mxu0
  %v771 = vadd.f32 %v674, %v770
  %v772 = vpop.f32.mrf.mxu0
  %v773 = vpop.f32.mrf.mxu0
  %v774 = vadd.f32 %v677, %v773
  %v775 = vpop.f32.mrf.mxu0
  %776 = vdwg.mxu0
  %777 = vmatprep.subr.bf16.mxu0 0
  %778 = vmatpush1.bf16.msra.mxu0 0
  %779 = vmatprep.subr.bf16.mxu0 0
  %780 = vmatpush1.bf16.msra.mxu0 0
  %781 = vmatprep.subr.bf16.mxu0 0
  %782 = vmatpush1.bf16.msra.mxu0 0
  %783 = vmatprep.subr.bf16.mxu0 0
  %784 = vmatpush1.bf16.msra.mxu0 0
  %785 = vmatprep.subr.bf16.mxu0 0
  %786 = vmatpush1.bf16.msra.mxu0 %v521
  %787 = vmatprep.subr.bf16.mxu0 0
  %788 = vmatpush1.bf16.msra.mxu0 %v520
  %789 = vmatprep.subr.bf16.mxu0 0
  %790 = vmatpush1.bf16.msra.mxu0 %v519
  %791 = vmatprep.subr.bf16.mxu0 0
  %792 = vmatpush1.bf16.msra.mxu0 %v518
  %793 = vmatprep.subr.bf16.mxu0 0
  %794 = vmatpush2.bf16.msra.mxu0 0
  %795 = vmatprep.subr.bf16.mxu0 0
  %796 = vmatpush2.bf16.msra.mxu0 0
  %797 = vmatprep.subr.bf16.mxu0 0
  %798 = vmatpush2.bf16.msra.mxu0 0
  %799 = vmatprep.subr.bf16.mxu0 0
  %800 = vmatpush2.bf16.msra.mxu0 0
  %801 = vmatprep.subr.bf16.mxu0 0
  %802 = vmatpush2.bf16.msra.mxu0 0
  %803 = vmatprep.subr.bf16.mxu0 0
  %804 = vmatpush2.bf16.msra.mxu0 0
  %805 = vmatprep.subr.bf16.mxu0 0
  %806 = vmatpush2.bf16.msra.mxu0 0
  %807 = vmatprep.subr.bf16.mxu0 0
  %808 = vmatpush2.bf16.msra.mxu0 0
  %809 = vmatprep.mubr.bf16.mxu0 0
  %810 = vmatmul.mubr.bf16.gmra.mxu0 %v560
  %v811 = vpop.f32.mrf.mxu0
  %v812 = vadd.f32 %v715, %v811
  %v813 = vpop.f32.mrf.mxu0
  %v814 = vpop.f32.mrf.mxu0
  %v815 = vadd.f32 %v718, %v814
  %v816 = vpop.f32.mrf.mxu0
  %817 = vmatprep.mubr.bf16.mxu0 0
  %818 = vmatmul.mubr.bf16.gmra.mxu0 %v563
  %v819 = vpop.f32.mrf.mxu0
  %v820 = vadd.f32 %v723, %v819
  %v821 = vpop.f32.mrf.mxu0
  %v822 = vpop.f32.mrf.mxu0
  %v823 = vadd.f32 %v726, %v822
  %v824 = vpop.f32.mrf.mxu0
  %825 = vmatprep.mubr.bf16.mxu0 0
  %826 = vmatmul.mubr.bf16.gmra.mxu0 %v566
  %v827 = vpop.f32.mrf.mxu0
  %v828 = vadd.f32 %v731, %v827
  %v829 = vpop.f32.mrf.mxu0
  %v830 = vpop.f32.mrf.mxu0
  %v831 = vadd.f32 %v734, %v830
  %v832 = vpop.f32.mrf.mxu0
  %833 = vmatprep.mubr.bf16.mxu0 0
  %834 = vmatmul.mubr.bf16.gmra.mxu0 %v569
  %v835 = vpop.f32.mrf.mxu0
  %v836 = vadd.f32 %v739, %v835
  %v837 = vpop.f32.mrf.mxu0
  %v838 = vpop.f32.mrf.mxu0
  %v839 = vadd.f32 %v742, %v838
  %v840 = vpop.f32.mrf.mxu0
  %841 = vmatprep.mubr.bf16.mxu0 0
  %842 = vmatmul.mubr.bf16.gmra.mxu0 %v572
  %v843 = vpop.f32.mrf.mxu0
  %v844 = vadd.f32 %v747, %v843
  %v845 = vpop.f32.mrf.mxu0
  %v846 = vpop.f32.mrf.mxu0
  %v847 = vadd.f32 %v750, %v846
  %v848 = vpop.f32.mrf.mxu0
  %849 = vmatprep.mubr.bf16.mxu0 0
  %850 = vmatmul.mubr.bf16.gmra.mxu0 %v575
  %v851 = vpop.f32.mrf.mxu0
  %v852 = vadd.f32 %v755, %v851
  %v853 = vpop.f32.mrf.mxu0
  %v854 = vpop.f32.mrf.mxu0
  %v855 = vadd.f32 %v758, %v854
  %v856 = vpop.f32.mrf.mxu0
  %857 = vmatprep.mubr.bf16.mxu0 0
  %858 = vmatmul.mubr.bf16.gmra.mxu0 %v578
  %v859 = vpop.f32.mrf.mxu0
  %v860 = vadd.f32 %v763, %v859
  %v861 = vpop.f32.mrf.mxu0
  %v862 = vpop.f32.mrf.mxu0
  %v863 = vadd.f32 %v766, %v862
  %v864 = vpop.f32.mrf.mxu0
  %865 = vmatprep.mubr.bf16.mxu0 0
  %866 = vmatmul.mubr.bf16.gmra.mxu0 %v581
  %v867 = vpop.f32.mrf.mxu0
  %v868 = vadd.f32 %v771, %v867
  %v869 = vpop.f32.mrf.mxu0
  %v870 = vpop.f32.mrf.mxu0
  %v871 = vadd.f32 %v774, %v870
  %v872 = vpop.f32.mrf.mxu0
  %873 = vdwg.mxu0
  %v874 = vmax.f32 %v812, 0.0
  %v875 = vmax.f32 %v815, 0.0
  %v876 = vmax.f32 %v820, 0.0
  %v877 = vmax.f32 %v823, 0.0
  %v878 = vmax.f32 %v828, 0.0
  %v879 = vmax.f32 %v831, 0.0
  %v880 = vmax.f32 %v836, 0.0
  %v881 = vmax.f32 %v839, 0.0
  %v882 = vmax.f32 %v844, 0.0
  %v883 = vmax.f32 %v847, 0.0
  %v884 = vmax.f32 %v852, 0.0
  %v885 = vmax.f32 %v855, 0.0
  %v886 = vmax.f32 %v860, 0.0
  %v887 = vmax.f32 %v863, 0.0
  %v888 = vmax.f32 %v868, 0.0
  %v889 = vmax.f32 %v871, 0.0
  %890 = vst.msk [vmem:[%s3] sm:$0xff] %vm558, %v874
  %891 = vst.msk [vmem:[%s3 + $0x8] sm:$0xff] %vm558, %v875
  %892 = vst.msk [vmem:[%s3 + $0x10] sm:$0xff] %vm558, %v876
  %893 = vst.msk [vmem:[%s3 + $0x18] sm:$0xff] %vm558, %v877
  %894 = vst.msk [vmem:[%s3 + $0x20] sm:$0xff] %vm558, %v878
  %895 = vst.msk [vmem:[%s3 + $0x28] sm:$0xff] %vm558, %v879
  %896 = vst.msk [vmem:[%s3 + $0x30] sm:$0xff] %vm558, %v880
  %897 = vst.msk [vmem:[%s3 + $0x38] sm:$0xff] %vm558, %v881
  %898 = vst.msk [vmem:[%s3 + $0x40] sm:$0xff] %vm558, %v882
  %899 = vst.msk [vmem:[%s3 + $0x48] sm:$0xff] %vm558, %v883
  %900 = vst.msk [vmem:[%s3 + $0x50] sm:$0xff] %vm558, %v884
  %901 = vst.msk [vmem:[%s3 + $0x58] sm:$0xff] %vm558, %v885
  %902 = vst.msk [vmem:[%s3 + $0x60] sm:$0xff] %vm558, %v886
  %903 = vst.msk [vmem:[%s3 + $0x68] sm:$0xff] %vm558, %v887
  %904 = vst.msk [vmem:[%s3 + $0x70] sm:$0xff] %vm558, %v888
  %905 = vst.msk [vmem:[%s3 + $0x78] sm:$0xff] %vm558, %v889
  // Predicated region
  $region14: #{patchifier_forward.65} parent=0 // pred_check
    _
  $region15: #{patchifier_forward.65} parent=0 // pred_check_branch
    %907 = sbr.rel (0) target = $region17
  $region16: #{patchifier_forward.65} parent=0 // pred_region
    _
  $region17: #{patchifier_forward.65} parent=0 // pred_fallthru
    _
  // Predicated region
  $region18: #{patchifier_forward.65} parent=0 // pred_check
    _
  $region19: #{patchifier_forward.65} parent=0 // pred_check_branch
    %909 = sbr.rel (0) target = $region21
  $region20: #{patchifier_forward.65} parent=0 // pred_region
    _
  $region21: #{patchifier_forward.65} parent=0 // pred_fallthru
    _

// kernel: patchifier_forward.63
$region0: #{patchifier_forward.63}
  #allocation0 [shape = 'u32[]', space=smem, size = 0x4, offset = 0x4, fixed_abs, tag = 'smem constant byte address 0x4 - core index']
  #allocation1 [shape = 'u32[144,128]{1,0:T(1,128)}', space=vmem, size = 0x12000, scoped, tag = 'internal scratch']
  %s0 = inlined_call_operand.vmem [shape: bf16[128,32], index: 0, kind: input, shape index: {}]
  %s1 = inlined_call_operand.vmem [shape: bf16[32,64], index: 1, kind: input, shape index: {}]
  %s2 = inlined_call_operand.vmem [shape: f32[1,64], index: 2, kind: input, shape index: {}]
  %s3 = inlined_call_operand.vmem [shape: f32[128,64], index: 3, kind: output, shape index: {}]
  %s4 = sld [smem:[#allocation0]]
  $region22: #{patchifier_forward.63} parent=0
    _
  %s6 = ssub.s32 1, %s4
  %s7 = scalar_select 0, %s6, %s4
  // Predicated region
  $region2: #{patchifier_forward.63} parent=0 // pred_check
    _
  $region3: #{patchifier_forward.63} parent=0 // pred_check_branch
    %9 = sbr.rel (0) target = $region5
  $region4: #{patchifier_forward.63} parent=0 // pred_region
    _
  $region5: #{patchifier_forward.63} parent=0 // pred_fallthru
    _
  // Predicated region
  $region6: #{patchifier_forward.63} parent=0 // pred_check
    _
  $region7: #{patchifier_forward.63} parent=0 // pred_check_branch
    %11 = sbr.rel (0) target = $region9
  $region8: #{patchifier_forward.63} parent=0 // pred_region
    _
  $region9: #{patchifier_forward.63} parent=0 // pred_fallthru
    _
  // Predicated region
  $region10: #{patchifier_forward.63} parent=0 // pred_check
    _
  $region11: #{patchifier_forward.63} parent=0 // pred_check_branch
    %13 = sbr.rel (0) target = $region13
  $region12: #{patchifier_forward.63} parent=0 // pred_region
    _
  $region13: #{patchifier_forward.63} parent=0 // pred_fallthru
    _
  %v15 = vld [vmem:[%s0] sm:$0xf]
  %v16 = vld [vmem:[%s0 + $0x4] sm:$0xf]
  %v17 = vld [vmem:[%s0 + $0x8] sm:$0xf]
  %v18 = vld [vmem:[%s0 + $0xc] sm:$0xf]
  %v19 = vld [vmem:[%s0 + $0x10] sm:$0xf]
  %v20 = vld [vmem:[%s0 + $0x14] sm:$0xf]
  %v21 = vld [vmem:[%s0 + $0x18] sm:$0xf]
  %v22 = vld [vmem:[%s0 + $0x1c] sm:$0xf]
  %v23 = vld [vmem:[%s0 + $0x20] sm:$0xf]
  %v24 = vld [vmem:[%s0 + $0x24] sm:$0xf]
  %v25 = vld [vmem:[%s0 + $0x28] sm:$0xf]
  %v26 = vld [vmem:[%s0 + $0x2c] sm:$0xf]
  %v27 = vld [vmem:[%s0 + $0x30] sm:$0xf]
  %v28 = vld [vmem:[%s0 + $0x34] sm:$0xf]
  %v29 = vld [vmem:[%s0 + $0x38] sm:$0xf]
  %v30 = vld [vmem:[%s0 + $0x3c] sm:$0xf]
  %v31 = vld [vmem:[%s1] sm:$0xf]
  %v32 = vld [vmem:[%s1 + $0x4] sm:$0xf]
  %v33 = vld [vmem:[%s1 + $0x8] sm:$0xf]
  %v34 = vld [vmem:[%s1 + $0xc] sm:$0xf]
  %v35 = vld [vmem:[%s2] sm:$0x1]
  %v37 = vlaneseq
  %v38 = vshrl.u32 %v37, 7
  %v39 = vsub.s32 0, %v38
  %v40 = vrot.slane %v35, %v39
  %v58 = vunpack.c.l.b16 %v15
  %v59 = vunpack.c.l.b16 %v16
  %v60 = vunpack.c.l.b16 %v17
  %v61 = vunpack.c.l.b16 %v18
  %v62 = vunpack.c.l.b16 %v19
  %v63 = vunpack.c.l.b16 %v20
  %v64 = vunpack.c.l.b16 %v21
  %v65 = vunpack.c.l.b16 %v22
  %v66 = vunpack.c.l.b16 %v23
  %v67 = vunpack.c.l.b16 %v24
  %v68 = vunpack.c.l.b16 %v25
  %v69 = vunpack.c.l.b16 %v26
  %v70 = vunpack.c.l.b16 %v27
  %v71 = vunpack.c.l.b16 %v28
  %v72 = vunpack.c.l.b16 %v29
  %v73 = vunpack.c.l.b16 %v30
  %v74 = vpack.c.b16 %v59, %v58
  %v75 = vpack.c.b16 %v61, %v60
  %v76 = vpack.c.b16 %v63, %v62
  %v77 = vpack.c.b16 %v65, %v64
  %v78 = vpack.c.b16 %v67, %v66
  %v79 = vpack.c.b16 %v69, %v68
  %v80 = vpack.c.b16 %v71, %v70
  %v81 = vpack.c.b16 %v73, %v72
  %v86 = vunpack.c.l.b16 %v31
  %v87 = vunpack.c.l.b16 %v32
  %v88 = vunpack.c.l.b16 %v33
  %v89 = vunpack.c.l.b16 %v34
  %v90 = vpack.c.b16 %v87, %v86
  %v91 = vpack.c.b16 %v89, %v88
  %vm94 = vcmask 261120
  %v96 = vsel %vm94, %v74, 0
  %v99 = vsel %vm94, %v75, 0
  %v102 = vsel %vm94, %v76, 0
  %v105 = vsel %vm94, %v77, 0
  %v108 = vsel %vm94, %v78, 0
  %v111 = vsel %vm94, %v79, 0
  %v114 = vsel %vm94, %v80, 0
  %v117 = vsel %vm94, %v81, 0
  %119 = vmatprep.subr.bf16.mxu0 0
  %120 = vmatpush1.bf16.msra.mxu0 0
  %121 = vmatprep.subr.bf16.mxu0 0
  %122 = vmatpush1.bf16.msra.mxu0 0
  %123 = vmatprep.subr.bf16.mxu0 0
  %124 = vmatpush1.bf16.msra.mxu0 0
  %125 = vmatprep.subr.bf16.mxu0 0
  %126 = vmatpush1.bf16.msra.mxu0 0
  %127 = vmatprep.subr.bf16.mxu0 0
  %128 = vmatpush1.bf16.msra.mxu0 0
  %129 = vmatprep.subr.bf16.mxu0 0
  %130 = vmatpush1.bf16.msra.mxu0 0
  %131 = vmatprep.subr.bf16.mxu0 0
  %132 = vmatpush1.bf16.msra.mxu0 %v91
  %133 = vmatprep.subr.bf16.mxu0 0
  %134 = vmatpush1.bf16.msra.mxu0 %v90
  %135 = vmatprep.subr.bf16.mxu0 0
  %136 = vmatpush2.bf16.msra.mxu0 0
  %137 = vmatprep.subr.bf16.mxu0 0
  %138 = vmatpush2.bf16.msra.mxu0 0
  %139 = vmatprep.subr.bf16.mxu0 0
  %140 = vmatpush2.bf16.msra.mxu0 0
  %141 = vmatprep.subr.bf16.mxu0 0
  %142 = vmatpush2.bf16.msra.mxu0 0
  %143 = vmatprep.subr.bf16.mxu0 0
  %144 = vmatpush2.bf16.msra.mxu0 0
  %145 = vmatprep.subr.bf16.mxu0 0
  %146 = vmatpush2.bf16.msra.mxu0 0
  %147 = vmatprep.subr.bf16.mxu0 0
  %148 = vmatpush2.bf16.msra.mxu0 0
  %149 = vmatprep.subr.bf16.mxu0 0
  %150 = vmatpush2.bf16.msra.mxu0 0
  %151 = vmatprep.mubr.bf16.mxu0 0
  %152 = vmatmul.mubr.bf16.gmra.mxu0 %v96
  %v153 = vpop.f32.mrf.mxu0
  %v154 = vadd.f32 %v40, %v153
  %v155 = vpop.f32.mrf.mxu0
  %v156 = vpop.f32.mrf.mxu0
  %v157 = vadd.f32 %v40, %v156
  %v158 = vpop.f32.mrf.mxu0
  %159 = vmatprep.mubr.bf16.mxu0 0
  %160 = vmatmul.mubr.bf16.gmra.mxu0 %v99
  %v161 = vpop.f32.mrf.mxu0
  %v162 = vadd.f32 %v40, %v161
  %v163 = vpop.f32.mrf.mxu0
  %v164 = vpop.f32.mrf.mxu0
  %v165 = vadd.f32 %v40, %v164
  %v166 = vpop.f32.mrf.mxu0
  %167 = vmatprep.mubr.bf16.mxu0 0
  %168 = vmatmul.mubr.bf16.gmra.mxu0 %v102
  %v169 = vpop.f32.mrf.mxu0
  %v170 = vadd.f32 %v40, %v169
  %v171 = vpop.f32.mrf.mxu0
  %v172 = vpop.f32.mrf.mxu0
  %v173 = vadd.f32 %v40, %v172
  %v174 = vpop.f32.mrf.mxu0
  %175 = vmatprep.mubr.bf16.mxu0 0
  %176 = vmatmul.mubr.bf16.gmra.mxu0 %v105
  %v177 = vpop.f32.mrf.mxu0
  %v178 = vadd.f32 %v40, %v177
  %v179 = vpop.f32.mrf.mxu0
  %v180 = vpop.f32.mrf.mxu0
  %v181 = vadd.f32 %v40, %v180
  %v182 = vpop.f32.mrf.mxu0
  %183 = vmatprep.mubr.bf16.mxu0 0
  %184 = vmatmul.mubr.bf16.gmra.mxu0 %v108
  %v185 = vpop.f32.mrf.mxu0
  %v186 = vadd.f32 %v40, %v185
  %v187 = vpop.f32.mrf.mxu0
  %v188 = vpop.f32.mrf.mxu0
  %v189 = vadd.f32 %v40, %v188
  %v190 = vpop.f32.mrf.mxu0
  %191 = vmatprep.mubr.bf16.mxu0 0
  %192 = vmatmul.mubr.bf16.gmra.mxu0 %v111
  %v193 = vpop.f32.mrf.mxu0
  %v194 = vadd.f32 %v40, %v193
  %v195 = vpop.f32.mrf.mxu0
  %v196 = vpop.f32.mrf.mxu0
  %v197 = vadd.f32 %v40, %v196
  %v198 = vpop.f32.mrf.mxu0
  %199 = vmatprep.mubr.bf16.mxu0 0
  %200 = vmatmul.mubr.bf16.gmra.mxu0 %v114
  %v201 = vpop.f32.mrf.mxu0
  %v202 = vadd.f32 %v40, %v201
  %v203 = vpop.f32.mrf.mxu0
  %v204 = vpop.f32.mrf.mxu0
  %v205 = vadd.f32 %v40, %v204
  %v206 = vpop.f32.mrf.mxu0
  %207 = vmatprep.mubr.bf16.mxu0 0
  %208 = vmatmul.mubr.bf16.gmra.mxu0 %v117
  %v209 = vpop.f32.mrf.mxu0
  %v210 = vadd.f32 %v40, %v209
  %v211 = vpop.f32.mrf.mxu0
  %v212 = vpop.f32.mrf.mxu0
  %v213 = vadd.f32 %v40, %v212
  %v214 = vpop.f32.mrf.mxu0
  %215 = vdwg.mxu0
  %vm216 = vcmask 523264
  %217 = vst.msk [vmem:[%s3] sm:$0xff] %vm216, %v154
  %218 = vst.msk [vmem:[%s3 + $0x8] sm:$0xff] %vm216, %v157
  %219 = vst.msk [vmem:[%s3 + $0x10] sm:$0xff] %vm216, %v162
  %220 = vst.msk [vmem:[%s3 + $0x18] sm:$0xff] %vm216, %v165
  %221 = vst.msk [vmem:[%s3 + $0x20] sm:$0xff] %vm216, %v170
  %222 = vst.msk [vmem:[%s3 + $0x28] sm:$0xff] %vm216, %v173
  %223 = vst.msk [vmem:[%s3 + $0x30] sm:$0xff] %vm216, %v178
  %224 = vst.msk [vmem:[%s3 + $0x38] sm:$0xff] %vm216, %v181
  %225 = vst.msk [vmem:[%s3 + $0x40] sm:$0xff] %vm216, %v186
  %226 = vst.msk [vmem:[%s3 + $0x48] sm:$0xff] %vm216, %v189
  %227 = vst.msk [vmem:[%s3 + $0x50] sm:$0xff] %vm216, %v194
  %228 = vst.msk [vmem:[%s3 + $0x58] sm:$0xff] %vm216, %v197
  %229 = vst.msk [vmem:[%s3 + $0x60] sm:$0xff] %vm216, %v202
  %230 = vst.msk [vmem:[%s3 + $0x68] sm:$0xff] %vm216, %v205
  %231 = vst.msk [vmem:[%s3 + $0x70] sm:$0xff] %vm216, %v210
  %232 = vst.msk [vmem:[%s3 + $0x78] sm:$0xff] %vm216, %v213
  // Predicated region
  $region14: #{patchifier_forward.63} parent=0 // pred_check
    _
  $region15: #{patchifier_forward.63} parent=0 // pred_check_branch
    %234 = sbr.rel (0) target = $region17
  $region16: #{patchifier_forward.63} parent=0 // pred_region
    _
  $region17: #{patchifier_forward.63} parent=0 // pred_fallthru
    _
  // Predicated region
  $region18: #{patchifier_forward.63} parent=0 // pred_check
    _
  $region19: #{patchifier_forward.63} parent=0 // pred_check_branch
    %236 = sbr.rel (0) target = $region21
  $region20: #{patchifier_forward.63} parent=0 // pred_region
    _
  $region21: #{patchifier_forward.63} parent=0 // pred_fallthru
    _

// kernel: patchifier_forward.68
$region0: #{patchifier_forward.68}
  #allocation0 [shape = 'u32[]', space=smem, size = 0x4, offset = 0x4, fixed_abs, tag = 'smem constant byte address 0x4 - core index']
  #allocation1 [shape = 'u32[144,128]{1,0:T(1,128)}', space=vmem, size = 0x12000, scoped, tag = 'internal scratch']
  %s0 = inlined_call_operand.vmem [shape: bf16[128,64], index: 0, kind: input, shape index: {}]
  %s1 = inlined_call_operand.vmem [shape: bf16[64,384], index: 1, kind: input, shape index: {}]
  %s2 = inlined_call_operand.vmem [shape: f32[1,384], index: 2, kind: input, shape index: {}]
  %s3 = inlined_call_operand.vmem [shape: f32[128,384], index: 3, kind: output, shape index: {}]
  %s4 = sld [smem:[#allocation0]]
  $region22: #{patchifier_forward.68} parent=0
    _
  %s6 = ssub.s32 1, %s4
  %s7 = scalar_select 0, %s6, %s4
  // Predicated region
  $region2: #{patchifier_forward.68} parent=0 // pred_check
    _
  $region3: #{patchifier_forward.68} parent=0 // pred_check_branch
    %9 = sbr.rel (0) target = $region5
  $region4: #{patchifier_forward.68} parent=0 // pred_region
    _
  $region5: #{patchifier_forward.68} parent=0 // pred_fallthru
    _
  // Predicated region
  $region6: #{patchifier_forward.68} parent=0 // pred_check
    _
  $region7: #{patchifier_forward.68} parent=0 // pred_check_branch
    %11 = sbr.rel (0) target = $region9
  $region8: #{patchifier_forward.68} parent=0 // pred_region
    _
  $region9: #{patchifier_forward.68} parent=0 // pred_fallthru
    _
  // Predicated region
  $region10: #{patchifier_forward.68} parent=0 // pred_check
    _
  $region11: #{patchifier_forward.68} parent=0 // pred_check_branch
    %13 = sbr.rel (0) target = $region13
  $region12: #{patchifier_forward.68} parent=0 // pred_region
    _
  $region13: #{patchifier_forward.68} parent=0 // pred_fallthru
    _
  %v15 = vld [vmem:[%s0] sm:$0xf]
  %v16 = vld [vmem:[%s0 + $0x4] sm:$0xf]
  %v17 = vld [vmem:[%s0 + $0x8] sm:$0xf]
  %v18 = vld [vmem:[%s0 + $0xc] sm:$0xf]
  %v19 = vld [vmem:[%s0 + $0x10] sm:$0xf]
  %v20 = vld [vmem:[%s0 + $0x14] sm:$0xf]
  %v21 = vld [vmem:[%s0 + $0x18] sm:$0xf]
  %v22 = vld [vmem:[%s0 + $0x1c] sm:$0xf]
  %v23 = vld [vmem:[%s0 + $0x20] sm:$0xf]
  %v24 = vld [vmem:[%s0 + $0x24] sm:$0xf]
  %v25 = vld [vmem:[%s0 + $0x28] sm:$0xf]
  %v26 = vld [vmem:[%s0 + $0x2c] sm:$0xf]
  %v27 = vld [vmem:[%s0 + $0x30] sm:$0xf]
  %v28 = vld [vmem:[%s0 + $0x34] sm:$0xf]
  %v29 = vld [vmem:[%s0 + $0x38] sm:$0xf]
  %v30 = vld [vmem:[%s0 + $0x3c] sm:$0xf]
  %v31 = vld [vmem:[%s1] sm:$0xff]
  %v32 = vld [vmem:[%s1 + $0x8] sm:$0xf]
  %v33 = vld [vmem:[%s1 + $0xc] sm:$0xff]
  %v34 = vld [vmem:[%s1 + $0x14] sm:$0xf]
  %v35 = vld [vmem:[%s1 + $0x18] sm:$0xff]
  %v36 = vld [vmem:[%s1 + $0x20] sm:$0xf]
  %v37 = vld [vmem:[%s1 + $0x24] sm:$0xff]
  %v38 = vld [vmem:[%s1 + $0x2c] sm:$0xf]
  %v39 = vld [vmem:[%s1 + $0x30] sm:$0xff]
  %v40 = vld [vmem:[%s1 + $0x38] sm:$0xf]
  %v41 = vld [vmem:[%s1 + $0x3c] sm:$0xff]
  %v42 = vld [vmem:[%s1 + $0x44] sm:$0xf]
  %v43 = vld [vmem:[%s1 + $0x48] sm:$0xff]
  %v44 = vld [vmem:[%s1 + $0x50] sm:$0xf]
  %v45 = vld [vmem:[%s1 + $0x54] sm:$0xff]
  %v46 = vld [vmem:[%s1 + $0x5c] sm:$0xf]
  %v47 = vld [vmem:[%s2] sm:$0x7]
  %v49 = vlaneseq
  %v50 = vshrl.u32 %v49, 7
  %v51 = vsub.s32 0, %v50
  %v52 = vrot.slane %v47, %v51
  %v53 = vlaneseq
  %v54 = vshrl.u32 %v53, 7
  %v55 = vsub.s32 1, %v54
  %v56 = vrot.slane %v47, %v55
  %v57 = vlaneseq
  %v58 = vshrl.u32 %v57, 7
  %v59 = vsub.s32 2, %v58
  %v60 = vrot.slane %v47, %v59
  %v80 = vunpack.c.l.b16 %v15
  %v81 = vunpack.c.l.b16 %v16
  %v82 = vunpack.c.l.b16 %v17
  %v83 = vunpack.c.l.b16 %v18
  %v84 = vunpack.c.l.b16 %v19
  %v85 = vunpack.c.l.b16 %v20
  %v86 = vunpack.c.l.b16 %v21
  %v87 = vunpack.c.l.b16 %v22
  %v88 = vunpack.c.l.b16 %v23
  %v89 = vunpack.c.l.b16 %v24
  %v90 = vunpack.c.l.b16 %v25
  %v91 = vunpack.c.l.b16 %v26
  %v92 = vunpack.c.l.b16 %v27
  %v93 = vunpack.c.l.b16 %v28
  %v94 = vunpack.c.l.b16 %v29
  %v95 = vunpack.c.l.b16 %v30
  %v96 = vpack.c.b16 %v81, %v80
  %v97 = vpack.c.b16 %v83, %v82
  %v98 = vpack.c.b16 %v85, %v84
  %v99 = vpack.c.b16 %v87, %v86
  %v100 = vpack.c.b16 %v89, %v88
  %v101 = vpack.c.b16 %v91, %v90
  %v102 = vpack.c.b16 %v93, %v92
  %v103 = vpack.c.b16 %v95, %v94
  %v120 = vunpack.c.l.b16 %v31
  %v121 = vunpack.c.h.b16 %v31
  %v122 = vunpack.c.l.b16 %v32
  %v123 = vunpack.c.l.b16 %v33
  %v124 = vunpack.c.h.b16 %v33
  %v125 = vunpack.c.l.b16 %v34
  %v126 = vunpack.c.l.b16 %v35
  %v127 = vunpack.c.h.b16 %v35
  %v128 = vunpack.c.l.b16 %v36
  %v129 = vunpack.c.l.b16 %v37
  %v130 = vunpack.c.h.b16 %v37
  %v131 = vunpack.c.l.b16 %v38
  %v132 = vunpack.c.l.b16 %v39
  %v133 = vunpack.c.h.b16 %v39
  %v134 = vunpack.c.l.b16 %v40
  %v135 = vunpack.c.l.b16 %v41
  %v136 = vunpack.c.h.b16 %v41
  %v137 = vunpack.c.l.b16 %v42
  %v138 = vunpack.c.l.b16 %v43
  %v139 = vunpack.c.h.b16 %v43
  %v140 = vunpack.c.l.b16 %v44
  %v141 = vunpack.c.l.b16 %v45
  %v142 = vunpack.c.h.b16 %v45
  %v143 = vunpack.c.l.b16 %v46
  %v144 = vpack.c.b16 %v123, %v120
  %v145 = vpack.c.b16 %v124, %v121
  %v146 = vpack.c.b16 %v125, %v122
  %v147 = vpack.c.b16 %v129, %v126
  %v148 = vpack.c.b16 %v130, %v127
  %v149 = vpack.c.b16 %v131, %v128
  %v150 = vpack.c.b16 %v135, %v132
  %v151 = vpack.c.b16 %v136, %v133
  %v152 = vpack.c.b16 %v137, %v134
  %v153 = vpack.c.b16 %v141, %v138
  %v154 = vpack.c.b16 %v142, %v139
  %v155 = vpack.c.b16 %v143, %v140
  %vm168 = vcmask 523264
  %v170 = vsel %vm168, %v96, 0
  %v173 = vsel %vm168, %v97, 0
  %v176 = vsel %vm168, %v98, 0
  %v179 = vsel %vm168, %v99, 0
  %v182 = vsel %vm168, %v100, 0
  %v185 = vsel %vm168, %v101, 0
  %v188 = vsel %vm168, %v102, 0
  %v191 = vsel %vm168, %v103, 0
  %193 = vmatprep.subr.bf16.mxu0 0
  %194 = vmatpush1.bf16.msra.mxu0 0
  %195 = vmatprep.subr.bf16.mxu0 0
  %196 = vmatpush1.bf16.msra.mxu0 0
  %197 = vmatprep.subr.bf16.mxu0 0
  %198 = vmatpush1.bf16.msra.mxu0 0
  %199 = vmatprep.subr.bf16.mxu0 0
  %200 = vmatpush1.bf16.msra.mxu0 0
  %201 = vmatprep.subr.bf16.mxu0 %v154
  %202 = vmatpush1.bf16.msra.mxu0 %v153
  %203 = vmatprep.subr.bf16.mxu0 %v151
  %204 = vmatpush1.bf16.msra.mxu0 %v150
  %205 = vmatprep.subr.bf16.mxu0 %v148
  %206 = vmatpush1.bf16.msra.mxu0 %v147
  %207 = vmatprep.subr.bf16.mxu0 %v145
  %208 = vmatpush1.bf16.msra.mxu0 %v144
  %209 = vmatprep.subr.bf16.mxu0 0
  %210 = vmatpush2.bf16.msra.mxu0 0
  %211 = vmatprep.subr.bf16.mxu0 0
  %212 = vmatpush2.bf16.msra.mxu0 0
  %213 = vmatprep.subr.bf16.mxu0 0
  %214 = vmatpush2.bf16.msra.mxu0 0
  %215 = vmatprep.subr.bf16.mxu0 0
  %216 = vmatpush2.bf16.msra.mxu0 0
  %217 = vmatprep.subr.bf16.mxu0 0
  %218 = vmatpush2.bf16.msra.mxu0 0
  %219 = vmatprep.subr.bf16.mxu0 0
  %220 = vmatpush2.bf16.msra.mxu0 0
  %221 = vmatprep.subr.bf16.mxu0 0
  %222 = vmatpush2.bf16.msra.mxu0 0
  %223 = vmatprep.subr.bf16.mxu0 0
  %224 = vmatpush2.bf16.msra.mxu0 0
  %225 = vmatprep.mubr.bf16.mxu0 0
  %226 = vmatmul.mubr.bf16.gmra.mxu0 %v170
  %v227 = vpop.f32.mrf.mxu0
  %v228 = vadd.f32 %v52, %v227
  %v229 = vpop.f32.mrf.mxu0
  %v230 = vadd.f32 %v56, %v229
  %v231 = vpop.f32.mrf.mxu0
  %v232 = vadd.f32 %v52, %v231
  %v233 = vpop.f32.mrf.mxu0
  %v234 = vadd.f32 %v56, %v233
  %235 = vmatprep.mubr.bf16.mxu0 0
  %236 = vmatmul.mubr.bf16.gmra.mxu0 %v173
  %v237 = vpop.f32.mrf.mxu0
  %v238 = vadd.f32 %v52, %v237
  %v239 = vpop.f32.mrf.mxu0
  %v240 = vadd.f32 %v56, %v239
  %v241 = vpop.f32.mrf.mxu0
  %v242 = vadd.f32 %v52, %v241
  %v243 = vpop.f32.mrf.mxu0
  %v244 = vadd.f32 %v56, %v243
  %245 = vmatprep.mubr.bf16.mxu0 0
  %246 = vmatmul.mubr.bf16.gmra.mxu0 %v176
  %v247 = vpop.f32.mrf.mxu0
  %v248 = vadd.f32 %v52, %v247
  %v249 = vpop.f32.mrf.mxu0
  %v250 = vadd.f32 %v56, %v249
  %v251 = vpop.f32.mrf.mxu0
  %v252 = vadd.f32 %v52, %v251
  %v253 = vpop.f32.mrf.mxu0
  %v254 = vadd.f32 %v56, %v253
  %255 = vmatprep.mubr.bf16.mxu0 0
  %256 = vmatmul.mubr.bf16.gmra.mxu0 %v179
  %v257 = vpop.f32.mrf.mxu0
  %v258 = vadd.f32 %v52, %v257
  %v259 = vpop.f32.mrf.mxu0
  %v260 = vadd.f32 %v56, %v259
  %v261 = vpop.f32.mrf.mxu0
  %v262 = vadd.f32 %v52, %v261
  %v263 = vpop.f32.mrf.mxu0
  %v264 = vadd.f32 %v56, %v263
  %265 = vmatprep.mubr.bf16.mxu0 0
  %266 = vmatmul.mubr.bf16.gmra.mxu0 %v182
  %v267 = vpop.f32.mrf.mxu0
  %v268 = vadd.f32 %v52, %v267
  %v269 = vpop.f32.mrf.mxu0
  %v270 = vadd.f32 %v56, %v269
  %v271 = vpop.f32.mrf.mxu0
  %v272 = vadd.f32 %v52, %v271
  %v273 = vpop.f32.mrf.mxu0
  %v274 = vadd.f32 %v56, %v273
  %275 = vmatprep.mubr.bf16.mxu0 0
  %276 = vmatmul.mubr.bf16.gmra.mxu0 %v185
  %v277 = vpop.f32.mrf.mxu0
  %v278 = vadd.f32 %v52, %v277
  %v279 = vpop.f32.mrf.mxu0
  %v280 = vadd.f32 %v56, %v279
  %v281 = vpop.f32.mrf.mxu0
  %v282 = vadd.f32 %v52, %v281
  %v283 = vpop.f32.mrf.mxu0
  %v284 = vadd.f32 %v56, %v283
  %285 = vmatprep.mubr.bf16.mxu0 0
  %286 = vmatmul.mubr.bf16.gmra.mxu0 %v188
  %v287 = vpop.f32.mrf.mxu0
  %v288 = vadd.f32 %v52, %v287
  %v289 = vpop.f32.mrf.mxu0
  %v290 = vadd.f32 %v56, %v289
  %v291 = vpop.f32.mrf.mxu0
  %v292 = vadd.f32 %v52, %v291
  %v293 = vpop.f32.mrf.mxu0
  %v294 = vadd.f32 %v56, %v293
  %295 = vmatprep.mubr.bf16.mxu0 0
  %296 = vmatmul.mubr.bf16.gmra.mxu0 %v191
  %v297 = vpop.f32.mrf.mxu0
  %v298 = vadd.f32 %v52, %v297
  %v299 = vpop.f32.mrf.mxu0
  %v300 = vadd.f32 %v56, %v299
  %v301 = vpop.f32.mrf.mxu0
  %v302 = vadd.f32 %v52, %v301
  %v303 = vpop.f32.mrf.mxu0
  %v304 = vadd.f32 %v56, %v303
  %305 = vdwg.mxu0
  %306 = vmatprep.subr.bf16.mxu0 0
  %307 = vmatpush1.bf16.msra.mxu0 0
  %308 = vmatprep.subr.bf16.mxu0 0
  %309 = vmatpush1.bf16.msra.mxu0 0
  %310 = vmatprep.subr.bf16.mxu0 0
  %311 = vmatpush1.bf16.msra.mxu0 0
  %312 = vmatprep.subr.bf16.mxu0 0
  %313 = vmatpush1.bf16.msra.mxu0 0
  %314 = vmatprep.subr.bf16.mxu0 0
  %315 = vmatpush1.bf16.msra.mxu0 %v155
  %316 = vmatprep.subr.bf16.mxu0 0
  %317 = vmatpush1.bf16.msra.mxu0 %v152
  %318 = vmatprep.subr.bf16.mxu0 0
  %319 = vmatpush1.bf16.msra.mxu0 %v149
  %320 = vmatprep.subr.bf16.mxu0 0
  %321 = vmatpush1.bf16.msra.mxu0 %v146
  %322 = vmatprep.subr.bf16.mxu0 0
  %323 = vmatpush2.bf16.msra.mxu0 0
  %324 = vmatprep.subr.bf16.mxu0 0
  %325 = vmatpush2.bf16.msra.mxu0 0
  %326 = vmatprep.subr.bf16.mxu0 0
  %327 = vmatpush2.bf16.msra.mxu0 0
  %328 = vmatprep.subr.bf16.mxu0 0
  %329 = vmatpush2.bf16.msra.mxu0 0
  %330 = vmatprep.subr.bf16.mxu0 0
  %331 = vmatpush2.bf16.msra.mxu0 0
  %332 = vmatprep.subr.bf16.mxu0 0
  %333 = vmatpush2.bf16.msra.mxu0 0
  %334 = vmatprep.subr.bf16.mxu0 0
  %335 = vmatpush2.bf16.msra.mxu0 0
  %336 = vmatprep.subr.bf16.mxu0 0
  %337 = vmatpush2.bf16.msra.mxu0 0
  %338 = vmatprep.mubr.bf16.mxu0 0
  %339 = vmatmul.mubr.bf16.gmra.mxu0 %v170
  %v340 = vpop.f32.mrf.mxu0
  %v341 = vadd.f32 %v60, %v340
  %v342 = vpop.f32.mrf.mxu0
  %v343 = vpop.f32.mrf.mxu0
  %v344 = vadd.f32 %v60, %v343
  %v345 = vpop.f32.mrf.mxu0
  %346 = vmatprep.mubr.bf16.mxu0 0
  %347 = vmatmul.mubr.bf16.gmra.mxu0 %v173
  %v348 = vpop.f32.mrf.mxu0
  %v349 = vadd.f32 %v60, %v348
  %v350 = vpop.f32.mrf.mxu0
  %v351 = vpop.f32.mrf.mxu0
  %v352 = vadd.f32 %v60, %v351
  %v353 = vpop.f32.mrf.mxu0
  %354 = vmatprep.mubr.bf16.mxu0 0
  %355 = vmatmul.mubr.bf16.gmra.mxu0 %v176
  %v356 = vpop.f32.mrf.mxu0
  %v357 = vadd.f32 %v60, %v356
  %v358 = vpop.f32.mrf.mxu0
  %v359 = vpop.f32.mrf.mxu0
  %v360 = vadd.f32 %v60, %v359
  %v361 = vpop.f32.mrf.mxu0
  %362 = vmatprep.mubr.bf16.mxu0 0
  %363 = vmatmul.mubr.bf16.gmra.mxu0 %v179
  %v364 = vpop.f32.mrf.mxu0
  %v365 = vadd.f32 %v60, %v364
  %v366 = vpop.f32.mrf.mxu0
  %v367 = vpop.f32.mrf.mxu0
  %v368 = vadd.f32 %v60, %v367
  %v369 = vpop.f32.mrf.mxu0
  %370 = vmatprep.mubr.bf16.mxu0 0
  %371 = vmatmul.mubr.bf16.gmra.mxu0 %v182
  %v372 = vpop.f32.mrf.mxu0
  %v373 = vadd.f32 %v60, %v372
  %v374 = vpop.f32.mrf.mxu0
  %v375 = vpop.f32.mrf.mxu0
  %v376 = vadd.f32 %v60, %v375
  %v377 = vpop.f32.mrf.mxu0
  %378 = vmatprep.mubr.bf16.mxu0 0
  %379 = vmatmul.mubr.bf16.gmra.mxu0 %v185
  %v380 = vpop.f32.mrf.mxu0
  %v381 = vadd.f32 %v60, %v380
  %v382 = vpop.f32.mrf.mxu0
  %v383 = vpop.f32.mrf.mxu0
  %v384 = vadd.f32 %v60, %v383
  %v385 = vpop.f32.mrf.mxu0
  %386 = vmatprep.mubr.bf16.mxu0 0
  %387 = vmatmul.mubr.bf16.gmra.mxu0 %v188
  %v388 = vpop.f32.mrf.mxu0
  %v389 = vadd.f32 %v60, %v388
  %v390 = vpop.f32.mrf.mxu0
  %v391 = vpop.f32.mrf.mxu0
  %v392 = vadd.f32 %v60, %v391
  %v393 = vpop.f32.mrf.mxu0
  %394 = vmatprep.mubr.bf16.mxu0 0
  %395 = vmatmul.mubr.bf16.gmra.mxu0 %v191
  %v396 = vpop.f32.mrf.mxu0
  %v397 = vadd.f32 %v60, %v396
  %v398 = vpop.f32.mrf.mxu0
  %v399 = vpop.f32.mrf.mxu0
  %v400 = vadd.f32 %v60, %v399
  %v401 = vpop.f32.mrf.mxu0
  %402 = vdwg.mxu0
  %v403 = vmul.f32 %v228, 0.25
  %v404 = vmul.f32 %v230, 0.25
  %v405 = vmul.f32 %v341, 0.25
  %v406 = vmul.f32 %v232, 0.25
  %v407 = vmul.f32 %v234, 0.25
  %v408 = vmul.f32 %v344, 0.25
  %v409 = vmul.f32 %v238, 0.25
  %v410 = vmul.f32 %v240, 0.25
  %v411 = vmul.f32 %v349, 0.25
  %v412 = vmul.f32 %v242, 0.25
  %v413 = vmul.f32 %v244, 0.25
  %v414 = vmul.f32 %v352, 0.25
  %v415 = vmul.f32 %v248, 0.25
  %v416 = vmul.f32 %v250, 0.25
  %v417 = vmul.f32 %v357, 0.25
  %v418 = vmul.f32 %v252, 0.25
  %v419 = vmul.f32 %v254, 0.25
  %v420 = vmul.f32 %v360, 0.25
  %v421 = vmul.f32 %v258, 0.25
  %v422 = vmul.f32 %v260, 0.25
  %v423 = vmul.f32 %v365, 0.25
  %v424 = vmul.f32 %v262, 0.25
  %v425 = vmul.f32 %v264, 0.25
  %v426 = vmul.f32 %v368, 0.25
  %v427 = vmul.f32 %v268, 0.25
  %v428 = vmul.f32 %v270, 0.25
  %v429 = vmul.f32 %v373, 0.25
  %v430 = vmul.f32 %v272, 0.25
  %v431 = vmul.f32 %v274, 0.25
  %v432 = vmul.f32 %v376, 0.25
  %v433 = vmul.f32 %v278, 0.25
  %v434 = vmul.f32 %v280, 0.25
  %v435 = vmul.f32 %v381, 0.25
  %v436 = vmul.f32 %v282, 0.25
  %v437 = vmul.f32 %v284, 0.25
  %v438 = vmul.f32 %v384, 0.25
  %v439 = vmul.f32 %v288, 0.25
  %v440 = vmul.f32 %v290, 0.25
  %v441 = vmul.f32 %v389, 0.25
  %v442 = vmul.f32 %v292, 0.25
  %v443 = vmul.f32 %v294, 0.25
  %v444 = vmul.f32 %v392, 0.25
  %v445 = vmul.f32 %v298, 0.25
  %v446 = vmul.f32 %v300, 0.25
  %v447 = vmul.f32 %v397, 0.25
  %v448 = vmul.f32 %v302, 0.25
  %v449 = vmul.f32 %v304, 0.25
  %v450 = vmul.f32 %v400, 0.25
  %451 = vst [vmem:[%s3] sm:$0xff] %v403
  %452 = vst [vmem:[%s3 + $0x8] sm:$0xff] %v404
  %453 = vst [vmem:[%s3 + $0x10] sm:$0xff] %v405
  %454 = vst [vmem:[%s3 + $0x18] sm:$0xff] %v406
  %455 = vst [vmem:[%s3 + $0x20] sm:$0xff] %v407
  %456 = vst [vmem:[%s3 + $0x28] sm:$0xff] %v408
  %457 = vst [vmem:[%s3 + $0x30] sm:$0xff] %v409
  %458 = vst [vmem:[%s3 + $0x38] sm:$0xff] %v410
  %459 = vst [vmem:[%s3 + $0x40] sm:$0xff] %v411
  %460 = vst [vmem:[%s3 + $0x48] sm:$0xff] %v412
  %461 = vst [vmem:[%s3 + $0x50] sm:$0xff] %v413
  %462 = vst [vmem:[%s3 + $0x58] sm:$0xff] %v414
  %463 = vst [vmem:[%s3 + $0x60] sm:$0xff] %v415
  %464 = vst [vmem:[%s3 + $0x68] sm:$0xff] %v416
  %465 = vst [vmem:[%s3 + $0x70] sm:$0xff] %v417
  %466 = vst [vmem:[%s3 + $0x78] sm:$0xff] %v418
  %467 = vst [vmem:[%s3 + $0x80] sm:$0xff] %v419
  %468 = vst [vmem:[%s3 + $0x88] sm:$0xff] %v420
  %469 = vst [vmem:[%s3 + $0x90] sm:$0xff] %v421
  %470 = vst [vmem:[%s3 + $0x98] sm:$0xff] %v422
  %471 = vst [vmem:[%s3 + $0xa0] sm:$0xff] %v423
  %472 = vst [vmem:[%s3 + $0xa8] sm:$0xff] %v424
  %473 = vst [vmem:[%s3 + $0xb0] sm:$0xff] %v425
  %474 = vst [vmem:[%s3 + $0xb8] sm:$0xff] %v426
  %475 = vst [vmem:[%s3 + $0xc0] sm:$0xff] %v427
  %476 = vst [vmem:[%s3 + $0xc8] sm:$0xff] %v428
  %477 = vst [vmem:[%s3 + $0xd0] sm:$0xff] %v429
  %478 = vst [vmem:[%s3 + $0xd8] sm:$0xff] %v430
  %479 = vst [vmem:[%s3 + $0xe0] sm:$0xff] %v431
  %480 = vst [vmem:[%s3 + $0xe8] sm:$0xff] %v432
  %481 = vst [vmem:[%s3 + $0xf0] sm:$0xff] %v433
  %482 = vst [vmem:[%s3 + $0xf8] sm:$0xff] %v434
  %483 = vst [vmem:[%s3 + $0x100] sm:$0xff] %v435
  %484 = vst [vmem:[%s3 + $0x108] sm:$0xff] %v436
  %485 = vst [vmem:[%s3 + $0x110] sm:$0xff] %v437
  %486 = vst [vmem:[%s3 + $0x118] sm:$0xff] %v438
  %487 = vst [vmem:[%s3 + $0x120] sm:$0xff] %v439
  %488 = vst [vmem:[%s3 + $0x128] sm:$0xff] %v440
  %489 = vst [vmem:[%s3 + $0x130] sm:$0xff] %v441
  %490 = vst [vmem:[%s3 + $0x138] sm:$0xff] %v442
  %491 = vst [vmem:[%s3 + $0x140] sm:$0xff] %v443
  %492 = vst [vmem:[%s3 + $0x148] sm:$0xff] %v444
  %493 = vst [vmem:[%s3 + $0x150] sm:$0xff] %v445
  %494 = vst [vmem:[%s3 + $0x158] sm:$0xff] %v446
  %495 = vst [vmem:[%s3 + $0x160] sm:$0xff] %v447
  %496 = vst [vmem:[%s3 + $0x168] sm:$0xff] %v448
  %497 = vst [vmem:[%s3 + $0x170] sm:$0xff] %v449
  %498 = vst [vmem:[%s3 + $0x178] sm:$0xff] %v450
  // Predicated region
  $region14: #{patchifier_forward.68} parent=0 // pred_check
    _
  $region15: #{patchifier_forward.68} parent=0 // pred_check_branch
    %500 = sbr.rel (0) target = $region17
  $region16: #{patchifier_forward.68} parent=0 // pred_region
    _
  $region17: #{patchifier_forward.68} parent=0 // pred_fallthru
    _
  // Predicated region
  $region18: #{patchifier_forward.68} parent=0 // pred_check
    _
  $region19: #{patchifier_forward.68} parent=0 // pred_check_branch
    %502 = sbr.rel (0) target = $region21
  $region20: #{patchifier_forward.68} parent=0 // pred_region
    _
  $region21: #{patchifier_forward.68} parent=0 // pred_fallthru
    _

// kernel: patchifier_forward.69
$region0: #{patchifier_forward.69}
  #allocation0 [shape = 'u32[]', space=smem, size = 0x4, offset = 0x4, fixed_abs, tag = 'smem constant byte address 0x4 - core index']
  #allocation1 [shape = 'u32[144,128]{1,0:T(1,128)}', space=vmem, size = 0x12000, scoped, tag = 'internal scratch']
  #allocation2 [shape = 'f32[1,1,1,384]{3,2,1,0:T(1,128)}', space=vmem, size = 0x600, scoped, tag = 'scratch operand']
  #allocation3 [shape = 's32[1]{0}', space=sflag, size = 0x4, scoped, tag = 'scratch operand']
  #allocation4 [shape = 's32[1]{0}', space=sflag, size = 0x4, scoped, tag = 'scoped memory for patchifier_forward.69']
  #allocation5 [shape = 'u8[8192]{0}', space=smem, size = 0x2000, scoped, tag = 'prefetched SMEM operand 0']
  #allocation8 [shape = 's32[]', space=sflag, size = 0x4, offset = 0, fixed_abs, tag = 'sflag constant byte address 0x0 - dummy sync flag']
  %s0 = inlined_call_operand.vmem [shape: s32[16,3], index: 0, kind: input, shape index: {}]
  %s1 = inlined_call_operand.vmem [shape: f32[2,8,8,384], index: 1, kind: input, shape index: {}]
  %s2 = inlined_call_operand.hbm [shape: f32[16,1,1,384], index: 2, kind: output, shape index: {}]
  %s3 = sld [smem:[#allocation0]]
  $region55: #{patchifier_forward.69} parent=0
    _
  %s5 = ssub.s32 1, %s3
  %s6 = scalar_select 0, %s5, %s3
  %s7 = sshll.u32 %s0, 4
  %s8 = int_to_ptr.vmem [resolvable:$true] %s7
  %10 = dma.vmem_to_smem %s8, 256, [#allocation5], [#allocation4]
  %11 = dma.done [#allocation4], 256
  %12 = sfence
  $region1: #{patchifier_forward.69} parent=0
    #allocation6 [shape = 'u8[3072]{0}', space=vmem, size = 0xc00, scoped, tag = 'output window, operand 0']
    #allocation7 [shape = 's32[2]{0}', space=sflag, size = 0x8, scoped, tag = 'scoped memory for patchifier_forward.69']
    %13 = vsyncpa [#allocation7], 0
    %s14 = scalar_lea.sflag [#allocation7], 1
    %15 = vsyncpa %s14, 0
    loop: start=0, step=1, limit=17
    $region2: #{patchifier_forward.69} parent=1 // loop_pre_header
      _
    $region3: #{patchifier_forward.69} parent=1 // loop_header
      %s17 = sphi 0, %s21
      %p18 = scmp.ge.s32.totalorder %s17, 17
      %s26 = sphi 0, %s28
      %s29 = sphi 0, %s26
      %s39 = sphi 0, %s29
    $region4: #{patchifier_forward.69} parent=1 // loop_header_branch
      %20 = sbr.rel (%p18) target = $region8
    $region5: #{patchifier_forward.69} parent=1 // loop_body
      %s22 = ssub.s32 %s17, 1
      %s23 = sadd.s32 %s17, 1
      %s24 = ssub.s32 %s17, %s23
      %p25 = scmp.eq.s32.totalorder %s24, 0
      %s27 = sadd.s32 %s26, 1
      %s28 = scalar_select %p25, %s26, %s27
      %p30 = pneg %p25
      %p31 = scmp.eq.s32.totalorder %s17, 15
      %p32 = por %p30, %p31
      %p33 = scmp.ne.s32.totalorder %s26, %s29
      %p34 = scmp.eq.s32.totalorder %s17, 0
      %p35 = por %p33, %p34
      %p36 = scmp.ne.s32.totalorder %s26, %s29
      %p37 = scmp.eq.s32.totalorder %s22, 15
      %p38 = por %p36, %p37
      %p40 = scmp.ne.s32.totalorder %s29, %s39
      %p41 = scmp.eq.s32.totalorder %s22, 0
      %p42 = por %p40, %p41
      %p43 = scmp.lt.s32.totalorder %s17, 16
      // Predicated region
      $region9: #{patchifier_forward.69} parent=5 // pred_check
        %p44 = pneg %p43
      $region10: #{patchifier_forward.69} parent=5 // pred_check_branch
        %46 = sbr.rel (%p44) target = $region12
      $region11: #{patchifier_forward.69} parent=5 // pred_region
        %p47 = pneg %p35
        %p48 = pneg %p32
        %s49 = sand.u32 %s26, 1
        %s50 = scalar_lea.sflag [#allocation7], %s49
        %s51 = sand.u32 %s26, 1
        %s52 = smul.addr %s51, 3
        %s53 = scalar_lea.vmem [#allocation6], %s52
        %s54 = smul.u32 %s17, 128
        %s55 = sld [smem:[#allocation5 + %s54]]
        %s56 = sadd.s32 %s54, 1
        %s57 = sld [smem:[#allocation5 + %s56]]
        %s58 = sadd.s32 %s54, 2
        %s59 = sld [smem:[#allocation5 + %s58]]
        %s60 = sshrl.u32 %s57, 3
        %s61 = sand.u32 %s57, 7
        %s62 = smul.u32 %s60, 24
        %s63 = sadd.s32 %s61, %s62
        %s64 = smul.u32 %s59, 24
        %s65 = sadd.s32 %s63, %s64
        %s66 = smul.u32 %s55, 192
        %s67 = sadd.s32 %s65, %s66
        %s68 = scalar_lea.vmem %s1, %s67
        %p70 = scmp.lt.u32.totalorder 1, 8
        %p71 = pneg %p70
        // Predicated region
        $region13: #{patchifier_forward.69} parent=11 // pred_check
          _
        $region14: #{patchifier_forward.69} parent=11 // pred_check_branch
          %73 = sbr.rel (%p70) target = $region16
        $region15: #{patchifier_forward.69} parent=11 // pred_region
          %s93 = sand.u32 1, 7
          %p94 = scmp.eq.s32.totalorder %s93, 0
          %p95 = pneg %p94
          // Predicated region
          $region28: #{patchifier_forward.69} parent=15 // pred_check
            _
          $region29: #{patchifier_forward.69} parent=15 // pred_check_branch
            %97 = sbr.rel (%p94) target = $region31
          $region30: #{patchifier_forward.69} parent=15 // pred_region
            %s98 = sand.u32 1, 7
            %s99 = ssub.s32 1, %s98
            %s100 = scalar_lea.vmem %s68, %s99
            %s101 = ssub.s32 1, %s98
            %s102 = scalar_lea.vmem [#allocation2], %s101
            %s103 = sshll.u32 1, %s98
            %s104 = ssub.s32 %s103, 1
            loop: start=0, step=1, limit=1
            $region32: #{patchifier_forward.69} parent=30 // loop_pre_header
              _
            $region33: #{patchifier_forward.69} parent=30 // loop_header
              %s106 = sphi 0, %s110
              %p107 = scmp.ge.s32.totalorder %s106, 1
              %s111 = sphi %s100, %s100
              %s112 = sphi %s102, %s102
            $region34: #{patchifier_forward.69} parent=30 // loop_header_branch
              %109 = sbr.rel (%p107) target = $region38
            $region35: #{patchifier_forward.69} parent=30 // loop_body
              %v113 = vld [vmem:[%s111] sm:%s104]
              %114 = vst [vmem:[%s112] sm:%s104] %v113
              %v115 = vld [vmem:[%s111 + $0x8] sm:%s104]
              %116 = vst [vmem:[%s112 + $0x1] sm:%s104] %v115
              %v117 = vld [vmem:[%s111 + $0x10] sm:%s104]
              %118 = vst [vmem:[%s112 + $0x2] sm:%s104] %v117
            $region36: #{patchifier_forward.69} parent=30 // loop_footer
              %s110 = sadd.s32 1, %s106
            $region37: #{patchifier_forward.69} parent=30 // loop_footer_branch
              %105 = sbr.rel target = $region33
            $region38: #{patchifier_forward.69} parent=30 // loop_exit
              _
          $region31: #{patchifier_forward.69} parent=15 // pred_fallthru
            _
        $region16: #{patchifier_forward.69} parent=11 // pred_fallthru
          _
        // Predicated region
        $region17: #{patchifier_forward.69} parent=11 // pred_check
          %p74 = pneg %p70
        $region18: #{patchifier_forward.69} parent=11 // pred_check_branch
          %76 = sbr.rel (%p74) target = $region20
        $region19: #{patchifier_forward.69} parent=11 // pred_region
          %s77 = sshll.u32 1, 1
          %s78 = ssub.s32 %s77, 1
          loop: start=0, step=1, limit=1
          $region21: #{patchifier_forward.69} parent=19 // loop_pre_header
            _
          $region22: #{patchifier_forward.69} parent=19 // loop_header
            %s80 = sphi 0, %s84
            %p81 = scmp.ge.s32.totalorder %s80, 1
            %s85 = sphi %s68, %s68
            %s86 = sphi [#allocation2], [#allocation2]
          $region23: #{patchifier_forward.69} parent=19 // loop_header_branch
            %83 = sbr.rel (%p81) target = $region27
          $region24: #{patchifier_forward.69} parent=19 // loop_body
            %v87 = vld [vmem:[%s85] sm:%s78]
            %88 = vst [vmem:[%s86] sm:%s78] %v87
            %v89 = vld [vmem:[%s85 + $0x8] sm:%s78]
            %90 = vst [vmem:[%s86 + $0x1] sm:%s78] %v89
            %v91 = vld [vmem:[%s85 + $0x10] sm:%s78]
            %92 = vst [vmem:[%s86 + $0x2] sm:%s78] %v91
          $region25: #{patchifier_forward.69} parent=19 // loop_footer
            %s84 = sadd.s32 1, %s80
          $region26: #{patchifier_forward.69} parent=19 // loop_footer_branch
            %79 = sbr.rel target = $region22
          $region27: #{patchifier_forward.69} parent=19 // loop_exit
            _
        $region20: #{patchifier_forward.69} parent=11 // pred_fallthru
          _
        // Predicated region
        $region39: #{patchifier_forward.69} parent=11 // pred_check
          _
        $region40: #{patchifier_forward.69} parent=11 // pred_check_branch
          %121 = sbr.rel (0) target = $region42
        $region41: #{patchifier_forward.69} parent=11 // pred_region
          %122 = vsyncadd [#allocation3], 48
        $region42: #{patchifier_forward.69} parent=11 // pred_fallthru
          _
        %s123 = smul.u32 1, 1
        %s124 = smul.u32 %s123, 1
        %s125 = smul.u32 %s124, 3
        %s126 = sshll.u32 %s125, 4
        %127 = dma.done [#allocation3], %s126
        %v128 = vld [vmem:[#allocation2] sm:$0x7]
        %v129 = vlaneseq
        %vm130 = vcmp.ge.s32.totalorder %v129, 0
        %vm131 = vcmp.lt.s32.totalorder %v129, 384
        %vm132 = vmand %vm130, %vm131
        %133 = vst.msk [vmem:[%s53] sm:$0x7] %vm132, %v128
        %s134 = sand.u32 %s26, 1
        %s135 = scalar_lea.sflag [#allocation7], %s134
        %s136 = sand.u32 %s26, 1
        %s137 = smul.addr %s136, 3
        %s138 = scalar_lea.vmem [#allocation6], %s137
        // Predicated region
        $region43: #{patchifier_forward.69} parent=11 // pred_check
          %p139 = pneg %p32
        $region44: #{patchifier_forward.69} parent=11 // pred_check_branch
          %141 = sbr.rel (%p139) target = $region46
        $region45: #{patchifier_forward.69} parent=11 // pred_region
          %s143 = ssub.s32 48, 48
          %144 = vsyncadd %s135, %s143
          %s145 = smul.addr %s17, 3
          %s146 = smul.addr %s145, 16
          %s147 = scalar_lea.hbm %s2, %s146
          %s149 = sshll.u32 %s138, 4
          %s150 = int_to_ptr.vmem [resolvable:$true] %s149
          %152 = dma.vmem_to_hbm [thread:$0]  %s150, 48, %s147, %s135
        $region46: #{patchifier_forward.69} parent=11 // pred_fallthru
          _
      $region12: #{patchifier_forward.69} parent=5 // pred_fallthru
        _
      %p153 = scmp.le.s32.totalorder 1, %s17
      // Predicated region
      $region47: #{patchifier_forward.69} parent=5 // pred_check
        %p154 = pneg %p153
      $region48: #{patchifier_forward.69} parent=5 // pred_check_branch
        %156 = sbr.rel (%p154) target = $region50
      $region49: #{patchifier_forward.69} parent=5 // pred_region
        %s157 = ssub.s32 %s17, 1
        // Predicated region
        $region51: #{patchifier_forward.69} parent=49 // pred_check
          %p158 = pneg %p38
        $region52: #{patchifier_forward.69} parent=49 // pred_check_branch
          %160 = sbr.rel (%p158) target = $region54
        $region53: #{patchifier_forward.69} parent=49 // pred_region
          %s161 = sand.u32 %s29, 1
          %s162 = scalar_lea.sflag [#allocation7], %s161
          %s163 = sand.u32 %s29, 1
          %s164 = smul.addr %s163, 3
          %s165 = scalar_lea.vmem [#allocation6], %s164
          %166 = dma.done %s162, 48
        $region54: #{patchifier_forward.69} parent=49 // pred_fallthru
          _
      $region50: #{patchifier_forward.69} parent=5 // pred_fallthru
        _
    $region6: #{patchifier_forward.69} parent=1 // loop_footer
      %s21 = sadd.s32 1, %s17
    $region7: #{patchifier_forward.69} parent=1 // loop_footer_branch
      %16 = sbr.rel target = $region3
    $region8: #{patchifier_forward.69} parent=1 // loop_exit
      _
    %167 = vsyncpa [#allocation7], 1
    %s168 = scalar_lea.sflag [#allocation7], 1
    %169 = vsyncpa %s168, 1
  %170 = vsyncmov [#allocation3]
  %s171 = vpop.sfrf %170
  %p172 = scmp.eq.s32.totalorder %s171, 0
  %p173 = pneg %p172
  %175 = shalt.err (%p173)

// kernel: patchifier_forward.37
$region0: #{patchifier_forward.37}
  #allocation0 [shape = 'u32[]', space=smem, size = 0x4, offset = 0x4, fixed_abs, tag = 'smem constant byte address 0x4 - core index']
  #allocation1 [shape = 'u32[144,128]{1,0:T(1,128)}', space=vmem, size = 0x12000, scoped, tag = 'internal scratch']
  %s0 = inlined_call_operand.vmem [shape: f32[2,256,32], index: 0, kind: input, shape index: {}]
  %s1 = inlined_call_operand.vmem [shape: f32[2,256,32], index: 1, kind: output, shape index: {}]
  %s2 = sld [smem:[#allocation0]]
  $region37: #{patchifier_forward.37} parent=0
    _
  %s4 = ssub.s32 1, %s2
  %s5 = scalar_select 0, %s4, %s2
  loop: start=0, step=1, limit=4
  $region2: #{patchifier_forward.37} parent=0 // loop_pre_header
    _
  $region3: #{patchifier_forward.37} parent=0 // loop_header
    %s7 = sphi 0, %s11
    %p8 = scmp.ge.s32.totalorder %s7, 4
    %s17 = sphi 0, %s19
    %s20 = sphi 0, %s17
    %s21 = sphi 0, %s20
    %s37 = sphi 0, %s21
    %s43 = sphi 0, %s45
    %s46 = sphi 0, %s43
    %s47 = sphi 0, %s46
    %s63 = sphi 0, %s47
  $region4: #{patchifier_forward.37} parent=0 // loop_header_branch
    %10 = sbr.rel (%p8) target = $region8
  $region5: #{patchifier_forward.37} parent=0 // loop_body
    %s12 = ssub.s32 %s7, 1
    %s13 = ssub.s32 %s7, 2
    %s14 = sadd.s32 %s7, 1
    %s15 = ssub.s32 %s7, %s14
    %p16 = scmp.eq.s32.totalorder %s15, 0
    %s18 = sadd.s32 %s17, 1
    %s19 = scalar_select %p16, %s17, %s18
    %p22 = pneg %p16
    %p23 = scmp.eq.s32.totalorder %s7, 1
    %p24 = por %p22, %p23
    %p25 = scmp.ne.s32.totalorder %s17, %s20
    %p26 = scmp.eq.s32.totalorder %s7, 0
    %p27 = por %p25, %p26
    %p28 = scmp.ne.s32.totalorder %s17, %s20
    %p29 = scmp.eq.s32.totalorder %s12, 1
    %p30 = por %p28, %p29
    %p31 = scmp.ne.s32.totalorder %s20, %s21
    %p32 = scmp.eq.s32.totalorder %s12, 0
    %p33 = por %p31, %p32
    %p34 = scmp.ne.s32.totalorder %s20, %s21
    %p35 = scmp.eq.s32.totalorder %s13, 1
    %p36 = por %p34, %p35
    %p38 = scmp.ne.s32.totalorder %s21, %s37
    %p39 = scmp.eq.s32.totalorder %s13, 0
    %p40 = por %p38, %p39
    %s41 = ssub.s32 %s7, %s14
    %p42 = scmp.eq.s32.totalorder %s41, 0
    %s44 = sadd.s32 %s43, 1
    %s45 = scalar_select %p42, %s43, %s44
    %p48 = pneg %p42
    %p49 = scmp.eq.s32.totalorder %s7, 1
    %p50 = por %p48, %p49
    %p51 = scmp.ne.s32.totalorder %s43, %s46
    %p52 = scmp.eq.s32.totalorder %s7, 0
    %p53 = por %p51, %p52
    %p54 = scmp.ne.s32.totalorder %s43, %s46
    %p55 = scmp.eq.s32.totalorder %s12, 1
    %p56 = por %p54, %p55
    %p57 = scmp.ne.s32.totalorder %s46, %s47
    %p58 = scmp.eq.s32.totalorder %s12, 0
    %p59 = por %p57, %p58
    %p60 = scmp.ne.s32.totalorder %s46, %s47
    %p61 = scmp.eq.s32.totalorder %s13, 1
    %p62 = por %p60, %p61
    %p64 = scmp.ne.s32.totalorder %s47, %s63
    %p65 = scmp.eq.s32.totalorder %s13, 0
    %p66 = por %p64, %p65
    %p67 = scmp.le.s32.totalorder 1, %s7
    %p68 = scmp.lt.s32.totalorder %s7, 3
    %p69 = pnand %p67, %p68
    %p70 = pneg %p69
    // Predicated region
    $region9: #{patchifier_forward.37} parent=5 // pred_check
      _
    $region10: #{patchifier_forward.37} parent=5 // pred_check_branch
      %72 = sbr.rel (%p69) target = $region12
    $region11: #{patchifier_forward.37} parent=5 // pred_region
      %s73 = ssub.s32 %s7, 1
    $region12: #{patchifier_forward.37} parent=5 // pred_fallthru
      _
    %p74 = scmp.lt.s32.totalorder %s7, 2
    // Predicated region
    $region13: #{patchifier_forward.37} parent=5 // pred_check
      %p75 = pneg %p74
    $region14: #{patchifier_forward.37} parent=5 // pred_check_branch
      %77 = sbr.rel (%p75) target = $region16
    $region15: #{patchifier_forward.37} parent=5 // pred_region
      // Predicated region
      $region17: #{patchifier_forward.37} parent=15 // pred_check
        %p78 = pneg %p27
      $region18: #{patchifier_forward.37} parent=15 // pred_check_branch
        %80 = sbr.rel (%p78) target = $region20
      $region19: #{patchifier_forward.37} parent=15 // pred_region
        %p81 = scmp.lt.s32.totalorder %s7, 1
        %s82 = scalar_select %p81, %s7, 1
        %s83 = smul.addr %s82, 32
        %s84 = smul.addr %s83, 8
        %s85 = scalar_lea.vmem %s0, %s84
      $region20: #{patchifier_forward.37} parent=15 // pred_fallthru
        _
    $region16: #{patchifier_forward.37} parent=5 // pred_fallthru
      _
    %p86 = scmp.le.s32.totalorder 1, %s7
    %p87 = scmp.lt.s32.totalorder %s7, 3
    %p88 = pnand %p86, %p87
    %p89 = pneg %p88
    // Predicated region
    $region21: #{patchifier_forward.37} parent=5 // pred_check
      _
    $region22: #{patchifier_forward.37} parent=5 // pred_check_branch
      %91 = sbr.rel (%p88) target = $region24
    $region23: #{patchifier_forward.37} parent=5 // pred_region
      %s92 = ssub.s32 %s7, 1
      %p93 = scmp.lt.s32.totalorder %s12, 1
      %s94 = scalar_select %p93, %s12, 1
      %s95 = smul.addr %s94, 32
      %s96 = smul.addr %s95, 8
      %s97 = scalar_lea.vmem %s0, %s96
      %p98 = pneg %p33
      %p99 = pneg %p30
      %p100 = pneg %p59
      %p101 = pneg %p56
      %p102 = scmp.lt.s32.totalorder %s12, 1
      %s103 = scalar_select %p102, %s12, 1
      %s104 = smul.addr %s103, 32
      %s105 = smul.addr %s104, 8
      %s106 = scalar_lea.vmem %s1, %s105
      %p107 = scmp.lt.s32.totalorder %s12, 1
      %s108 = scalar_select %p107, %s12, 1
      %s109 = smul.addr %s108, 32
      %s110 = smul.addr %s109, 8
      %s111 = scalar_lea.vmem %s0, %s110
      %p112 = scmp.lt.s32.totalorder %s12, 1
      %s113 = scalar_select %p112, %s12, 1
      %s114 = smul.addr %s113, 32
      %s115 = smul.addr %s114, 8
      %s116 = scalar_lea.vmem %s1, %s115
      %v117 = vld [vmem:[%s111] sm:$0xff]
      %v118 = vld [vmem:[%s111 + $0x8] sm:$0xff]
      %v119 = vld [vmem:[%s111 + $0x10] sm:$0xff]
      %v120 = vld [vmem:[%s111 + $0x18] sm:$0xff]
      %v121 = vld [vmem:[%s111 + $0x20] sm:$0xff]
      %v122 = vld [vmem:[%s111 + $0x28] sm:$0xff]
      %v123 = vld [vmem:[%s111 + $0x30] sm:$0xff]
      %v124 = vld [vmem:[%s111 + $0x38] sm:$0xff]
      %v125 = vld [vmem:[%s111 + $0x40] sm:$0xff]
      %v126 = vld [vmem:[%s111 + $0x48] sm:$0xff]
      %v127 = vld [vmem:[%s111 + $0x50] sm:$0xff]
      %v128 = vld [vmem:[%s111 + $0x58] sm:$0xff]
      %v129 = vld [vmem:[%s111 + $0x60] sm:$0xff]
      %v130 = vld [vmem:[%s111 + $0x68] sm:$0xff]
      %v131 = vld [vmem:[%s111 + $0x70] sm:$0xff]
      %v132 = vld [vmem:[%s111 + $0x78] sm:$0xff]
      %v133 = vld [vmem:[%s111 + $0x80] sm:$0xff]
      %v134 = vld [vmem:[%s111 + $0x88] sm:$0xff]
      %v135 = vld [vmem:[%s111 + $0x90] sm:$0xff]
      %v136 = vld [vmem:[%s111 + $0x98] sm:$0xff]
      %v137 = vld [vmem:[%s111 + $0xa0] sm:$0xff]
      %v138 = vld [vmem:[%s111 + $0xa8] sm:$0xff]
      %v139 = vld [vmem:[%s111 + $0xb0] sm:$0xff]
      %v140 = vld [vmem:[%s111 + $0xb8] sm:$0xff]
      %v141 = vld [vmem:[%s111 + $0xc0] sm:$0xff]
      %v142 = vld [vmem:[%s111 + $0xc8] sm:$0xff]
      %v143 = vld [vmem:[%s111 + $0xd0] sm:$0xff]
      %v144 = vld [vmem:[%s111 + $0xd8] sm:$0xff]
      %v145 = vld [vmem:[%s111 + $0xe0] sm:$0xff]
      %v146 = vld [vmem:[%s111 + $0xe8] sm:$0xff]
      %v147 = vld [vmem:[%s111 + $0xf0] sm:$0xff]
      %v148 = vld [vmem:[%s111 + $0xf8] sm:$0xff]
      %vm149 = vcmask 261120
      %v150 = vsel %vm149, %v117, 0.0
      %v151 = vsel %vm149, %v118, 0.0
      %v152 = vadd.f32 %v150, %v151
      %v153 = vsel %vm149, %v119, 0.0
      %v154 = vadd.f32 %v152, %v153
      %v155 = vsel %vm149, %v120, 0.0
      %v156 = vadd.f32 %v154, %v155
      %v157 = vsel %vm149, %v121, 0.0
      %v158 = vadd.f32 %v156, %v157
      %v159 = vsel %vm149, %v122, 0.0
      %v160 = vadd.f32 %v158, %v159
      %v161 = vsel %vm149, %v123, 0.0
      %v162 = vadd.f32 %v160, %v161
      %v163 = vsel %vm149, %v124, 0.0
      %v164 = vadd.f32 %v162, %v163
      %v165 = vsel %vm149, %v125, 0.0
      %v166 = vadd.f32 %v164, %v165
      %v167 = vsel %vm149, %v126, 0.0
      %v168 = vadd.f32 %v166, %v167
      %v169 = vsel %vm149, %v127, 0.0
      %v170 = vadd.f32 %v168, %v169
      %v171 = vsel %vm149, %v128, 0.0
      %v172 = vadd.f32 %v170, %v171
      %v173 = vsel %vm149, %v129, 0.0
      %v174 = vadd.f32 %v172, %v173
      %v175 = vsel %vm149, %v130, 0.0
      %v176 = vadd.f32 %v174, %v175
      %v177 = vsel %vm149, %v131, 0.0
      %v178 = vadd.f32 %v176, %v177
      %v179 = vsel %vm149, %v132, 0.0
      %v180 = vadd.f32 %v178, %v179
      %v181 = vsel %vm149, %v133, 0.0
      %v182 = vadd.f32 %v180, %v181
      %v183 = vsel %vm149, %v134, 0.0
      %v184 = vadd.f32 %v182, %v183
      %v185 = vsel %vm149, %v135, 0.0
      %v186 = vadd.f32 %v184, %v185
      %v187 = vsel %vm149, %v136, 0.0
      %v188 = vadd.f32 %v186, %v187
      %v189 = vsel %vm149, %v137, 0.0
      %v190 = vadd.f32 %v188, %v189
      %v191 = vsel %vm149, %v138, 0.0
      %v192 = vadd.f32 %v190, %v191
      %v193 = vsel %vm149, %v139, 0.0
      %v194 = vadd.f32 %v192, %v193
      %v195 = vsel %vm149, %v140, 0.0
      %v196 = vadd.f32 %v194, %v195
      %v197 = vsel %vm149, %v141, 0.0
      %v198 = vadd.f32 %v196, %v197
      %v199 = vsel %vm149, %v142, 0.0
      %v200 = vadd.f32 %v198, %v199
      %v201 = vsel %vm149, %v143, 0.0
      %v202 = vadd.f32 %v200, %v201
      %v203 = vsel %vm149, %v144, 0.0
      %v204 = vadd.f32 %v202, %v203
      %v205 = vsel %vm149, %v145, 0.0
      %v206 = vadd.f32 %v204, %v205
      %v207 = vsel %vm149, %v146, 0.0
      %v208 = vadd.f32 %v206, %v207
      %v209 = vsel %vm149, %v147, 0.0
      %v210 = vadd.f32 %v208, %v209
      %v211 = vsel %vm149, %v148, 0.0
      %v212 = vadd.f32 %v210, %v211
      %v213 = vrot.slane %v212, 4
      %v214 = vadd.f32 %v212, %v213
      %v215 = vrot.slane %v214, 2
      %v216 = vadd.f32 %v214, %v215
      %v217 = vrot.slane %v216, 1
      %v218 = vadd.f32 %v216, %v217
      %v219 = vrcp.pop 256.0
      %v220 = vmul.f32 %v218, %v219
      %v221 = vsub.f32 %v117, %v220
      %v222 = vsub.f32 %v118, %v220
      %v223 = vsub.f32 %v119, %v220
      %v224 = vsub.f32 %v120, %v220
      %v225 = vsub.f32 %v121, %v220
      %v226 = vsub.f32 %v122, %v220
      %v227 = vsub.f32 %v123, %v220
      %v228 = vsub.f32 %v124, %v220
      %v229 = vsub.f32 %v125, %v220
      %v230 = vsub.f32 %v126, %v220
      %v231 = vsub.f32 %v127, %v220
      %v232 = vsub.f32 %v128, %v220
      %v233 = vsub.f32 %v129, %v220
      %v234 = vsub.f32 %v130, %v220
      %v235 = vsub.f32 %v131, %v220
      %v236 = vsub.f32 %v132, %v220
      %v237 = vsub.f32 %v133, %v220
      %v238 = vsub.f32 %v134, %v220
      %v239 = vsub.f32 %v135, %v220
      %v240 = vsub.f32 %v136, %v220
      %v241 = vsub.f32 %v137, %v220
      %v242 = vsub.f32 %v138, %v220
      %v243 = vsub.f32 %v139, %v220
      %v244 = vsub.f32 %v140, %v220
      %v245 = vsub.f32 %v141, %v220
      %v246 = vsub.f32 %v142, %v220
      %v247 = vsub.f32 %v143, %v220
      %v248 = vsub.f32 %v144, %v220
      %v249 = vsub.f32 %v145, %v220
      %v250 = vsub.f32 %v146, %v220
      %v251 = vsub.f32 %v147, %v220
      %v252 = vsub.f32 %v148, %v220
      %v253 = vmul.f32 %v221, %v221
      %v254 = vmul.f32 %v222, %v222
      %v255 = vmul.f32 %v223, %v223
      %v256 = vmul.f32 %v224, %v224
      %v257 = vmul.f32 %v225, %v225
      %v258 = vmul.f32 %v226, %v226
      %v259 = vmul.f32 %v227, %v227
      %v260 = vmul.f32 %v228, %v228
      %v261 = vmul.f32 %v229, %v229
      %v262 = vmul.f32 %v230, %v230
      %v263 = vmul.f32 %v231, %v231
      %v264 = vmul.f32 %v232, %v232
      %v265 = vmul.f32 %v233, %v233
      %v266 = vmul.f32 %v234, %v234
      %v267 = vmul.f32 %v235, %v235
      %v268 = vmul.f32 %v236, %v236
      %v269 = vmul.f32 %v237, %v237
      %v270 = vmul.f32 %v238, %v238
      %v271 = vmul.f32 %v239, %v239
      %v272 = vmul.f32 %v240, %v240
      %v273 = vmul.f32 %v241, %v241
      %v274 = vmul.f32 %v242, %v242
      %v275 = vmul.f32 %v243, %v243
      %v276 = vmul.f32 %v244, %v244
      %v277 = vmul.f32 %v245, %v245
      %v278 = vmul.f32 %v246, %v246
      %v279 = vmul.f32 %v247, %v247
      %v280 = vmul.f32 %v248, %v248
      %v281 = vmul.f32 %v249, %v249
      %v282 = vmul.f32 %v250, %v250
      %v283 = vmul.f32 %v251, %v251
      %v284 = vmul.f32 %v252, %v252
      %v285 = vsel %vm149, %v253, 0.0
      %v286 = vsel %vm149, %v254, 0.0
      %v287 = vadd.f32 %v285, %v286
      %v288 = vsel %vm149, %v255, 0.0
      %v289 = vadd.f32 %v287, %v288
      %v290 = vsel %vm149, %v256, 0.0
      %v291 = vadd.f32 %v289, %v290
      %v292 = vsel %vm149, %v257, 0.0
      %v293 = vadd.f32 %v291, %v292
      %v294 = vsel %vm149, %v258, 0.0
      %v295 = vadd.f32 %v293, %v294
      %v296 = vsel %vm149, %v259, 0.0
      %v297 = vadd.f32 %v295, %v296
      %v298 = vsel %vm149, %v260, 0.0
      %v299 = vadd.f32 %v297, %v298
      %v300 = vsel %vm149, %v261, 0.0
      %v301 = vadd.f32 %v299, %v300
      %v302 = vsel %vm149, %v262, 0.0
      %v303 = vadd.f32 %v301, %v302
      %v304 = vsel %vm149, %v263, 0.0
      %v305 = vadd.f32 %v303, %v304
      %v306 = vsel %vm149, %v264, 0.0
      %v307 = vadd.f32 %v305, %v306
      %v308 = vsel %vm149, %v265, 0.0
      %v309 = vadd.f32 %v307, %v308
      %v310 = vsel %vm149, %v266, 0.0
      %v311 = vadd.f32 %v309, %v310
      %v312 = vsel %vm149, %v267, 0.0
      %v313 = vadd.f32 %v311, %v312
      %v314 = vsel %vm149, %v268, 0.0
      %v315 = vadd.f32 %v313, %v314
      %v316 = vsel %vm149, %v269, 0.0
      %v317 = vadd.f32 %v315, %v316
      %v318 = vsel %vm149, %v270, 0.0
      %v319 = vadd.f32 %v317, %v318
      %v320 = vsel %vm149, %v271, 0.0
      %v321 = vadd.f32 %v319, %v320
      %v322 = vsel %vm149, %v272, 0.0
      %v323 = vadd.f32 %v321, %v322
      %v324 = vsel %vm149, %v273, 0.0
      %v325 = vadd.f32 %v323, %v324
      %v326 = vsel %vm149, %v274, 0.0
      %v327 = vadd.f32 %v325, %v326
      %v328 = vsel %vm149, %v275, 0.0
      %v329 = vadd.f32 %v327, %v328
      %v330 = vsel %vm149, %v276, 0.0
      %v331 = vadd.f32 %v329, %v330
      %v332 = vsel %vm149, %v277, 0.0
      %v333 = vadd.f32 %v331, %v332
      %v334 = vsel %vm149, %v278, 0.0
      %v335 = vadd.f32 %v333, %v334
      %v336 = vsel %vm149, %v279, 0.0
      %v337 = vadd.f32 %v335, %v336
      %v338 = vsel %vm149, %v280, 0.0
      %v339 = vadd.f32 %v337, %v338
      %v340 = vsel %vm149, %v281, 0.0
      %v341 = vadd.f32 %v339, %v340
      %v342 = vsel %vm149, %v282, 0.0
      %v343 = vadd.f32 %v341, %v342
      %v344 = vsel %vm149, %v283, 0.0
      %v345 = vadd.f32 %v343, %v344
      %v346 = vsel %vm149, %v284, 0.0
      %v347 = vadd.f32 %v345, %v346
      %v348 = vrot.slane %v347, 4
      %v349 = vadd.f32 %v347, %v348
      %v350 = vrot.slane %v349, 2
      %v351 = vadd.f32 %v349, %v350
      %v352 = vrot.slane %v351, 1
      %v353 = vadd.f32 %v351, %v352
      %v354 = vmul.f32 %v353, %v219
      %v355 = vadd.f32 %v354, 1e-05
      %v356 = vrsqrt.pop %v355
      %v357 = vmul.f32 %v221, %v356
      %v358 = vmul.f32 %v222, %v356
      %v359 = vmul.f32 %v223, %v356
      %v360 = vmul.f32 %v224, %v356
      %v361 = vmul.f32 %v225, %v356
      %v362 = vmul.f32 %v226, %v356
      %v363 = vmul.f32 %v227, %v356
      %v364 = vmul.f32 %v228, %v356
      %v365 = vmul.f32 %v229, %v356
      %v366 = vmul.f32 %v230, %v356
      %v367 = vmul.f32 %v231, %v356
      %v368 = vmul.f32 %v232, %v356
      %v369 = vmul.f32 %v233, %v356
      %v370 = vmul.f32 %v234, %v356
      %v371 = vmul.f32 %v235, %v356
      %v372 = vmul.f32 %v236, %v356
      %v373 = vmul.f32 %v237, %v356
      %v374 = vmul.f32 %v238, %v356
      %v375 = vmul.f32 %v239, %v356
      %v376 = vmul.f32 %v240, %v356
      %v377 = vmul.f32 %v241, %v356
      %v378 = vmul.f32 %v242, %v356
      %v379 = vmul.f32 %v243, %v356
      %v380 = vmul.f32 %v244, %v356
      %v381 = vmul.f32 %v245, %v356
      %v382 = vmul.f32 %v246, %v356
      %v383 = vmul.f32 %v247, %v356
      %v384 = vmul.f32 %v248, %v356
      %v385 = vmul.f32 %v249, %v356
      %v386 = vmul.f32 %v250, %v356
      %v387 = vmul.f32 %v251, %v356
      %v388 = vmul.f32 %v252, %v356
      %v389 = vmax.f32 %v357, 0.0
      %v390 = vmax.f32 %v358, 0.0
      %v391 = vmax.f32 %v359, 0.0
      %v392 = vmax.f32 %v360, 0.0
      %v393 = vmax.f32 %v361, 0.0
      %v394 = vmax.f32 %v362, 0.0
      %v395 = vmax.f32 %v363, 0.0
      %v396 = vmax.f32 %v364, 0.0
      %v397 = vmax.f32 %v365, 0.0
      %v398 = vmax.f32 %v366, 0.0
      %v399 = vmax.f32 %v367, 0.0
      %v400 = vmax.f32 %v368, 0.0
      %v401 = vmax.f32 %v369, 0.0
      %v402 = vmax.f32 %v370, 0.0
      %v403 = vmax.f32 %v371, 0.0
      %v404 = vmax.f32 %v372, 0.0
      %v405 = vmax.f32 %v373, 0.0
      %v406 = vmax.f32 %v374, 0.0
      %v407 = vmax.f32 %v375, 0.0
      %v408 = vmax.f32 %v376, 0.0
      %v409 = vmax.f32 %v377, 0.0
      %v410 = vmax.f32 %v378, 0.0
      %v411 = vmax.f32 %v379, 0.0
      %v412 = vmax.f32 %v380, 0.0
      %v413 = vmax.f32 %v381, 0.0
      %v414 = vmax.f32 %v382, 0.0
      %v415 = vmax.f32 %v383, 0.0
      %v416 = vmax.f32 %v384, 0.0
      %v417 = vmax.f32 %v385, 0.0
      %v418 = vmax.f32 %v386, 0.0
      %v419 = vmax.f32 %v387, 0.0
      %v420 = vmax.f32 %v388, 0.0
      %421 = vst.msk [vmem:[%s116] sm:$0xff] %vm149, %v389
      %422 = vst.msk [vmem:[%s116 + $0x8] sm:$0xff] %vm149, %v390
      %423 = vst.msk [vmem:[%s116 + $0x10] sm:$0xff] %vm149, %v391
      %424 = vst.msk [vmem:[%s116 + $0x18] sm:$0xff] %vm149, %v392
      %425 = vst.msk [vmem:[%s116 + $0x20] sm:$0xff] %vm149, %v393
      %426 = vst.msk [vmem:[%s116 + $0x28] sm:$0xff] %vm149, %v394
      %427 = vst.msk [vmem:[%s116 + $0x30] sm:$0xff] %vm149, %v395
      %428 = vst.msk [vmem:[%s116 + $0x38] sm:$0xff] %vm149, %v396
      %429 = vst.msk [vmem:[%s116 + $0x40] sm:$0xff] %vm149, %v397
      %430 = vst.msk [vmem:[%s116 + $0x48] sm:$0xff] %vm149, %v398
      %431 = vst.msk [vmem:[%s116 + $0x50] sm:$0xff] %vm149, %v399
      %432 = vst.msk [vmem:[%s116 + $0x58] sm:$0xff] %vm149, %v400
      %433 = vst.msk [vmem:[%s116 + $0x60] sm:$0xff] %vm149, %v401
      %434 = vst.msk [vmem:[%s116 + $0x68] sm:$0xff] %vm149, %v402
      %435 = vst.msk [vmem:[%s116 + $0x70] sm:$0xff] %vm149, %v403
      %436 = vst.msk [vmem:[%s116 + $0x78] sm:$0xff] %vm149, %v404
      %437 = vst.msk [vmem:[%s116 + $0x80] sm:$0xff] %vm149, %v405
      %438 = vst.msk [vmem:[%s116 + $0x88] sm:$0xff] %vm149, %v406
      %439 = vst.msk [vmem:[%s116 + $0x90] sm:$0xff] %vm149, %v407
      %440 = vst.msk [vmem:[%s116 + $0x98] sm:$0xff] %vm149, %v408
      %441 = vst.msk [vmem:[%s116 + $0xa0] sm:$0xff] %vm149, %v409
      %442 = vst.msk [vmem:[%s116 + $0xa8] sm:$0xff] %vm149, %v410
      %443 = vst.msk [vmem:[%s116 + $0xb0] sm:$0xff] %vm149, %v411
      %444 = vst.msk [vmem:[%s116 + $0xb8] sm:$0xff] %vm149, %v412
      %445 = vst.msk [vmem:[%s116 + $0xc0] sm:$0xff] %vm149, %v413
      %446 = vst.msk [vmem:[%s116 + $0xc8] sm:$0xff] %vm149, %v414
      %447 = vst.msk [vmem:[%s116 + $0xd0] sm:$0xff] %vm149, %v415
      %448 = vst.msk [vmem:[%s116 + $0xd8] sm:$0xff] %vm149, %v416
      %449 = vst.msk [vmem:[%s116 + $0xe0] sm:$0xff] %vm149, %v417
      %450 = vst.msk [vmem:[%s116 + $0xe8] sm:$0xff] %vm149, %v418
      %451 = vst.msk [vmem:[%s116 + $0xf0] sm:$0xff] %vm149, %v419
      %452 = vst.msk [vmem:[%s116 + $0xf8] sm:$0xff] %vm149, %v420
      %p453 = scmp.lt.s32.totalorder %s12, 1
      %s454 = scalar_select %p453, %s12, 1
      %s455 = smul.addr %s454, 32
      %s456 = smul.addr %s455, 8
      %s457 = scalar_lea.vmem %s1, %s456
      // Predicated region
      $region25: #{patchifier_forward.37} parent=23 // pred_check
        %p458 = pneg %p56
      $region26: #{patchifier_forward.37} parent=23 // pred_check_branch
        %460 = sbr.rel (%p458) target = $region28
      $region27: #{patchifier_forward.37} parent=23 // pred_region
        _
      $region28: #{patchifier_forward.37} parent=23 // pred_fallthru
        _
    $region24: #{patchifier_forward.37} parent=5 // pred_fallthru
      _
    %p461 = scmp.le.s32.totalorder 2, %s7
    // Predicated region
    $region29: #{patchifier_forward.37} parent=5 // pred_check
      %p462 = pneg %p461
    $region30: #{patchifier_forward.37} parent=5 // pred_check_branch
      %464 = sbr.rel (%p462) target = $region32
    $region31: #{patchifier_forward.37} parent=5 // pred_region
      %s465 = ssub.s32 %s7, 2
      // Predicated region
      $region33: #{patchifier_forward.37} parent=31 // pred_check
        %p466 = pneg %p62
      $region34: #{patchifier_forward.37} parent=31 // pred_check_branch
        %468 = sbr.rel (%p466) target = $region36
      $region35: #{patchifier_forward.37} parent=31 // pred_region
        %p469 = scmp.lt.s32.totalorder %s13, 1
        %s470 = scalar_select %p469, %s13, 1
        %s471 = smul.addr %s470, 32
        %s472 = smul.addr %s471, 8
        %s473 = scalar_lea.vmem %s1, %s472
      $region36: #{patchifier_forward.37} parent=31 // pred_fallthru
        _
    $region32: #{patchifier_forward.37} parent=5 // pred_fallthru
      _
  $region6: #{patchifier_forward.37} parent=0 // loop_footer
    %s11 = sadd.s32 1, %s7
  $region7: #{patchifier_forward.37} parent=0 // loop_footer_branch
    %6 = sbr.rel target = $region3
  $region8: #{patchifier_forward.37} parent=0 // loop_exit
    _

// kernel: patchifier_forward.36
$region0: #{patchifier_forward.36}
  #allocation0 [shape = 'u32[]', space=smem, size = 0x4, offset = 0x4, fixed_abs, tag = 'smem constant byte address 0x4 - core index']
  #allocation1 [shape = 'u32[144,128]{1,0:T(1,128)}', space=vmem, size = 0x12000, scoped, tag = 'internal scratch']
  %s0 = inlined_call_operand.vmem [shape: bf16[512,147], index: 0, kind: input, shape index: {}]
  %s1 = inlined_call_operand.vmem [shape: bf16[147,32], index: 1, kind: input, shape index: {}]
  %s2 = inlined_call_operand.vmem [shape: f32[1,32], index: 2, kind: input, shape index: {}]
  %s3 = inlined_call_operand.vmem [shape: f32[512,32], index: 3, kind: output, shape index: {}]
  %s4 = sld [smem:[#allocation0]]
  $region45: #{patchifier_forward.36} parent=0
    _
  %s6 = ssub.s32 1, %s4
  %s7 = scalar_select 0, %s6, %s4
  loop: start=0, step=1, limit=4
  $region2: #{patchifier_forward.36} parent=0 // loop_pre_header
    _
  $region3: #{patchifier_forward.36} parent=0 // loop_header
    %s9 = sphi 0, %s13
    %p10 = scmp.ge.s32.totalorder %s9, 4
    %s19 = sphi 0, %s21
    %s22 = sphi 0, %s19
    %s23 = sphi 0, %s22
    %s39 = sphi 0, %s23
    %s43 = sphi 0, %s43
    %s45 = sphi 0, %s43
    %s46 = sphi 0, %s45
    %s60 = sphi 0, %s46
    %s64 = sphi 0, %s64
    %s66 = sphi 0, %s64
    %s67 = sphi 0, %s66
    %s81 = sphi 0, %s67
    %s87 = sphi 0, %s89
    %s90 = sphi 0, %s87
    %s91 = sphi 0, %s90
    %s107 = sphi 0, %s91
  $region4: #{patchifier_forward.36} parent=0 // loop_header_branch
    %12 = sbr.rel (%p10) target = $region8
  $region5: #{patchifier_forward.36} parent=0 // loop_body
    %s14 = ssub.s32 %s9, 1
    %s15 = ssub.s32 %s9, 2
    %s16 = sadd.s32 %s9, 1
    %s17 = ssub.s32 %s9, %s16
    %p18 = scmp.eq.s32.totalorder %s17, 0
    %s20 = sadd.s32 %s19, 1
    %s21 = scalar_select %p18, %s19, %s20
    %p24 = pneg %p18
    %p25 = scmp.eq.s32.totalorder %s9, 1
    %p26 = por %p24, %p25
    %p27 = scmp.ne.s32.totalorder %s19, %s22
    %p28 = scmp.eq.s32.totalorder %s9, 0
    %p29 = por %p27, %p28
    %p30 = scmp.ne.s32.totalorder %s19, %s22
    %p31 = scmp.eq.s32.totalorder %s14, 1
    %p32 = por %p30, %p31
    %p33 = scmp.ne.s32.totalorder %s22, %s23
    %p34 = scmp.eq.s32.totalorder %s14, 0
    %p35 = por %p33, %p34
    %p36 = scmp.ne.s32.totalorder %s22, %s23
    %p37 = scmp.eq.s32.totalorder %s15, 1
    %p38 = por %p36, %p37
    %p40 = scmp.ne.s32.totalorder %s23, %s39
    %p41 = scmp.eq.s32.totalorder %s15, 0
    %p42 = por %p40, %p41
    %s44 = sadd.s32 %s43, 1
    %p47 = scmp.eq.s32.totalorder %s9, 1
    %p48 = scmp.ne.s32.totalorder %s43, %s45
    %p49 = scmp.eq.s32.totalorder %s9, 0
    %p50 = por %p48, %p49
    %p51 = scmp.ne.s32.totalorder %s43, %s45
    %p52 = scmp.eq.s32.totalorder %s14, 1
    %p53 = por %p51, %p52
    %p54 = scmp.ne.s32.totalorder %s45, %s46
    %p55 = scmp.eq.s32.totalorder %s14, 0
    %p56 = por %p54, %p55
    %p57 = scmp.ne.s32.totalorder %s45, %s46
    %p58 = scmp.eq.s32.totalorder %s15, 1
    %p59 = por %p57, %p58
    %p61 = scmp.ne.s32.totalorder %s46, %s60
    %p62 = scmp.eq.s32.totalorder %s15, 0
    %p63 = por %p61, %p62
    %s65 = sadd.s32 %s64, 1
    %p68 = scmp.eq.s32.totalorder %s9, 1
    %p69 = scmp.ne.s32.totalorder %s64, %s66
    %p70 = scmp.eq.s32.totalorder %s9, 0
    %p71 = por %p69, %p70
    %p72 = scmp.ne.s32.totalorder %s64, %s66
    %p73 = scmp.eq.s32.totalorder %s14, 1
    %p74 = por %p72, %p73
    %p75 = scmp.ne.s32.totalorder %s66, %s67
    %p76 = scmp.eq.s32.totalorder %s14, 0
    %p77 = por %p75, %p76
    %p78 = scmp.ne.s32.totalorder %s66, %s67
    %p79 = scmp.eq.s32.totalorder %s15, 1
    %p80 = por %p78, %p79
    %p82 = scmp.ne.s32.totalorder %s67, %s81
    %p83 = scmp.eq.s32.totalorder %s15, 0
    %p84 = por %p82, %p83
    %s85 = ssub.s32 %s9, %s16
    %p86 = scmp.eq.s32.totalorder %s85, 0
    %s88 = sadd.s32 %s87, 1
    %s89 = scalar_select %p86, %s87, %s88
    %p92 = pneg %p86
    %p93 = scmp.eq.s32.totalorder %s9, 1
    %p94 = por %p92, %p93
    %p95 = scmp.ne.s32.totalorder %s87, %s90
    %p96 = scmp.eq.s32.totalorder %s9, 0
    %p97 = por %p95, %p96
    %p98 = scmp.ne.s32.totalorder %s87, %s90
    %p99 = scmp.eq.s32.totalorder %s14, 1
    %p100 = por %p98, %p99
    %p101 = scmp.ne.s32.totalorder %s90, %s91
    %p102 = scmp.eq.s32.totalorder %s14, 0
    %p103 = por %p101, %p102
    %p104 = scmp.ne.s32.totalorder %s90, %s91
    %p105 = scmp.eq.s32.totalorder %s15, 1
    %p106 = por %p104, %p105
    %p108 = scmp.ne.s32.totalorder %s91, %s107
    %p109 = scmp.eq.s32.totalorder %s15, 0
    %p110 = por %p108, %p109
    %p111 = scmp.le.s32.totalorder 1, %s9
    %p112 = scmp.lt.s32.totalorder %s9, 3
    %p113 = pnand %p111, %p112
    %p114 = pneg %p113
    // Predicated region
    $region9: #{patchifier_forward.36} parent=5 // pred_check
      _
    $region10: #{patchifier_forward.36} parent=5 // pred_check_branch
      %116 = sbr.rel (%p113) target = $region12
    $region11: #{patchifier_forward.36} parent=5 // pred_region
      %s117 = ssub.s32 %s9, 1
      // Predicated region
      $region13: #{patchifier_forward.36} parent=11 // pred_check
        %p118 = pneg %p56
      $region14: #{patchifier_forward.36} parent=11 // pred_check_branch
        %120 = sbr.rel (%p118) target = $region16
      $region15: #{patchifier_forward.36} parent=11 // pred_region
        _
      $region16: #{patchifier_forward.36} parent=11 // pred_fallthru
        _
      // Predicated region
      $region17: #{patchifier_forward.36} parent=11 // pred_check
        %p121 = pneg %p77
      $region18: #{patchifier_forward.36} parent=11 // pred_check_branch
        %123 = sbr.rel (%p121) target = $region20
      $region19: #{patchifier_forward.36} parent=11 // pred_region
        _
      $region20: #{patchifier_forward.36} parent=11 // pred_fallthru
        _
    $region12: #{patchifier_forward.36} parent=5 // pred_fallthru
      _
    %p124 = scmp.lt.s32.totalorder %s9, 2
    // Predicated region
    $region21: #{patchifier_forward.36} parent=5 // pred_check
      %p125 = pneg %p124
    $region22: #{patchifier_forward.36} parent=5 // pred_check_branch
      %127 = sbr.rel (%p125) target = $region24
    $region23: #{patchifier_forward.36} parent=5 // pred_region
      // Predicated region
      $region25: #{patchifier_forward.36} parent=23 // pred_check
        %p128 = pneg %p29
      $region26: #{patchifier_forward.36} parent=23 // pred_check_branch
        %130 = sbr.rel (%p128) target = $region28
      $region27: #{patchifier_forward.36} parent=23 // pred_region
        %s131 = smul.u32 32, %s9
        %p132 = scmp.lt.s32.totalorder %s131, 63
        %s133 = scalar_select %p132, %s131, 63
        %s134 = smul.addr %s133, 2
        %s135 = smul.addr %s134, 4
        %s136 = scalar_lea.vmem %s0, %s135
        %s137 = smul.u32 32, %s9
      $region28: #{patchifier_forward.36} parent=23 // pred_fallthru
        _
    $region24: #{patchifier_forward.36} parent=5 // pred_fallthru
      _
    %p138 = scmp.le.s32.totalorder 1, %s9
    %p139 = scmp.lt.s32.totalorder %s9, 3
    %p140 = pnand %p138, %p139
    %p141 = pneg %p140
    // Predicated region
    $region29: #{patchifier_forward.36} parent=5 // pred_check
      _
    $region30: #{patchifier_forward.36} parent=5 // pred_check_branch
      %143 = sbr.rel (%p140) target = $region32
    $region31: #{patchifier_forward.36} parent=5 // pred_region
      %s144 = ssub.s32 %s9, 1
      %s145 = smul.u32 32, %s14
      %p146 = scmp.lt.s32.totalorder %s145, 63
      %s147 = scalar_select %p146, %s145, 63
      %s148 = smul.addr %s147, 2
      %s149 = smul.addr %s148, 4
      %s150 = scalar_lea.vmem %s0, %s149
      %p151 = pneg %p35
      %p152 = pneg %p32
      %p153 = pneg %p56
      %p154 = pneg %p53
      %p155 = pneg %p77
      %p156 = pneg %p74
      %p157 = pneg %p103
      %p158 = pneg %p100
      %s159 = smul.u32 32, %s14
      %p160 = scmp.lt.s32.totalorder %s159, 63
      %s161 = scalar_select %p160, %s159, 63
      %s162 = smul.addr %s161, 8
      %s163 = scalar_lea.vmem %s3, %s162
      %s164 = smul.u32 32, %s14
      %p165 = scmp.lt.s32.totalorder %s164, 63
      %s166 = scalar_select %p165, %s164, 63
      %s167 = smul.addr %s166, 2
      %s168 = smul.addr %s167, 4
      %s169 = scalar_lea.vmem %s0, %s168
      %s170 = smul.u32 32, %s14
      %s171 = smul.u32 32, %s14
      %p172 = scmp.lt.s32.totalorder %s171, 63
      %s173 = scalar_select %p172, %s171, 63
      %s174 = smul.addr %s173, 8
      %s175 = scalar_lea.vmem %s3, %s174
      %s176 = smul.u32 32, %s14
      %v178 = vld [vmem:[%s169] sm:$0xff]
      %v179 = vld [vmem:[%s169 + $0x8] sm:$0xff]
      %v180 = vld [vmem:[%s169 + $0x10] sm:$0xff]
      %v181 = vld [vmem:[%s169 + $0x18] sm:$0xff]
      %v182 = vld [vmem:[%s169 + $0x20] sm:$0xff]
      %v183 = vld [vmem:[%s169 + $0x28] sm:$0xff]
      %v184 = vld [vmem:[%s169 + $0x30] sm:$0xff]
      %v185 = vld [vmem:[%s169 + $0x38] sm:$0xff]
      %v186 = vld [vmem:[%s169 + $0x40] sm:$0xff]
      %v187 = vld [vmem:[%s169 + $0x48] sm:$0xff]
      %v188 = vld [vmem:[%s169 + $0x50] sm:$0xff]
      %v189 = vld [vmem:[%s169 + $0x58] sm:$0xff]
      %v190 = vld [vmem:[%s169 + $0x60] sm:$0xff]
      %v191 = vld [vmem:[%s169 + $0x68] sm:$0xff]
      %v192 = vld [vmem:[%s169 + $0x70] sm:$0xff]
      %v193 = vld [vmem:[%s169 + $0x78] sm:$0xff]
      %v194 = vld [vmem:[%s169 + $0x80] sm:$0xff]
      %v195 = vld [vmem:[%s169 + $0x88] sm:$0xff]
      %v196 = vld [vmem:[%s169 + $0x90] sm:$0xff]
      %v197 = vld [vmem:[%s169 + $0x98] sm:$0xff]
      %v198 = vld [vmem:[%s169 + $0xa0] sm:$0xff]
      %v199 = vld [vmem:[%s169 + $0xa8] sm:$0xff]
      %v200 = vld [vmem:[%s169 + $0xb0] sm:$0xff]
      %v201 = vld [vmem:[%s169 + $0xb8] sm:$0xff]
      %v202 = vld [vmem:[%s169 + $0xc0] sm:$0xff]
      %v203 = vld [vmem:[%s169 + $0xc8] sm:$0xff]
      %v204 = vld [vmem:[%s169 + $0xd0] sm:$0xff]
      %v205 = vld [vmem:[%s169 + $0xd8] sm:$0xff]
      %v206 = vld [vmem:[%s169 + $0xe0] sm:$0xff]
      %v207 = vld [vmem:[%s169 + $0xe8] sm:$0xff]
      %v208 = vld [vmem:[%s169 + $0xf0] sm:$0xff]
      %v209 = vld [vmem:[%s169 + $0xf8] sm:$0xff]
      %v210 = vld [vmem:[%s1] sm:$0xf]
      %v211 = vld [vmem:[%s1 + $0x4] sm:$0xf]
      %v212 = vld [vmem:[%s1 + $0x8] sm:$0xf]
      %v213 = vld [vmem:[%s1 + $0xc] sm:$0xf]
      %v214 = vld [vmem:[%s1 + $0x10] sm:$0xf]
      %v215 = vld [vmem:[%s1 + $0x14] sm:$0xf]
      %v216 = vld [vmem:[%s1 + $0x18] sm:$0xf]
      %v217 = vld [vmem:[%s1 + $0x1c] sm:$0xf]
      %v218 = vld [vmem:[%s1 + $0x20] sm:$0xf]
      %v219 = vld [vmem:[%s1 + $0x24] sm:$0xf]
      %v220 = vld [vmem:[%s1 + $0x28] sm:$0xf]
      %v221 = vld [vmem:[%s1 + $0x2c] sm:$0xf]
      %v222 = vld [vmem:[%s1 + $0x30] sm:$0xf]
      %v223 = vld [vmem:[%s1 + $0x34] sm:$0xf]
      %v224 = vld [vmem:[%s1 + $0x38] sm:$0xf]
      %v225 = vld [vmem:[%s1 + $0x3c] sm:$0xf]
      %v226 = vld [vmem:[%s1 + $0x40] sm:$0xf]
      %v227 = vld [vmem:[%s1 + $0x44] sm:$0xf]
      %v228 = vld [vmem:[%s1 + $0x48] sm:$0x3]
      %v229 = vld [vmem:[%s2] sm:$0x1]
      %v231 = vlaneseq
      %v232 = vshrl.u32 %v231, 7
      %v233 = vsub.s32 0, %v232
      %v234 = vrot.slane %v229, %v233
      %v268 = vunpack.c.l.b16 %v178
      %v269 = vunpack.c.h.b16 %v178
      %v270 = vunpack.c.l.b16 %v179
      %v271 = vunpack.c.h.b16 %v179
      %v272 = vunpack.c.l.b16 %v180
      %v273 = vunpack.c.h.b16 %v180
      %v274 = vunpack.c.l.b16 %v181
      %v275 = vunpack.c.h.b16 %v181
      %v276 = vunpack.c.l.b16 %v182
      %v277 = vunpack.c.h.b16 %v182
      %v278 = vunpack.c.l.b16 %v183
      %v279 = vunpack.c.h.b16 %v183
      %v280 = vunpack.c.l.b16 %v184
      %v281 = vunpack.c.h.b16 %v184
      %v282 = vunpack.c.l.b16 %v185
      %v283 = vunpack.c.h.b16 %v185
      %v284 = vunpack.c.l.b16 %v186
      %v285 = vunpack.c.h.b16 %v186
      %v286 = vunpack.c.l.b16 %v187
      %v287 = vunpack.c.h.b16 %v187
      %v288 = vunpack.c.l.b16 %v188
      %v289 = vunpack.c.h.b16 %v188
      %v290 = vunpack.c.l.b16 %v189
      %v291 = vunpack.c.h.b16 %v189
      %v292 = vunpack.c.l.b16 %v190
      %v293 = vunpack.c.h.b16 %v190
      %v294 = vunpack.c.l.b16 %v191
      %v295 = vunpack.c.h.b16 %v191
      %v296 = vunpack.c.l.b16 %v192
      %v297 = vunpack.c.h.b16 %v192
      %v298 = vunpack.c.l.b16 %v193
      %v299 = vunpack.c.h.b16 %v193
      %v300 = vunpack.c.l.b16 %v194
      %v301 = vunpack.c.h.b16 %v194
      %v302 = vunpack.c.l.b16 %v195
      %v303 = vunpack.c.h.b16 %v195
      %v304 = vunpack.c.l.b16 %v196
      %v305 = vunpack.c.h.b16 %v196
      %v306 = vunpack.c.l.b16 %v197
      %v307 = vunpack.c.h.b16 %v197
      %v308 = vunpack.c.l.b16 %v198
      %v309 = vunpack.c.h.b16 %v198
      %v310 = vunpack.c.l.b16 %v199
      %v311 = vunpack.c.h.b16 %v199
      %v312 = vunpack.c.l.b16 %v200
      %v313 = vunpack.c.h.b16 %v200
      %v314 = vunpack.c.l.b16 %v201
      %v315 = vunpack.c.h.b16 %v201
      %v316 = vunpack.c.l.b16 %v202
      %v317 = vunpack.c.h.b16 %v202
      %v318 = vunpack.c.l.b16 %v203
      %v319 = vunpack.c.h.b16 %v203
      %v320 = vunpack.c.l.b16 %v204
      %v321 = vunpack.c.h.b16 %v204
      %v322 = vunpack.c.l.b16 %v205
      %v323 = vunpack.c.h.b16 %v205
      %v324 = vunpack.c.l.b16 %v206
      %v325 = vunpack.c.h.b16 %v206
      %v326 = vunpack.c.l.b16 %v207
      %v327 = vunpack.c.h.b16 %v207
      %v328 = vunpack.c.l.b16 %v208
      %v329 = vunpack.c.h.b16 %v208
      %v330 = vunpack.c.l.b16 %v209
      %v331 = vunpack.c.h.b16 %v209
      %v332 = vpack.c.b16 %v270, %v268
      %v333 = vpack.c.b16 %v271, %v269
      %v334 = vpack.c.b16 %v274, %v272
      %v335 = vpack.c.b16 %v275, %v273
      %v336 = vpack.c.b16 %v278, %v276
      %v337 = vpack.c.b16 %v279, %v277
      %v338 = vpack.c.b16 %v282, %v280
      %v339 = vpack.c.b16 %v283, %v281
      %v340 = vpack.c.b16 %v286, %v284
      %v341 = vpack.c.b16 %v287, %v285
      %v342 = vpack.c.b16 %v290, %v288
      %v343 = vpack.c.b16 %v291, %v289
      %v344 = vpack.c.b16 %v294, %v292
      %v345 = vpack.c.b16 %v295, %v293
      %v346 = vpack.c.b16 %v298, %v296
      %v347 = vpack.c.b16 %v299, %v297
      %v348 = vpack.c.b16 %v302, %v300
      %v349 = vpack.c.b16 %v303, %v301
      %v350 = vpack.c.b16 %v306, %v304
      %v351 = vpack.c.b16 %v307, %v305
      %v352 = vpack.c.b16 %v310, %v308
      %v353 = vpack.c.b16 %v311, %v309
      %v354 = vpack.c.b16 %v314, %v312
      %v355 = vpack.c.b16 %v315, %v313
      %v356 = vpack.c.b16 %v318, %v316
      %v357 = vpack.c.b16 %v319, %v317
      %v358 = vpack.c.b16 %v322, %v320
      %v359 = vpack.c.b16 %v323, %v321
      %v360 = vpack.c.b16 %v326, %v324
      %v361 = vpack.c.b16 %v327, %v325
      %v362 = vpack.c.b16 %v330, %v328
      %v363 = vpack.c.b16 %v331, %v329
      %v399 = vunpack.c.l.b16 %v210
      %v400 = vunpack.c.l.b16 %v211
      %v401 = vunpack.c.l.b16 %v212
      %v402 = vunpack.c.l.b16 %v213
      %v403 = vunpack.c.l.b16 %v214
      %v404 = vunpack.c.l.b16 %v215
      %v405 = vunpack.c.l.b16 %v216
      %v406 = vunpack.c.l.b16 %v217
      %v407 = vunpack.c.l.b16 %v218
      %v408 = vunpack.c.l.b16 %v219
      %v409 = vunpack.c.l.b16 %v220
      %v410 = vunpack.c.l.b16 %v221
      %v411 = vunpack.c.l.b16 %v222
      %v412 = vunpack.c.l.b16 %v223
      %v413 = vunpack.c.l.b16 %v224
      %v414 = vunpack.c.l.b16 %v225
      %v415 = vunpack.c.l.b16 %v226
      %v416 = vunpack.c.l.b16 %v227
      %v417 = vunpack.c.l.b16 %v228
      %v418 = vpack.c.b16 %v400, %v399
      %v419 = vpack.c.b16 %v402, %v401
      %v420 = vpack.c.b16 %v404, %v403
      %v421 = vpack.c.b16 %v406, %v405
      %v422 = vpack.c.b16 %v408, %v407
      %v423 = vpack.c.b16 %v410, %v409
      %v424 = vpack.c.b16 %v412, %v411
      %v425 = vpack.c.b16 %v414, %v413
      %v426 = vpack.c.b16 %v416, %v415
      %v427 = vpack.c.b16 %v417, %v417
      %vm437 = vcmask 154624
      %v439 = vsel %vm437, %v333, 0
      %v442 = vsel %vm437, %v335, 0
      %v445 = vsel %vm437, %v337, 0
      %v448 = vsel %vm437, %v339, 0
      %v451 = vsel %vm437, %v341, 0
      %v454 = vsel %vm437, %v343, 0
      %v457 = vsel %vm437, %v345, 0
      %v460 = vsel %vm437, %v347, 0
      %v463 = vsel %vm437, %v349, 0
      %v466 = vsel %vm437, %v351, 0
      %v469 = vsel %vm437, %v353, 0
      %v472 = vsel %vm437, %v355, 0
      %v475 = vsel %vm437, %v357, 0
      %v478 = vsel %vm437, %v359, 0
      %v481 = vsel %vm437, %v361, 0
      %v484 = vsel %vm437, %v363, 0
      %vm486 = vcmask 1040384
      %vm487 = vcmask 1041408
      %v488 = vsel %vm486, 4294967295, 65535
      %v489 = vsel %vm487, %v488, 0
      %v491 = vand.u32 %v427, %v489
      %493 = vmatprep.subr.bf16.mxu0 0
      %494 = vmatpush1.bf16.msra.mxu0 %v425
      %495 = vmatprep.subr.bf16.mxu0 0
      %496 = vmatpush1.bf16.msra.mxu0 %v424
      %497 = vmatprep.subr.bf16.mxu0 0
      %498 = vmatpush1.bf16.msra.mxu0 %v423
      %499 = vmatprep.subr.bf16.mxu0 0
      %500 = vmatpush1.bf16.msra.mxu0 %v422
      %501 = vmatprep.subr.bf16.mxu0 0
      %502 = vmatpush1.bf16.msra.mxu0 %v421
      %503 = vmatprep.subr.bf16.mxu0 0
      %504 = vmatpush1.bf16.msra.mxu0 %v420
      %505 = vmatprep.subr.bf16.mxu0 0
      %506 = vmatpush1.bf16.msra.mxu0 %v419
      %507 = vmatprep.subr.bf16.mxu0 0
      %508 = vmatpush1.bf16.msra.mxu0 %v418
      %509 = vmatprep.subr.bf16.mxu0 0
      %510 = vmatpush2.bf16.msra.mxu0 0
      %511 = vmatprep.subr.bf16.mxu0 0
      %512 = vmatpush2.bf16.msra.mxu0 0
      %513 = vmatprep.subr.bf16.mxu0 0
      %514 = vmatpush2.bf16.msra.mxu0 0
      %515 = vmatprep.subr.bf16.mxu0 0
      %516 = vmatpush2.bf16.msra.mxu0 0
      %517 = vmatprep.subr.bf16.mxu0 0
      %518 = vmatpush2.bf16.msra.mxu0 0
      %519 = vmatprep.subr.bf16.mxu0 0
      %520 = vmatpush2.bf16.msra.mxu0 0
      %521 = vmatprep.subr.bf16.mxu0 0
      %522 = vmatpush2.bf16.msra.mxu0 %v491
      %523 = vmatprep.subr.bf16.mxu0 0
      %524 = vmatpush2.bf16.msra.mxu0 %v426
      %525 = vmatprep.mubr.bf16.mxu0 %v439
      %526 = vmatmul.mubr.bf16.gmra.mxu0 %v332
      %v527 = vpop.f32.mrf.mxu0
      %v528 = vadd.f32 %v234, %v527
      %v529 = vpop.f32.mrf.mxu0
      %v530 = vpop.f32.mrf.mxu0
      %v531 = vadd.f32 %v234, %v530
      %v532 = vpop.f32.mrf.mxu0
      %533 = vmatprep.mubr.bf16.mxu0 %v442
      %534 = vmatmul.mubr.bf16.gmra.mxu0 %v334
      %v535 = vpop.f32.mrf.mxu0
      %v536 = vadd.f32 %v234, %v535
      %v537 = vpop.f32.mrf.mxu0
      %v538 = vpop.f32.mrf.mxu0
      %v539 = vadd.f32 %v234, %v538
      %v540 = vpop.f32.mrf.mxu0
      %541 = vmatprep.mubr.bf16.mxu0 %v445
      %542 = vmatmul.mubr.bf16.gmra.mxu0 %v336
      %v543 = vpop.f32.mrf.mxu0
      %v544 = vadd.f32 %v234, %v543
      %v545 = vpop.f32.mrf.mxu0
      %v546 = vpop.f32.mrf.mxu0
      %v547 = vadd.f32 %v234, %v546
      %v548 = vpop.f32.mrf.mxu0
      %549 = vmatprep.mubr.bf16.mxu0 %v448
      %550 = vmatmul.mubr.bf16.gmra.mxu0 %v338
      %v551 = vpop.f32.mrf.mxu0
      %v552 = vadd.f32 %v234, %v551
      %v553 = vpop.f32.mrf.mxu0
      %v554 = vpop.f32.mrf.mxu0
      %v555 = vadd.f32 %v234, %v554
      %v556 = vpop.f32.mrf.mxu0
      %557 = vmatprep.mubr.bf16.mxu0 %v451
      %558 = vmatmul.mubr.bf16.gmra.mxu0 %v340
      %v559 = vpop.f32.mrf.mxu0
      %v560 = vadd.f32 %v234, %v559
      %v561 = vpop.f32.mrf.mxu0
      %v562 = vpop.f32.mrf.mxu0
      %v563 = vadd.f32 %v234, %v562
      %v564 = vpop.f32.mrf.mxu0
      %565 = vmatprep.mubr.bf16.mxu0 %v454
      %566 = vmatmul.mubr.bf16.gmra.mxu0 %v342
      %v567 = vpop.f32.mrf.mxu0
      %v568 = vadd.f32 %v234, %v567
      %v569 = vpop.f32.mrf.mxu0
      %v570 = vpop.f32.mrf.mxu0
      %v571 = vadd.f32 %v234, %v570
      %v572 = vpop.f32.mrf.mxu0
      %573 = vmatprep.mubr.bf16.mxu0 %v457
      %574 = vmatmul.mubr.bf16.gmra.mxu0 %v344
      %v575 = vpop.f32.mrf.mxu0
      %v576 = vadd.f32 %v234, %v575
      %v577 = vpop.f32.mrf.mxu0
      %v578 = vpop.f32.mrf.mxu0
      %v579 = vadd.f32 %v234, %v578
      %v580 = vpop.f32.mrf.mxu0
      %581 = vmatprep.mubr.bf16.mxu0 %v460
      %582 = vmatmul.mubr.bf16.gmra.mxu0 %v346
      %v583 = vpop.f32.mrf.mxu0
      %v584 = vadd.f32 %v234, %v583
      %v585 = vpop.f32.mrf.mxu0
      %v586 = vpop.f32.mrf.mxu0
      %v587 = vadd.f32 %v234, %v586
      %v588 = vpop.f32.mrf.mxu0
      %589 = vmatprep.mubr.bf16.mxu0 %v463
      %590 = vmatmul.mubr.bf16.gmra.mxu0 %v348
      %v591 = vpop.f32.mrf.mxu0
      %v592 = vadd.f32 %v234, %v591
      %v593 = vpop.f32.mrf.mxu0
      %v594 = vpop.f32.mrf.mxu0
      %v595 = vadd.f32 %v234, %v594
      %v596 = vpop.f32.mrf.mxu0
      %597 = vmatprep.mubr.bf16.mxu0 %v466
      %598 = vmatmul.mubr.bf16.gmra.mxu0 %v350
      %v599 = vpop.f32.mrf.mxu0
      %v600 = vadd.f32 %v234, %v599
      %v601 = vpop.f32.mrf.mxu0
      %v602 = vpop.f32.mrf.mxu0
      %v603 = vadd.f32 %v234, %v602
      %v604 = vpop.f32.mrf.mxu0
      %605 = vmatprep.mubr.bf16.mxu0 %v469
      %606 = vmatmul.mubr.bf16.gmra.mxu0 %v352
      %v607 = vpop.f32.mrf.mxu0
      %v608 = vadd.f32 %v234, %v607
      %v609 = vpop.f32.mrf.mxu0
      %v610 = vpop.f32.mrf.mxu0
      %v611 = vadd.f32 %v234, %v610
      %v612 = vpop.f32.mrf.mxu0
      %613 = vmatprep.mubr.bf16.mxu0 %v472
      %614 = vmatmul.mubr.bf16.gmra.mxu0 %v354
      %v615 = vpop.f32.mrf.mxu0
      %v616 = vadd.f32 %v234, %v615
      %v617 = vpop.f32.mrf.mxu0
      %v618 = vpop.f32.mrf.mxu0
      %v619 = vadd.f32 %v234, %v618
      %v620 = vpop.f32.mrf.mxu0
      %621 = vmatprep.mubr.bf16.mxu0 %v475
      %622 = vmatmul.mubr.bf16.gmra.mxu0 %v356
      %v623 = vpop.f32.mrf.mxu0
      %v624 = vadd.f32 %v234, %v623
      %v625 = vpop.f32.mrf.mxu0
      %v626 = vpop.f32.mrf.mxu0
      %v627 = vadd.f32 %v234, %v626
      %v628 = vpop.f32.mrf.mxu0
      %629 = vmatprep.mubr.bf16.mxu0 %v478
      %630 = vmatmul.mubr.bf16.gmra.mxu0 %v358
      %v631 = vpop.f32.mrf.mxu0
      %v632 = vadd.f32 %v234, %v631
      %v633 = vpop.f32.mrf.mxu0
      %v634 = vpop.f32.mrf.mxu0
      %v635 = vadd.f32 %v234, %v634
      %v636 = vpop.f32.mrf.mxu0
      %637 = vmatprep.mubr.bf16.mxu0 %v481
      %638 = vmatmul.mubr.bf16.gmra.mxu0 %v360
      %v639 = vpop.f32.mrf.mxu0
      %v640 = vadd.f32 %v234, %v639
      %v641 = vpop.f32.mrf.mxu0
      %v642 = vpop.f32.mrf.mxu0
      %v643 = vadd.f32 %v234, %v642
      %v644 = vpop.f32.mrf.mxu0
      %645 = vmatprep.mubr.bf16.mxu0 %v484
      %646 = vmatmul.mubr.bf16.gmra.mxu0 %v362
      %v647 = vpop.f32.mrf.mxu0
      %v648 = vadd.f32 %v234, %v647
      %v649 = vpop.f32.mrf.mxu0
      %v650 = vpop.f32.mrf.mxu0
      %v651 = vadd.f32 %v234, %v650
      %v652 = vpop.f32.mrf.mxu0
      %653 = vdwg.mxu0
      %vm654 = vcmask 261120
      %655 = vst.msk [vmem:[%s175] sm:$0xff] %vm654, %v528
      %656 = vst.msk [vmem:[%s175 + $0x8] sm:$0xff] %vm654, %v531
      %657 = vst.msk [vmem:[%s175 + $0x10] sm:$0xff] %vm654, %v536
      %658 = vst.msk [vmem:[%s175 + $0x18] sm:$0xff] %vm654, %v539
      %659 = vst.msk [vmem:[%s175 + $0x20] sm:$0xff] %vm654, %v544
      %660 = vst.msk [vmem:[%s175 + $0x28] sm:$0xff] %vm654, %v547
      %661 = vst.msk [vmem:[%s175 + $0x30] sm:$0xff] %vm654, %v552
      %662 = vst.msk [vmem:[%s175 + $0x38] sm:$0xff] %vm654, %v555
      %663 = vst.msk [vmem:[%s175 + $0x40] sm:$0xff] %vm654, %v560
      %664 = vst.msk [vmem:[%s175 + $0x48] sm:$0xff] %vm654, %v563
      %665 = vst.msk [vmem:[%s175 + $0x50] sm:$0xff] %vm654, %v568
      %666 = vst.msk [vmem:[%s175 + $0x58] sm:$0xff] %vm654, %v571
      %667 = vst.msk [vmem:[%s175 + $0x60] sm:$0xff] %vm654, %v576
      %668 = vst.msk [vmem:[%s175 + $0x68] sm:$0xff] %vm654, %v579
      %669 = vst.msk [vmem:[%s175 + $0x70] sm:$0xff] %vm654, %v584
      %670 = vst.msk [vmem:[%s175 + $0x78] sm:$0xff] %vm654, %v587
      %671 = vst.msk [vmem:[%s175 + $0x80] sm:$0xff] %vm654, %v592
      %672 = vst.msk [vmem:[%s175 + $0x88] sm:$0xff] %vm654, %v595
      %673 = vst.msk [vmem:[%s175 + $0x90] sm:$0xff] %vm654, %v600
      %674 = vst.msk [vmem:[%s175 + $0x98] sm:$0xff] %vm654, %v603
      %675 = vst.msk [vmem:[%s175 + $0xa0] sm:$0xff] %vm654, %v608
      %676 = vst.msk [vmem:[%s175 + $0xa8] sm:$0xff] %vm654, %v611
      %677 = vst.msk [vmem:[%s175 + $0xb0] sm:$0xff] %vm654, %v616
      %678 = vst.msk [vmem:[%s175 + $0xb8] sm:$0xff] %vm654, %v619
      %679 = vst.msk [vmem:[%s175 + $0xc0] sm:$0xff] %vm654, %v624
      %680 = vst.msk [vmem:[%s175 + $0xc8] sm:$0xff] %vm654, %v627
      %681 = vst.msk [vmem:[%s175 + $0xd0] sm:$0xff] %vm654, %v632
      %682 = vst.msk [vmem:[%s175 + $0xd8] sm:$0xff] %vm654, %v635
      %683 = vst.msk [vmem:[%s175 + $0xe0] sm:$0xff] %vm654, %v640
      %684 = vst.msk [vmem:[%s175 + $0xe8] sm:$0xff] %vm654, %v643
      %685 = vst.msk [vmem:[%s175 + $0xf0] sm:$0xff] %vm654, %v648
      %686 = vst.msk [vmem:[%s175 + $0xf8] sm:$0xff] %vm654, %v651
      %s687 = smul.u32 32, %s14
      %p688 = scmp.lt.s32.totalorder %s687, 63
      %s689 = scalar_select %p688, %s687, 63
      %s690 = smul.addr %s689, 8
      %s691 = scalar_lea.vmem %s3, %s690
      // Predicated region
      $region33: #{patchifier_forward.36} parent=31 // pred_check
        %p692 = pneg %p100
      $region34: #{patchifier_forward.36} parent=31 // pred_check_branch
        %694 = sbr.rel (%p692) target = $region36
      $region35: #{patchifier_forward.36} parent=31 // pred_region
        %s695 = smul.u32 32, %s14
      $region36: #{patchifier_forward.36} parent=31 // pred_fallthru
        _
    $region32: #{patchifier_forward.36} parent=5 // pred_fallthru
      _
    %p696 = scmp.le.s32.totalorder 2, %s9
    // Predicated region
    $region37: #{patchifier_forward.36} parent=5 // pred_check
      %p697 = pneg %p696
    $region38: #{patchifier_forward.36} parent=5 // pred_check_branch
      %699 = sbr.rel (%p697) target = $region40
    $region39: #{patchifier_forward.36} parent=5 // pred_region
      %s700 = ssub.s32 %s9, 2
      // Predicated region
      $region41: #{patchifier_forward.36} parent=39 // pred_check
        %p701 = pneg %p106
      $region42: #{patchifier_forward.36} parent=39 // pred_check_branch
        %703 = sbr.rel (%p701) target = $region44
      $region43: #{patchifier_forward.36} parent=39 // pred_region
        %s704 = smul.u32 32, %s15
        %p705 = scmp.lt.s32.totalorder %s704, 63
        %s706 = scalar_select %p705, %s704, 63
        %s707 = smul.addr %s706, 8
        %s708 = scalar_lea.vmem %s3, %s707
      $region44: #{patchifier_forward.36} parent=39 // pred_fallthru
        _
    $region40: #{patchifier_forward.36} parent=5 // pred_fallthru
      _
  $region6: #{patchifier_forward.36} parent=0 // loop_footer
    %s13 = sadd.s32 1, %s9
  $region7: #{patchifier_forward.36} parent=0 // loop_footer_branch
    %8 = sbr.rel target = $region3
  $region8: #{patchifier_forward.36} parent=0 // loop_exit
    _

// kernel: patchifier_forward.38
$region0: #{patchifier_forward.38}
  #allocation0 [shape = 'u32[]', space=smem, size = 0x4, offset = 0x4, fixed_abs, tag = 'smem constant byte address 0x4 - core index']
  #allocation1 [shape = 'u32[144,128]{1,0:T(1,128)}', space=vmem, size = 0x12000, scoped, tag = 'internal scratch']
  %s0 = inlined_call_operand.vmem [shape: bf16[512,288], index: 0, kind: input, shape index: {}]
  %s1 = inlined_call_operand.vmem [shape: bf16[288,32], index: 1, kind: input, shape index: {}]
  %s2 = inlined_call_operand.vmem [shape: f32[1,32], index: 2, kind: input, shape index: {}]
  %s3 = inlined_call_operand.vmem [shape: f32[512,32], index: 3, kind: output, shape index: {}]
  %s4 = sld [smem:[#allocation0]]
  $region45: #{patchifier_forward.38} parent=0
    _
  %s6 = ssub.s32 1, %s4
  %s7 = scalar_select 0, %s6, %s4
  loop: start=0, step=1, limit=4
  $region2: #{patchifier_forward.38} parent=0 // loop_pre_header
    _
  $region3: #{patchifier_forward.38} parent=0 // loop_header
    %s9 = sphi 0, %s13
    %p10 = scmp.ge.s32.totalorder %s9, 4
    %s19 = sphi 0, %s21
    %s22 = sphi 0, %s19
    %s23 = sphi 0, %s22
    %s39 = sphi 0, %s23
    %s43 = sphi 0, %s43
    %s45 = sphi 0, %s43
    %s46 = sphi 0, %s45
    %s60 = sphi 0, %s46
    %s64 = sphi 0, %s64
    %s66 = sphi 0, %s64
    %s67 = sphi 0, %s66
    %s81 = sphi 0, %s67
    %s87 = sphi 0, %s89
    %s90 = sphi 0, %s87
    %s91 = sphi 0, %s90
    %s107 = sphi 0, %s91
  $region4: #{patchifier_forward.38} parent=0 // loop_header_branch
    %12 = sbr.rel (%p10) target = $region8
  $region5: #{patchifier_forward.38} parent=0 // loop_body
    %s14 = ssub.s32 %s9, 1
    %s15 = ssub.s32 %s9, 2
    %s16 = sadd.s32 %s9, 1
    %s17 = ssub.s32 %s9, %s16
    %p18 = scmp.eq.s32.totalorder %s17, 0
    %s20 = sadd.s32 %s19, 1
    %s21 = scalar_select %p18, %s19, %s20
    %p24 = pneg %p18
    %p25 = scmp.eq.s32.totalorder %s9, 1
    %p26 = por %p24, %p25
    %p27 = scmp.ne.s32.totalorder %s19, %s22
    %p28 = scmp.eq.s32.totalorder %s9, 0
    %p29 = por %p27, %p28
    %p30 = scmp.ne.s32.totalorder %s19, %s22
    %p31 = scmp.eq.s32.totalorder %s14, 1
    %p32 = por %p30, %p31
    %p33 = scmp.ne.s32.totalorder %s22, %s23
    %p34 = scmp.eq.s32.totalorder %s14, 0
    %p35 = por %p33, %p34
    %p36 = scmp.ne.s32.totalorder %s22, %s23
    %p37 = scmp.eq.s32.totalorder %s15, 1
    %p38 = por %p36, %p37
    %p40 = scmp.ne.s32.totalorder %s23, %s39
    %p41 = scmp.eq.s32.totalorder %s15, 0
    %p42 = por %p40, %p41
    %s44 = sadd.s32 %s43, 1
    %p47 = scmp.eq.s32.totalorder %s9, 1
    %p48 = scmp.ne.s32.totalorder %s43, %s45
    %p49 = scmp.eq.s32.totalorder %s9, 0
    %p50 = por %p48, %p49
    %p51 = scmp.ne.s32.totalorder %s43, %s45
    %p52 = scmp.eq.s32.totalorder %s14, 1
    %p53 = por %p51, %p52
    %p54 = scmp.ne.s32.totalorder %s45, %s46
    %p55 = scmp.eq.s32.totalorder %s14, 0
    %p56 = por %p54, %p55
    %p57 = scmp.ne.s32.totalorder %s45, %s46
    %p58 = scmp.eq.s32.totalorder %s15, 1
    %p59 = por %p57, %p58
    %p61 = scmp.ne.s32.totalorder %s46, %s60
    %p62 = scmp.eq.s32.totalorder %s15, 0
    %p63 = por %p61, %p62
    %s65 = sadd.s32 %s64, 1
    %p68 = scmp.eq.s32.totalorder %s9, 1
    %p69 = scmp.ne.s32.totalorder %s64, %s66
    %p70 = scmp.eq.s32.totalorder %s9, 0
    %p71 = por %p69, %p70
    %p72 = scmp.ne.s32.totalorder %s64, %s66
    %p73 = scmp.eq.s32.totalorder %s14, 1
    %p74 = por %p72, %p73
    %p75 = scmp.ne.s32.totalorder %s66, %s67
    %p76 = scmp.eq.s32.totalorder %s14, 0
    %p77 = por %p75, %p76
    %p78 = scmp.ne.s32.totalorder %s66, %s67
    %p79 = scmp.eq.s32.totalorder %s15, 1
    %p80 = por %p78, %p79
    %p82 = scmp.ne.s32.totalorder %s67, %s81
    %p83 = scmp.eq.s32.totalorder %s15, 0
    %p84 = por %p82, %p83
    %s85 = ssub.s32 %s9, %s16
    %p86 = scmp.eq.s32.totalorder %s85, 0
    %s88 = sadd.s32 %s87, 1
    %s89 = scalar_select %p86, %s87, %s88
    %p92 = pneg %p86
    %p93 = scmp.eq.s32.totalorder %s9, 1
    %p94 = por %p92, %p93
    %p95 = scmp.ne.s32.totalorder %s87, %s90
    %p96 = scmp.eq.s32.totalorder %s9, 0
    %p97 = por %p95, %p96
    %p98 = scmp.ne.s32.totalorder %s87, %s90
    %p99 = scmp.eq.s32.totalorder %s14, 1
    %p100 = por %p98, %p99
    %p101 = scmp.ne.s32.totalorder %s90, %s91
    %p102 = scmp.eq.s32.totalorder %s14, 0
    %p103 = por %p101, %p102
    %p104 = scmp.ne.s32.totalorder %s90, %s91
    %p105 = scmp.eq.s32.totalorder %s15, 1
    %p106 = por %p104, %p105
    %p108 = scmp.ne.s32.totalorder %s91, %s107
    %p109 = scmp.eq.s32.totalorder %s15, 0
    %p110 = por %p108, %p109
    %p111 = scmp.le.s32.totalorder 1, %s9
    %p112 = scmp.lt.s32.totalorder %s9, 3
    %p113 = pnand %p111, %p112
    %p114 = pneg %p113
    // Predicated region
    $region9: #{patchifier_forward.38} parent=5 // pred_check
      _
    $region10: #{patchifier_forward.38} parent=5 // pred_check_branch
      %116 = sbr.rel (%p113) target = $region12
    $region11: #{patchifier_forward.38} parent=5 // pred_region
      %s117 = ssub.s32 %s9, 1
      // Predicated region
      $region13: #{patchifier_forward.38} parent=11 // pred_check
        %p118 = pneg %p56
      $region14: #{patchifier_forward.38} parent=11 // pred_check_branch
        %120 = sbr.rel (%p118) target = $region16
      $region15: #{patchifier_forward.38} parent=11 // pred_region
        _
      $region16: #{patchifier_forward.38} parent=11 // pred_fallthru
        _
      // Predicated region
      $region17: #{patchifier_forward.38} parent=11 // pred_check
        %p121 = pneg %p77
      $region18: #{patchifier_forward.38} parent=11 // pred_check_branch
        %123 = sbr.rel (%p121) target = $region20
      $region19: #{patchifier_forward.38} parent=11 // pred_region
        _
      $region20: #{patchifier_forward.38} parent=11 // pred_fallthru
        _
    $region12: #{patchifier_forward.38} parent=5 // pred_fallthru
      _
    %p124 = scmp.lt.s32.totalorder %s9, 2
    // Predicated region
    $region21: #{patchifier_forward.38} parent=5 // pred_check
      %p125 = pneg %p124
    $region22: #{patchifier_forward.38} parent=5 // pred_check_branch
      %127 = sbr.rel (%p125) target = $region24
    $region23: #{patchifier_forward.38} parent=5 // pred_region
      // Predicated region
      $region25: #{patchifier_forward.38} parent=23 // pred_check
        %p128 = pneg %p29
      $region26: #{patchifier_forward.38} parent=23 // pred_check_branch
        %130 = sbr.rel (%p128) target = $region28
      $region27: #{patchifier_forward.38} parent=23 // pred_region
        %s131 = smul.u32 32, %s9
        %p132 = scmp.lt.s32.totalorder %s131, 63
        %s133 = scalar_select %p132, %s131, 63
        %s134 = smul.addr %s133, 3
        %s135 = smul.addr %s134, 4
        %s136 = scalar_lea.vmem %s0, %s135
        %s137 = smul.u32 32, %s9
      $region28: #{patchifier_forward.38} parent=23 // pred_fallthru
        _
    $region24: #{patchifier_forward.38} parent=5 // pred_fallthru
      _
    %p138 = scmp.le.s32.totalorder 1, %s9
    %p139 = scmp.lt.s32.totalorder %s9, 3
    %p140 = pnand %p138, %p139
    %p141 = pneg %p140
    // Predicated region
    $region29: #{patchifier_forward.38} parent=5 // pred_check
      _
    $region30: #{patchifier_forward.38} parent=5 // pred_check_branch
      %143 = sbr.rel (%p140) target = $region32
    $region31: #{patchifier_forward.38} parent=5 // pred_region
      %s144 = ssub.s32 %s9, 1
      %s145 = smul.u32 32, %s14
      %p146 = scmp.lt.s32.totalorder %s145, 63
      %s147 = scalar_select %p146, %s145, 63
      %s148 = smul.addr %s147, 3
      %s149 = smul.addr %s148, 4
      %s150 = scalar_lea.vmem %s0, %s149
      %p151 = pneg %p35
      %p152 = pneg %p32
      %p153 = pneg %p56
      %p154 = pneg %p53
      %p155 = pneg %p77
      %p156 = pneg %p74
      %p157 = pneg %p103
      %p158 = pneg %p100
      %s159 = smul.u32 32, %s14
      %p160 = scmp.lt.s32.totalorder %s159, 63
      %s161 = scalar_select %p160, %s159, 63
      %s162 = smul.addr %s161, 8
      %s163 = scalar_lea.vmem %s3, %s162
      %s164 = smul.u32 32, %s14
      %p165 = scmp.lt.s32.totalorder %s164, 63
      %s166 = scalar_select %p165, %s164, 63
      %s167 = smul.addr %s166, 3
      %s168 = smul.addr %s167, 4
      %s169 = scalar_lea.vmem %s0, %s168
      %s170 = smul.u32 32, %s14
      %s171 = smul.u32 32, %s14
      %p172 = scmp.lt.s32.totalorder %s171, 63
      %s173 = scalar_select %p172, %s171, 63
      %s174 = smul.addr %s173, 8
      %s175 = scalar_lea.vmem %s3, %s174
      %s176 = smul.u32 32, %s14
      %v178 = vld [vmem:[%s169] sm:$0xff]
      %v179 = vld [vmem:[%s169 + $0x8] sm:$0xf]
      %v180 = vld [vmem:[%s169 + $0xc] sm:$0xff]
      %v181 = vld [vmem:[%s169 + $0x14] sm:$0xf]
      %v182 = vld [vmem:[%s169 + $0x18] sm:$0xff]
      %v183 = vld [vmem:[%s169 + $0x20] sm:$0xf]
      %v184 = vld [vmem:[%s169 + $0x24] sm:$0xff]
      %v185 = vld [vmem:[%s169 + $0x2c] sm:$0xf]
      %v186 = vld [vmem:[%s169 + $0x30] sm:$0xff]
      %v187 = vld [vmem:[%s169 + $0x38] sm:$0xf]
      %v188 = vld [vmem:[%s169 + $0x3c] sm:$0xff]
      %v189 = vld [vmem:[%s169 + $0x44] sm:$0xf]
      %v190 = vld [vmem:[%s169 + $0x48] sm:$0xff]
      %v191 = vld [vmem:[%s169 + $0x50] sm:$0xf]
      %v192 = vld [vmem:[%s169 + $0x54] sm:$0xff]
      %v193 = vld [vmem:[%s169 + $0x5c] sm:$0xf]
      %v194 = vld [vmem:[%s169 + $0x60] sm:$0xff]
      %v195 = vld [vmem:[%s169 + $0x68] sm:$0xf]
      %v196 = vld [vmem:[%s169 + $0x6c] sm:$0xff]
      %v197 = vld [vmem:[%s169 + $0x74] sm:$0xf]
      %v198 = vld [vmem:[%s169 + $0x78] sm:$0xff]
      %v199 = vld [vmem:[%s169 + $0x80] sm:$0xf]
      %v200 = vld [vmem:[%s169 + $0x84] sm:$0xff]
      %v201 = vld [vmem:[%s169 + $0x8c] sm:$0xf]
      %v202 = vld [vmem:[%s169 + $0x90] sm:$0xff]
      %v203 = vld [vmem:[%s169 + $0x98] sm:$0xf]
      %v204 = vld [vmem:[%s169 + $0x9c] sm:$0xff]
      %v205 = vld [vmem:[%s169 + $0xa4] sm:$0xf]
      %v206 = vld [vmem:[%s169 + $0xa8] sm:$0xff]
      %v207 = vld [vmem:[%s169 + $0xb0] sm:$0xf]
      %v208 = vld [vmem:[%s169 + $0xb4] sm:$0xff]
      %v209 = vld [vmem:[%s169 + $0xbc] sm:$0xf]
      %v210 = vld [vmem:[%s169 + $0xc0] sm:$0xff]
      %v211 = vld [vmem:[%s169 + $0xc8] sm:$0xf]
      %v212 = vld [vmem:[%s169 + $0xcc] sm:$0xff]
      %v213 = vld [vmem:[%s169 + $0xd4] sm:$0xf]
      %v214 = vld [vmem:[%s169 + $0xd8] sm:$0xff]
      %v215 = vld [vmem:[%s169 + $0xe0] sm:$0xf]
      %v216 = vld [vmem:[%s169 + $0xe4] sm:$0xff]
      %v217 = vld [vmem:[%s169 + $0xec] sm:$0xf]
      %v218 = vld [vmem:[%s169 + $0xf0] sm:$0xff]
      %v219 = vld [vmem:[%s169 + $0xf8] sm:$0xf]
      %v220 = vld [vmem:[%s169 + $0xfc] sm:$0xff]
      %v221 = vld [vmem:[%s169 + $0x104] sm:$0xf]
      %v222 = vld [vmem:[%s169 + $0x108] sm:$0xff]
      %v223 = vld [vmem:[%s169 + $0x110] sm:$0xf]
      %v224 = vld [vmem:[%s169 + $0x114] sm:$0xff]
      %v225 = vld [vmem:[%s169 + $0x11c] sm:$0xf]
      %v226 = vld [vmem:[%s169 + $0x120] sm:$0xff]
      %v227 = vld [vmem:[%s169 + $0x128] sm:$0xf]
      %v228 = vld [vmem:[%s169 + $0x12c] sm:$0xff]
      %v229 = vld [vmem:[%s169 + $0x134] sm:$0xf]
      %v230 = vld [vmem:[%s169 + $0x138] sm:$0xff]
      %v231 = vld [vmem:[%s169 + $0x140] sm:$0xf]
      %v232 = vld [vmem:[%s169 + $0x144] sm:$0xff]
      %v233 = vld [vmem:[%s169 + $0x14c] sm:$0xf]
      %v234 = vld [vmem:[%s169 + $0x150] sm:$0xff]
      %v235 = vld [vmem:[%s169 + $0x158] sm:$0xf]
      %v236 = vld [vmem:[%s169 + $0x15c] sm:$0xff]
      %v237 = vld [vmem:[%s169 + $0x164] sm:$0xf]
      %v238 = vld [vmem:[%s169 + $0x168] sm:$0xff]
      %v239 = vld [vmem:[%s169 + $0x170] sm:$0xf]
      %v240 = vld [vmem:[%s169 + $0x174] sm:$0xff]
      %v241 = vld [vmem:[%s169 + $0x17c] sm:$0xf]
      %v242 = vld [vmem:[%s1] sm:$0xf]
      %v243 = vld [vmem:[%s1 + $0x4] sm:$0xf]
      %v244 = vld [vmem:[%s1 + $0x8] sm:$0xf]
      %v245 = vld [vmem:[%s1 + $0xc] sm:$0xf]
      %v246 = vld [vmem:[%s1 + $0x10] sm:$0xf]
      %v247 = vld [vmem:[%s1 + $0x14] sm:$0xf]
      %v248 = vld [vmem:[%s1 + $0x18] sm:$0xf]
      %v249 = vld [vmem:[%s1 + $0x1c] sm:$0xf]
      %v250 = vld [vmem:[%s1 + $0x20] sm:$0xf]
      %v251 = vld [vmem:[%s1 + $0x24] sm:$0xf]
      %v252 = vld [vmem:[%s1 + $0x28] sm:$0xf]
      %v253 = vld [vmem:[%s1 + $0x2c] sm:$0xf]
      %v254 = vld [vmem:[%s1 + $0x30] sm:$0xf]
      %v255 = vld [vmem:[%s1 + $0x34] sm:$0xf]
      %v256 = vld [vmem:[%s1 + $0x38] sm:$0xf]
      %v257 = vld [vmem:[%s1 + $0x3c] sm:$0xf]
      %v258 = vld [vmem:[%s1 + $0x40] sm:$0xf]
      %v259 = vld [vmem:[%s1 + $0x44] sm:$0xf]
      %v260 = vld [vmem:[%s1 + $0x48] sm:$0xf]
      %v261 = vld [vmem:[%s1 + $0x4c] sm:$0xf]
      %v262 = vld [vmem:[%s1 + $0x50] sm:$0xf]
      %v263 = vld [vmem:[%s1 + $0x54] sm:$0xf]
      %v264 = vld [vmem:[%s1 + $0x58] sm:$0xf]
      %v265 = vld [vmem:[%s1 + $0x5c] sm:$0xf]
      %v266 = vld [vmem:[%s1 + $0x60] sm:$0xf]
      %v267 = vld [vmem:[%s1 + $0x64] sm:$0xf]
      %v268 = vld [vmem:[%s1 + $0x68] sm:$0xf]
      %v269 = vld [vmem:[%s1 + $0x6c] sm:$0xf]
      %v270 = vld [vmem:[%s1 + $0x70] sm:$0xf]
      %v271 = vld [vmem:[%s1 + $0x74] sm:$0xf]
      %v272 = vld [vmem:[%s1 + $0x78] sm:$0xf]
      %v273 = vld [vmem:[%s1 + $0x7c] sm:$0xf]
      %v274 = vld [vmem:[%s1 + $0x80] sm:$0xf]
      %v275 = vld [vmem:[%s1 + $0x84] sm:$0xf]
      %v276 = vld [vmem:[%s1 + $0x88] sm:$0xf]
      %v277 = vld [vmem:[%s1 + $0x8c] sm:$0xf]
      %v278 = vld [vmem:[%s2] sm:$0x1]
      %v280 = vlaneseq
      %v281 = vshrl.u32 %v280, 7
      %v282 = vsub.s32 0, %v281
      %v283 = vrot.slane %v278, %v282
      %v349 = vunpack.c.l.b16 %v178
      %v350 = vunpack.c.h.b16 %v178
      %v351 = vunpack.c.l.b16 %v179
      %v352 = vunpack.c.l.b16 %v180
      %v353 = vunpack.c.h.b16 %v180
      %v354 = vunpack.c.l.b16 %v181
      %v355 = vunpack.c.l.b16 %v182
      %v356 = vunpack.c.h.b16 %v182
      %v357 = vunpack.c.l.b16 %v183
      %v358 = vunpack.c.l.b16 %v184
      %v359 = vunpack.c.h.b16 %v184
      %v360 = vunpack.c.l.b16 %v185
      %v361 = vunpack.c.l.b16 %v186
      %v362 = vunpack.c.h.b16 %v186
      %v363 = vunpack.c.l.b16 %v187
      %v364 = vunpack.c.l.b16 %v188
      %v365 = vunpack.c.h.b16 %v188
      %v366 = vunpack.c.l.b16 %v189
      %v367 = vunpack.c.l.b16 %v190
      %v368 = vunpack.c.h.b16 %v190
      %v369 = vunpack.c.l.b16 %v191
      %v370 = vunpack.c.l.b16 %v192
      %v371 = vunpack.c.h.b16 %v192
      %v372 = vunpack.c.l.b16 %v193
      %v373 = vunpack.c.l.b16 %v194
      %v374 = vunpack.c.h.b16 %v194
      %v375 = vunpack.c.l.b16 %v195
      %v376 = vunpack.c.l.b16 %v196
      %v377 = vunpack.c.h.b16 %v196
      %v378 = vunpack.c.l.b16 %v197
      %v379 = vunpack.c.l.b16 %v198
      %v380 = vunpack.c.h.b16 %v198
      %v381 = vunpack.c.l.b16 %v199
      %v382 = vunpack.c.l.b16 %v200
      %v383 = vunpack.c.h.b16 %v200
      %v384 = vunpack.c.l.b16 %v201
      %v385 = vunpack.c.l.b16 %v202
      %v386 = vunpack.c.h.b16 %v202
      %v387 = vunpack.c.l.b16 %v203
      %v388 = vunpack.c.l.b16 %v204
      %v389 = vunpack.c.h.b16 %v204
      %v390 = vunpack.c.l.b16 %v205
      %v391 = vunpack.c.l.b16 %v206
      %v392 = vunpack.c.h.b16 %v206
      %v393 = vunpack.c.l.b16 %v207
      %v394 = vunpack.c.l.b16 %v208
      %v395 = vunpack.c.h.b16 %v208
      %v396 = vunpack.c.l.b16 %v209
      %v397 = vunpack.c.l.b16 %v210
      %v398 = vunpack.c.h.b16 %v210
      %v399 = vunpack.c.l.b16 %v211
      %v400 = vunpack.c.l.b16 %v212
      %v401 = vunpack.c.h.b16 %v212
      %v402 = vunpack.c.l.b16 %v213
      %v403 = vunpack.c.l.b16 %v214
      %v404 = vunpack.c.h.b16 %v214
      %v405 = vunpack.c.l.b16 %v215
      %v406 = vunpack.c.l.b16 %v216
      %v407 = vunpack.c.h.b16 %v216
      %v408 = vunpack.c.l.b16 %v217
      %v409 = vunpack.c.l.b16 %v218
      %v410 = vunpack.c.h.b16 %v218
      %v411 = vunpack.c.l.b16 %v219
      %v412 = vunpack.c.l.b16 %v220
      %v413 = vunpack.c.h.b16 %v220
      %v414 = vunpack.c.l.b16 %v221
      %v415 = vunpack.c.l.b16 %v222
      %v416 = vunpack.c.h.b16 %v222
      %v417 = vunpack.c.l.b16 %v223
      %v418 = vunpack.c.l.b16 %v224
      %v419 = vunpack.c.h.b16 %v224
      %v420 = vunpack.c.l.b16 %v225
      %v421 = vunpack.c.l.b16 %v226
      %v422 = vunpack.c.h.b16 %v226
      %v423 = vunpack.c.l.b16 %v227
      %v424 = vunpack.c.l.b16 %v228
      %v425 = vunpack.c.h.b16 %v228
      %v426 = vunpack.c.l.b16 %v229
      %v427 = vunpack.c.l.b16 %v230
      %v428 = vunpack.c.h.b16 %v230
      %v429 = vunpack.c.l.b16 %v231
      %v430 = vunpack.c.l.b16 %v232
      %v431 = vunpack.c.h.b16 %v232
      %v432 = vunpack.c.l.b16 %v233
      %v433 = vunpack.c.l.b16 %v234
      %v434 = vunpack.c.h.b16 %v234
      %v435 = vunpack.c.l.b16 %v235
      %v436 = vunpack.c.l.b16 %v236
      %v437 = vunpack.c.h.b16 %v236
      %v438 = vunpack.c.l.b16 %v237
      %v439 = vunpack.c.l.b16 %v238
      %v440 = vunpack.c.h.b16 %v238
      %v441 = vunpack.c.l.b16 %v239
      %v442 = vunpack.c.l.b16 %v240
      %v443 = vunpack.c.h.b16 %v240
      %v444 = vunpack.c.l.b16 %v241
      %v445 = vpack.c.b16 %v352, %v349
      %v446 = vpack.c.b16 %v353, %v350
      %v447 = vpack.c.b16 %v354, %v351
      %v448 = vpack.c.b16 %v358, %v355
      %v449 = vpack.c.b16 %v359, %v356
      %v450 = vpack.c.b16 %v360, %v357
      %v451 = vpack.c.b16 %v364, %v361
      %v452 = vpack.c.b16 %v365, %v362
      %v453 = vpack.c.b16 %v366, %v363
      %v454 = vpack.c.b16 %v370, %v367
      %v455 = vpack.c.b16 %v371, %v368
      %v456 = vpack.c.b16 %v372, %v369
      %v457 = vpack.c.b16 %v376, %v373
      %v458 = vpack.c.b16 %v377, %v374
      %v459 = vpack.c.b16 %v378, %v375
      %v460 = vpack.c.b16 %v382, %v379
      %v461 = vpack.c.b16 %v383, %v380
      %v462 = vpack.c.b16 %v384, %v381
      %v463 = vpack.c.b16 %v388, %v385
      %v464 = vpack.c.b16 %v389, %v386
      %v465 = vpack.c.b16 %v390, %v387
      %v466 = vpack.c.b16 %v394, %v391
      %v467 = vpack.c.b16 %v395, %v392
      %v468 = vpack.c.b16 %v396, %v393
      %v469 = vpack.c.b16 %v400, %v397
      %v470 = vpack.c.b16 %v401, %v398
      %v471 = vpack.c.b16 %v402, %v399
      %v472 = vpack.c.b16 %v406, %v403
      %v473 = vpack.c.b16 %v407, %v404
      %v474 = vpack.c.b16 %v408, %v405
      %v475 = vpack.c.b16 %v412, %v409
      %v476 = vpack.c.b16 %v413, %v410
      %v477 = vpack.c.b16 %v414, %v411
      %v478 = vpack.c.b16 %v418, %v415
      %v479 = vpack.c.b16 %v419, %v416
      %v480 = vpack.c.b16 %v420, %v417
      %v481 = vpack.c.b16 %v424, %v421
      %v482 = vpack.c.b16 %v425, %v422
      %v483 = vpack.c.b16 %v426, %v423
      %v484 = vpack.c.b16 %v430, %v427
      %v485 = vpack.c.b16 %v431, %v428
      %v486 = vpack.c.b16 %v432, %v429
      %v487 = vpack.c.b16 %v436, %v433
      %v488 = vpack.c.b16 %v437, %v434
      %v489 = vpack.c.b16 %v438, %v435
      %v490 = vpack.c.b16 %v442, %v439
      %v491 = vpack.c.b16 %v443, %v440
      %v492 = vpack.c.b16 %v444, %v441
      %v561 = vunpack.c.l.b16 %v242
      %v562 = vunpack.c.l.b16 %v243
      %v563 = vunpack.c.l.b16 %v244
      %v564 = vunpack.c.l.b16 %v245
      %v565 = vunpack.c.l.b16 %v246
      %v566 = vunpack.c.l.b16 %v247
      %v567 = vunpack.c.l.b16 %v248
      %v568 = vunpack.c.l.b16 %v249
      %v569 = vunpack.c.l.b16 %v250
      %v570 = vunpack.c.l.b16 %v251
      %v571 = vunpack.c.l.b16 %v252
      %v572 = vunpack.c.l.b16 %v253
      %v573 = vunpack.c.l.b16 %v254
      %v574 = vunpack.c.l.b16 %v255
      %v575 = vunpack.c.l.b16 %v256
      %v576 = vunpack.c.l.b16 %v257
      %v577 = vunpack.c.l.b16 %v258
      %v578 = vunpack.c.l.b16 %v259
      %v579 = vunpack.c.l.b16 %v260
      %v580 = vunpack.c.l.b16 %v261
      %v581 = vunpack.c.l.b16 %v262
      %v582 = vunpack.c.l.b16 %v263
      %v583 = vunpack.c.l.b16 %v264
      %v584 = vunpack.c.l.b16 %v265
      %v585 = vunpack.c.l.b16 %v266
      %v586 = vunpack.c.l.b16 %v267
      %v587 = vunpack.c.l.b16 %v268
      %v588 = vunpack.c.l.b16 %v269
      %v589 = vunpack.c.l.b16 %v270
      %v590 = vunpack.c.l.b16 %v271
      %v591 = vunpack.c.l.b16 %v272
      %v592 = vunpack.c.l.b16 %v273
      %v593 = vunpack.c.l.b16 %v274
      %v594 = vunpack.c.l.b16 %v275
      %v595 = vunpack.c.l.b16 %v276
      %v596 = vunpack.c.l.b16 %v277
      %v597 = vpack.c.b16 %v562, %v561
      %v598 = vpack.c.b16 %v564, %v563
      %v599 = vpack.c.b16 %v566, %v565
      %v600 = vpack.c.b16 %v568, %v567
      %v601 = vpack.c.b16 %v570, %v569
      %v602 = vpack.c.b16 %v572, %v571
      %v603 = vpack.c.b16 %v574, %v573
      %v604 = vpack.c.b16 %v576, %v575
      %v605 = vpack.c.b16 %v578, %v577
      %v606 = vpack.c.b16 %v580, %v579
      %v607 = vpack.c.b16 %v582, %v581
      %v608 = vpack.c.b16 %v584, %v583
      %v609 = vpack.c.b16 %v586, %v585
      %v610 = vpack.c.b16 %v588, %v587
      %v611 = vpack.c.b16 %v590, %v589
      %v612 = vpack.c.b16 %v592, %v591
      %v613 = vpack.c.b16 %v594, %v593
      %v614 = vpack.c.b16 %v596, %v595
      %vm633 = vcmask 261120
      %v635 = vsel %vm633, %v447, 0
      %v638 = vsel %vm633, %v450, 0
      %v641 = vsel %vm633, %v453, 0
      %v644 = vsel %vm633, %v456, 0
      %v647 = vsel %vm633, %v459, 0
      %v650 = vsel %vm633, %v462, 0
      %v653 = vsel %vm633, %v465, 0
      %v656 = vsel %vm633, %v468, 0
      %v659 = vsel %vm633, %v471, 0
      %v662 = vsel %vm633, %v474, 0
      %v665 = vsel %vm633, %v477, 0
      %v668 = vsel %vm633, %v480, 0
      %v671 = vsel %vm633, %v483, 0
      %v674 = vsel %vm633, %v486, 0
      %v677 = vsel %vm633, %v489, 0
      %v680 = vsel %vm633, %v492, 0
      %682 = vmatprep.subr.bf16.mxu0 0
      %683 = vmatpush1.bf16.msra.mxu0 %v604
      %684 = vmatprep.subr.bf16.mxu0 0
      %685 = vmatpush1.bf16.msra.mxu0 %v603
      %686 = vmatprep.subr.bf16.mxu0 0
      %687 = vmatpush1.bf16.msra.mxu0 %v602
      %688 = vmatprep.subr.bf16.mxu0 0
      %689 = vmatpush1.bf16.msra.mxu0 %v601
      %690 = vmatprep.subr.bf16.mxu0 0
      %691 = vmatpush1.bf16.msra.mxu0 %v600
      %692 = vmatprep.subr.bf16.mxu0 0
      %693 = vmatpush1.bf16.msra.mxu0 %v599
      %694 = vmatprep.subr.bf16.mxu0 0
      %695 = vmatpush1.bf16.msra.mxu0 %v598
      %696 = vmatprep.subr.bf16.mxu0 0
      %697 = vmatpush1.bf16.msra.mxu0 %v597
      %698 = vmatprep.subr.bf16.mxu0 0
      %699 = vmatpush2.bf16.msra.mxu0 %v612
      %700 = vmatprep.subr.bf16.mxu0 0
      %701 = vmatpush2.bf16.msra.mxu0 %v611
      %702 = vmatprep.subr.bf16.mxu0 0
      %703 = vmatpush2.bf16.msra.mxu0 %v610
      %704 = vmatprep.subr.bf16.mxu0 0
      %705 = vmatpush2.bf16.msra.mxu0 %v609
      %706 = vmatprep.subr.bf16.mxu0 0
      %707 = vmatpush2.bf16.msra.mxu0 %v608
      %708 = vmatprep.subr.bf16.mxu0 0
      %709 = vmatpush2.bf16.msra.mxu0 %v607
      %710 = vmatprep.subr.bf16.mxu0 0
      %711 = vmatpush2.bf16.msra.mxu0 %v606
      %712 = vmatprep.subr.bf16.mxu0 0
      %713 = vmatpush2.bf16.msra.mxu0 %v605
      %714 = vmatprep.mubr.bf16.mxu0 %v446
      %715 = vmatmul.mubr.bf16.gmra.mxu0 %v445
      %v716 = vpop.f32.mrf.mxu0
      %v717 = vadd.f32 %v283, %v716
      %v718 = vpop.f32.mrf.mxu0
      %v719 = vpop.f32.mrf.mxu0
      %v720 = vadd.f32 %v283, %v719
      %v721 = vpop.f32.mrf.mxu0
      %722 = vmatprep.mubr.bf16.mxu0 %v449
      %723 = vmatmul.mubr.bf16.gmra.mxu0 %v448
      %v724 = vpop.f32.mrf.mxu0
      %v725 = vadd.f32 %v283, %v724
      %v726 = vpop.f32.mrf.mxu0
      %v727 = vpop.f32.mrf.mxu0
      %v728 = vadd.f32 %v283, %v727
      %v729 = vpop.f32.mrf.mxu0
      %730 = vmatprep.mubr.bf16.mxu0 %v452
      %731 = vmatmul.mubr.bf16.gmra.mxu0 %v451
      %v732 = vpop.f32.mrf.mxu0
      %v733 = vadd.f32 %v283, %v732
      %v734 = vpop.f32.mrf.mxu0
      %v735 = vpop.f32.mrf.mxu0
      %v736 = vadd.f32 %v283, %v735
      %v737 = vpop.f32.mrf.mxu0
      %738 = vmatprep.mubr.bf16.mxu0 %v455
      %739 = vmatmul.mubr.bf16.gmra.mxu0 %v454
      %v740 = vpop.f32.mrf.mxu0
      %v741 = vadd.f32 %v283, %v740
      %v742 = vpop.f32.mrf.mxu0
      %v743 = vpop.f32.mrf.mxu0
      %v744 = vadd.f32 %v283, %v743
      %v745 = vpop.f32.mrf.mxu0
      %746 = vmatprep.mubr.bf16.mxu0 %v458
      %747 = vmatmul.mubr.bf16.gmra.mxu0 %v457
      %v748 = vpop.f32.mrf.mxu0
      %v749 = vadd.f32 %v283, %v748
      %v750 = vpop.f32.mrf.mxu0
      %v751 = vpop.f32.mrf.mxu0
      %v752 = vadd.f32 %v283, %v751
      %v753 = vpop.f32.mrf.mxu0
      %754 = vmatprep.mubr.bf16.mxu0 %v461
      %755 = vmatmul.mubr.bf16.gmra.mxu0 %v460
      %v756 = vpop.f32.mrf.mxu0
      %v757 = vadd.f32 %v283, %v756
      %v758 = vpop.f32.mrf.mxu0
      %v759 = vpop.f32.mrf.mxu0
      %v760 = vadd.f32 %v283, %v759
      %v761 = vpop.f32.mrf.mxu0
      %762 = vmatprep.mubr.bf16.mxu0 %v464
      %763 = vmatmul.mubr.bf16.gmra.mxu0 %v463
      %v764 = vpop.f32.mrf.mxu0
      %v765 = vadd.f32 %v283, %v764
      %v766 = vpop.f32.mrf.mxu0
      %v767 = vpop.f32.mrf.mxu0
      %v768 = vadd.f32 %v283, %v767
      %v769 = vpop.f32.mrf.mxu0
      %770 = vmatprep.mubr.bf16.mxu0 %v467
      %771 = vmatmul.mubr.bf16.gmra.mxu0 %v466
      %v772 = vpop.f32.mrf.mxu0
      %v773 = vadd.f32 %v283, %v772
      %v774 = vpop.f32.mrf.mxu0
      %v775 = vpop.f32.mrf.mxu0
      %v776 = vadd.f32 %v283, %v775
      %v777 = vpop.f32.mrf.mxu0
      %778 = vmatprep.mubr.bf16.mxu0 %v470
      %779 = vmatmul.mubr.bf16.gmra.mxu0 %v469
      %v780 = vpop.f32.mrf.mxu0
      %v781 = vadd.f32 %v283, %v780
      %v782 = vpop.f32.mrf.mxu0
      %v783 = vpop.f32.mrf.mxu0
      %v784 = vadd.f32 %v283, %v783
      %v785 = vpop.f32.mrf.mxu0
      %786 = vmatprep.mubr.bf16.mxu0 %v473
      %787 = vmatmul.mubr.bf16.gmra.mxu0 %v472
      %v788 = vpop.f32.mrf.mxu0
      %v789 = vadd.f32 %v283, %v788
      %v790 = vpop.f32.mrf.mxu0
      %v791 = vpop.f32.mrf.mxu0
      %v792 = vadd.f32 %v283, %v791
      %v793 = vpop.f32.mrf.mxu0
      %794 = vmatprep.mubr.bf16.mxu0 %v476
      %795 = vmatmul.mubr.bf16.gmra.mxu0 %v475
      %v796 = vpop.f32.mrf.mxu0
      %v797 = vadd.f32 %v283, %v796
      %v798 = vpop.f32.mrf.mxu0
      %v799 = vpop.f32.mrf.mxu0
      %v800 = vadd.f32 %v283, %v799
      %v801 = vpop.f32.mrf.mxu0
      %802 = vmatprep.mubr.bf16.mxu0 %v479
      %803 = vmatmul.mubr.bf16.gmra.mxu0 %v478
      %v804 = vpop.f32.mrf.mxu0
      %v805 = vadd.f32 %v283, %v804
      %v806 = vpop.f32.mrf.mxu0
      %v807 = vpop.f32.mrf.mxu0
      %v808 = vadd.f32 %v283, %v807
      %v809 = vpop.f32.mrf.mxu0
      %810 = vmatprep.mubr.bf16.mxu0 %v482
      %811 = vmatmul.mubr.bf16.gmra.mxu0 %v481
      %v812 = vpop.f32.mrf.mxu0
      %v813 = vadd.f32 %v283, %v812
      %v814 = vpop.f32.mrf.mxu0
      %v815 = vpop.f32.mrf.mxu0
      %v816 = vadd.f32 %v283, %v815
      %v817 = vpop.f32.mrf.mxu0
      %818 = vmatprep.mubr.bf16.mxu0 %v485
      %819 = vmatmul.mubr.bf16.gmra.mxu0 %v484
      %v820 = vpop.f32.mrf.mxu0
      %v821 = vadd.f32 %v283, %v820
      %v822 = vpop.f32.mrf.mxu0
      %v823 = vpop.f32.mrf.mxu0
      %v824 = vadd.f32 %v283, %v823
      %v825 = vpop.f32.mrf.mxu0
      %826 = vmatprep.mubr.bf16.mxu0 %v488
      %827 = vmatmul.mubr.bf16.gmra.mxu0 %v487
      %v828 = vpop.f32.mrf.mxu0
      %v829 = vadd.f32 %v283, %v828
      %v830 = vpop.f32.mrf.mxu0
      %v831 = vpop.f32.mrf.mxu0
      %v832 = vadd.f32 %v283, %v831
      %v833 = vpop.f32.mrf.mxu0
      %834 = vmatprep.mubr.bf16.mxu0 %v491
      %835 = vmatmul.mubr.bf16.gmra.mxu0 %v490
      %v836 = vpop.f32.mrf.mxu0
      %v837 = vadd.f32 %v283, %v836
      %v838 = vpop.f32.mrf.mxu0
      %v839 = vpop.f32.mrf.mxu0
      %v840 = vadd.f32 %v283, %v839
      %v841 = vpop.f32.mrf.mxu0
      %842 = vdwg.mxu0
      %843 = vmatprep.subr.bf16.mxu0 0
      %844 = vmatpush1.bf16.msra.mxu0 0
      %845 = vmatprep.subr.bf16.mxu0 0
      %846 = vmatpush1.bf16.msra.mxu0 0
      %847 = vmatprep.subr.bf16.mxu0 0
      %848 = vmatpush1.bf16.msra.mxu0 0
      %849 = vmatprep.subr.bf16.mxu0 0
      %850 = vmatpush1.bf16.msra.mxu0 0
      %851 = vmatprep.subr.bf16.mxu0 0
      %852 = vmatpush1.bf16.msra.mxu0 0
      %853 = vmatprep.subr.bf16.mxu0 0
      %854 = vmatpush1.bf16.msra.mxu0 0
      %855 = vmatprep.subr.bf16.mxu0 0
      %856 = vmatpush1.bf16.msra.mxu0 %v614
      %857 = vmatprep.subr.bf16.mxu0 0
      %858 = vmatpush1.bf16.msra.mxu0 %v613
      %859 = vmatprep.subr.bf16.mxu0 0
      %860 = vmatpush2.bf16.msra.mxu0 0
      %861 = vmatprep.subr.bf16.mxu0 0
      %862 = vmatpush2.bf16.msra.mxu0 0
      %863 = vmatprep.subr.bf16.mxu0 0
      %864 = vmatpush2.bf16.msra.mxu0 0
      %865 = vmatprep.subr.bf16.mxu0 0
      %866 = vmatpush2.bf16.msra.mxu0 0
      %867 = vmatprep.subr.bf16.mxu0 0
      %868 = vmatpush2.bf16.msra.mxu0 0
      %869 = vmatprep.subr.bf16.mxu0 0
      %870 = vmatpush2.bf16.msra.mxu0 0
      %871 = vmatprep.subr.bf16.mxu0 0
      %872 = vmatpush2.bf16.msra.mxu0 0
      %873 = vmatprep.subr.bf16.mxu0 0
      %874 = vmatpush2.bf16.msra.mxu0 0
      %875 = vmatprep.mubr.bf16.mxu0 0
      %876 = vmatmul.mubr.bf16.gmra.mxu0 %v635
      %v877 = vpop.f32.mrf.mxu0
      %v878 = vadd.f32 %v717, %v877
      %v879 = vpop.f32.mrf.mxu0
      %v880 = vpop.f32.mrf.mxu0
      %v881 = vadd.f32 %v720, %v880
      %v882 = vpop.f32.mrf.mxu0
      %883 = vmatprep.mubr.bf16.mxu0 0
      %884 = vmatmul.mubr.bf16.gmra.mxu0 %v638
      %v885 = vpop.f32.mrf.mxu0
      %v886 = vadd.f32 %v725, %v885
      %v887 = vpop.f32.mrf.mxu0
      %v888 = vpop.f32.mrf.mxu0
      %v889 = vadd.f32 %v728, %v888
      %v890 = vpop.f32.mrf.mxu0
      %891 = vmatprep.mubr.bf16.mxu0 0
      %892 = vmatmul.mubr.bf16.gmra.mxu0 %v641
      %v893 = vpop.f32.mrf.mxu0
      %v894 = vadd.f32 %v733, %v893
      %v895 = vpop.f32.mrf.mxu0
      %v896 = vpop.f32.mrf.mxu0
      %v897 = vadd.f32 %v736, %v896
      %v898 = vpop.f32.mrf.mxu0
      %899 = vmatprep.mubr.bf16.mxu0 0
      %900 = vmatmul.mubr.bf16.gmra.mxu0 %v644
      %v901 = vpop.f32.mrf.mxu0
      %v902 = vadd.f32 %v741, %v901
      %v903 = vpop.f32.mrf.mxu0
      %v904 = vpop.f32.mrf.mxu0
      %v905 = vadd.f32 %v744, %v904
      %v906 = vpop.f32.mrf.mxu0
      %907 = vmatprep.mubr.bf16.mxu0 0
      %908 = vmatmul.mubr.bf16.gmra.mxu0 %v647
      %v909 = vpop.f32.mrf.mxu0
      %v910 = vadd.f32 %v749, %v909
      %v911 = vpop.f32.mrf.mxu0
      %v912 = vpop.f32.mrf.mxu0
      %v913 = vadd.f32 %v752, %v912
      %v914 = vpop.f32.mrf.mxu0
      %915 = vmatprep.mubr.bf16.mxu0 0
      %916 = vmatmul.mubr.bf16.gmra.mxu0 %v650
      %v917 = vpop.f32.mrf.mxu0
      %v918 = vadd.f32 %v757, %v917
      %v919 = vpop.f32.mrf.mxu0
      %v920 = vpop.f32.mrf.mxu0
      %v921 = vadd.f32 %v760, %v920
      %v922 = vpop.f32.mrf.mxu0
      %923 = vmatprep.mubr.bf16.mxu0 0
      %924 = vmatmul.mubr.bf16.gmra.mxu0 %v653
      %v925 = vpop.f32.mrf.mxu0
      %v926 = vadd.f32 %v765, %v925
      %v927 = vpop.f32.mrf.mxu0
      %v928 = vpop.f32.mrf.mxu0
      %v929 = vadd.f32 %v768, %v928
      %v930 = vpop.f32.mrf.mxu0
      %931 = vmatprep.mubr.bf16.mxu0 0
      %932 = vmatmul.mubr.bf16.gmra.mxu0 %v656
      %v933 = vpop.f32.mrf.mxu0
      %v934 = vadd.f32 %v773, %v933
      %v935 = vpop.f32.mrf.mxu0
      %v936 = vpop.f32.mrf.mxu0
      %v937 = vadd.f32 %v776, %v936
      %v938 = vpop.f32.mrf.mxu0
      %939 = vmatprep.mubr.bf16.mxu0 0
      %940 = vmatmul.mubr.bf16.gmra.mxu0 %v659
      %v941 = vpop.f32.mrf.mxu0
      %v942 = vadd.f32 %v781, %v941
      %v943 = vpop.f32.mrf.mxu0
      %v944 = vpop.f32.mrf.mxu0
      %v945 = vadd.f32 %v784, %v944
      %v946 = vpop.f32.mrf.mxu0
      %947 = vmatprep.mubr.bf16.mxu0 0
      %948 = vmatmul.mubr.bf16.gmra.mxu0 %v662
      %v949 = vpop.f32.mrf.mxu0
      %v950 = vadd.f32 %v789, %v949
      %v951 = vpop.f32.mrf.mxu0
      %v952 = vpop.f32.mrf.mxu0
      %v953 = vadd.f32 %v792, %v952
      %v954 = vpop.f32.mrf.mxu0
      %955 = vmatprep.mubr.bf16.mxu0 0
      %956 = vmatmul.mubr.bf16.gmra.mxu0 %v665
      %v957 = vpop.f32.mrf.mxu0
      %v958 = vadd.f32 %v797, %v957
      %v959 = vpop.f32.mrf.mxu0
      %v960 = vpop.f32.mrf.mxu0
      %v961 = vadd.f32 %v800, %v960
      %v962 = vpop.f32.mrf.mxu0
      %963 = vmatprep.mubr.bf16.mxu0 0
      %964 = vmatmul.mubr.bf16.gmra.mxu0 %v668
      %v965 = vpop.f32.mrf.mxu0
      %v966 = vadd.f32 %v805, %v965
      %v967 = vpop.f32.mrf.mxu0
      %v968 = vpop.f32.mrf.mxu0
      %v969 = vadd.f32 %v808, %v968
      %v970 = vpop.f32.mrf.mxu0
      %971 = vmatprep.mubr.bf16.mxu0 0
      %972 = vmatmul.mubr.bf16.gmra.mxu0 %v671
      %v973 = vpop.f32.mrf.mxu0
      %v974 = vadd.f32 %v813, %v973
      %v975 = vpop.f32.mrf.mxu0
      %v976 = vpop.f32.mrf.mxu0
      %v977 = vadd.f32 %v816, %v976
      %v978 = vpop.f32.mrf.mxu0
      %979 = vmatprep.mubr.bf16.mxu0 0
      %980 = vmatmul.mubr.bf16.gmra.mxu0 %v674
      %v981 = vpop.f32.mrf.mxu0
      %v982 = vadd.f32 %v821, %v981
      %v983 = vpop.f32.mrf.mxu0
      %v984 = vpop.f32.mrf.mxu0
      %v985 = vadd.f32 %v824, %v984
      %v986 = vpop.f32.mrf.mxu0
      %987 = vmatprep.mubr.bf16.mxu0 0
      %988 = vmatmul.mubr.bf16.gmra.mxu0 %v677
      %v989 = vpop.f32.mrf.mxu0
      %v990 = vadd.f32 %v829, %v989
      %v991 = vpop.f32.mrf.mxu0
      %v992 = vpop.f32.mrf.mxu0
      %v993 = vadd.f32 %v832, %v992
      %v994 = vpop.f32.mrf.mxu0
      %995 = vmatprep.mubr.bf16.mxu0 0
      %996 = vmatmul.mubr.bf16.gmra.mxu0 %v680
      %v997 = vpop.f32.mrf.mxu0
      %v998 = vadd.f32 %v837, %v997
      %v999 = vpop.f32.mrf.mxu0
      %v1000 = vpop.f32.mrf.mxu0
      %v1001 = vadd.f32 %v840, %v1000
      %v1002 = vpop.f32.mrf.mxu0
      %1003 = vdwg.mxu0
      %1004 = vst.msk [vmem:[%s175] sm:$0xff] %vm633, %v878
      %1005 = vst.msk [vmem:[%s175 + $0x8] sm:$0xff] %vm633, %v881
      %1006 = vst.msk [vmem:[%s175 + $0x10] sm:$0xff] %vm633, %v886
      %1007 = vst.msk [vmem:[%s175 + $0x18] sm:$0xff] %vm633, %v889
      %1008 = vst.msk [vmem:[%s175 + $0x20] sm:$0xff] %vm633, %v894
      %1009 = vst.msk [vmem:[%s175 + $0x28] sm:$0xff] %vm633, %v897
      %1010 = vst.msk [vmem:[%s175 + $0x30] sm:$0xff] %vm633, %v902
      %1011 = vst.msk [vmem:[%s175 + $0x38] sm:$0xff] %vm633, %v905
      %1012 = vst.msk [vmem:[%s175 + $0x40] sm:$0xff] %vm633, %v910
      %1013 = vst.msk [vmem:[%s175 + $0x48] sm:$0xff] %vm633, %v913
      %1014 = vst.msk [vmem:[%s175 + $0x50] sm:$0xff] %vm633, %v918
      %1015 = vst.msk [vmem:[%s175 + $0x58] sm:$0xff] %vm633, %v921
      %1016 = vst.msk [vmem:[%s175 + $0x60] sm:$0xff] %vm633, %v926
      %1017 = vst.msk [vmem:[%s175 + $0x68] sm:$0xff] %vm633, %v929
      %1018 = vst.msk [vmem:[%s175 + $0x70] sm:$0xff] %vm633, %v934
      %1019 = vst.msk [vmem:[%s175 + $0x78] sm:$0xff] %vm633, %v937
      %1020 = vst.msk [vmem:[%s175 + $0x80] sm:$0xff] %vm633, %v942
      %1021 = vst.msk [vmem:[%s175 + $0x88] sm:$0xff] %vm633, %v945
      %1022 = vst.msk [vmem:[%s175 + $0x90] sm:$0xff] %vm633, %v950
      %1023 = vst.msk [vmem:[%s175 + $0x98] sm:$0xff] %vm633, %v953
      %1024 = vst.msk [vmem:[%s175 + $0xa0] sm:$0xff] %vm633, %v958
      %1025 = vst.msk [vmem:[%s175 + $0xa8] sm:$0xff] %vm633, %v961
      %1026 = vst.msk [vmem:[%s175 + $0xb0] sm:$0xff] %vm633, %v966
      %1027 = vst.msk [vmem:[%s175 + $0xb8] sm:$0xff] %vm633, %v969
      %1028 = vst.msk [vmem:[%s175 + $0xc0] sm:$0xff] %vm633, %v974
      %1029 = vst.msk [vmem:[%s175 + $0xc8] sm:$0xff] %vm633, %v977
      %1030 = vst.msk [vmem:[%s175 + $0xd0] sm:$0xff] %vm633, %v982
      %1031 = vst.msk [vmem:[%s175 + $0xd8] sm:$0xff] %vm633, %v985
      %1032 = vst.msk [vmem:[%s175 + $0xe0] sm:$0xff] %vm633, %v990
      %1033 = vst.msk [vmem:[%s175 + $0xe8] sm:$0xff] %vm633, %v993
      %1034 = vst.msk [vmem:[%s175 + $0xf0] sm:$0xff] %vm633, %v998
      %1035 = vst.msk [vmem:[%s175 + $0xf8] sm:$0xff] %vm633, %v1001
      %s1036 = smul.u32 32, %s14
      %p1037 = scmp.lt.s32.totalorder %s1036, 63
      %s1038 = scalar_select %p1037, %s1036, 63
      %s1039 = smul.addr %s1038, 8
      %s1040 = scalar_lea.vmem %s3, %s1039
      // Predicated region
      $region33: #{patchifier_forward.38} parent=31 // pred_check
        %p1041 = pneg %p100
      $region34: #{patchifier_forward.38} parent=31 // pred_check_branch
        %1043 = sbr.rel (%p1041) target = $region36
      $region35: #{patchifier_forward.38} parent=31 // pred_region
        %s1044 = smul.u32 32, %s14
      $region36: #{patchifier_forward.38} parent=31 // pred_fallthru
        _
    $region32: #{patchifier_forward.38} parent=5 // pred_fallthru
      _
    %p1045 = scmp.le.s32.totalorder 2, %s9
    // Predicated region
    $region37: #{patchifier_forward.38} parent=5 // pred_check
      %p1046 = pneg %p1045
    $region38: #{patchifier_forward.38} parent=5 // pred_check_branch
      %1048 = sbr.rel (%p1046) target = $region40
    $region39: #{patchifier_forward.38} parent=5 // pred_region
      %s1049 = ssub.s32 %s9, 2
      // Predicated region
      $region41: #{patchifier_forward.38} parent=39 // pred_check
        %p1050 = pneg %p106
      $region42: #{patchifier_forward.38} parent=39 // pred_check_branch
        %1052 = sbr.rel (%p1050) target = $region44
      $region43: #{patchifier_forward.38} parent=39 // pred_region
        %s1053 = smul.u32 32, %s15
        %p1054 = scmp.lt.s32.totalorder %s1053, 63
        %s1055 = scalar_select %p1054, %s1053, 63
        %s1056 = smul.addr %s1055, 8
        %s1057 = scalar_lea.vmem %s3, %s1056
      $region44: #{patchifier_forward.38} parent=39 // pred_fallthru
        _
    $region40: #{patchifier_forward.38} parent=5 // pred_fallthru
      _
  $region6: #{patchifier_forward.38} parent=0 // loop_footer
    %s13 = sadd.s32 1, %s9
  $region7: #{patchifier_forward.38} parent=0 // loop_footer_branch
    %8 = sbr.rel target = $region3
  $region8: #{patchifier_forward.38} parent=0 // loop_exit
    _

// kernel: patchifier_forward.48
$region0: #{patchifier_forward.48}
  #allocation0 [shape = 'u32[]', space=smem, size = 0x4, offset = 0x4, fixed_abs, tag = 'smem constant byte address 0x4 - core index']
  #allocation1 [shape = 'u32[144,128]{1,0:T(1,128)}', space=vmem, size = 0x12000, scoped, tag = 'internal scratch']
  %s0 = inlined_call_operand.vmem [shape: bf16[128,288], index: 0, kind: input, shape index: {}]
  %s1 = inlined_call_operand.vmem [shape: bf16[288,64], index: 1, kind: input, shape index: {}]
  %s2 = inlined_call_operand.vmem [shape: f32[1,64], index: 2, kind: input, shape index: {}]
  %s3 = inlined_call_operand.vmem [shape: f32[128,64], index: 3, kind: output, shape index: {}]
  %s4 = sld [smem:[#allocation0]]
  $region22: #{patchifier_forward.48} parent=0
    _
  %s6 = ssub.s32 1, %s4
  %s7 = scalar_select 0, %s6, %s4
  // Predicated region
  $region2: #{patchifier_forward.48} parent=0 // pred_check
    _
  $region3: #{patchifier_forward.48} parent=0 // pred_check_branch
    %9 = sbr.rel (0) target = $region5
  $region4: #{patchifier_forward.48} parent=0 // pred_region
    _
  $region5: #{patchifier_forward.48} parent=0 // pred_fallthru
    _
  // Predicated region
  $region6: #{patchifier_forward.48} parent=0 // pred_check
    _
  $region7: #{patchifier_forward.48} parent=0 // pred_check_branch
    %11 = sbr.rel (0) target = $region9
  $region8: #{patchifier_forward.48} parent=0 // pred_region
    _
  $region9: #{patchifier_forward.48} parent=0 // pred_fallthru
    _
  // Predicated region
  $region10: #{patchifier_forward.48} parent=0 // pred_check
    _
  $region11: #{patchifier_forward.48} parent=0 // pred_check_branch
    %13 = sbr.rel (0) target = $region13
  $region12: #{patchifier_forward.48} parent=0 // pred_region
    _
  $region13: #{patchifier_forward.48} parent=0 // pred_fallthru
    _
  %v15 = vld [vmem:[%s0] sm:$0xff]
  %v16 = vld [vmem:[%s0 + $0x8] sm:$0xf]
  %v17 = vld [vmem:[%s0 + $0xc] sm:$0xff]
  %v18 = vld [vmem:[%s0 + $0x14] sm:$0xf]
  %v19 = vld [vmem:[%s0 + $0x18] sm:$0xff]
  %v20 = vld [vmem:[%s0 + $0x20] sm:$0xf]
  %v21 = vld [vmem:[%s0 + $0x24] sm:$0xff]
  %v22 = vld [vmem:[%s0 + $0x2c] sm:$0xf]
  %v23 = vld [vmem:[%s0 + $0x30] sm:$0xff]
  %v24 = vld [vmem:[%s0 + $0x38] sm:$0xf]
  %v25 = vld [vmem:[%s0 + $0x3c] sm:$0xff]
  %v26 = vld [vmem:[%s0 + $0x44] sm:$0xf]
  %v27 = vld [vmem:[%s0 + $0x48] sm:$0xff]
  %v28 = vld [vmem:[%s0 + $0x50] sm:$0xf]
  %v29 = vld [vmem:[%s0 + $0x54] sm:$0xff]
  %v30 = vld [vmem:[%s0 + $0x5c] sm:$0xf]
  %v31 = vld [vmem:[%s0 + $0x60] sm:$0xff]
  %v32 = vld [vmem:[%s0 + $0x68] sm:$0xf]
  %v33 = vld [vmem:[%s0 + $0x6c] sm:$0xff]
  %v34 = vld [vmem:[%s0 + $0x74] sm:$0xf]
  %v35 = vld [vmem:[%s0 + $0x78] sm:$0xff]
  %v36 = vld [vmem:[%s0 + $0x80] sm:$0xf]
  %v37 = vld [vmem:[%s0 + $0x84] sm:$0xff]
  %v38 = vld [vmem:[%s0 + $0x8c] sm:$0xf]
  %v39 = vld [vmem:[%s0 + $0x90] sm:$0xff]
  %v40 = vld [vmem:[%s0 + $0x98] sm:$0xf]
  %v41 = vld [vmem:[%s0 + $0x9c] sm:$0xff]
  %v42 = vld [vmem:[%s0 + $0xa4] sm:$0xf]
  %v43 = vld [vmem:[%s0 + $0xa8] sm:$0xff]
  %v44 = vld [vmem:[%s0 + $0xb0] sm:$0xf]
  %v45 = vld [vmem:[%s0 + $0xb4] sm:$0xff]
  %v46 = vld [vmem:[%s0 + $0xbc] sm:$0xf]
  %v47 = vld [vmem:[%s1] sm:$0xf]
  %v48 = vld [vmem:[%s1 + $0x4] sm:$0xf]
  %v49 = vld [vmem:[%s1 + $0x8] sm:$0xf]
  %v50 = vld [vmem:[%s1 + $0xc] sm:$0xf]
  %v51 = vld [vmem:[%s1 + $0x10] sm:$0xf]
  %v52 = vld [vmem:[%s1 + $0x14] sm:$0xf]
  %v53 = vld [vmem:[%s1 + $0x18] sm:$0xf]
  %v54 = vld [vmem:[%s1 + $0x1c] sm:$0xf]
  %v55 = vld [vmem:[%s1 + $0x20] sm:$0xf]
  %v56 = vld [vmem:[%s1 + $0x24] sm:$0xf]
  %v57 = vld [vmem:[%s1 + $0x28] sm:$0xf]
  %v58 = vld [vmem:[%s1 + $0x2c] sm:$0xf]
  %v59 = vld [vmem:[%s1 + $0x30] sm:$0xf]
  %v60 = vld [vmem:[%s1 + $0x34] sm:$0xf]
  %v61 = vld [vmem:[%s1 + $0x38] sm:$0xf]
  %v62 = vld [vmem:[%s1 + $0x3c] sm:$0xf]
  %v63 = vld [vmem:[%s1 + $0x40] sm:$0xf]
  %v64 = vld [vmem:[%s1 + $0x44] sm:$0xf]
  %v65 = vld [vmem:[%s1 + $0x48] sm:$0xf]
  %v66 = vld [vmem:[%s1 + $0x4c] sm:$0xf]
  %v67 = vld [vmem:[%s1 + $0x50] sm:$0xf]
  %v68 = vld [vmem:[%s1 + $0x54] sm:$0xf]
  %v69 = vld [vmem:[%s1 + $0x58] sm:$0xf]
  %v70 = vld [vmem:[%s1 + $0x5c] sm:$0xf]
  %v71 = vld [vmem:[%s1 + $0x60] sm:$0xf]
  %v72 = vld [vmem:[%s1 + $0x64] sm:$0xf]
  %v73 = vld [vmem:[%s1 + $0x68] sm:$0xf]
  %v74 = vld [vmem:[%s1 + $0x6c] sm:$0xf]
  %v75 = vld [vmem:[%s1 + $0x70] sm:$0xf]
  %v76 = vld [vmem:[%s1 + $0x74] sm:$0xf]
  %v77 = vld [vmem:[%s1 + $0x78] sm:$0xf]
  %v78 = vld [vmem:[%s1 + $0x7c] sm:$0xf]
  %v79 = vld [vmem:[%s1 + $0x80] sm:$0xf]
  %v80 = vld [vmem:[%s1 + $0x84] sm:$0xf]
  %v81 = vld [vmem:[%s1 + $0x88] sm:$0xf]
  %v82 = vld [vmem:[%s1 + $0x8c] sm:$0xf]
  %v83 = vld [vmem:[%s2] sm:$0x1]
  %v85 = vlaneseq
  %v86 = vshrl.u32 %v85, 7
  %v87 = vsub.s32 0, %v86
  %v88 = vrot.slane %v83, %v87
  %v122 = vunpack.c.l.b16 %v15
  %v123 = vunpack.c.h.b16 %v15
  %v124 = vunpack.c.l.b16 %v16
  %v125 = vunpack.c.l.b16 %v17
  %v126 = vunpack.c.h.b16 %v17
  %v127 = vunpack.c.l.b16 %v18
  %v128 = vunpack.c.l.b16 %v19
  %v129 = vunpack.c.h.b16 %v19
  %v130 = vunpack.c.l.b16 %v20
  %v131 = vunpack.c.l.b16 %v21
  %v132 = vunpack.c.h.b16 %v21
  %v133 = vunpack.c.l.b16 %v22
  %v134 = vunpack.c.l.b16 %v23
  %v135 = vunpack.c.h.b16 %v23
  %v136 = vunpack.c.l.b16 %v24
  %v137 = vunpack.c.l.b16 %v25
  %v138 = vunpack.c.h.b16 %v25
  %v139 = vunpack.c.l.b16 %v26
  %v140 = vunpack.c.l.b16 %v27
  %v141 = vunpack.c.h.b16 %v27
  %v142 = vunpack.c.l.b16 %v28
  %v143 = vunpack.c.l.b16 %v29
  %v144 = vunpack.c.h.b16 %v29
  %v145 = vunpack.c.l.b16 %v30
  %v146 = vunpack.c.l.b16 %v31
  %v147 = vunpack.c.h.b16 %v31
  %v148 = vunpack.c.l.b16 %v32
  %v149 = vunpack.c.l.b16 %v33
  %v150 = vunpack.c.h.b16 %v33
  %v151 = vunpack.c.l.b16 %v34
  %v152 = vunpack.c.l.b16 %v35
  %v153 = vunpack.c.h.b16 %v35
  %v154 = vunpack.c.l.b16 %v36
  %v155 = vunpack.c.l.b16 %v37
  %v156 = vunpack.c.h.b16 %v37
  %v157 = vunpack.c.l.b16 %v38
  %v158 = vunpack.c.l.b16 %v39
  %v159 = vunpack.c.h.b16 %v39
  %v160 = vunpack.c.l.b16 %v40
  %v161 = vunpack.c.l.b16 %v41
  %v162 = vunpack.c.h.b16 %v41
  %v163 = vunpack.c.l.b16 %v42
  %v164 = vunpack.c.l.b16 %v43
  %v165 = vunpack.c.h.b16 %v43
  %v166 = vunpack.c.l.b16 %v44
  %v167 = vunpack.c.l.b16 %v45
  %v168 = vunpack.c.h.b16 %v45
  %v169 = vunpack.c.l.b16 %v46
  %v170 = vpack.c.b16 %v125, %v122
  %v171 = vpack.c.b16 %v126, %v123
  %v172 = vpack.c.b16 %v127, %v124
  %v173 = vpack.c.b16 %v131, %v128
  %v174 = vpack.c.b16 %v132, %v129
  %v175 = vpack.c.b16 %v133, %v130
  %v176 = vpack.c.b16 %v137, %v134
  %v177 = vpack.c.b16 %v138, %v135
  %v178 = vpack.c.b16 %v139, %v136
  %v179 = vpack.c.b16 %v143, %v140
  %v180 = vpack.c.b16 %v144, %v141
  %v181 = vpack.c.b16 %v145, %v142
  %v182 = vpack.c.b16 %v149, %v146
  %v183 = vpack.c.b16 %v150, %v147
  %v184 = vpack.c.b16 %v151, %v148
  %v185 = vpack.c.b16 %v155, %v152
  %v186 = vpack.c.b16 %v156, %v153
  %v187 = vpack.c.b16 %v157, %v154
  %v188 = vpack.c.b16 %v161, %v158
  %v189 = vpack.c.b16 %v162, %v159
  %v190 = vpack.c.b16 %v163, %v160
  %v191 = vpack.c.b16 %v167, %v164
  %v192 = vpack.c.b16 %v168, %v165
  %v193 = vpack.c.b16 %v169, %v166
  %v246 = vunpack.c.l.b16 %v47
  %v247 = vunpack.c.l.b16 %v48
  %v248 = vunpack.c.l.b16 %v49
  %v249 = vunpack.c.l.b16 %v50
  %v250 = vunpack.c.l.b16 %v51
  %v251 = vunpack.c.l.b16 %v52
  %v252 = vunpack.c.l.b16 %v53
  %v253 = vunpack.c.l.b16 %v54
  %v254 = vunpack.c.l.b16 %v55
  %v255 = vunpack.c.l.b16 %v56
  %v256 = vunpack.c.l.b16 %v57
  %v257 = vunpack.c.l.b16 %v58
  %v258 = vunpack.c.l.b16 %v59
  %v259 = vunpack.c.l.b16 %v60
  %v260 = vunpack.c.l.b16 %v61
  %v261 = vunpack.c.l.b16 %v62
  %v262 = vunpack.c.l.b16 %v63
  %v263 = vunpack.c.l.b16 %v64
  %v264 = vunpack.c.l.b16 %v65
  %v265 = vunpack.c.l.b16 %v66
  %v266 = vunpack.c.l.b16 %v67
  %v267 = vunpack.c.l.b16 %v68
  %v268 = vunpack.c.l.b16 %v69
  %v269 = vunpack.c.l.b16 %v70
  %v270 = vunpack.c.l.b16 %v71
  %v271 = vunpack.c.l.b16 %v72
  %v272 = vunpack.c.l.b16 %v73
  %v273 = vunpack.c.l.b16 %v74
  %v274 = vunpack.c.l.b16 %v75
  %v275 = vunpack.c.l.b16 %v76
  %v276 = vunpack.c.l.b16 %v77
  %v277 = vunpack.c.l.b16 %v78
  %v278 = vunpack.c.l.b16 %v79
  %v279 = vunpack.c.l.b16 %v80
  %v280 = vunpack.c.l.b16 %v81
  %v281 = vunpack.c.l.b16 %v82
  %v282 = vpack.c.b16 %v247, %v246
  %v283 = vpack.c.b16 %v249, %v248
  %v284 = vpack.c.b16 %v251, %v250
  %v285 = vpack.c.b16 %v253, %v252
  %v286 = vpack.c.b16 %v255, %v254
  %v287 = vpack.c.b16 %v257, %v256
  %v288 = vpack.c.b16 %v259, %v258
  %v289 = vpack.c.b16 %v261, %v260
  %v290 = vpack.c.b16 %v263, %v262
  %v291 = vpack.c.b16 %v265, %v264
  %v292 = vpack.c.b16 %v267, %v266
  %v293 = vpack.c.b16 %v269, %v268
  %v294 = vpack.c.b16 %v271, %v270
  %v295 = vpack.c.b16 %v273, %v272
  %v296 = vpack.c.b16 %v275, %v274
  %v297 = vpack.c.b16 %v277, %v276
  %v298 = vpack.c.b16 %v279, %v278
  %v299 = vpack.c.b16 %v281, %v280
  %vm318 = vcmask 261120
  %v320 = vsel %vm318, %v172, 0
  %v323 = vsel %vm318, %v175, 0
  %v326 = vsel %vm318, %v178, 0
  %v329 = vsel %vm318, %v181, 0
  %v332 = vsel %vm318, %v184, 0
  %v335 = vsel %vm318, %v187, 0
  %v338 = vsel %vm318, %v190, 0
  %v341 = vsel %vm318, %v193, 0
  %343 = vmatprep.subr.bf16.mxu0 0
  %344 = vmatpush1.bf16.msra.mxu0 %v289
  %345 = vmatprep.subr.bf16.mxu0 0
  %346 = vmatpush1.bf16.msra.mxu0 %v288
  %347 = vmatprep.subr.bf16.mxu0 0
  %348 = vmatpush1.bf16.msra.mxu0 %v287
  %349 = vmatprep.subr.bf16.mxu0 0
  %350 = vmatpush1.bf16.msra.mxu0 %v286
  %351 = vmatprep.subr.bf16.mxu0 0
  %352 = vmatpush1.bf16.msra.mxu0 %v285
  %353 = vmatprep.subr.bf16.mxu0 0
  %354 = vmatpush1.bf16.msra.mxu0 %v284
  %355 = vmatprep.subr.bf16.mxu0 0
  %356 = vmatpush1.bf16.msra.mxu0 %v283
  %357 = vmatprep.subr.bf16.mxu0 0
  %358 = vmatpush1.bf16.msra.mxu0 %v282
  %359 = vmatprep.subr.bf16.mxu0 0
  %360 = vmatpush2.bf16.msra.mxu0 %v297
  %361 = vmatprep.subr.bf16.mxu0 0
  %362 = vmatpush2.bf16.msra.mxu0 %v296
  %363 = vmatprep.subr.bf16.mxu0 0
  %364 = vmatpush2.bf16.msra.mxu0 %v295
  %365 = vmatprep.subr.bf16.mxu0 0
  %366 = vmatpush2.bf16.msra.mxu0 %v294
  %367 = vmatprep.subr.bf16.mxu0 0
  %368 = vmatpush2.bf16.msra.mxu0 %v293
  %369 = vmatprep.subr.bf16.mxu0 0
  %370 = vmatpush2.bf16.msra.mxu0 %v292
  %371 = vmatprep.subr.bf16.mxu0 0
  %372 = vmatpush2.bf16.msra.mxu0 %v291
  %373 = vmatprep.subr.bf16.mxu0 0
  %374 = vmatpush2.bf16.msra.mxu0 %v290
  %375 = vmatprep.mubr.bf16.mxu0 %v171
  %376 = vmatmul.mubr.bf16.gmra.mxu0 %v170
  %v377 = vpop.f32.mrf.mxu0
  %v378 = vadd.f32 %v88, %v377
  %v379 = vpop.f32.mrf.mxu0
  %v380 = vpop.f32.mrf.mxu0
  %v381 = vadd.f32 %v88, %v380
  %v382 = vpop.f32.mrf.mxu0
  %383 = vmatprep.mubr.bf16.mxu0 %v174
  %384 = vmatmul.mubr.bf16.gmra.mxu0 %v173
  %v385 = vpop.f32.mrf.mxu0
  %v386 = vadd.f32 %v88, %v385
  %v387 = vpop.f32.mrf.mxu0
  %v388 = vpop.f32.mrf.mxu0
  %v389 = vadd.f32 %v88, %v388
  %v390 = vpop.f32.mrf.mxu0
  %391 = vmatprep.mubr.bf16.mxu0 %v177
  %392 = vmatmul.mubr.bf16.gmra.mxu0 %v176
  %v393 = vpop.f32.mrf.mxu0
  %v394 = vadd.f32 %v88, %v393
  %v395 = vpop.f32.mrf.mxu0
  %v396 = vpop.f32.mrf.mxu0
  %v397 = vadd.f32 %v88, %v396
  %v398 = vpop.f32.mrf.mxu0
  %399 = vmatprep.mubr.bf16.mxu0 %v180
  %400 = vmatmul.mubr.bf16.gmra.mxu0 %v179
  %v401 = vpop.f32.mrf.mxu0
  %v402 = vadd.f32 %v88, %v401
  %v403 = vpop.f32.mrf.mxu0
  %v404 = vpop.f32.mrf.mxu0
  %v405 = vadd.f32 %v88, %v404
  %v406 = vpop.f32.mrf.mxu0
  %407 = vmatprep.mubr.bf16.mxu0 %v183
  %408 = vmatmul.mubr.bf16.gmra.mxu0 %v182
  %v409 = vpop.f32.mrf.mxu0
  %v410 = vadd.f32 %v88, %v409
  %v411 = vpop.f32.mrf.mxu0
  %v412 = vpop.f32.mrf.mxu0
  %v413 = vadd.f32 %v88, %v412
  %v414 = vpop.f32.mrf.mxu0
  %415 = vmatprep.mubr.bf16.mxu0 %v186
  %416 = vmatmul.mubr.bf16.gmra.mxu0 %v185
  %v417 = vpop.f32.mrf.mxu0
  %v418 = vadd.f32 %v88, %v417
  %v419 = vpop.f32.mrf.mxu0
  %v420 = vpop.f32.mrf.mxu0
  %v421 = vadd.f32 %v88, %v420
  %v422 = vpop.f32.mrf.mxu0
  %423 = vmatprep.mubr.bf16.mxu0 %v189
  %424 = vmatmul.mubr.bf16.gmra.mxu0 %v188
  %v425 = vpop.f32.mrf.mxu0
  %v426 = vadd.f32 %v88, %v425
  %v427 = vpop.f32.mrf.mxu0
  %v428 = vpop.f32.mrf.mxu0
  %v429 = vadd.f32 %v88, %v428
  %v430 = vpop.f32.mrf.mxu0
  %431 = vmatprep.mubr.bf16.mxu0 %v192
  %432 = vmatmul.mubr.bf16.gmra.mxu0 %v191
  %v433 = vpop.f32.mrf.mxu0
  %v434 = vadd.f32 %v88, %v433
  %v435 = vpop.f32.mrf.mxu0
  %v436 = vpop.f32.mrf.mxu0
  %v437 = vadd.f32 %v88, %v436
  %v438 = vpop.f32.mrf.mxu0
  %439 = vdwg.mxu0
  %440 = vmatprep.subr.bf16.mxu0 0
  %441 = vmatpush1.bf16.msra.mxu0 0
  %442 = vmatprep.subr.bf16.mxu0 0
  %443 = vmatpush1.bf16.msra.mxu0 0
  %444 = vmatprep.subr.bf16.mxu0 0
  %445 = vmatpush1.bf16.msra.mxu0 0
  %446 = vmatprep.subr.bf16.mxu0 0
  %447 = vmatpush1.bf16.msra.mxu0 0
  %448 = vmatprep.subr.bf16.mxu0 0
  %449 = vmatpush1.bf16.msra.mxu0 0
  %450 = vmatprep.subr.bf16.mxu0 0
  %451 = vmatpush1.bf16.msra.mxu0 0
  %452 = vmatprep.subr.bf16.mxu0 0
  %453 = vmatpush1.bf16.msra.mxu0 %v299
  %454 = vmatprep.subr.bf16.mxu0 0
  %455 = vmatpush1.bf16.msra.mxu0 %v298
  %456 = vmatprep.subr.bf16.mxu0 0
  %457 = vmatpush2.bf16.msra.mxu0 0
  %458 = vmatprep.subr.bf16.mxu0 0
  %459 = vmatpush2.bf16.msra.mxu0 0
  %460 = vmatprep.subr.bf16.mxu0 0
  %461 = vmatpush2.bf16.msra.mxu0 0
  %462 = vmatprep.subr.bf16.mxu0 0
  %463 = vmatpush2.bf16.msra.mxu0 0
  %464 = vmatprep.subr.bf16.mxu0 0
  %465 = vmatpush2.bf16.msra.mxu0 0
  %466 = vmatprep.subr.bf16.mxu0 0
  %467 = vmatpush2.bf16.msra.mxu0 0
  %468 = vmatprep.subr.bf16.mxu0 0
  %469 = vmatpush2.bf16.msra.mxu0 0
  %470 = vmatprep.subr.bf16.mxu0 0
  %471 = vmatpush2.bf16.msra.mxu0 0
  %472 = vmatprep.mubr.bf16.mxu0 0
  %473 = vmatmul.mubr.bf16.gmra.mxu0 %v320
  %v474 = vpop.f32.mrf.mxu0
  %v475 = vadd.f32 %v378, %v474
  %v476 = vpop.f32.mrf.mxu0
  %v477 = vpop.f32.mrf.mxu0
  %v478 = vadd.f32 %v381, %v477
  %v479 = vpop.f32.mrf.mxu0
  %480 = vmatprep.mubr.bf16.mxu0 0
  %481 = vmatmul.mubr.bf16.gmra.mxu0 %v323
  %v482 = vpop.f32.mrf.mxu0
  %v483 = vadd.f32 %v386, %v482
  %v484 = vpop.f32.mrf.mxu0
  %v485 = vpop.f32.mrf.mxu0
  %v486 = vadd.f32 %v389, %v485
  %v487 = vpop.f32.mrf.mxu0
  %488 = vmatprep.mubr.bf16.mxu0 0
  %489 = vmatmul.mubr.bf16.gmra.mxu0 %v326
  %v490 = vpop.f32.mrf.mxu0
  %v491 = vadd.f32 %v394, %v490
  %v492 = vpop.f32.mrf.mxu0
  %v493 = vpop.f32.mrf.mxu0
  %v494 = vadd.f32 %v397, %v493
  %v495 = vpop.f32.mrf.mxu0
  %496 = vmatprep.mubr.bf16.mxu0 0
  %497 = vmatmul.mubr.bf16.gmra.mxu0 %v329
  %v498 = vpop.f32.mrf.mxu0
  %v499 = vadd.f32 %v402, %v498
  %v500 = vpop.f32.mrf.mxu0
  %v501 = vpop.f32.mrf.mxu0
  %v502 = vadd.f32 %v405, %v501
  %v503 = vpop.f32.mrf.mxu0
  %504 = vmatprep.mubr.bf16.mxu0 0
  %505 = vmatmul.mubr.bf16.gmra.mxu0 %v332
  %v506 = vpop.f32.mrf.mxu0
  %v507 = vadd.f32 %v410, %v506
  %v508 = vpop.f32.mrf.mxu0
  %v509 = vpop.f32.mrf.mxu0
  %v510 = vadd.f32 %v413, %v509
  %v511 = vpop.f32.mrf.mxu0
  %512 = vmatprep.mubr.bf16.mxu0 0
  %513 = vmatmul.mubr.bf16.gmra.mxu0 %v335
  %v514 = vpop.f32.mrf.mxu0
  %v515 = vadd.f32 %v418, %v514
  %v516 = vpop.f32.mrf.mxu0
  %v517 = vpop.f32.mrf.mxu0
  %v518 = vadd.f32 %v421, %v517
  %v519 = vpop.f32.mrf.mxu0
  %520 = vmatprep.mubr.bf16.mxu0 0
  %521 = vmatmul.mubr.bf16.gmra.mxu0 %v338
  %v522 = vpop.f32.mrf.mxu0
  %v523 = vadd.f32 %v426, %v522
  %v524 = vpop.f32.mrf.mxu0
  %v525 = vpop.f32.mrf.mxu0
  %v526 = vadd.f32 %v429, %v525
  %v527 = vpop.f32.mrf.mxu0
  %528 = vmatprep.mubr.bf16.mxu0 0
  %529 = vmatmul.mubr.bf16.gmra.mxu0 %v341
  %v530 = vpop.f32.mrf.mxu0
  %v531 = vadd.f32 %v434, %v530
  %v532 = vpop.f32.mrf.mxu0
  %v533 = vpop.f32.mrf.mxu0
  %v534 = vadd.f32 %v437, %v533
  %v535 = vpop.f32.mrf.mxu0
  %536 = vdwg.mxu0
  %vm537 = vcmask 523264
  %538 = vst.msk [vmem:[%s3] sm:$0xff] %vm537, %v475
  %539 = vst.msk [vmem:[%s3 + $0x8] sm:$0xff] %vm537, %v478
  %540 = vst.msk [vmem:[%s3 + $0x10] sm:$0xff] %vm537, %v483
  %541 = vst.msk [vmem:[%s3 + $0x18] sm:$0xff] %vm537, %v486
  %542 = vst.msk [vmem:[%s3 + $0x20] sm:$0xff] %vm537, %v491
  %543 = vst.msk [vmem:[%s3 + $0x28] sm:$0xff] %vm537, %v494
  %544 = vst.msk [vmem:[%s3 + $0x30] sm:$0xff] %vm537, %v499
  %545 = vst.msk [vmem:[%s3 + $0x38] sm:$0xff] %vm537, %v502
  %546 = vst.msk [vmem:[%s3 + $0x40] sm:$0xff] %vm537, %v507
  %547 = vst.msk [vmem:[%s3 + $0x48] sm:$0xff] %vm537, %v510
  %548 = vst.msk [vmem:[%s3 + $0x50] sm:$0xff] %vm537, %v515
  %549 = vst.msk [vmem:[%s3 + $0x58] sm:$0xff] %vm537, %v518
  %550 = vst.msk [vmem:[%s3 + $0x60] sm:$0xff] %vm537, %v523
  %551 = vst.msk [vmem:[%s3 + $0x68] sm:$0xff] %vm537, %v526
  %552 = vst.msk [vmem:[%s3 + $0x70] sm:$0xff] %vm537, %v531
  %553 = vst.msk [vmem:[%s3 + $0x78] sm:$0xff] %vm537, %v534
  // Predicated region
  $region14: #{patchifier_forward.48} parent=0 // pred_check
    _
  $region15: #{patchifier_forward.48} parent=0 // pred_check_branch
    %555 = sbr.rel (0) target = $region17
  $region16: #{patchifier_forward.48} parent=0 // pred_region
    _
  $region17: #{patchifier_forward.48} parent=0 // pred_fallthru
    _
  // Predicated region
  $region18: #{patchifier_forward.48} parent=0 // pred_check
    _
  $region19: #{patchifier_forward.48} parent=0 // pred_check_branch
    %557 = sbr.rel (0) target = $region21
  $region20: #{patchifier_forward.48} parent=0 // pred_region
    _
  $region21: #{patchifier_forward.48} parent=0 // pred_fallthru
    _

// kernel: patchifier_forward.47
$region0: #{patchifier_forward.47}
  #allocation0 [shape = 'u32[]', space=smem, size = 0x4, offset = 0x4, fixed_abs, tag = 'smem constant byte address 0x4 - core index']
  #allocation1 [shape = 'u32[144,128]{1,0:T(1,128)}', space=vmem, size = 0x12000, scoped, tag = 'internal scratch']
  %s0 = inlined_call_operand.vmem [shape: f32[2,64,64], index: 0, kind: input, shape index: {}]
  %s1 = inlined_call_operand.vmem [shape: f32[2,64,64], index: 1, kind: output, shape index: {}]
  %s2 = sld [smem:[#allocation0]]
  $region37: #{patchifier_forward.47} parent=0
    _
  %s4 = ssub.s32 1, %s2
  %s5 = scalar_select 0, %s4, %s2
  loop: start=0, step=1, limit=4
  $region2: #{patchifier_forward.47} parent=0 // loop_pre_header
    _
  $region3: #{patchifier_forward.47} parent=0 // loop_header
    %s7 = sphi 0, %s11
    %p8 = scmp.ge.s32.totalorder %s7, 4
    %s17 = sphi 0, %s19
    %s20 = sphi 0, %s17
    %s21 = sphi 0, %s20
    %s37 = sphi 0, %s21
    %s43 = sphi 0, %s45
    %s46 = sphi 0, %s43
    %s47 = sphi 0, %s46
    %s63 = sphi 0, %s47
  $region4: #{patchifier_forward.47} parent=0 // loop_header_branch
    %10 = sbr.rel (%p8) target = $region8
  $region5: #{patchifier_forward.47} parent=0 // loop_body
    %s12 = ssub.s32 %s7, 1
    %s13 = ssub.s32 %s7, 2
    %s14 = sadd.s32 %s7, 1
    %s15 = ssub.s32 %s7, %s14
    %p16 = scmp.eq.s32.totalorder %s15, 0
    %s18 = sadd.s32 %s17, 1
    %s19 = scalar_select %p16, %s17, %s18
    %p22 = pneg %p16
    %p23 = scmp.eq.s32.totalorder %s7, 1
    %p24 = por %p22, %p23
    %p25 = scmp.ne.s32.totalorder %s17, %s20
    %p26 = scmp.eq.s32.totalorder %s7, 0
    %p27 = por %p25, %p26
    %p28 = scmp.ne.s32.totalorder %s17, %s20
    %p29 = scmp.eq.s32.totalorder %s12, 1
    %p30 = por %p28, %p29
    %p31 = scmp.ne.s32.totalorder %s20, %s21
    %p32 = scmp.eq.s32.totalorder %s12, 0
    %p33 = por %p31, %p32
    %p34 = scmp.ne.s32.totalorder %s20, %s21
    %p35 = scmp.eq.s32.totalorder %s13, 1
    %p36 = por %p34, %p35
    %p38 = scmp.ne.s32.totalorder %s21, %s37
    %p39 = scmp.eq.s32.totalorder %s13, 0
    %p40 = por %p38, %p39
    %s41 = ssub.s32 %s7, %s14
    %p42 = scmp.eq.s32.totalorder %s41, 0
    %s44 = sadd.s32 %s43, 1
    %s45 = scalar_select %p42, %s43, %s44
    %p48 = pneg %p42
    %p49 = scmp.eq.s32.totalorder %s7, 1
    %p50 = por %p48, %p49
    %p51 = scmp.ne.s32.totalorder %s43, %s46
    %p52 = scmp.eq.s32.totalorder %s7, 0
    %p53 = por %p51, %p52
    %p54 = scmp.ne.s32.totalorder %s43, %s46
    %p55 = scmp.eq.s32.totalorder %s12, 1
    %p56 = por %p54, %p55
    %p57 = scmp.ne.s32.totalorder %s46, %s47
    %p58 = scmp.eq.s32.totalorder %s12, 0
    %p59 = por %p57, %p58
    %p60 = scmp.ne.s32.totalorder %s46, %s47
    %p61 = scmp.eq.s32.totalorder %s13, 1
    %p62 = por %p60, %p61
    %p64 = scmp.ne.s32.totalorder %s47, %s63
    %p65 = scmp.eq.s32.totalorder %s13, 0
    %p66 = por %p64, %p65
    %p67 = scmp.le.s32.totalorder 1, %s7
    %p68 = scmp.lt.s32.totalorder %s7, 3
    %p69 = pnand %p67, %p68
    %p70 = pneg %p69
    // Predicated region
    $region9: #{patchifier_forward.47} parent=5 // pred_check
      _
    $region10: #{patchifier_forward.47} parent=5 // pred_check_branch
      %72 = sbr.rel (%p69) target = $region12
    $region11: #{patchifier_forward.47} parent=5 // pred_region
      %s73 = ssub.s32 %s7, 1
    $region12: #{patchifier_forward.47} parent=5 // pred_fallthru
      _
    %p74 = scmp.lt.s32.totalorder %s7, 2
    // Predicated region
    $region13: #{patchifier_forward.47} parent=5 // pred_check
      %p75 = pneg %p74
    $region14: #{patchifier_forward.47} parent=5 // pred_check_branch
      %77 = sbr.rel (%p75) target = $region16
    $region15: #{patchifier_forward.47} parent=5 // pred_region
      // Predicated region
      $region17: #{patchifier_forward.47} parent=15 // pred_check
        %p78 = pneg %p27
      $region18: #{patchifier_forward.47} parent=15 // pred_check_branch
        %80 = sbr.rel (%p78) target = $region20
      $region19: #{patchifier_forward.47} parent=15 // pred_region
        %p81 = scmp.lt.s32.totalorder %s7, 1
        %s82 = scalar_select %p81, %s7, 1
        %s83 = smul.addr %s82, 8
        %s84 = smul.addr %s83, 8
        %s85 = scalar_lea.vmem %s0, %s84
      $region20: #{patchifier_forward.47} parent=15 // pred_fallthru
        _
    $region16: #{patchifier_forward.47} parent=5 // pred_fallthru
      _
    %p86 = scmp.le.s32.totalorder 1, %s7
    %p87 = scmp.lt.s32.totalorder %s7, 3
    %p88 = pnand %p86, %p87
    %p89 = pneg %p88
    // Predicated region
    $region21: #{patchifier_forward.47} parent=5 // pred_check
      _
    $region22: #{patchifier_forward.47} parent=5 // pred_check_branch
      %91 = sbr.rel (%p88) target = $region24
    $region23: #{patchifier_forward.47} parent=5 // pred_region
      %s92 = ssub.s32 %s7, 1
      %p93 = scmp.lt.s32.totalorder %s12, 1
      %s94 = scalar_select %p93, %s12, 1
      %s95 = smul.addr %s94, 8
      %s96 = smul.addr %s95, 8
      %s97 = scalar_lea.vmem %s0, %s96
      %p98 = pneg %p33
      %p99 = pneg %p30
      %p100 = pneg %p59
      %p101 = pneg %p56
      %p102 = scmp.lt.s32.totalorder %s12, 1
      %s103 = scalar_select %p102, %s12, 1
      %s104 = smul.addr %s103, 8
      %s105 = smul.addr %s104, 8
      %s106 = scalar_lea.vmem %s1, %s105
      %p107 = scmp.lt.s32.totalorder %s12, 1
      %s108 = scalar_select %p107, %s12, 1
      %s109 = smul.addr %s108, 8
      %s110 = smul.addr %s109, 8
      %s111 = scalar_lea.vmem %s0, %s110
      %p112 = scmp.lt.s32.totalorder %s12, 1
      %s113 = scalar_select %p112, %s12, 1
      %s114 = smul.addr %s113, 8
      %s115 = smul.addr %s114, 8
      %s116 = scalar_lea.vmem %s1, %s115
      %v117 = vld [vmem:[%s111] sm:$0xff]
      %v118 = vld [vmem:[%s111 + $0x8] sm:$0xff]
      %v119 = vld [vmem:[%s111 + $0x10] sm:$0xff]
      %v120 = vld [vmem:[%s111 + $0x18] sm:$0xff]
      %v121 = vld [vmem:[%s111 + $0x20] sm:$0xff]
      %v122 = vld [vmem:[%s111 + $0x28] sm:$0xff]
      %v123 = vld [vmem:[%s111 + $0x30] sm:$0xff]
      %v124 = vld [vmem:[%s111 + $0x38] sm:$0xff]
      %vm125 = vcmask 523264
      %v126 = vsel %vm125, %v117, 0.0
      %v127 = vsel %vm125, %v118, 0.0
      %v128 = vadd.f32 %v126, %v127
      %v129 = vsel %vm125, %v119, 0.0
      %v130 = vadd.f32 %v128, %v129
      %v131 = vsel %vm125, %v120, 0.0
      %v132 = vadd.f32 %v130, %v131
      %v133 = vsel %vm125, %v121, 0.0
      %v134 = vadd.f32 %v132, %v133
      %v135 = vsel %vm125, %v122, 0.0
      %v136 = vadd.f32 %v134, %v135
      %v137 = vsel %vm125, %v123, 0.0
      %v138 = vadd.f32 %v136, %v137
      %v139 = vsel %vm125, %v124, 0.0
      %v140 = vadd.f32 %v138, %v139
      %v141 = vrot.slane %v140, 4
      %v142 = vadd.f32 %v140, %v141
      %v143 = vrot.slane %v142, 2
      %v144 = vadd.f32 %v142, %v143
      %v145 = vrot.slane %v144, 1
      %v146 = vadd.f32 %v144, %v145
      %v147 = vrcp.pop 64.0
      %v148 = vmul.f32 %v146, %v147
      %v149 = vsub.f32 %v117, %v148
      %v150 = vsub.f32 %v118, %v148
      %v151 = vsub.f32 %v119, %v148
      %v152 = vsub.f32 %v120, %v148
      %v153 = vsub.f32 %v121, %v148
      %v154 = vsub.f32 %v122, %v148
      %v155 = vsub.f32 %v123, %v148
      %v156 = vsub.f32 %v124, %v148
      %v157 = vmul.f32 %v149, %v149
      %v158 = vmul.f32 %v150, %v150
      %v159 = vmul.f32 %v151, %v151
      %v160 = vmul.f32 %v152, %v152
      %v161 = vmul.f32 %v153, %v153
      %v162 = vmul.f32 %v154, %v154
      %v163 = vmul.f32 %v155, %v155
      %v164 = vmul.f32 %v156, %v156
      %v165 = vsel %vm125, %v157, 0.0
      %v166 = vsel %vm125, %v158, 0.0
      %v167 = vadd.f32 %v165, %v166
      %v168 = vsel %vm125, %v159, 0.0
      %v169 = vadd.f32 %v167, %v168
      %v170 = vsel %vm125, %v160, 0.0
      %v171 = vadd.f32 %v169, %v170
      %v172 = vsel %vm125, %v161, 0.0
      %v173 = vadd.f32 %v171, %v172
      %v174 = vsel %vm125, %v162, 0.0
      %v175 = vadd.f32 %v173, %v174
      %v176 = vsel %vm125, %v163, 0.0
      %v177 = vadd.f32 %v175, %v176
      %v178 = vsel %vm125, %v164, 0.0
      %v179 = vadd.f32 %v177, %v178
      %v180 = vrot.slane %v179, 4
      %v181 = vadd.f32 %v179, %v180
      %v182 = vrot.slane %v181, 2
      %v183 = vadd.f32 %v181, %v182
      %v184 = vrot.slane %v183, 1
      %v185 = vadd.f32 %v183, %v184
      %v186 = vmul.f32 %v185, %v147
      %v187 = vadd.f32 %v186, 1e-05
      %v188 = vrsqrt.pop %v187
      %v189 = vmul.f32 %v149, %v188
      %v190 = vmul.f32 %v150, %v188
      %v191 = vmul.f32 %v151, %v188
      %v192 = vmul.f32 %v152, %v188
      %v193 = vmul.f32 %v153, %v188
      %v194 = vmul.f32 %v154, %v188
      %v195 = vmul.f32 %v155, %v188
      %v196 = vmul.f32 %v156, %v188
      %197 = vst.msk [vmem:[%s116] sm:$0xff] %vm125, %v189
      %198 = vst.msk [vmem:[%s116 + $0x8] sm:$0xff] %vm125, %v190
      %199 = vst.msk [vmem:[%s116 + $0x10] sm:$0xff] %vm125, %v191
      %200 = vst.msk [vmem:[%s116 + $0x18] sm:$0xff] %vm125, %v192
      %201 = vst.msk [vmem:[%s116 + $0x20] sm:$0xff] %vm125, %v193
      %202 = vst.msk [vmem:[%s116 + $0x28] sm:$0xff] %vm125, %v194
      %203 = vst.msk [vmem:[%s116 + $0x30] sm:$0xff] %vm125, %v195
      %204 = vst.msk [vmem:[%s116 + $0x38] sm:$0xff] %vm125, %v196
      %p205 = scmp.lt.s32.totalorder %s12, 1
      %s206 = scalar_select %p205, %s12, 1
      %s207 = smul.addr %s206, 8
      %s208 = smul.addr %s207, 8
      %s209 = scalar_lea.vmem %s1, %s208
      // Predicated region
      $region25: #{patchifier_forward.47} parent=23 // pred_check
        %p210 = pneg %p56
      $region26: #{patchifier_forward.47} parent=23 // pred_check_branch
        %212 = sbr.rel (%p210) target = $region28
      $region27: #{patchifier_forward.47} parent=23 // pred_region
        _
      $region28: #{patchifier_forward.47} parent=23 // pred_fallthru
        _
    $region24: #{patchifier_forward.47} parent=5 // pred_fallthru
      _
    %p213 = scmp.le.s32.totalorder 2, %s7
    // Predicated region
    $region29: #{patchifier_forward.47} parent=5 // pred_check
      %p214 = pneg %p213
    $region30: #{patchifier_forward.47} parent=5 // pred_check_branch
      %216 = sbr.rel (%p214) target = $region32
    $region31: #{patchifier_forward.47} parent=5 // pred_region
      %s217 = ssub.s32 %s7, 2
      // Predicated region
      $region33: #{patchifier_forward.47} parent=31 // pred_check
        %p218 = pneg %p62
      $region34: #{patchifier_forward.47} parent=31 // pred_check_branch
        %220 = sbr.rel (%p218) target = $region36
      $region35: #{patchifier_forward.47} parent=31 // pred_region
        %p221 = scmp.lt.s32.totalorder %s13, 1
        %s222 = scalar_select %p221, %s13, 1
        %s223 = smul.addr %s222, 8
        %s224 = smul.addr %s223, 8
        %s225 = scalar_lea.vmem %s1, %s224
      $region36: #{patchifier_forward.47} parent=31 // pred_fallthru
        _
    $region32: #{patchifier_forward.47} parent=5 // pred_fallthru
      _
  $region6: #{patchifier_forward.47} parent=0 // loop_footer
    %s11 = sadd.s32 1, %s7
  $region7: #{patchifier_forward.47} parent=0 // loop_footer_branch
    %6 = sbr.rel target = $region3
  $region8: #{patchifier_forward.47} parent=0 // loop_exit
    _

// kernel: patchifier_forward.49
$region0: #{patchifier_forward.49}
  #allocation0 [shape = 'u32[]', space=smem, size = 0x4, offset = 0x4, fixed_abs, tag = 'smem constant byte address 0x4 - core index']
  #allocation1 [shape = 'u32[144,128]{1,0:T(1,128)}', space=vmem, size = 0x12000, scoped, tag = 'internal scratch']
  %s0 = inlined_call_operand.vmem [shape: f32[2,64,64], index: 0, kind: input, shape index: {}]
  %s1 = inlined_call_operand.vmem [shape: f32[2,64,64], index: 1, kind: output, shape index: {}]
  %s2 = sld [smem:[#allocation0]]
  $region37: #{patchifier_forward.49} parent=0
    _
  %s4 = ssub.s32 1, %s2
  %s5 = scalar_select 0, %s4, %s2
  loop: start=0, step=1, limit=4
  $region2: #{patchifier_forward.49} parent=0 // loop_pre_header
    _
  $region3: #{patchifier_forward.49} parent=0 // loop_header
    %s7 = sphi 0, %s11
    %p8 = scmp.ge.s32.totalorder %s7, 4
    %s17 = sphi 0, %s19
    %s20 = sphi 0, %s17
    %s21 = sphi 0, %s20
    %s37 = sphi 0, %s21
    %s43 = sphi 0, %s45
    %s46 = sphi 0, %s43
    %s47 = sphi 0, %s46
    %s63 = sphi 0, %s47
  $region4: #{patchifier_forward.49} parent=0 // loop_header_branch
    %10 = sbr.rel (%p8) target = $region8
  $region5: #{patchifier_forward.49} parent=0 // loop_body
    %s12 = ssub.s32 %s7, 1
    %s13 = ssub.s32 %s7, 2
    %s14 = sadd.s32 %s7, 1
    %s15 = ssub.s32 %s7, %s14
    %p16 = scmp.eq.s32.totalorder %s15, 0
    %s18 = sadd.s32 %s17, 1
    %s19 = scalar_select %p16, %s17, %s18
    %p22 = pneg %p16
    %p23 = scmp.eq.s32.totalorder %s7, 1
    %p24 = por %p22, %p23
    %p25 = scmp.ne.s32.totalorder %s17, %s20
    %p26 = scmp.eq.s32.totalorder %s7, 0
    %p27 = por %p25, %p26
    %p28 = scmp.ne.s32.totalorder %s17, %s20
    %p29 = scmp.eq.s32.totalorder %s12, 1
    %p30 = por %p28, %p29
    %p31 = scmp.ne.s32.totalorder %s20, %s21
    %p32 = scmp.eq.s32.totalorder %s12, 0
    %p33 = por %p31, %p32
    %p34 = scmp.ne.s32.totalorder %s20, %s21
    %p35 = scmp.eq.s32.totalorder %s13, 1
    %p36 = por %p34, %p35
    %p38 = scmp.ne.s32.totalorder %s21, %s37
    %p39 = scmp.eq.s32.totalorder %s13, 0
    %p40 = por %p38, %p39
    %s41 = ssub.s32 %s7, %s14
    %p42 = scmp.eq.s32.totalorder %s41, 0
    %s44 = sadd.s32 %s43, 1
    %s45 = scalar_select %p42, %s43, %s44
    %p48 = pneg %p42
    %p49 = scmp.eq.s32.totalorder %s7, 1
    %p50 = por %p48, %p49
    %p51 = scmp.ne.s32.totalorder %s43, %s46
    %p52 = scmp.eq.s32.totalorder %s7, 0
    %p53 = por %p51, %p52
    %p54 = scmp.ne.s32.totalorder %s43, %s46
    %p55 = scmp.eq.s32.totalorder %s12, 1
    %p56 = por %p54, %p55
    %p57 = scmp.ne.s32.totalorder %s46, %s47
    %p58 = scmp.eq.s32.totalorder %s12, 0
    %p59 = por %p57, %p58
    %p60 = scmp.ne.s32.totalorder %s46, %s47
    %p61 = scmp.eq.s32.totalorder %s13, 1
    %p62 = por %p60, %p61
    %p64 = scmp.ne.s32.totalorder %s47, %s63
    %p65 = scmp.eq.s32.totalorder %s13, 0
    %p66 = por %p64, %p65
    %p67 = scmp.le.s32.totalorder 1, %s7
    %p68 = scmp.lt.s32.totalorder %s7, 3
    %p69 = pnand %p67, %p68
    %p70 = pneg %p69
    // Predicated region
    $region9: #{patchifier_forward.49} parent=5 // pred_check
      _
    $region10: #{patchifier_forward.49} parent=5 // pred_check_branch
      %72 = sbr.rel (%p69) target = $region12
    $region11: #{patchifier_forward.49} parent=5 // pred_region
      %s73 = ssub.s32 %s7, 1
    $region12: #{patchifier_forward.49} parent=5 // pred_fallthru
      _
    %p74 = scmp.lt.s32.totalorder %s7, 2
    // Predicated region
    $region13: #{patchifier_forward.49} parent=5 // pred_check
      %p75 = pneg %p74
    $region14: #{patchifier_forward.49} parent=5 // pred_check_branch
      %77 = sbr.rel (%p75) target = $region16
    $region15: #{patchifier_forward.49} parent=5 // pred_region
      // Predicated region
      $region17: #{patchifier_forward.49} parent=15 // pred_check
        %p78 = pneg %p27
      $region18: #{patchifier_forward.49} parent=15 // pred_check_branch
        %80 = sbr.rel (%p78) target = $region20
      $region19: #{patchifier_forward.49} parent=15 // pred_region
        %p81 = scmp.lt.s32.totalorder %s7, 1
        %s82 = scalar_select %p81, %s7, 1
        %s83 = smul.addr %s82, 8
        %s84 = smul.addr %s83, 8
        %s85 = scalar_lea.vmem %s0, %s84
      $region20: #{patchifier_forward.49} parent=15 // pred_fallthru
        _
    $region16: #{patchifier_forward.49} parent=5 // pred_fallthru
      _
    %p86 = scmp.le.s32.totalorder 1, %s7
    %p87 = scmp.lt.s32.totalorder %s7, 3
    %p88 = pnand %p86, %p87
    %p89 = pneg %p88
    // Predicated region
    $region21: #{patchifier_forward.49} parent=5 // pred_check
      _
    $region22: #{patchifier_forward.49} parent=5 // pred_check_branch
      %91 = sbr.rel (%p88) target = $region24
    $region23: #{patchifier_forward.49} parent=5 // pred_region
      %s92 = ssub.s32 %s7, 1
      %p93 = scmp.lt.s32.totalorder %s12, 1
      %s94 = scalar_select %p93, %s12, 1
      %s95 = smul.addr %s94, 8
      %s96 = smul.addr %s95, 8
      %s97 = scalar_lea.vmem %s0, %s96
      %p98 = pneg %p33
      %p99 = pneg %p30
      %p100 = pneg %p59
      %p101 = pneg %p56
      %p102 = scmp.lt.s32.totalorder %s12, 1
      %s103 = scalar_select %p102, %s12, 1
      %s104 = smul.addr %s103, 8
      %s105 = smul.addr %s104, 8
      %s106 = scalar_lea.vmem %s1, %s105
      %p107 = scmp.lt.s32.totalorder %s12, 1
      %s108 = scalar_select %p107, %s12, 1
      %s109 = smul.addr %s108, 8
      %s110 = smul.addr %s109, 8
      %s111 = scalar_lea.vmem %s0, %s110
      %p112 = scmp.lt.s32.totalorder %s12, 1
      %s113 = scalar_select %p112, %s12, 1
      %s114 = smul.addr %s113, 8
      %s115 = smul.addr %s114, 8
      %s116 = scalar_lea.vmem %s1, %s115
      %v117 = vld [vmem:[%s111] sm:$0xff]
      %v118 = vld [vmem:[%s111 + $0x8] sm:$0xff]
      %v119 = vld [vmem:[%s111 + $0x10] sm:$0xff]
      %v120 = vld [vmem:[%s111 + $0x18] sm:$0xff]
      %v121 = vld [vmem:[%s111 + $0x20] sm:$0xff]
      %v122 = vld [vmem:[%s111 + $0x28] sm:$0xff]
      %v123 = vld [vmem:[%s111 + $0x30] sm:$0xff]
      %v124 = vld [vmem:[%s111 + $0x38] sm:$0xff]
      %vm125 = vcmask 523264
      %v126 = vsel %vm125, %v117, 0.0
      %v127 = vsel %vm125, %v118, 0.0
      %v128 = vadd.f32 %v126, %v127
      %v129 = vsel %vm125, %v119, 0.0
      %v130 = vadd.f32 %v128, %v129
      %v131 = vsel %vm125, %v120, 0.0
      %v132 = vadd.f32 %v130, %v131
      %v133 = vsel %vm125, %v121, 0.0
      %v134 = vadd.f32 %v132, %v133
      %v135 = vsel %vm125, %v122, 0.0
      %v136 = vadd.f32 %v134, %v135
      %v137 = vsel %vm125, %v123, 0.0
      %v138 = vadd.f32 %v136, %v137
      %v139 = vsel %vm125, %v124, 0.0
      %v140 = vadd.f32 %v138, %v139
      %v141 = vrot.slane %v140, 4
      %v142 = vadd.f32 %v140, %v141
      %v143 = vrot.slane %v142, 2
      %v144 = vadd.f32 %v142, %v143
      %v145 = vrot.slane %v144, 1
      %v146 = vadd.f32 %v144, %v145
      %v147 = vrcp.pop 64.0
      %v148 = vmul.f32 %v146, %v147
      %v149 = vsub.f32 %v117, %v148
      %v150 = vsub.f32 %v118, %v148
      %v151 = vsub.f32 %v119, %v148
      %v152 = vsub.f32 %v120, %v148
      %v153 = vsub.f32 %v121, %v148
      %v154 = vsub.f32 %v122, %v148
      %v155 = vsub.f32 %v123, %v148
      %v156 = vsub.f32 %v124, %v148
      %v157 = vmul.f32 %v149, %v149
      %v158 = vmul.f32 %v150, %v150
      %v159 = vmul.f32 %v151, %v151
      %v160 = vmul.f32 %v152, %v152
      %v161 = vmul.f32 %v153, %v153
      %v162 = vmul.f32 %v154, %v154
      %v163 = vmul.f32 %v155, %v155
      %v164 = vmul.f32 %v156, %v156
      %v165 = vsel %vm125, %v157, 0.0
      %v166 = vsel %vm125, %v158, 0.0
      %v167 = vadd.f32 %v165, %v166
      %v168 = vsel %vm125, %v159, 0.0
      %v169 = vadd.f32 %v167, %v168
      %v170 = vsel %vm125, %v160, 0.0
      %v171 = vadd.f32 %v169, %v170
      %v172 = vsel %vm125, %v161, 0.0
      %v173 = vadd.f32 %v171, %v172
      %v174 = vsel %vm125, %v162, 0.0
      %v175 = vadd.f32 %v173, %v174
      %v176 = vsel %vm125, %v163, 0.0
      %v177 = vadd.f32 %v175, %v176
      %v178 = vsel %vm125, %v164, 0.0
      %v179 = vadd.f32 %v177, %v178
      %v180 = vrot.slane %v179, 4
      %v181 = vadd.f32 %v179, %v180
      %v182 = vrot.slane %v181, 2
      %v183 = vadd.f32 %v181, %v182
      %v184 = vrot.slane %v183, 1
      %v185 = vadd.f32 %v183, %v184
      %v186 = vmul.f32 %v185, %v147
      %v187 = vadd.f32 %v186, 1e-05
      %v188 = vrsqrt.pop %v187
      %v189 = vmul.f32 %v149, %v188
      %v190 = vmul.f32 %v150, %v188
      %v191 = vmul.f32 %v151, %v188
      %v192 = vmul.f32 %v152, %v188
      %v193 = vmul.f32 %v153, %v188
      %v194 = vmul.f32 %v154, %v188
      %v195 = vmul.f32 %v155, %v188
      %v196 = vmul.f32 %v156, %v188
      %v197 = vmax.f32 %v189, 0.0
      %v198 = vmax.f32 %v190, 0.0
      %v199 = vmax.f32 %v191, 0.0
      %v200 = vmax.f32 %v192, 0.0
      %v201 = vmax.f32 %v193, 0.0
      %v202 = vmax.f32 %v194, 0.0
      %v203 = vmax.f32 %v195, 0.0
      %v204 = vmax.f32 %v196, 0.0
      %205 = vst.msk [vmem:[%s116] sm:$0xff] %vm125, %v197
      %206 = vst.msk [vmem:[%s116 + $0x8] sm:$0xff] %vm125, %v198
      %207 = vst.msk [vmem:[%s116 + $0x10] sm:$0xff] %vm125, %v199
      %208 = vst.msk [vmem:[%s116 + $0x18] sm:$0xff] %vm125, %v200
      %209 = vst.msk [vmem:[%s116 + $0x20] sm:$0xff] %vm125, %v201
      %210 = vst.msk [vmem:[%s116 + $0x28] sm:$0xff] %vm125, %v202
      %211 = vst.msk [vmem:[%s116 + $0x30] sm:$0xff] %vm125, %v203
      %212 = vst.msk [vmem:[%s116 + $0x38] sm:$0xff] %vm125, %v204
      %p213 = scmp.lt.s32.totalorder %s12, 1
      %s214 = scalar_select %p213, %s12, 1
      %s215 = smul.addr %s214, 8
      %s216 = smul.addr %s215, 8
      %s217 = scalar_lea.vmem %s1, %s216
      // Predicated region
      $region25: #{patchifier_forward.49} parent=23 // pred_check
        %p218 = pneg %p56
      $region26: #{patchifier_forward.49} parent=23 // pred_check_branch
        %220 = sbr.rel (%p218) target = $region28
      $region27: #{patchifier_forward.49} parent=23 // pred_region
        _
      $region28: #{patchifier_forward.49} parent=23 // pred_fallthru
        _
    $region24: #{patchifier_forward.49} parent=5 // pred_fallthru
      _
    %p221 = scmp.le.s32.totalorder 2, %s7
    // Predicated region
    $region29: #{patchifier_forward.49} parent=5 // pred_check
      %p222 = pneg %p221
    $region30: #{patchifier_forward.49} parent=5 // pred_check_branch
      %224 = sbr.rel (%p222) target = $region32
    $region31: #{patchifier_forward.49} parent=5 // pred_region
      %s225 = ssub.s32 %s7, 2
      // Predicated region
      $region33: #{patchifier_forward.49} parent=31 // pred_check
        %p226 = pneg %p62
      $region34: #{patchifier_forward.49} parent=31 // pred_check_branch
        %228 = sbr.rel (%p226) target = $region36
      $region35: #{patchifier_forward.49} parent=31 // pred_region
        %p229 = scmp.lt.s32.totalorder %s13, 1
        %s230 = scalar_select %p229, %s13, 1
        %s231 = smul.addr %s230, 8
        %s232 = smul.addr %s231, 8
        %s233 = scalar_lea.vmem %s1, %s232
      $region36: #{patchifier_forward.49} parent=31 // pred_fallthru
        _
    $region32: #{patchifier_forward.49} parent=5 // pred_fallthru
      _
  $region6: #{patchifier_forward.49} parent=0 // loop_footer
    %s11 = sadd.s32 1, %s7
  $region7: #{patchifier_forward.49} parent=0 // loop_footer_branch
    %6 = sbr.rel target = $region3
  $region8: #{patchifier_forward.49} parent=0 // loop_exit
    _

// kernel: patchifier_forward.57
$region0: #{patchifier_forward.57}
  #allocation0 [shape = 'u32[]', space=smem, size = 0x4, offset = 0x4, fixed_abs, tag = 'smem constant byte address 0x4 - core index']
  #allocation1 [shape = 'u32[144,128]{1,0:T(1,128)}', space=vmem, size = 0x12000, scoped, tag = 'internal scratch']
  #allocation2 [shape = 'f32[1,3,3,128]{3,2,1,0:T(4,128)}', space=vmem, size = 0x1800, scoped, tag = 'scratch operand']
  #allocation3 [shape = 's32[1]{0}', space=sflag, size = 0x4, scoped, tag = 'scratch operand']
  #allocation4 [shape = 's32[1]{0}', space=sflag, size = 0x4, scoped, tag = 'scoped memory for patchifier_forward.57']
  #allocation5 [shape = 'u8[8192]{0}', space=smem, size = 0x2000, scoped, tag = 'prefetched SMEM operand 0']
  #allocation6 [shape = 's32[]', space=sflag, size = 0x4, offset = 0, fixed_abs, tag = 'sflag constant byte address 0x0 - dummy sync flag']
  %s0 = inlined_call_operand.vmem [shape: s32[16,3], index: 0, kind: input, shape index: {}]
  %s1 = inlined_call_operand.vmem [shape: f32[2,8,8,128], index: 1, kind: input, shape index: {}]
  %s2 = inlined_call_operand.vmem [shape: f32[16,3,3,128], index: 2, kind: output, shape index: {}]
  %s3 = sld [smem:[#allocation0]]
  $region62: #{patchifier_forward.57} parent=0
    _
  %s5 = ssub.s32 1, %s3
  %s6 = scalar_select 0, %s5, %s3
  %s7 = sshll.u32 %s0, 4
  %s8 = int_to_ptr.vmem [resolvable:$true] %s7
  %10 = dma.vmem_to_smem %s8, 256, [#allocation5], [#allocation4]
  %11 = dma.done [#allocation4], 256
  %12 = sfence
  loop: start=0, step=1, limit=17
  $region2: #{patchifier_forward.57} parent=0 // loop_pre_header
    _
  $region3: #{patchifier_forward.57} parent=0 // loop_header
    %s14 = sphi 0, %s18
    %p15 = scmp.ge.s32.totalorder %s14, 17
    %s23 = sphi 0, %s25
    %s26 = sphi 0, %s23
    %s36 = sphi 0, %s26
  $region4: #{patchifier_forward.57} parent=0 // loop_header_branch
    %17 = sbr.rel (%p15) target = $region8
  $region5: #{patchifier_forward.57} parent=0 // loop_body
    %s19 = ssub.s32 %s14, 1
    %s20 = sadd.s32 %s14, 1
    %s21 = ssub.s32 %s14, %s20
    %p22 = scmp.eq.s32.totalorder %s21, 0
    %s24 = sadd.s32 %s23, 1
    %s25 = scalar_select %p22, %s23, %s24
    %p27 = pneg %p22
    %p28 = scmp.eq.s32.totalorder %s14, 15
    %p29 = por %p27, %p28
    %p30 = scmp.ne.s32.totalorder %s23, %s26
    %p31 = scmp.eq.s32.totalorder %s14, 0
    %p32 = por %p30, %p31
    %p33 = scmp.ne.s32.totalorder %s23, %s26
    %p34 = scmp.eq.s32.totalorder %s19, 15
    %p35 = por %p33, %p34
    %p37 = scmp.ne.s32.totalorder %s26, %s36
    %p38 = scmp.eq.s32.totalorder %s19, 0
    %p39 = por %p37, %p38
    %p40 = scmp.lt.s32.totalorder %s14, 16
    // Predicated region
    $region9: #{patchifier_forward.57} parent=5 // pred_check
      %p41 = pneg %p40
    $region10: #{patchifier_forward.57} parent=5 // pred_check_branch
      %43 = sbr.rel (%p41) target = $region12
    $region11: #{patchifier_forward.57} parent=5 // pred_region
      %p44 = pneg %p32
      %p45 = pneg %p29
      %p46 = scmp.lt.s32.totalorder %s14, 15
      %s47 = scalar_select %p46, %s14, 15
      %s48 = smul.addr %s47, 3
      %s49 = smul.addr %s48, 4
      %s50 = scalar_lea.vmem %s2, %s49
      %p51 = scmp.lt.s32.totalorder %s14, 15
      %s52 = scalar_select %p51, %s14, 15
      %s53 = smul.addr %s52, 3
      %s54 = smul.addr %s53, 4
      %s55 = scalar_lea.vmem %s2, %s54
      %s56 = smul.u32 %s14, 128
      %s57 = sld [smem:[#allocation5 + %s56]]
      %s58 = sadd.s32 %s56, 1
      %s59 = sld [smem:[#allocation5 + %s58]]
      %s60 = sadd.s32 %s56, 2
      %s61 = sld [smem:[#allocation5 + %s60]]
      %s62 = ssub.s32 %s61, 1
      %s63 = ssub.s32 %s59, 1
      %s64 = smul.u32 %s62, 8
      %s65 = sadd.s32 %s63, %s64
      %s66 = smul.u32 %s57, 64
      %s67 = sadd.s32 %s65, %s66
      %s68 = scalar_lea.vmem %s1, %s67
      %p70 = scmp.lt.u32.totalorder 3, 8
      %p71 = pneg %p70
      // Predicated region
      $region13: #{patchifier_forward.57} parent=11 // pred_check
        _
      $region14: #{patchifier_forward.57} parent=11 // pred_check_branch
        %73 = sbr.rel (%p70) target = $region16
      $region15: #{patchifier_forward.57} parent=11 // pred_region
        %s93 = sand.u32 3, 7
        %p94 = scmp.eq.s32.totalorder %s93, 0
        %p95 = pneg %p94
        // Predicated region
        $region28: #{patchifier_forward.57} parent=15 // pred_check
          _
        $region29: #{patchifier_forward.57} parent=15 // pred_check_branch
          %97 = sbr.rel (%p94) target = $region31
        $region30: #{patchifier_forward.57} parent=15 // pred_region
          %s98 = sand.u32 3, 7
          %s99 = ssub.s32 3, %s98
          %s100 = scalar_lea.vmem %s68, %s99
          %s101 = ssub.s32 3, %s98
          %s102 = scalar_lea.vmem [#allocation2], %s101
          loop: start=0, step=1, limit=1
          $region32: #{patchifier_forward.57} parent=30 // loop_pre_header
            _
          $region33: #{patchifier_forward.57} parent=30 // loop_header
            %s104 = sphi 0, %s108
            %p105 = scmp.ge.s32.totalorder %s104, 1
            %s109 = sphi %s68, %s68
            %s110 = sphi [#allocation2], [#allocation2]
          $region34: #{patchifier_forward.57} parent=30 // loop_header_branch
            %107 = sbr.rel (%p105) target = $region38
          $region35: #{patchifier_forward.57} parent=30 // loop_body
            _
          $region36: #{patchifier_forward.57} parent=30 // loop_footer
            %s108 = sadd.s32 1, %s104
          $region37: #{patchifier_forward.57} parent=30 // loop_footer_branch
            %103 = sbr.rel target = $region33
          $region38: #{patchifier_forward.57} parent=30 // loop_exit
            _
          %s111 = sshll.u32 1, %s98
          %s112 = ssub.s32 %s111, 1
          loop: start=0, step=1, limit=1
          $region39: #{patchifier_forward.57} parent=30 // loop_pre_header
            _
          $region40: #{patchifier_forward.57} parent=30 // loop_header
            %s114 = sphi 0, %s118
            %p115 = scmp.ge.s32.totalorder %s114, 1
            %s119 = sphi %s100, %s100
            %s120 = sphi %s102, %s102
          $region41: #{patchifier_forward.57} parent=30 // loop_header_branch
            %117 = sbr.rel (%p115) target = $region45
          $region42: #{patchifier_forward.57} parent=30 // loop_body
            %v121 = vld [vmem:[%s119] sm:%s112]
            %122 = vst [vmem:[%s120] sm:%s112] %v121
            %v123 = vld [vmem:[%s119 + $0x8] sm:%s112]
            %124 = vst [vmem:[%s120 + $0x4] sm:%s112] %v123
            %v125 = vld [vmem:[%s119 + $0x10] sm:%s112]
            %126 = vst [vmem:[%s120 + $0x8] sm:%s112] %v125
          $region43: #{patchifier_forward.57} parent=30 // loop_footer
            %s118 = sadd.s32 1, %s114
          $region44: #{patchifier_forward.57} parent=30 // loop_footer_branch
            %113 = sbr.rel target = $region40
          $region45: #{patchifier_forward.57} parent=30 // loop_exit
            _
        $region31: #{patchifier_forward.57} parent=15 // pred_fallthru
          _
      $region16: #{patchifier_forward.57} parent=11 // pred_fallthru
        _
      // Predicated region
      $region17: #{patchifier_forward.57} parent=11 // pred_check
        %p74 = pneg %p70
      $region18: #{patchifier_forward.57} parent=11 // pred_check_branch
        %76 = sbr.rel (%p74) target = $region20
      $region19: #{patchifier_forward.57} parent=11 // pred_region
        %s77 = sshll.u32 1, 3
        %s78 = ssub.s32 %s77, 1
        loop: start=0, step=1, limit=1
        $region21: #{patchifier_forward.57} parent=19 // loop_pre_header
          _
        $region22: #{patchifier_forward.57} parent=19 // loop_header
          %s80 = sphi 0, %s84
          %p81 = scmp.ge.s32.totalorder %s80, 1
          %s85 = sphi %s68, %s68
          %s86 = sphi [#allocation2], [#allocation2]
        $region23: #{patchifier_forward.57} parent=19 // loop_header_branch
          %83 = sbr.rel (%p81) target = $region27
        $region24: #{patchifier_forward.57} parent=19 // loop_body
          %v87 = vld [vmem:[%s85] sm:%s78]
          %88 = vst [vmem:[%s86] sm:%s78] %v87
          %v89 = vld [vmem:[%s85 + $0x8] sm:%s78]
          %90 = vst [vmem:[%s86 + $0x4] sm:%s78] %v89
          %v91 = vld [vmem:[%s85 + $0x10] sm:%s78]
          %92 = vst [vmem:[%s86 + $0x8] sm:%s78] %v91
        $region25: #{patchifier_forward.57} parent=19 // loop_footer
          %s84 = sadd.s32 1, %s80
        $region26: #{patchifier_forward.57} parent=19 // loop_footer_branch
          %79 = sbr.rel target = $region22
        $region27: #{patchifier_forward.57} parent=19 // loop_exit
          _
      $region20: #{patchifier_forward.57} parent=11 // pred_fallthru
        _
      // Predicated region
      $region46: #{patchifier_forward.57} parent=11 // pred_check
        _
      $region47: #{patchifier_forward.57} parent=11 // pred_check_branch
        %129 = sbr.rel (0) target = $region49
      $region48: #{patchifier_forward.57} parent=11 // pred_region
        %130 = vsyncadd [#allocation3], 144
      $region49: #{patchifier_forward.57} parent=11 // pred_fallthru
        _
      %s131 = smul.u32 1, 3
      %s132 = smul.u32 %s131, 3
      %s133 = smul.u32 %s132, 1
      %s134 = sshll.u32 %s133, 4
      %135 = dma.done [#allocation3], %s134
      %v136 = vld [vmem:[#allocation2] sm:$0x7]
      %v137 = vld [vmem:[#allocation2 + $0x4] sm:$0x7]
      %v138 = vld [vmem:[#allocation2 + $0x8] sm:$0x7]
      %139 = vst [vmem:[%s55] sm:$0x7] %v136
      %140 = vst [vmem:[%s55 + $0x4] sm:$0x7] %v137
      %141 = vst [vmem:[%s55 + $0x8] sm:$0x7] %v138
      %p142 = scmp.lt.s32.totalorder %s14, 15
      %s143 = scalar_select %p142, %s14, 15
      %s144 = smul.addr %s143, 3
      %s145 = smul.addr %s144, 4
      %s146 = scalar_lea.vmem %s2, %s145
      // Predicated region
      $region50: #{patchifier_forward.57} parent=11 // pred_check
        %p147 = pneg %p29
      $region51: #{patchifier_forward.57} parent=11 // pred_check_branch
        %149 = sbr.rel (%p147) target = $region53
      $region52: #{patchifier_forward.57} parent=11 // pred_region
        _
      $region53: #{patchifier_forward.57} parent=11 // pred_fallthru
        _
    $region12: #{patchifier_forward.57} parent=5 // pred_fallthru
      _
    %p150 = scmp.le.s32.totalorder 1, %s14
    // Predicated region
    $region54: #{patchifier_forward.57} parent=5 // pred_check
      %p151 = pneg %p150
    $region55: #{patchifier_forward.57} parent=5 // pred_check_branch
      %153 = sbr.rel (%p151) target = $region57
    $region56: #{patchifier_forward.57} parent=5 // pred_region
      %s154 = ssub.s32 %s14, 1
      // Predicated region
      $region58: #{patchifier_forward.57} parent=56 // pred_check
        %p155 = pneg %p35
      $region59: #{patchifier_forward.57} parent=56 // pred_check_branch
        %157 = sbr.rel (%p155) target = $region61
      $region60: #{patchifier_forward.57} parent=56 // pred_region
        %p158 = scmp.lt.s32.totalorder %s19, 15
        %s159 = scalar_select %p158, %s19, 15
        %s160 = smul.addr %s159, 3
        %s161 = smul.addr %s160, 4
        %s162 = scalar_lea.vmem %s2, %s161
      $region61: #{patchifier_forward.57} parent=56 // pred_fallthru
        _
    $region57: #{patchifier_forward.57} parent=5 // pred_fallthru
      _
  $region6: #{patchifier_forward.57} parent=0 // loop_footer
    %s18 = sadd.s32 1, %s14
  $region7: #{patchifier_forward.57} parent=0 // loop_footer_branch
    %13 = sbr.rel target = $region3
  $region8: #{patchifier_forward.57} parent=0 // loop_exit
    _
  %163 = vsyncmov [#allocation3]
  %s164 = vpop.sfrf %163
  %p165 = scmp.eq.s32.totalorder %s164, 0
  %p166 = pneg %p165
  %168 = shalt.err (%p166)

// kernel: patchifier_forward.56
$region0: #{patchifier_forward.56}
  #allocation0 [shape = 'u32[]', space=smem, size = 0x4, offset = 0x4, fixed_abs, tag = 'smem constant byte address 0x4 - core index']
  #allocation1 [shape = 'u32[144,128]{1,0:T(1,128)}', space=vmem, size = 0x12000, scoped, tag = 'internal scratch']
  %s0 = inlined_call_operand.vmem [shape: bf16[128,64], index: 0, kind: input, shape index: {}]
  %s1 = inlined_call_operand.vmem [shape: bf16[64,128], index: 1, kind: input, shape index: {}]
  %s2 = inlined_call_operand.vmem [shape: f32[1,128], index: 2, kind: input, shape index: {}]
  %s3 = inlined_call_operand.vmem [shape: f32[128,128], index: 3, kind: output, shape index: {}]
  %s4 = sld [smem:[#allocation0]]
  $region22: #{patchifier_forward.56} parent=0
    _
  %s6 = ssub.s32 1, %s4
  %s7 = scalar_select 0, %s6, %s4
  // Predicated region
  $region2: #{patchifier_forward.56} parent=0 // pred_check
    _
  $region3: #{patchifier_forward.56} parent=0 // pred_check_branch
    %9 = sbr.rel (0) target = $region5
  $region4: #{patchifier_forward.56} parent=0 // pred_region
    _
  $region5: #{patchifier_forward.56} parent=0 // pred_fallthru
    _
  // Predicated region
  $region6: #{patchifier_forward.56} parent=0 // pred_check
    _
  $region7: #{patchifier_forward.56} parent=0 // pred_check_branch
    %11 = sbr.rel (0) target = $region9
  $region8: #{patchifier_forward.56} parent=0 // pred_region
    _
  $region9: #{patchifier_forward.56} parent=0 // pred_fallthru
    _
  // Predicated region
  $region10: #{patchifier_forward.56} parent=0 // pred_check
    _
  $region11: #{patchifier_forward.56} parent=0 // pred_check_branch
    %13 = sbr.rel (0) target = $region13
  $region12: #{patchifier_forward.56} parent=0 // pred_region
    _
  $region13: #{patchifier_forward.56} parent=0 // pred_fallthru
    _
  %v15 = vld [vmem:[%s0] sm:$0xf]
  %v16 = vld [vmem:[%s0 + $0x4] sm:$0xf]
  %v17 = vld [vmem:[%s0 + $0x8] sm:$0xf]
  %v18 = vld [vmem:[%s0 + $0xc] sm:$0xf]
  %v19 = vld [vmem:[%s0 + $0x10] sm:$0xf]
  %v20 = vld [vmem:[%s0 + $0x14] sm:$0xf]
  %v21 = vld [vmem:[%s0 + $0x18] sm:$0xf]
  %v22 = vld [vmem:[%s0 + $0x1c] sm:$0xf]
  %v23 = vld [vmem:[%s0 + $0x20] sm:$0xf]
  %v24 = vld [vmem:[%s0 + $0x24] sm:$0xf]
  %v25 = vld [vmem:[%s0 + $0x28] sm:$0xf]
  %v26 = vld [vmem:[%s0 + $0x2c] sm:$0xf]
  %v27 = vld [vmem:[%s0 + $0x30] sm:$0xf]
  %v28 = vld [vmem:[%s0 + $0x34] sm:$0xf]
  %v29 = vld [vmem:[%s0 + $0x38] sm:$0xf]
  %v30 = vld [vmem:[%s0 + $0x3c] sm:$0xf]
  %v31 = vld [vmem:[%s1] sm:$0xf]
  %v32 = vld [vmem:[%s1 + $0x4] sm:$0xf]
  %v33 = vld [vmem:[%s1 + $0x8] sm:$0xf]
  %v34 = vld [vmem:[%s1 + $0xc] sm:$0xf]
  %v35 = vld [vmem:[%s1 + $0x10] sm:$0xf]
  %v36 = vld [vmem:[%s1 + $0x14] sm:$0xf]
  %v37 = vld [vmem:[%s1 + $0x18] sm:$0xf]
  %v38 = vld [vmem:[%s1 + $0x1c] sm:$0xf]
  %v39 = vld [vmem:[%s2] sm:$0x1]
  %v41 = vlaneseq
  %v42 = vshrl.u32 %v41, 7
  %v43 = vsub.s32 0, %v42
  %v44 = vrot.slane %v39, %v43
  %v62 = vunpack.c.l.b16 %v15
  %v63 = vunpack.c.l.b16 %v16
  %v64 = vunpack.c.l.b16 %v17
  %v65 = vunpack.c.l.b16 %v18
  %v66 = vunpack.c.l.b16 %v19
  %v67 = vunpack.c.l.b16 %v20
  %v68 = vunpack.c.l.b16 %v21
  %v69 = vunpack.c.l.b16 %v22
  %v70 = vunpack.c.l.b16 %v23
  %v71 = vunpack.c.l.b16 %v24
  %v72 = vunpack.c.l.b16 %v25
  %v73 = vunpack.c.l.b16 %v26
  %v74 = vunpack.c.l.b16 %v27
  %v75 = vunpack.c.l.b16 %v28
  %v76 = vunpack.c.l.b16 %v29
  %v77 = vunpack.c.l.b16 %v30
  %v78 = vpack.c.b16 %v63, %v62
  %v79 = vpack.c.b16 %v65, %v64
  %v80 = vpack.c.b16 %v67, %v66
  %v81 = vpack.c.b16 %v69, %v68
  %v82 = vpack.c.b16 %v71, %v70
  %v83 = vpack.c.b16 %v73, %v72
  %v84 = vpack.c.b16 %v75, %v74
  %v85 = vpack.c.b16 %v77, %v76
  %v94 = vunpack.c.l.b16 %v31
  %v95 = vunpack.c.l.b16 %v32
  %v96 = vunpack.c.l.b16 %v33
  %v97 = vunpack.c.l.b16 %v34
  %v98 = vunpack.c.l.b16 %v35
  %v99 = vunpack.c.l.b16 %v36
  %v100 = vunpack.c.l.b16 %v37
  %v101 = vunpack.c.l.b16 %v38
  %v102 = vpack.c.b16 %v95, %v94
  %v103 = vpack.c.b16 %v97, %v96
  %v104 = vpack.c.b16 %v99, %v98
  %v105 = vpack.c.b16 %v101, %v100
  %vm110 = vcmask 523264
  %v112 = vsel %vm110, %v78, 0
  %v115 = vsel %vm110, %v79, 0
  %v118 = vsel %vm110, %v80, 0
  %v121 = vsel %vm110, %v81, 0
  %v124 = vsel %vm110, %v82, 0
  %v127 = vsel %vm110, %v83, 0
  %v130 = vsel %vm110, %v84, 0
  %v133 = vsel %vm110, %v85, 0
  %135 = vmatprep.subr.bf16.mxu0 0
  %136 = vmatpush1.bf16.msra.mxu0 0
  %137 = vmatprep.subr.bf16.mxu0 0
  %138 = vmatpush1.bf16.msra.mxu0 0
  %139 = vmatprep.subr.bf16.mxu0 0
  %140 = vmatpush1.bf16.msra.mxu0 0
  %141 = vmatprep.subr.bf16.mxu0 0
  %142 = vmatpush1.bf16.msra.mxu0 0
  %143 = vmatprep.subr.bf16.mxu0 0
  %144 = vmatpush1.bf16.msra.mxu0 %v105
  %145 = vmatprep.subr.bf16.mxu0 0
  %146 = vmatpush1.bf16.msra.mxu0 %v104
  %147 = vmatprep.subr.bf16.mxu0 0
  %148 = vmatpush1.bf16.msra.mxu0 %v103
  %149 = vmatprep.subr.bf16.mxu0 0
  %150 = vmatpush1.bf16.msra.mxu0 %v102
  %151 = vmatprep.subr.bf16.mxu0 0
  %152 = vmatpush2.bf16.msra.mxu0 0
  %153 = vmatprep.subr.bf16.mxu0 0
  %154 = vmatpush2.bf16.msra.mxu0 0
  %155 = vmatprep.subr.bf16.mxu0 0
  %156 = vmatpush2.bf16.msra.mxu0 0
  %157 = vmatprep.subr.bf16.mxu0 0
  %158 = vmatpush2.bf16.msra.mxu0 0
  %159 = vmatprep.subr.bf16.mxu0 0
  %160 = vmatpush2.bf16.msra.mxu0 0
  %161 = vmatprep.subr.bf16.mxu0 0
  %162 = vmatpush2.bf16.msra.mxu0 0
  %163 = vmatprep.subr.bf16.mxu0 0
  %164 = vmatpush2.bf16.msra.mxu0 0
  %165 = vmatprep.subr.bf16.mxu0 0
  %166 = vmatpush2.bf16.msra.mxu0 0
  %167 = vmatprep.mubr.bf16.mxu0 0
  %168 = vmatmul.mubr.bf16.gmra.mxu0 %v112
  %v169 = vpop.f32.mrf.mxu0
  %v170 = vadd.f32 %v44, %v169
  %v171 = vpop.f32.mrf.mxu0
  %v172 = vpop.f32.mrf.mxu0
  %v173 = vadd.f32 %v44, %v172
  %v174 = vpop.f32.mrf.mxu0
  %175 = vmatprep.mubr.bf16.mxu0 0
  %176 = vmatmul.mubr.bf16.gmra.mxu0 %v115
  %v177 = vpop.f32.mrf.mxu0
  %v178 = vadd.f32 %v44, %v177
  %v179 = vpop.f32.mrf.mxu0
  %v180 = vpop.f32.mrf.mxu0
  %v181 = vadd.f32 %v44, %v180
  %v182 = vpop.f32.mrf.mxu0
  %183 = vmatprep.mubr.bf16.mxu0 0
  %184 = vmatmul.mubr.bf16.gmra.mxu0 %v118
  %v185 = vpop.f32.mrf.mxu0
  %v186 = vadd.f32 %v44, %v185
  %v187 = vpop.f32.mrf.mxu0
  %v188 = vpop.f32.mrf.mxu0
  %v189 = vadd.f32 %v44, %v188
  %v190 = vpop.f32.mrf.mxu0
  %191 = vmatprep.mubr.bf16.mxu0 0
  %192 = vmatmul.mubr.bf16.gmra.mxu0 %v121
  %v193 = vpop.f32.mrf.mxu0
  %v194 = vadd.f32 %v44, %v193
  %v195 = vpop.f32.mrf.mxu0
  %v196 = vpop.f32.mrf.mxu0
  %v197 = vadd.f32 %v44, %v196
  %v198 = vpop.f32.mrf.mxu0
  %199 = vmatprep.mubr.bf16.mxu0 0
  %200 = vmatmul.mubr.bf16.gmra.mxu0 %v124
  %v201 = vpop.f32.mrf.mxu0
  %v202 = vadd.f32 %v44, %v201
  %v203 = vpop.f32.mrf.mxu0
  %v204 = vpop.f32.mrf.mxu0
  %v205 = vadd.f32 %v44, %v204
  %v206 = vpop.f32.mrf.mxu0
  %207 = vmatprep.mubr.bf16.mxu0 0
  %208 = vmatmul.mubr.bf16.gmra.mxu0 %v127
  %v209 = vpop.f32.mrf.mxu0
  %v210 = vadd.f32 %v44, %v209
  %v211 = vpop.f32.mrf.mxu0
  %v212 = vpop.f32.mrf.mxu0
  %v213 = vadd.f32 %v44, %v212
  %v214 = vpop.f32.mrf.mxu0
  %215 = vmatprep.mubr.bf16.mxu0 0
  %216 = vmatmul.mubr.bf16.gmra.mxu0 %v130
  %v217 = vpop.f32.mrf.mxu0
  %v218 = vadd.f32 %v44, %v217
  %v219 = vpop.f32.mrf.mxu0
  %v220 = vpop.f32.mrf.mxu0
  %v221 = vadd.f32 %v44, %v220
  %v222 = vpop.f32.mrf.mxu0
  %223 = vmatprep.mubr.bf16.mxu0 0
  %224 = vmatmul.mubr.bf16.gmra.mxu0 %v133
  %v225 = vpop.f32.mrf.mxu0
  %v226 = vadd.f32 %v44, %v225
  %v227 = vpop.f32.mrf.mxu0
  %v228 = vpop.f32.mrf.mxu0
  %v229 = vadd.f32 %v44, %v228
  %v230 = vpop.f32.mrf.mxu0
  %231 = vdwg.mxu0
  %v232 = vmul.f32 %v170, 0.25
  %v233 = vmul.f32 %v173, 0.25
  %v234 = vmul.f32 %v178, 0.25
  %v235 = vmul.f32 %v181, 0.25
  %v236 = vmul.f32 %v186, 0.25
  %v237 = vmul.f32 %v189, 0.25
  %v238 = vmul.f32 %v194, 0.25
  %v239 = vmul.f32 %v197, 0.25
  %v240 = vmul.f32 %v202, 0.25
  %v241 = vmul.f32 %v205, 0.25
  %v242 = vmul.f32 %v210, 0.25
  %v243 = vmul.f32 %v213, 0.25
  %v244 = vmul.f32 %v218, 0.25
  %v245 = vmul.f32 %v221, 0.25
  %v246 = vmul.f32 %v226, 0.25
  %v247 = vmul.f32 %v229, 0.25
  %248 = vst [vmem:[%s3] sm:$0xff] %v232
  %249 = vst [vmem:[%s3 + $0x8] sm:$0xff] %v233
  %250 = vst [vmem:[%s3 + $0x10] sm:$0xff] %v234
  %251 = vst [vmem:[%s3 + $0x18] sm:$0xff] %v235
  %252 = vst [vmem:[%s3 + $0x20] sm:$0xff] %v236
  %253 = vst [vmem:[%s3 + $0x28] sm:$0xff] %v237
  %254 = vst [vmem:[%s3 + $0x30] sm:$0xff] %v238
  %255 = vst [vmem:[%s3 + $0x38] sm:$0xff] %v239
  %256 = vst [vmem:[%s3 + $0x40] sm:$0xff] %v240
  %257 = vst [vmem:[%s3 + $0x48] sm:$0xff] %v241
  %258 = vst [vmem:[%s3 + $0x50] sm:$0xff] %v242
  %259 = vst [vmem:[%s3 + $0x58] sm:$0xff] %v243
  %260 = vst [vmem:[%s3 + $0x60] sm:$0xff] %v244
  %261 = vst [vmem:[%s3 + $0x68] sm:$0xff] %v245
  %262 = vst [vmem:[%s3 + $0x70] sm:$0xff] %v246
  %263 = vst [vmem:[%s3 + $0x78] sm:$0xff] %v247
  // Predicated region
  $region14: #{patchifier_forward.56} parent=0 // pred_check
    _
  $region15: #{patchifier_forward.56} parent=0 // pred_check_branch
    %265 = sbr.rel (0) target = $region17
  $region16: #{patchifier_forward.56} parent=0 // pred_region
    _
  $region17: #{patchifier_forward.56} parent=0 // pred_fallthru
    _
  // Predicated region
  $region18: #{patchifier_forward.56} parent=0 // pred_check
    _
  $region19: #{patchifier_forward.56} parent=0 // pred_check_branch
    %267 = sbr.rel (0) target = $region21
  $region20: #{patchifier_forward.56} parent=0 // pred_region
    _
  $region21: #{patchifier_forward.56} parent=0 // pred_fallthru
    _

// kernel: patchifier_forward.50
$region0: #{patchifier_forward.50}
  #allocation0 [shape = 'u32[]', space=smem, size = 0x4, offset = 0x4, fixed_abs, tag = 'smem constant byte address 0x4 - core index']
  #allocation1 [shape = 'u32[144,128]{1,0:T(1,128)}', space=vmem, size = 0x12000, scoped, tag = 'internal scratch']
  %s0 = inlined_call_operand.vmem [shape: bf16[128,576], index: 0, kind: input, shape index: {}]
  %s1 = inlined_call_operand.vmem [shape: bf16[576,64], index: 1, kind: input, shape index: {}]
  %s2 = inlined_call_operand.vmem [shape: f32[1,64], index: 2, kind: input, shape index: {}]
  %s3 = inlined_call_operand.vmem [shape: f32[128,64], index: 3, kind: output, shape index: {}]
  %s4 = sld [smem:[#allocation0]]
  $region22: #{patchifier_forward.50} parent=0
    _
  %s6 = ssub.s32 1, %s4
  %s7 = scalar_select 0, %s6, %s4
  // Predicated region
  $region2: #{patchifier_forward.50} parent=0 // pred_check
    _
  $region3: #{patchifier_forward.50} parent=0 // pred_check_branch
    %9 = sbr.rel (0) target = $region5
  $region4: #{patchifier_forward.50} parent=0 // pred_region
    _
  $region5: #{patchifier_forward.50} parent=0 // pred_fallthru
    _
  // Predicated region
  $region6: #{patchifier_forward.50} parent=0 // pred_check
    _
  $region7: #{patchifier_forward.50} parent=0 // pred_check_branch
    %11 = sbr.rel (0) target = $region9
  $region8: #{patchifier_forward.50} parent=0 // pred_region
    _
  $region9: #{patchifier_forward.50} parent=0 // pred_fallthru
    _
  // Predicated region
  $region10: #{patchifier_forward.50} parent=0 // pred_check
    _
  $region11: #{patchifier_forward.50} parent=0 // pred_check_branch
    %13 = sbr.rel (0) target = $region13
  $region12: #{patchifier_forward.50} parent=0 // pred_region
    _
  $region13: #{patchifier_forward.50} parent=0 // pred_fallthru
    _
  %v15 = vld [vmem:[%s0] sm:$0xff]
  %v16 = vld [vmem:[%s0 + $0x8] sm:$0xff]
  %v17 = vld [vmem:[%s0 + $0x10] sm:$0xf]
  %v18 = vld [vmem:[%s0 + $0x14] sm:$0xff]
  %v19 = vld [vmem:[%s0 + $0x1c] sm:$0xff]
  %v20 = vld [vmem:[%s0 + $0x24] sm:$0xf]
  %v21 = vld [vmem:[%s0 + $0x28] sm:$0xff]
  %v22 = vld [vmem:[%s0 + $0x30] sm:$0xff]
  %v23 = vld [vmem:[%s0 + $0x38] sm:$0xf]
  %v24 = vld [vmem:[%s0 + $0x3c] sm:$0xff]
  %v25 = vld [vmem:[%s0 + $0x44] sm:$0xff]
  %v26 = vld [vmem:[%s0 + $0x4c] sm:$0xf]
  %v27 = vld [vmem:[%s0 + $0x50] sm:$0xff]
  %v28 = vld [vmem:[%s0 + $0x58] sm:$0xff]
  %v29 = vld [vmem:[%s0 + $0x60] sm:$0xf]
  %v30 = vld [vmem:[%s0 + $0x64] sm:$0xff]
  %v31 = vld [vmem:[%s0 + $0x6c] sm:$0xff]
  %v32 = vld [vmem:[%s0 + $0x74] sm:$0xf]
  %v33 = vld [vmem:[%s0 + $0x78] sm:$0xff]
  %v34 = vld [vmem:[%s0 + $0x80] sm:$0xff]
  %v35 = vld [vmem:[%s0 + $0x88] sm:$0xf]
  %v36 = vld [vmem:[%s0 + $0x8c] sm:$0xff]
  %v37 = vld [vmem:[%s0 + $0x94] sm:$0xff]
  %v38 = vld [vmem:[%s0 + $0x9c] sm:$0xf]
  %v39 = vld [vmem:[%s0 + $0xa0] sm:$0xff]
  %v40 = vld [vmem:[%s0 + $0xa8] sm:$0xff]
  %v41 = vld [vmem:[%s0 + $0xb0] sm:$0xf]
  %v42 = vld [vmem:[%s0 + $0xb4] sm:$0xff]
  %v43 = vld [vmem:[%s0 + $0xbc] sm:$0xff]
  %v44 = vld [vmem:[%s0 + $0xc4] sm:$0xf]
  %v45 = vld [vmem:[%s0 + $0xc8] sm:$0xff]
  %v46 = vld [vmem:[%s0 + $0xd0] sm:$0xff]
  %v47 = vld [vmem:[%s0 + $0xd8] sm:$0xf]
  %v48 = vld [vmem:[%s0 + $0xdc] sm:$0xff]
  %v49 = vld [vmem:[%s0 + $0xe4] sm:$0xff]
  %v50 = vld [vmem:[%s0 + $0xec] sm:$0xf]
  %v51 = vld [vmem:[%s0 + $0xf0] sm:$0xff]
  %v52 = vld [vmem:[%s0 + $0xf8] sm:$0xff]
  %v53 = vld [vmem:[%s0 + $0x100] sm:$0xf]
  %v54 = vld [vmem:[%s0 + $0x104] sm:$0xff]
  %v55 = vld [vmem:[%s0 + $0x10c] sm:$0xff]
  %v56 = vld [vmem:[%s0 + $0x114] sm:$0xf]
  %v57 = vld [vmem:[%s0 + $0x118] sm:$0xff]
  %v58 = vld [vmem:[%s0 + $0x120] sm:$0xff]
  %v59 = vld [vmem:[%s0 + $0x128] sm:$0xf]
  %v60 = vld [vmem:[%s0 + $0x12c] sm:$0xff]
  %v61 = vld [vmem:[%s0 + $0x134] sm:$0xff]
  %v62 = vld [vmem:[%s0 + $0x13c] sm:$0xf]
  %v63 = vld [vmem:[%s1] sm:$0xf]
  %v64 = vld [vmem:[%s1 + $0x4] sm:$0xf]
  %v65 = vld [vmem:[%s1 + $0x8] sm:$0xf]
  %v66 = vld [vmem:[%s1 + $0xc] sm:$0xf]
  %v67 = vld [vmem:[%s1 + $0x10] sm:$0xf]
  %v68 = vld [vmem:[%s1 + $0x14] sm:$0xf]
  %v69 = vld [vmem:[%s1 + $0x18] sm:$0xf]
  %v70 = vld [vmem:[%s1 + $0x1c] sm:$0xf]
  %v71 = vld [vmem:[%s1 + $0x20] sm:$0xf]
  %v72 = vld [vmem:[%s1 + $0x24] sm:$0xf]
  %v73 = vld [vmem:[%s1 + $0x28] sm:$0xf]
  %v74 = vld [vmem:[%s1 + $0x2c] sm:$0xf]
  %v75 = vld [vmem:[%s1 + $0x30] sm:$0xf]
  %v76 = vld [vmem:[%s1 + $0x34] sm:$0xf]
  %v77 = vld [vmem:[%s1 + $0x38] sm:$0xf]
  %v78 = vld [vmem:[%s1 + $0x3c] sm:$0xf]
  %v79 = vld [vmem:[%s1 + $0x40] sm:$0xf]
  %v80 = vld [vmem:[%s1 + $0x44] sm:$0xf]
  %v81 = vld [vmem:[%s1 + $0x48] sm:$0xf]
  %v82 = vld [vmem:[%s1 + $0x4c] sm:$0xf]
  %v83 = vld [vmem:[%s1 + $0x50] sm:$0xf]
  %v84 = vld [vmem:[%s1 + $0x54] sm:$0xf]
  %v85 = vld [vmem:[%s1 + $0x58] sm:$0xf]
  %v86 = vld [vmem:[%s1 + $0x5c] sm:$0xf]
  %v87 = vld [vmem:[%s1 + $0x60] sm:$0xf]
  %v88 = vld [vmem:[%s1 + $0x64] sm:$0xf]
  %v89 = vld [vmem:[%s1 + $0x68] sm:$0xf]
  %v90 = vld [vmem:[%s1 + $0x6c] sm:$0xf]
  %v91 = vld [vmem:[%s1 + $0x70] sm:$0xf]
  %v92 = vld [vmem:[%s1 + $0x74] sm:$0xf]
  %v93 = vld [vmem:[%s1 + $0x78] sm:$0xf]
  %v94 = vld [vmem:[%s1 + $0x7c] sm:$0xf]
  %v95 = vld [vmem:[%s1 + $0x80] sm:$0xf]
  %v96 = vld [vmem:[%s1 + $0x84] sm:$0xf]
  %v97 = vld [vmem:[%s1 + $0x88] sm:$0xf]
  %v98 = vld [vmem:[%s1 + $0x8c] sm:$0xf]
  %v99 = vld [vmem:[%s1 + $0x90] sm:$0xf]
  %v100 = vld [vmem:[%s1 + $0x94] sm:$0xf]
  %v101 = vld [vmem:[%s1 + $0x98] sm:$0xf]
  %v102 = vld [vmem:[%s1 + $0x9c] sm:$0xf]
  %v103 = vld [vmem:[%s1 + $0xa0] sm:$0xf]
  %v104 = vld [vmem:[%s1 + $0xa4] sm:$0xf]
  %v105 = vld [vmem:[%s1 + $0xa8] sm:$0xf]
  %v106 = vld [vmem:[%s1 + $0xac] sm:$0xf]
  %v107 = vld [vmem:[%s1 + $0xb0] sm:$0xf]
  %v108 = vld [vmem:[%s1 + $0xb4] sm:$0xf]
  %v109 = vld [vmem:[%s1 + $0xb8] sm:$0xf]
  %v110 = vld [vmem:[%s1 + $0xbc] sm:$0xf]
  %v111 = vld [vmem:[%s1 + $0xc0] sm:$0xf]
  %v112 = vld [vmem:[%s1 + $0xc4] sm:$0xf]
  %v113 = vld [vmem:[%s1 + $0xc8] sm:$0xf]
  %v114 = vld [vmem:[%s1 + $0xcc] sm:$0xf]
  %v115 = vld [vmem:[%s1 + $0xd0] sm:$0xf]
  %v116 = vld [vmem:[%s1 + $0xd4] sm:$0xf]
  %v117 = vld [vmem:[%s1 + $0xd8] sm:$0xf]
  %v118 = vld [vmem:[%s1 + $0xdc] sm:$0xf]
  %v119 = vld [vmem:[%s1 + $0xe0] sm:$0xf]
  %v120 = vld [vmem:[%s1 + $0xe4] sm:$0xf]
  %v121 = vld [vmem:[%s1 + $0xe8] sm:$0xf]
  %v122 = vld [vmem:[%s1 + $0xec] sm:$0xf]
  %v123 = vld [vmem:[%s1 + $0xf0] sm:$0xf]
  %v124 = vld [vmem:[%s1 + $0xf4] sm:$0xf]
  %v125 = vld [vmem:[%s1 + $0xf8] sm:$0xf]
  %v126 = vld [vmem:[%s1 + $0xfc] sm:$0xf]
  %v127 = vld [vmem:[%s1 + $0x100] sm:$0xf]
  %v128 = vld [vmem:[%s1 + $0x104] sm:$0xf]
  %v129 = vld [vmem:[%s1 + $0x108] sm:$0xf]
  %v130 = vld [vmem:[%s1 + $0x10c] sm:$0xf]
  %v131 = vld [vmem:[%s1 + $0x110] sm:$0xf]
  %v132 = vld [vmem:[%s1 + $0x114] sm:$0xf]
  %v133 = vld [vmem:[%s1 + $0x118] sm:$0xf]
  %v134 = vld [vmem:[%s1 + $0x11c] sm:$0xf]
  %v135 = vld [vmem:[%s2] sm:$0x1]
  %v137 = vlaneseq
  %v138 = vshrl.u32 %v137, 7
  %v139 = vsub.s32 0, %v138
  %v140 = vrot.slane %v135, %v139
  %v190 = vunpack.c.l.b16 %v15
  %v191 = vunpack.c.h.b16 %v15
  %v192 = vunpack.c.l.b16 %v16
  %v193 = vunpack.c.h.b16 %v16
  %v194 = vunpack.c.l.b16 %v17
  %v195 = vunpack.c.l.b16 %v18
  %v196 = vunpack.c.h.b16 %v18
  %v197 = vunpack.c.l.b16 %v19
  %v198 = vunpack.c.h.b16 %v19
  %v199 = vunpack.c.l.b16 %v20
  %v200 = vunpack.c.l.b16 %v21
  %v201 = vunpack.c.h.b16 %v21
  %v202 = vunpack.c.l.b16 %v22
  %v203 = vunpack.c.h.b16 %v22
  %v204 = vunpack.c.l.b16 %v23
  %v205 = vunpack.c.l.b16 %v24
  %v206 = vunpack.c.h.b16 %v24
  %v207 = vunpack.c.l.b16 %v25
  %v208 = vunpack.c.h.b16 %v25
  %v209 = vunpack.c.l.b16 %v26
  %v210 = vunpack.c.l.b16 %v27
  %v211 = vunpack.c.h.b16 %v27
  %v212 = vunpack.c.l.b16 %v28
  %v213 = vunpack.c.h.b16 %v28
  %v214 = vunpack.c.l.b16 %v29
  %v215 = vunpack.c.l.b16 %v30
  %v216 = vunpack.c.h.b16 %v30
  %v217 = vunpack.c.l.b16 %v31
  %v218 = vunpack.c.h.b16 %v31
  %v219 = vunpack.c.l.b16 %v32
  %v220 = vunpack.c.l.b16 %v33
  %v221 = vunpack.c.h.b16 %v33
  %v222 = vunpack.c.l.b16 %v34
  %v223 = vunpack.c.h.b16 %v34
  %v224 = vunpack.c.l.b16 %v35
  %v225 = vunpack.c.l.b16 %v36
  %v226 = vunpack.c.h.b16 %v36
  %v227 = vunpack.c.l.b16 %v37
  %v228 = vunpack.c.h.b16 %v37
  %v229 = vunpack.c.l.b16 %v38
  %v230 = vunpack.c.l.b16 %v39
  %v231 = vunpack.c.h.b16 %v39
  %v232 = vunpack.c.l.b16 %v40
  %v233 = vunpack.c.h.b16 %v40
  %v234 = vunpack.c.l.b16 %v41
  %v235 = vunpack.c.l.b16 %v42
  %v236 = vunpack.c.h.b16 %v42
  %v237 = vunpack.c.l.b16 %v43
  %v238 = vunpack.c.h.b16 %v43
  %v239 = vunpack.c.l.b16 %v44
  %v240 = vunpack.c.l.b16 %v45
  %v241 = vunpack.c.h.b16 %v45
  %v242 = vunpack.c.l.b16 %v46
  %v243 = vunpack.c.h.b16 %v46
  %v244 = vunpack.c.l.b16 %v47
  %v245 = vunpack.c.l.b16 %v48
  %v246 = vunpack.c.h.b16 %v48
  %v247 = vunpack.c.l.b16 %v49
  %v248 = vunpack.c.h.b16 %v49
  %v249 = vunpack.c.l.b16 %v50
  %v250 = vunpack.c.l.b16 %v51
  %v251 = vunpack.c.h.b16 %v51
  %v252 = vunpack.c.l.b16 %v52
  %v253 = vunpack.c.h.b16 %v52
  %v254 = vunpack.c.l.b16 %v53
  %v255 = vunpack.c.l.b16 %v54
  %v256 = vunpack.c.h.b16 %v54
  %v257 = vunpack.c.l.b16 %v55
  %v258 = vunpack.c.h.b16 %v55
  %v259 = vunpack.c.l.b16 %v56
  %v260 = vunpack.c.l.b16 %v57
  %v261 = vunpack.c.h.b16 %v57
  %v262 = vunpack.c.l.b16 %v58
  %v263 = vunpack.c.h.b16 %v58
  %v264 = vunpack.c.l.b16 %v59
  %v265 = vunpack.c.l.b16 %v60
  %v266 = vunpack.c.h.b16 %v60
  %v267 = vunpack.c.l.b16 %v61
  %v268 = vunpack.c.h.b16 %v61
  %v269 = vunpack.c.l.b16 %v62
  %v270 = vpack.c.b16 %v195, %v190
  %v271 = vpack.c.b16 %v196, %v191
  %v272 = vpack.c.b16 %v197, %v192
  %v273 = vpack.c.b16 %v198, %v193
  %v274 = vpack.c.b16 %v199, %v194
  %v275 = vpack.c.b16 %v205, %v200
  %v276 = vpack.c.b16 %v206, %v201
  %v277 = vpack.c.b16 %v207, %v202
  %v278 = vpack.c.b16 %v208, %v203
  %v279 = vpack.c.b16 %v209, %v204
  %v280 = vpack.c.b16 %v215, %v210
  %v281 = vpack.c.b16 %v216, %v211
  %v282 = vpack.c.b16 %v217, %v212
  %v283 = vpack.c.b16 %v218, %v213
  %v284 = vpack.c.b16 %v219, %v214
  %v285 = vpack.c.b16 %v225, %v220
  %v286 = vpack.c.b16 %v226, %v221
  %v287 = vpack.c.b16 %v227, %v222
  %v288 = vpack.c.b16 %v228, %v223
  %v289 = vpack.c.b16 %v229, %v224
  %v290 = vpack.c.b16 %v235, %v230
  %v291 = vpack.c.b16 %v236, %v231
  %v292 = vpack.c.b16 %v237, %v232
  %v293 = vpack.c.b16 %v238, %v233
  %v294 = vpack.c.b16 %v239, %v234
  %v295 = vpack.c.b16 %v245, %v240
  %v296 = vpack.c.b16 %v246, %v241
  %v297 = vpack.c.b16 %v247, %v242
  %v298 = vpack.c.b16 %v248, %v243
  %v299 = vpack.c.b16 %v249, %v244
  %v300 = vpack.c.b16 %v255, %v250
  %v301 = vpack.c.b16 %v256, %v251
  %v302 = vpack.c.b16 %v257, %v252
  %v303 = vpack.c.b16 %v258, %v253
  %v304 = vpack.c.b16 %v259, %v254
  %v305 = vpack.c.b16 %v265, %v260
  %v306 = vpack.c.b16 %v266, %v261
  %v307 = vpack.c.b16 %v267, %v262
  %v308 = vpack.c.b16 %v268, %v263
  %v309 = vpack.c.b16 %v269, %v264
  %v414 = vunpack.c.l.b16 %v63
  %v415 = vunpack.c.l.b16 %v64
  %v416 = vunpack.c.l.b16 %v65
  %v417 = vunpack.c.l.b16 %v66
  %v418 = vunpack.c.l.b16 %v67
  %v419 = vunpack.c.l.b16 %v68
  %v420 = vunpack.c.l.b16 %v69
  %v421 = vunpack.c.l.b16 %v70
  %v422 = vunpack.c.l.b16 %v71
  %v423 = vunpack.c.l.b16 %v72
  %v424 = vunpack.c.l.b16 %v73
  %v425 = vunpack.c.l.b16 %v74
  %v426 = vunpack.c.l.b16 %v75
  %v427 = vunpack.c.l.b16 %v76
  %v428 = vunpack.c.l.b16 %v77
  %v429 = vunpack.c.l.b16 %v78
  %v430 = vunpack.c.l.b16 %v79
  %v431 = vunpack.c.l.b16 %v80
  %v432 = vunpack.c.l.b16 %v81
  %v433 = vunpack.c.l.b16 %v82
  %v434 = vunpack.c.l.b16 %v83
  %v435 = vunpack.c.l.b16 %v84
  %v436 = vunpack.c.l.b16 %v85
  %v437 = vunpack.c.l.b16 %v86
  %v438 = vunpack.c.l.b16 %v87
  %v439 = vunpack.c.l.b16 %v88
  %v440 = vunpack.c.l.b16 %v89
  %v441 = vunpack.c.l.b16 %v90
  %v442 = vunpack.c.l.b16 %v91
  %v443 = vunpack.c.l.b16 %v92
  %v444 = vunpack.c.l.b16 %v93
  %v445 = vunpack.c.l.b16 %v94
  %v446 = vunpack.c.l.b16 %v95
  %v447 = vunpack.c.l.b16 %v96
  %v448 = vunpack.c.l.b16 %v97
  %v449 = vunpack.c.l.b16 %v98
  %v450 = vunpack.c.l.b16 %v99
  %v451 = vunpack.c.l.b16 %v100
  %v452 = vunpack.c.l.b16 %v101
  %v453 = vunpack.c.l.b16 %v102
  %v454 = vunpack.c.l.b16 %v103
  %v455 = vunpack.c.l.b16 %v104
  %v456 = vunpack.c.l.b16 %v105
  %v457 = vunpack.c.l.b16 %v106
  %v458 = vunpack.c.l.b16 %v107
  %v459 = vunpack.c.l.b16 %v108
  %v460 = vunpack.c.l.b16 %v109
  %v461 = vunpack.c.l.b16 %v110
  %v462 = vunpack.c.l.b16 %v111
  %v463 = vunpack.c.l.b16 %v112
  %v464 = vunpack.c.l.b16 %v113
  %v465 = vunpack.c.l.b16 %v114
  %v466 = vunpack.c.l.b16 %v115
  %v467 = vunpack.c.l.b16 %v116
  %v468 = vunpack.c.l.b16 %v117
  %v469 = vunpack.c.l.b16 %v118
  %v470 = vunpack.c.l.b16 %v119
  %v471 = vunpack.c.l.b16 %v120
  %v472 = vunpack.c.l.b16 %v121
  %v473 = vunpack.c.l.b16 %v122
  %v474 = vunpack.c.l.b16 %v123
  %v475 = vunpack.c.l.b16 %v124
  %v476 = vunpack.c.l.b16 %v125
  %v477 = vunpack.c.l.b16 %v126
  %v478 = vunpack.c.l.b16 %v127
  %v479 = vunpack.c.l.b16 %v128
  %v480 = vunpack.c.l.b16 %v129
  %v481 = vunpack.c.l.b16 %v130
  %v482 = vunpack.c.l.b16 %v131
  %v483 = vunpack.c.l.b16 %v132
  %v484 = vunpack.c.l.b16 %v133
  %v485 = vunpack.c.l.b16 %v134
  %v486 = vpack.c.b16 %v415, %v414
  %v487 = vpack.c.b16 %v417, %v416
  %v488 = vpack.c.b16 %v419, %v418
  %v489 = vpack.c.b16 %v421, %v420
  %v490 = vpack.c.b16 %v423, %v422
  %v491 = vpack.c.b16 %v425, %v424
  %v492 = vpack.c.b16 %v427, %v426
  %v493 = vpack.c.b16 %v429, %v428
  %v494 = vpack.c.b16 %v431, %v430
  %v495 = vpack.c.b16 %v433, %v432
  %v496 = vpack.c.b16 %v435, %v434
  %v497 = vpack.c.b16 %v437, %v436
  %v498 = vpack.c.b16 %v439, %v438
  %v499 = vpack.c.b16 %v441, %v440
  %v500 = vpack.c.b16 %v443, %v442
  %v501 = vpack.c.b16 %v445, %v444
  %v502 = vpack.c.b16 %v447, %v446
  %v503 = vpack.c.b16 %v449, %v448
  %v504 = vpack.c.b16 %v451, %v450
  %v505 = vpack.c.b16 %v453, %v452
  %v506 = vpack.c.b16 %v455, %v454
  %v507 = vpack.c.b16 %v457, %v456
  %v508 = vpack.c.b16 %v459, %v458
  %v509 = vpack.c.b16 %v461, %v460
  %v510 = vpack.c.b16 %v463, %v462
  %v511 = vpack.c.b16 %v465, %v464
  %v512 = vpack.c.b16 %v467, %v466
  %v513 = vpack.c.b16 %v469, %v468
  %v514 = vpack.c.b16 %v471, %v470
  %v515 = vpack.c.b16 %v473, %v472
  %v516 = vpack.c.b16 %v475, %v474
  %v517 = vpack.c.b16 %v477, %v476
  %v518 = vpack.c.b16 %v479, %v478
  %v519 = vpack.c.b16 %v481, %v480
  %v520 = vpack.c.b16 %v483, %v482
  %v521 = vpack.c.b16 %v485, %v484
  %vm558 = vcmask 523264
  %v560 = vsel %vm558, %v274, 0
  %v563 = vsel %vm558, %v279, 0
  %v566 = vsel %vm558, %v284, 0
  %v569 = vsel %vm558, %v289, 0
  %v572 = vsel %vm558, %v294, 0
  %v575 = vsel %vm558, %v299, 0
  %v578 = vsel %vm558, %v304, 0
  %v581 = vsel %vm558, %v309, 0
  %583 = vmatprep.subr.bf16.mxu0 0
  %584 = vmatpush1.bf16.msra.mxu0 %v493
  %585 = vmatprep.subr.bf16.mxu0 0
  %586 = vmatpush1.bf16.msra.mxu0 %v492
  %587 = vmatprep.subr.bf16.mxu0 0
  %588 = vmatpush1.bf16.msra.mxu0 %v491
  %589 = vmatprep.subr.bf16.mxu0 0
  %590 = vmatpush1.bf16.msra.mxu0 %v490
  %591 = vmatprep.subr.bf16.mxu0 0
  %592 = vmatpush1.bf16.msra.mxu0 %v489
  %593 = vmatprep.subr.bf16.mxu0 0
  %594 = vmatpush1.bf16.msra.mxu0 %v488
  %595 = vmatprep.subr.bf16.mxu0 0
  %596 = vmatpush1.bf16.msra.mxu0 %v487
  %597 = vmatprep.subr.bf16.mxu0 0
  %598 = vmatpush1.bf16.msra.mxu0 %v486
  %599 = vmatprep.subr.bf16.mxu0 0
  %600 = vmatpush2.bf16.msra.mxu0 %v501
  %601 = vmatprep.subr.bf16.mxu0 0
  %602 = vmatpush2.bf16.msra.mxu0 %v500
  %603 = vmatprep.subr.bf16.mxu0 0
  %604 = vmatpush2.bf16.msra.mxu0 %v499
  %605 = vmatprep.subr.bf16.mxu0 0
  %606 = vmatpush2.bf16.msra.mxu0 %v498
  %607 = vmatprep.subr.bf16.mxu0 0
  %608 = vmatpush2.bf16.msra.mxu0 %v497
  %609 = vmatprep.subr.bf16.mxu0 0
  %610 = vmatpush2.bf16.msra.mxu0 %v496
  %611 = vmatprep.subr.bf16.mxu0 0
  %612 = vmatpush2.bf16.msra.mxu0 %v495
  %613 = vmatprep.subr.bf16.mxu0 0
  %614 = vmatpush2.bf16.msra.mxu0 %v494
  %615 = vmatprep.mubr.bf16.mxu0 %v271
  %616 = vmatmul.mubr.bf16.gmra.mxu0 %v270
  %v617 = vpop.f32.mrf.mxu0
  %v618 = vadd.f32 %v140, %v617
  %v619 = vpop.f32.mrf.mxu0
  %v620 = vpop.f32.mrf.mxu0
  %v621 = vadd.f32 %v140, %v620
  %v622 = vpop.f32.mrf.mxu0
  %623 = vmatprep.mubr.bf16.mxu0 %v276
  %624 = vmatmul.mubr.bf16.gmra.mxu0 %v275
  %v625 = vpop.f32.mrf.mxu0
  %v626 = vadd.f32 %v140, %v625
  %v627 = vpop.f32.mrf.mxu0
  %v628 = vpop.f32.mrf.mxu0
  %v629 = vadd.f32 %v140, %v628
  %v630 = vpop.f32.mrf.mxu0
  %631 = vmatprep.mubr.bf16.mxu0 %v281
  %632 = vmatmul.mubr.bf16.gmra.mxu0 %v280
  %v633 = vpop.f32.mrf.mxu0
  %v634 = vadd.f32 %v140, %v633
  %v635 = vpop.f32.mrf.mxu0
  %v636 = vpop.f32.mrf.mxu0
  %v637 = vadd.f32 %v140, %v636
  %v638 = vpop.f32.mrf.mxu0
  %639 = vmatprep.mubr.bf16.mxu0 %v286
  %640 = vmatmul.mubr.bf16.gmra.mxu0 %v285
  %v641 = vpop.f32.mrf.mxu0
  %v642 = vadd.f32 %v140, %v641
  %v643 = vpop.f32.mrf.mxu0
  %v644 = vpop.f32.mrf.mxu0
  %v645 = vadd.f32 %v140, %v644
  %v646 = vpop.f32.mrf.mxu0
  %647 = vmatprep.mubr.bf16.mxu0 %v291
  %648 = vmatmul.mubr.bf16.gmra.mxu0 %v290
  %v649 = vpop.f32.mrf.mxu0
  %v650 = vadd.f32 %v140, %v649
  %v651 = vpop.f32.mrf.mxu0
  %v652 = vpop.f32.mrf.mxu0
  %v653 = vadd.f32 %v140, %v652
  %v654 = vpop.f32.mrf.mxu0
  %655 = vmatprep.mubr.bf16.mxu0 %v296
  %656 = vmatmul.mubr.bf16.gmra.mxu0 %v295
  %v657 = vpop.f32.mrf.mxu0
  %v658 = vadd.f32 %v140, %v657
  %v659 = vpop.f32.mrf.mxu0
  %v660 = vpop.f32.mrf.mxu0
  %v661 = vadd.f32 %v140, %v660
  %v662 = vpop.f32.mrf.mxu0
  %663 = vmatprep.mubr.bf16.mxu0 %v301
  %664 = vmatmul.mubr.bf16.gmra.mxu0 %v300
  %v665 = vpop.f32.mrf.mxu0
  %v666 = vadd.f32 %v140, %v665
  %v667 = vpop.f32.mrf.mxu0
  %v668 = vpop.f32.mrf.mxu0
  %v669 = vadd.f32 %v140, %v668
  %v670 = vpop.f32.mrf.mxu0
  %671 = vmatprep.mubr.bf16.mxu0 %v306
  %672 = vmatmul.mubr.bf16.gmra.mxu0 %v305
  %v673 = vpop.f32.mrf.mxu0
  %v674 = vadd.f32 %v140, %v673
  %v675 = vpop.f32.mrf.mxu0
  %v676 = vpop.f32.mrf.mxu0
  %v677 = vadd.f32 %v140, %v676
  %v678 = vpop.f32.mrf.mxu0
  %679 = vdwg.mxu0
  %680 = vmatprep.subr.bf16.mxu0 0
  %681 = vmatpush1.bf16.msra.mxu0 %v509
  %682 = vmatprep.subr.bf16.mxu0 0
  %683 = vmatpush1.bf16.msra.mxu0 %v508
  %684 = vmatprep.subr.bf16.mxu0 0
  %685 = vmatpush1.bf16.msra.mxu0 %v507
  %686 = vmatprep.subr.bf16.mxu0 0
  %687 = vmatpush1.bf16.msra.mxu0 %v506
  %688 = vmatprep.subr.bf16.mxu0 0
  %689 = vmatpush1.bf16.msra.mxu0 %v505
  %690 = vmatprep.subr.bf16.mxu0 0
  %691 = vmatpush1.bf16.msra.mxu0 %v504
  %692 = vmatprep.subr.bf16.mxu0 0
  %693 = vmatpush1.bf16.msra.mxu0 %v503
  %694 = vmatprep.subr.bf16.mxu0 0
  %695 = vmatpush1.bf16.msra.mxu0 %v502
  %696 = vmatprep.subr.bf16.mxu0 0
  %697 = vmatpush2.bf16.msra.mxu0 %v517
  %698 = vmatprep.subr.bf16.mxu0 0
  %699 = vmatpush2.bf16.msra.mxu0 %v516
  %700 = vmatprep.subr.bf16.mxu0 0
  %701 = vmatpush2.bf16.msra.mxu0 %v515
  %702 = vmatprep.subr.bf16.mxu0 0
  %703 = vmatpush2.bf16.msra.mxu0 %v514
  %704 = vmatprep.subr.bf16.mxu0 0
  %705 = vmatpush2.bf16.msra.mxu0 %v513
  %706 = vmatprep.subr.bf16.mxu0 0
  %707 = vmatpush2.bf16.msra.mxu0 %v512
  %708 = vmatprep.subr.bf16.mxu0 0
  %709 = vmatpush2.bf16.msra.mxu0 %v511
  %710 = vmatprep.subr.bf16.mxu0 0
  %711 = vmatpush2.bf16.msra.mxu0 %v510
  %712 = vmatprep.mubr.bf16.mxu0 %v273
  %713 = vmatmul.mubr.bf16.gmra.mxu0 %v272
  %v714 = vpop.f32.mrf.mxu0
  %v715 = vadd.f32 %v618, %v714
  %v716 = vpop.f32.mrf.mxu0
  %v717 = vpop.f32.mrf.mxu0
  %v718 = vadd.f32 %v621, %v717
  %v719 = vpop.f32.mrf.mxu0
  %720 = vmatprep.mubr.bf16.mxu0 %v278
  %721 = vmatmul.mubr.bf16.gmra.mxu0 %v277
  %v722 = vpop.f32.mrf.mxu0
  %v723 = vadd.f32 %v626, %v722
  %v724 = vpop.f32.mrf.mxu0
  %v725 = vpop.f32.mrf.mxu0
  %v726 = vadd.f32 %v629, %v725
  %v727 = vpop.f32.mrf.mxu0
  %728 = vmatprep.mubr.bf16.mxu0 %v283
  %729 = vmatmul.mubr.bf16.gmra.mxu0 %v282
  %v730 = vpop.f32.mrf.mxu0
  %v731 = vadd.f32 %v634, %v730
  %v732 = vpop.f32.mrf.mxu0
  %v733 = vpop.f32.mrf.mxu0
  %v734 = vadd.f32 %v637, %v733
  %v735 = vpop.f32.mrf.mxu0
  %736 = vmatprep.mubr.bf16.mxu0 %v288
  %737 = vmatmul.mubr.bf16.gmra.mxu0 %v287
  %v738 = vpop.f32.mrf.mxu0
  %v739 = vadd.f32 %v642, %v738
  %v740 = vpop.f32.mrf.mxu0
  %v741 = vpop.f32.mrf.mxu0
  %v742 = vadd.f32 %v645, %v741
  %v743 = vpop.f32.mrf.mxu0
  %744 = vmatprep.mubr.bf16.mxu0 %v293
  %745 = vmatmul.mubr.bf16.gmra.mxu0 %v292
  %v746 = vpop.f32.mrf.mxu0
  %v747 = vadd.f32 %v650, %v746
  %v748 = vpop.f32.mrf.mxu0
  %v749 = vpop.f32.mrf.mxu0
  %v750 = vadd.f32 %v653, %v749
  %v751 = vpop.f32.mrf.mxu0
  %752 = vmatprep.mubr.bf16.mxu0 %v298
  %753 = vmatmul.mubr.bf16.gmra.mxu0 %v297
  %v754 = vpop.f32.mrf.mxu0
  %v755 = vadd.f32 %v658, %v754
  %v756 = vpop.f32.mrf.mxu0
  %v757 = vpop.f32.mrf.mxu0
  %v758 = vadd.f32 %v661, %v757
  %v759 = vpop.f32.mrf.mxu0
  %760 = vmatprep.mubr.bf16.mxu0 %v303
  %761 = vmatmul.mubr.bf16.gmra.mxu0 %v302
  %v762 = vpop.f32.mrf.mxu0
  %v763 = vadd.f32 %v666, %v762
  %v764 = vpop.f32.mrf.mxu0
  %v765 = vpop.f32.mrf.mxu0
  %v766 = vadd.f32 %v669, %v765
  %v767 = vpop.f32.mrf.mxu0
  %768 = vmatprep.mubr.bf16.mxu0 %v308
  %769 = vmatmul.mubr.bf16.gmra.mxu0 %v307
  %v770 = vpop.f32.mrf.mxu0
  %v771 = vadd.f32 %v674, %v770
  %v772 = vpop.f32.mrf.mxu0
  %v773 = vpop.f32.mrf.mxu0
  %v774 = vadd.f32 %v677, %v773
  %v775 = vpop.f32.mrf.mxu0
  %776 = vdwg.mxu0
  %777 = vmatprep.subr.bf16.mxu0 0
  %778 = vmatpush1.bf16.msra.mxu0 0
  %779 = vmatprep.subr.bf16.mxu0 0
  %780 = vmatpush1.bf16.msra.mxu0 0
  %781 = vmatprep.subr.bf16.mxu0 0
  %782 = vmatpush1.bf16.msra.mxu0 0
  %783 = vmatprep.subr.bf16.mxu0 0
  %784 = vmatpush1.bf16.msra.mxu0 0
  %785 = vmatprep.subr.bf16.mxu0 0
  %786 = vmatpush1.bf16.msra.mxu0 %v521
  %787 = vmatprep.subr.bf16.mxu0 0
  %788 = vmatpush1.bf16.msra.mxu0 %v520
  %789 = vmatprep.subr.bf16.mxu0 0
  %790 = vmatpush1.bf16.msra.mxu0 %v519
  %791 = vmatprep.subr.bf16.mxu0 0
  %792 = vmatpush1.bf16.msra.mxu0 %v518
  %793 = vmatprep.subr.bf16.mxu0 0
  %794 = vmatpush2.bf16.msra.mxu0 0
  %795 = vmatprep.subr.bf16.mxu0 0
  %796 = vmatpush2.bf16.msra.mxu0 0
  %797 = vmatprep.subr.bf16.mxu0 0
  %798 = vmatpush2.bf16.msra.mxu0 0
  %799 = vmatprep.subr.bf16.mxu0 0
  %800 = vmatpush2.bf16.msra.mxu0 0
  %801 = vmatprep.subr.bf16.mxu0 0
  %802 = vmatpush2.bf16.msra.mxu0 0
  %803 = vmatprep.subr.bf16.mxu0 0
  %804 = vmatpush2.bf16.msra.mxu0 0
  %805 = vmatprep.subr.bf16.mxu0 0
  %806 = vmatpush2.bf16.msra.mxu0 0
  %807 = vmatprep.subr.bf16.mxu0 0
  %808 = vmatpush2.bf16.msra.mxu0 0
  %809 = vmatprep.mubr.bf16.mxu0 0
  %810 = vmatmul.mubr.bf16.gmra.mxu0 %v560
  %v811 = vpop.f32.mrf.mxu0
  %v812 = vadd.f32 %v715, %v811
  %v813 = vpop.f32.mrf.mxu0
  %v814 = vpop.f32.mrf.mxu0
  %v815 = vadd.f32 %v718, %v814
  %v816 = vpop.f32.mrf.mxu0
  %817 = vmatprep.mubr.bf16.mxu0 0
  %818 = vmatmul.mubr.bf16.gmra.mxu0 %v563
  %v819 = vpop.f32.mrf.mxu0
  %v820 = vadd.f32 %v723, %v819
  %v821 = vpop.f32.mrf.mxu0
  %v822 = vpop.f32.mrf.mxu0
  %v823 = vadd.f32 %v726, %v822
  %v824 = vpop.f32.mrf.mxu0
  %825 = vmatprep.mubr.bf16.mxu0 0
  %826 = vmatmul.mubr.bf16.gmra.mxu0 %v566
  %v827 = vpop.f32.mrf.mxu0
  %v828 = vadd.f32 %v731, %v827
  %v829 = vpop.f32.mrf.mxu0
  %v830 = vpop.f32.mrf.mxu0
  %v831 = vadd.f32 %v734, %v830
  %v832 = vpop.f32.mrf.mxu0
  %833 = vmatprep.mubr.bf16.mxu0 0
  %834 = vmatmul.mubr.bf16.gmra.mxu0 %v569
  %v835 = vpop.f32.mrf.mxu0
  %v836 = vadd.f32 %v739, %v835
  %v837 = vpop.f32.mrf.mxu0
  %v838 = vpop.f32.mrf.mxu0
  %v839 = vadd.f32 %v742, %v838
  %v840 = vpop.f32.mrf.mxu0
  %841 = vmatprep.mubr.bf16.mxu0 0
  %842 = vmatmul.mubr.bf16.gmra.mxu0 %v572
  %v843 = vpop.f32.mrf.mxu0
  %v844 = vadd.f32 %v747, %v843
  %v845 = vpop.f32.mrf.mxu0
  %v846 = vpop.f32.mrf.mxu0
  %v847 = vadd.f32 %v750, %v846
  %v848 = vpop.f32.mrf.mxu0
  %849 = vmatprep.mubr.bf16.mxu0 0
  %850 = vmatmul.mubr.bf16.gmra.mxu0 %v575
  %v851 = vpop.f32.mrf.mxu0
  %v852 = vadd.f32 %v755, %v851
  %v853 = vpop.f32.mrf.mxu0
  %v854 = vpop.f32.mrf.mxu0
  %v855 = vadd.f32 %v758, %v854
  %v856 = vpop.f32.mrf.mxu0
  %857 = vmatprep.mubr.bf16.mxu0 0
  %858 = vmatmul.mubr.bf16.gmra.mxu0 %v578
  %v859 = vpop.f32.mrf.mxu0
  %v860 = vadd.f32 %v763, %v859
  %v861 = vpop.f32.mrf.mxu0
  %v862 = vpop.f32.mrf.mxu0
  %v863 = vadd.f32 %v766, %v862
  %v864 = vpop.f32.mrf.mxu0
  %865 = vmatprep.mubr.bf16.mxu0 0
  %866 = vmatmul.mubr.bf16.gmra.mxu0 %v581
  %v867 = vpop.f32.mrf.mxu0
  %v868 = vadd.f32 %v771, %v867
  %v869 = vpop.f32.mrf.mxu0
  %v870 = vpop.f32.mrf.mxu0
  %v871 = vadd.f32 %v774, %v870
  %v872 = vpop.f32.mrf.mxu0
  %873 = vdwg.mxu0
  %874 = vst.msk [vmem:[%s3] sm:$0xff] %vm558, %v812
  %875 = vst.msk [vmem:[%s3 + $0x8] sm:$0xff] %vm558, %v815
  %876 = vst.msk [vmem:[%s3 + $0x10] sm:$0xff] %vm558, %v820
  %877 = vst.msk [vmem:[%s3 + $0x18] sm:$0xff] %vm558, %v823
  %878 = vst.msk [vmem:[%s3 + $0x20] sm:$0xff] %vm558, %v828
  %879 = vst.msk [vmem:[%s3 + $0x28] sm:$0xff] %vm558, %v831
  %880 = vst.msk [vmem:[%s3 + $0x30] sm:$0xff] %vm558, %v836
  %881 = vst.msk [vmem:[%s3 + $0x38] sm:$0xff] %vm558, %v839
  %882 = vst.msk [vmem:[%s3 + $0x40] sm:$0xff] %vm558, %v844
  %883 = vst.msk [vmem:[%s3 + $0x48] sm:$0xff] %vm558, %v847
  %884 = vst.msk [vmem:[%s3 + $0x50] sm:$0xff] %vm558, %v852
  %885 = vst.msk [vmem:[%s3 + $0x58] sm:$0xff] %vm558, %v855
  %886 = vst.msk [vmem:[%s3 + $0x60] sm:$0xff] %vm558, %v860
  %887 = vst.msk [vmem:[%s3 + $0x68] sm:$0xff] %vm558, %v863
  %888 = vst.msk [vmem:[%s3 + $0x70] sm:$0xff] %vm558, %v868
  %889 = vst.msk [vmem:[%s3 + $0x78] sm:$0xff] %vm558, %v871
  // Predicated region
  $region14: #{patchifier_forward.50} parent=0 // pred_check
    _
  $region15: #{patchifier_forward.50} parent=0 // pred_check_branch
    %891 = sbr.rel (0) target = $region17
  $region16: #{patchifier_forward.50} parent=0 // pred_region
    _
  $region17: #{patchifier_forward.50} parent=0 // pred_fallthru
    _
  // Predicated region
  $region18: #{patchifier_forward.50} parent=0 // pred_check
    _
  $region19: #{patchifier_forward.50} parent=0 // pred_check_branch
    %893 = sbr.rel (0) target = $region21
  $region20: #{patchifier_forward.50} parent=0 // pred_region
    _
  $region21: #{patchifier_forward.50} parent=0 // pred_fallthru
    _

</llo_original>
